<compile_context>
chip_gen: v7x
topology: tpu7x:2x2x1
jax: 0.10.0
libtpu: 0.0.40
codegen_flags: <defaults>
</compile_context>

<pallas_src>
import functools

import jax
import jax.numpy as jnp
from jax import lax
from jax.experimental import pallas as pl
from jax.experimental.pallas import tpu as pltpu


# ---------------------------------------------------------------------------
# Fused kernel: halo DMA -> depthwise conv -> LayerNorm -> fc1 -> srelu -> fc2
#               -> residual add, for one (batch, h_tile) block of rows.
# ---------------------------------------------------------------------------
def _fused_convnext_kernel(
    x_hbm,            # (B, H + KH - 1, W + KW - 1, Cp) f32, HBM (pl.ANY)
    cw_ref,           # (KH*KW, Cp) f32   depthwise conv weights (flattened taps)
    cb_ref,           # (1, Cp)    f32    conv bias
    lnw_ref,          # (1, Cp)    f32    LayerNorm weight
    lnb_ref,          # (1, Cp)    f32    LayerNorm bias
    w1_ref,           # (Cp, Fp)   bf16   fc1 weight
    b1_ref,           # (1, Fp)    f32    fc1 bias
    w2_ref,           # (Fp, Cp)   bf16   fc2 weight
    b2_ref,           # (1, Cp)    f32    fc2 bias
    o_ref,            # (1, th, W, Cp) f32 output block
    xs_ref,           # VMEM scratch (th + KH - 1, W + KW - 1, Cp) f32
    acc_ref,          # VMEM scratch (th, W, Cp) f32 conv accumulator
    sem,              # DMA semaphore
    *, kh_size, kw_size, c_real, eps):
    th, W, Cp = acc_ref.shape
    ph = (kh_size - 1) // 2
    pw = (kw_size - 1) // 2

    b = pl.program_id(0)
    ht = pl.program_id(1)
    rows = xs_ref.shape[0]                       # th + KH - 1 (halo'd rows)
    row0 = pl.multiple_of(ht * th, th)

    # Halo'd input tile: padded rows [ht*th, ht*th + th + KH - 1).
    # (Could be double-buffered across grid steps to hide the DMA; the output
    #  writeback is already auto-pipelined by the BlockSpec.)
    dma = pltpu.make_async_copy(x_hbm.at[b, pl.ds(row0, rows)], xs_ref, sem)
    dma.start()
    dma.wait()

    # ---- depthwise conv: accumulate taps into a VMEM scratch ----------------
    for kh in range(kh_size):
        base = kh * kw_size
        part = xs_ref[kh:kh + th, 0:W, :] * cw_ref[base:base + 1, :]
        for kw in range(1, kw_size):
            part = part + (xs_ref[kh:kh + th, kw:kw + W, :]
                           * cw_ref[base + kw:base + kw + 1, :])
        if kh == 0:
            acc_ref[...] = part
        else:
            acc_ref[...] += part

    conv = acc_ref[...] + cb_ref[...]                       # (th, W, Cp)
    tokens = conv.reshape(th * W, Cp)
    resid = xs_ref[ph:ph + th, pw:pw + W, :].reshape(th * W, Cp)

    # ---- LayerNorm over the real channels (padded lanes are exact zeros) ----
    ch_mask = (lax.broadcasted_iota(jnp.int32, (1, Cp), 1) < c_real
               ).astype(jnp.float32)
    inv_c = 1.0 / float(c_real)
    y = tokens * ch_mask
    mean = jnp.sum(y, axis=-1, keepdims=True) * inv_c
    yc = (y - mean) * ch_mask
    var = jnp.sum(yc * yc, axis=-1, keepdims=True) * inv_c   # biased, as F.layer_norm
    yn = yc * lax.rsqrt(var + eps)
    yn = yn * lnw_ref[...] + lnb_ref[...]

    # ---- MLP: bf16 operands on the MXU, f32 accumulation --------------------
    h = jnp.dot(yn.astype(jnp.bfloat16), w1_ref[...],
                preferred_element_type=jnp.float32) + b1_ref[...]
    h = jnp.maximum(h, 0.0)
    h = h * h                                               # srelu = squared ReLU
    mlp = jnp.dot(h.astype(jnp.bfloat16), w2_ref[...],
                  preferred_element_type=jnp.float32) + b2_ref[...]

    o_ref[...] = (resid + mlp).reshape(1, th, W, Cp)


# ---------------------------------------------------------------------------
# Wrapper
# ---------------------------------------------------------------------------
def _round_up(x, m):
    return (x + m - 1) // m * m


def _pick_h_tile(H, W, max_tokens=512):
    th = 1
    for d in range(1, H + 1):
        if H % d == 0 and d * W <= max_tokens:
            th = d
    return th


def convnext_block_2d(x_nchw, params, *, eps=1e-5, h_tile=None):
    B, C, H, W = x_nchw.shape
    conv_w = params["conv_w"]          # (KH, KW, C)
    conv_b = params["conv_b"]          # (C,)
    ln_w = params["ln_w"]              # (C,)
    ln_b = params["ln_b"]              # (C,)
    w1 = params["w1"]                  # (C, Fh)
    b1 = params["b1"]                  # (Fh,)
    w2 = params["w2"]                  # (Fh, C)
    b2 = params["b2"]                  # (C,)
    KH, KW, _ = conv_w.shape
    Fh = w1.shape[1]
    assert KH % 2 == 1 and KW % 2 == 1, "stride-1 'same' conv requires odd kernel"

    LANE = 128
    Cp = _round_up(C, LANE)            # lane-dense channel padding
    Fp = _round_up(Fh, LANE)
    ph, pw = (KH - 1) // 2, (KW - 1) // 2
    Wp = W + KW - 1

    th = h_tile if h_tile is not None else _pick_h_tile(H, W)
    assert H % th == 0, "h_tile must divide H"

    f32 = jnp.float32
    # NCHW -> NHWC, channel padded to Cp, spatial 'same' halo padded.
    # (Single materialization; if the surrounding model runs NHWC end-to-end,
    #  the two transposes at the block boundary can be dropped entirely.)
    x_nhwc = jnp.transpose(x_nchw, (0, 2, 3, 1)).astype(f32)
    x_pad = jnp.pad(x_nhwc, ((0, 0), (ph, ph), (pw, pw), (0, Cp - C)))

    cw = jnp.pad(conv_w.astype(f32), ((0, 0), (0, 0), (0, Cp - C))).reshape(KH * KW, Cp)
    cb = jnp.pad(conv_b.astype(f32), (0, Cp - C)).reshape(1, Cp)
    lnw = jnp.pad(ln_w.astype(f32), (0, Cp - C)).reshape(1, Cp)
    lnb = jnp.pad(ln_b.astype(f32), (0, Cp - C)).reshape(1, Cp)
    w1p = jnp.pad(w1.astype(f32), ((0, Cp - C), (0, Fp - Fh))).astype(jnp.bfloat16)
    b1p = jnp.pad(b1.astype(f32), (0, Fp - Fh)).reshape(1, Fp)
    w2p = jnp.pad(w2.astype(f32), ((0, Fp - Fh), (0, Cp - C))).astype(jnp.bfloat16)
    b2p = jnp.pad(b2.astype(f32), (0, Cp - C)).reshape(1, Cp)

    kernel = functools.partial(
        _fused_convnext_kernel, kh_size=KH, kw_size=KW, c_real=C, eps=eps)

    out_pad = pl.pallas_call(
        kernel,
        out_shape=jax.ShapeDtypeStruct((B, H, W, Cp), jnp.float32),
        grid=(B, H // th),
        in_specs=[
            pl.BlockSpec(memory_space=pl.ANY),                    # x_pad stays in HBM
            pl.BlockSpec((KH * KW, Cp), lambda b, h: (0, 0)),     # conv weight (resident)
            pl.BlockSpec((1, Cp), lambda b, h: (0, 0)),           # conv bias
            pl.BlockSpec((1, Cp), lambda b, h: (0, 0)),           # ln weight
            pl.BlockSpec((1, Cp), lambda b, h: (0, 0)),           # ln bias
            pl.BlockSpec((Cp, Fp), lambda b, h: (0, 0)),          # fc1 weight (bf16)
            pl.BlockSpec((1, Fp), lambda b, h: (0, 0)),           # fc1 bias
            pl.BlockSpec((Fp, Cp), lambda b, h: (0, 0)),          # fc2 weight (bf16)
            pl.BlockSpec((1, Cp), lambda b, h: (0, 0)),           # fc2 bias
        ],
        out_specs=pl.BlockSpec((1, th, W, Cp), lambda b, h: (b, h, 0, 0)),
        scratch_shapes=[
            pltpu.VMEM((th + KH - 1, Wp, Cp), jnp.float32),       # halo'd input tile
            pltpu.VMEM((th, W, Cp), jnp.float32),                 # conv accumulator
            pltpu.SemaphoreType.DMA,
        ],
        compiler_params=pltpu.CompilerParams(
            dimension_semantics=("parallel", "parallel"),
            vmem_limit_bytes=64 * 1024 * 1024),
    )(x_pad, cw, cb, lnw, lnb, w1p, b1p, w2p, b2p)

    # Drop padded channels, back to NCHW (drop_path == identity at rate 0 / eval).
    return jnp.transpose(out_pad[..., :C], (0, 3, 1, 2))


# ---------------------------------------------------------------------------
# Pure-JAX reference for validation (f32 everywhere, matches the PyTorch spec).
# ---------------------------------------------------------------------------
def convnext_block_2d_ref(x_nchw, params, *, eps=1e-5):
    B, C, H, W = x_nchw.shape
    KH, KW, _ = params["conv_w"].shape
    ph, pw = (KH - 1) // 2, (KW - 1) // 2
    conv_w = jnp.transpose(params["conv_w"], (2, 0, 1))[:, None, :, :]  # (C,1,KH,KW)
    y = lax.conv_general_dilated(
        x_nchw.astype(jnp.float32), conv_w,
        window_strides=(1, 1), padding=[(ph, ph), (pw, pw)],
        dimension_numbers=("NCHW", "OIHW", "NCHW"),
        feature_group_count=C,
    ) + params["conv_b"][None, :, None, None]
    tok = jnp.transpose(y, (0, 2, 3, 1)).reshape(B, H * W, C)
    mean = jnp.mean(tok, axis=-1, keepdims=True)
    var = jnp.mean((tok - mean) ** 2, axis=-1, keepdims=True)
    tn = (tok - mean) * lax.rsqrt(var + eps) * params["ln_w"] + params["ln_b"]
    h = tn @ params["w1"] + params["b1"]
    h = jnp.maximum(h, 0.0) ** 2
    out = h @ params["w2"] + params["b2"]
    out = jnp.transpose(out.reshape(B, H, W, C), (0, 3, 1, 2))
    return x_nchw + out


def make_params(key, hidden_size, ffn_hidden_size, kernel_size=(7, 7)):
    k1, k2, k3, k4 = jax.random.split(key, 4)
    KH, KW = kernel_size
    std = 0.02  # TRUNC_NORMAL_STD analogue; deterministic synthetic init
    return {
        "conv_w": 0.1 * jax.random.normal(k1, (KH, KW, hidden_size), jnp.float32),
        "conv_b": 0.01 * jax.random.normal(k2, (hidden_size,), jnp.float32),
        "ln_w": jnp.ones((hidden_size,), jnp.float32),
        "ln_b": jnp.zeros((hidden_size,), jnp.float32),
        "w1": std * jax.random.normal(k3, (hidden_size, ffn_hidden_size), jnp.float32),
        "b1": jnp.zeros((ffn_hidden_size,), jnp.float32),
        "w2": std * jax.random.normal(k4, (ffn_hidden_size, hidden_size), jnp.float32),
        "b2": jnp.zeros((hidden_size,), jnp.float32),
    }


if __name__ == "__main__":
    key = jax.random.PRNGKey(0)
    kx, kp = jax.random.split(key)

    B, C, H, W = 2, 4, 16, 16
    ffn = 16
    x = jax.random.normal(kx, (B, C, H, W), jnp.float32)   # NCHW, like PyTorch
    params = make_params(kp, C, ffn)

    out = convnext_block_2d(x, params)
    out = jax.block_until_ready(out)

    ref = convnext_block_2d_ref(x, params)
    assert out.shape == (B, C, H, W)
    # bf16 MXU operands (f32 accumulation) => slightly looser tolerance than f32.
    assert jnp.allclose(out, ref, atol=1e-3, rtol=1e-3), float(jnp.max(jnp.abs(out - ref)))

    print("KERNEL_OK")
</pallas_src>

<mosaic_0001>
module attributes {stable_mosaic.version = 11 : i64} {
  func.func @_fused_convnext_kernel(%arg0: i32, %arg1: i32, %arg2: memref<2x22x22x128xf32, #tpu.memory_space<any>>, %arg3: memref<49x128xf32, #tpu.memory_space<vmem>>, %arg4: memref<1x128xf32, #tpu.memory_space<vmem>>, %arg5: memref<1x128xf32, #tpu.memory_space<vmem>>, %arg6: memref<1x128xf32, #tpu.memory_space<vmem>>, %arg7: memref<128x128xbf16, #tpu.memory_space<vmem>>, %arg8: memref<1x128xf32, #tpu.memory_space<vmem>>, %arg9: memref<128x128xbf16, #tpu.memory_space<vmem>>, %arg10: memref<1x128xf32, #tpu.memory_space<vmem>>, %arg11: memref<1x16x16x128xf32, #tpu.memory_space<vmem>>, %arg12: memref<22x22x128xf32, #tpu.memory_space<vmem>>, %arg13: memref<16x16x128xf32, #tpu.memory_space<vmem>>, %arg14: memref<!tpu.dma_semaphore, #tpu.memory_space<semaphore_mem>>) attributes {dimension_semantics = [#tpu.dimension_semantics<parallel>, #tpu.dimension_semantics<parallel>], iteration_bounds = array<i64: 2, 1>, scalar_prefetch = 0 : i64, scratch_operands = 3 : i64, tpu.core_type = #tpu.core_type<tc>, window_params = [{}, {pipeline_mode = #tpu.pipeline_mode<synchronous>, transform_indices = @transform_1, window_bounds = array<i64: 49, 128>}, {pipeline_mode = #tpu.pipeline_mode<synchronous>, transform_indices = @transform_2, window_bounds = array<i64: 1, 128>}, {pipeline_mode = #tpu.pipeline_mode<synchronous>, transform_indices = @transform_3, window_bounds = array<i64: 1, 128>}, {pipeline_mode = #tpu.pipeline_mode<synchronous>, transform_indices = @transform_4, window_bounds = array<i64: 1, 128>}, {pipeline_mode = #tpu.pipeline_mode<synchronous>, transform_indices = @transform_5, window_bounds = array<i64: 128, 128>}, {pipeline_mode = #tpu.pipeline_mode<synchronous>, transform_indices = @transform_6, window_bounds = array<i64: 1, 128>}, {pipeline_mode = #tpu.pipeline_mode<synchronous>, transform_indices = @transform_7, window_bounds = array<i64: 128, 128>}, {pipeline_mode = #tpu.pipeline_mode<synchronous>, transform_indices = @transform_8, window_bounds = array<i64: 1, 128>}, {transform_indices = @transform_9, window_bounds = array<i64: 1, 16, 16, 128>}]} {
    %c16_i32 = arith.constant 16 : i32
    %0 = arith.muli %arg1, %c16_i32 : i32
    %1 = tpu.assume_multiple %0, 16 : i32
    %c0_i32 = arith.constant 0 : i32
    %c0_i32_0 = arith.constant 0 : i32
    %2 = tpu.memref_slice %arg2[%arg0, %1, %c0_i32, %c0_i32_0] : memref<2x22x22x128xf32, #tpu.memory_space<any>> -> memref<1x22x22x128xf32, #tpu.memory_space<any>>
    %3 = tpu.memref_squeeze %2 : memref<1x22x22x128xf32, #tpu.memory_space<any>> -> memref<22x22x128xf32, #tpu.memory_space<any>>
    tpu.enqueue_dma source(%3 : memref<22x22x128xf32, #tpu.memory_space<any>>) target(%arg12 : memref<22x22x128xf32, #tpu.memory_space<vmem>>) target_semaphore(%arg14 : memref<!tpu.dma_semaphore, #tpu.memory_space<semaphore_mem>>)
    %c0_i32_1 = arith.constant 0 : i32
    %c0_i32_2 = arith.constant 0 : i32
    %4 = tpu.memref_slice %arg2[%arg0, %1, %c0_i32_1, %c0_i32_2] : memref<2x22x22x128xf32, #tpu.memory_space<any>> -> memref<1x22x22x128xf32, #tpu.memory_space<any>>
    %5 = tpu.memref_squeeze %4 : memref<1x22x22x128xf32, #tpu.memory_space<any>> -> memref<22x22x128xf32, #tpu.memory_space<any>>
    tpu.wait_dma2 semaphore(%arg14 : memref<!tpu.dma_semaphore, #tpu.memory_space<semaphore_mem>>) src(%5 : memref<22x22x128xf32, #tpu.memory_space<any>>) dst(%arg12 : memref<22x22x128xf32, #tpu.memory_space<vmem>>)
    %c0 = arith.constant 0 : index
    %c0_3 = arith.constant 0 : index
    %c0_4 = arith.constant 0 : index
    %6 = vector.load %arg12[%c0, %c0_3, %c0_4] : memref<22x22x128xf32, #tpu.memory_space<vmem>>, vector<16x16x128xf32>
    %c0_5 = arith.constant 0 : index
    %c0_6 = arith.constant 0 : index
    %7 = vector.load %arg3[%c0_5, %c0_6] : memref<49x128xf32, #tpu.memory_space<vmem>>, vector<1x128xf32>
    %8 = vector.shape_cast %7 : vector<1x128xf32> to vector<1x1x128xf32>
    %9 = vector.broadcast %8 : vector<1x1x128xf32> to vector<16x16x128xf32>
    %10 = arith.mulf %6, %9 : vector<16x16x128xf32>
    %c0_7 = arith.constant 0 : index
    %c1 = arith.constant 1 : index
    %c0_8 = arith.constant 0 : index
    %11 = vector.load %arg12[%c0_7, %c1, %c0_8] : memref<22x22x128xf32, #tpu.memory_space<vmem>>, vector<16x16x128xf32>
    %c1_9 = arith.constant 1 : index
    %c0_10 = arith.constant 0 : index
    %12 = vector.load %arg3[%c1_9, %c0_10] : memref<49x128xf32, #tpu.memory_space<vmem>>, vector<1x128xf32>
    %13 = vector.shape_cast %12 : vector<1x128xf32> to vector<1x1x128xf32>
    %14 = vector.broadcast %13 : vector<1x1x128xf32> to vector<16x16x128xf32>
    %15 = arith.mulf %11, %14 : vector<16x16x128xf32>
    %16 = arith.addf %10, %15 : vector<16x16x128xf32>
    %c0_11 = arith.constant 0 : index
    %c2 = arith.constant 2 : index
    %c0_12 = arith.constant 0 : index
    %17 = vector.load %arg12[%c0_11, %c2, %c0_12] : memref<22x22x128xf32, #tpu.memory_space<vmem>>, vector<16x16x128xf32>
    %c2_13 = arith.constant 2 : index
    %c0_14 = arith.constant 0 : index
    %18 = vector.load %arg3[%c2_13, %c0_14] : memref<49x128xf32, #tpu.memory_space<vmem>>, vector<1x128xf32>
    %19 = vector.shape_cast %18 : vector<1x128xf32> to vector<1x1x128xf32>
    %20 = vector.broadcast %19 : vector<1x1x128xf32> to vector<16x16x128xf32>
    %21 = arith.mulf %17, %20 : vector<16x16x128xf32>
    %22 = arith.addf %16, %21 : vector<16x16x128xf32>
    %c0_15 = arith.constant 0 : index
    %c3 = arith.constant 3 : index
    %c0_16 = arith.constant 0 : index
    %23 = vector.load %arg12[%c0_15, %c3, %c0_16] : memref<22x22x128xf32, #tpu.memory_space<vmem>>, vector<16x16x128xf32>
    %c3_17 = arith.constant 3 : index
    %c0_18 = arith.constant 0 : index
    %24 = vector.load %arg3[%c3_17, %c0_18] : memref<49x128xf32, #tpu.memory_space<vmem>>, vector<1x128xf32>
    %25 = vector.shape_cast %24 : vector<1x128xf32> to vector<1x1x128xf32>
    %26 = vector.broadcast %25 : vector<1x1x128xf32> to vector<16x16x128xf32>
    %27 = arith.mulf %23, %26 : vector<16x16x128xf32>
    %28 = arith.addf %22, %27 : vector<16x16x128xf32>
    %c0_19 = arith.constant 0 : index
    %c4 = arith.constant 4 : index
    %c0_20 = arith.constant 0 : index
    %29 = vector.load %arg12[%c0_19, %c4, %c0_20] : memref<22x22x128xf32, #tpu.memory_space<vmem>>, vector<16x16x128xf32>
    %c4_21 = arith.constant 4 : index
    %c0_22 = arith.constant 0 : index
    %30 = vector.load %arg3[%c4_21, %c0_22] : memref<49x128xf32, #tpu.memory_space<vmem>>, vector<1x128xf32>
    %31 = vector.shape_cast %30 : vector<1x128xf32> to vector<1x1x128xf32>
    %32 = vector.broadcast %31 : vector<1x1x128xf32> to vector<16x16x128xf32>
    %33 = arith.mulf %29, %32 : vector<16x16x128xf32>
    %34 = arith.addf %28, %33 : vector<16x16x128xf32>
    %c0_23 = arith.constant 0 : index
    %c5 = arith.constant 5 : index
    %c0_24 = arith.constant 0 : index
    %35 = vector.load %arg12[%c0_23, %c5, %c0_24] : memref<22x22x128xf32, #tpu.memory_space<vmem>>, vector<16x16x128xf32>
    %c5_25 = arith.constant 5 : index
    %c0_26 = arith.constant 0 : index
    %36 = vector.load %arg3[%c5_25, %c0_26] : memref<49x128xf32, #tpu.memory_space<vmem>>, vector<1x128xf32>
    %37 = vector.shape_cast %36 : vector<1x128xf32> to vector<1x1x128xf32>
    %38 = vector.broadcast %37 : vector<1x1x128xf32> to vector<16x16x128xf32>
    %39 = arith.mulf %35, %38 : vector<16x16x128xf32>
    %40 = arith.addf %34, %39 : vector<16x16x128xf32>
    %c0_27 = arith.constant 0 : index
    %c6 = arith.constant 6 : index
    %c0_28 = arith.constant 0 : index
    %41 = vector.load %arg12[%c0_27, %c6, %c0_28] : memref<22x22x128xf32, #tpu.memory_space<vmem>>, vector<16x16x128xf32>
    %c6_29 = arith.constant 6 : index
    %c0_30 = arith.constant 0 : index
    %42 = vector.load %arg3[%c6_29, %c0_30] : memref<49x128xf32, #tpu.memory_space<vmem>>, vector<1x128xf32>
    %43 = vector.shape_cast %42 : vector<1x128xf32> to vector<1x1x128xf32>
    %44 = vector.broadcast %43 : vector<1x1x128xf32> to vector<16x16x128xf32>
    %45 = arith.mulf %41, %44 : vector<16x16x128xf32>
    %46 = arith.addf %40, %45 : vector<16x16x128xf32>
    %c0_31 = arith.constant 0 : index
    %c0_32 = arith.constant 0 : index
    %c0_33 = arith.constant 0 : index
    %47 = vector.load %arg13[%c0_31, %c0_32, %c0_33] : memref<16x16x128xf32, #tpu.memory_space<vmem>>, vector<16x16x128xf32>
    tpu.vector_store %arg13[%c0_31, %c0_32, %c0_33], %46 {strides = array<i32>} : memref<16x16x128xf32, #tpu.memory_space<vmem>>, vector<16x16x128xf32>,
    %c1_34 = arith.constant 1 : index
    %c0_35 = arith.constant 0 : index
    %c0_36 = arith.constant 0 : index
    %48 = vector.load %arg12[%c1_34, %c0_35, %c0_36] : memref<22x22x128xf32, #tpu.memory_space<vmem>>, vector<16x16x128xf32>
    %c7 = arith.constant 7 : index
    %c0_37 = arith.constant 0 : index
    %49 = vector.load %arg3[%c7, %c0_37] : memref<49x128xf32, #tpu.memory_space<vmem>>, vector<1x128xf32>
    %50 = vector.shape_cast %49 : vector<1x128xf32> to vector<1x1x128xf32>
    %51 = vector.broadcast %50 : vector<1x1x128xf32> to vector<16x16x128xf32>
    %52 = arith.mulf %48, %51 : vector<16x16x128xf32>
    %c1_38 = arith.constant 1 : index
    %c1_39 = arith.constant 1 : index
    %c0_40 = arith.constant 0 : index
    %53 = vector.load %arg12[%c1_38, %c1_39, %c0_40] : memref<22x22x128xf32, #tpu.memory_space<vmem>>, vector<16x16x128xf32>
    %c8 = arith.constant 8 : index
    %c0_41 = arith.constant 0 : index
    %54 = vector.load %arg3[%c8, %c0_41] : memref<49x128xf32, #tpu.memory_space<vmem>>, vector<1x128xf32>
    %55 = vector.shape_cast %54 : vector<1x128xf32> to vector<1x1x128xf32>
    %56 = vector.broadcast %55 : vector<1x1x128xf32> to vector<16x16x128xf32>
    %57 = arith.mulf %53, %56 : vector<16x16x128xf32>
    %58 = arith.addf %52, %57 : vector<16x16x128xf32>
    %c1_42 = arith.constant 1 : index
    %c2_43 = arith.constant 2 : index
    %c0_44 = arith.constant 0 : index
    %59 = vector.load %arg12[%c1_42, %c2_43, %c0_44] : memref<22x22x128xf32, #tpu.memory_space<vmem>>, vector<16x16x128xf32>
    %c9 = arith.constant 9 : index
    %c0_45 = arith.constant 0 : index
    %60 = vector.load %arg3[%c9, %c0_45] : memref<49x128xf32, #tpu.memory_space<vmem>>, vector<1x128xf32>
    %61 = vector.shape_cast %60 : vector<1x128xf32> to vector<1x1x128xf32>
    %62 = vector.broadcast %61 : vector<1x1x128xf32> to vector<16x16x128xf32>
    %63 = arith.mulf %59, %62 : vector<16x16x128xf32>
    %64 = arith.addf %58, %63 : vector<16x16x128xf32>
    %c1_46 = arith.constant 1 : index
    %c3_47 = arith.constant 3 : index
    %c0_48 = arith.constant 0 : index
    %65 = vector.load %arg12[%c1_46, %c3_47, %c0_48] : memref<22x22x128xf32, #tpu.memory_space<vmem>>, vector<16x16x128xf32>
    %c10 = arith.constant 10 : index
    %c0_49 = arith.constant 0 : index
    %66 = vector.load %arg3[%c10, %c0_49] : memref<49x128xf32, #tpu.memory_space<vmem>>, vector<1x128xf32>
    %67 = vector.shape_cast %66 : vector<1x128xf32> to vector<1x1x128xf32>
    %68 = vector.broadcast %67 : vector<1x1x128xf32> to vector<16x16x128xf32>
    %69 = arith.mulf %65, %68 : vector<16x16x128xf32>
    %70 = arith.addf %64, %69 : vector<16x16x128xf32>
    %c1_50 = arith.constant 1 : index
    %c4_51 = arith.constant 4 : index
    %c0_52 = arith.constant 0 : index
    %71 = vector.load %arg12[%c1_50, %c4_51, %c0_52] : memref<22x22x128xf32, #tpu.memory_space<vmem>>, vector<16x16x128xf32>
    %c11 = arith.constant 11 : index
    %c0_53 = arith.constant 0 : index
    %72 = vector.load %arg3[%c11, %c0_53] : memref<49x128xf32, #tpu.memory_space<vmem>>, vector<1x128xf32>
    %73 = vector.shape_cast %72 : vector<1x128xf32> to vector<1x1x128xf32>
    %74 = vector.broadcast %73 : vector<1x1x128xf32> to vector<16x16x128xf32>
    %75 = arith.mulf %71, %74 : vector<16x16x128xf32>
    %76 = arith.addf %70, %75 : vector<16x16x128xf32>
    %c1_54 = arith.constant 1 : index
    %c5_55 = arith.constant 5 : index
    %c0_56 = arith.constant 0 : index
    %77 = vector.load %arg12[%c1_54, %c5_55, %c0_56] : memref<22x22x128xf32, #tpu.memory_space<vmem>>, vector<16x16x128xf32>
    %c12 = arith.constant 12 : index
    %c0_57 = arith.constant 0 : index
    %78 = vector.load %arg3[%c12, %c0_57] : memref<49x128xf32, #tpu.memory_space<vmem>>, vector<1x128xf32>
    %79 = vector.shape_cast %78 : vector<1x128xf32> to vector<1x1x128xf32>
    %80 = vector.broadcast %79 : vector<1x1x128xf32> to vector<16x16x128xf32>
    %81 = arith.mulf %77, %80 : vector<16x16x128xf32>
    %82 = arith.addf %76, %81 : vector<16x16x128xf32>
    %c1_58 = arith.constant 1 : index
    %c6_59 = arith.constant 6 : index
    %c0_60 = arith.constant 0 : index
    %83 = vector.load %arg12[%c1_58, %c6_59, %c0_60] : memref<22x22x128xf32, #tpu.memory_space<vmem>>, vector<16x16x128xf32>
    %c13 = arith.constant 13 : index
    %c0_61 = arith.constant 0 : index
    %84 = vector.load %arg3[%c13, %c0_61] : memref<49x128xf32, #tpu.memory_space<vmem>>, vector<1x128xf32>
    %85 = vector.shape_cast %84 : vector<1x128xf32> to vector<1x1x128xf32>
    %86 = vector.broadcast %85 : vector<1x1x128xf32> to vector<16x16x128xf32>
    %87 = arith.mulf %83, %86 : vector<16x16x128xf32>
    %88 = arith.addf %82, %87 : vector<16x16x128xf32>
    %c0_62 = arith.constant 0 : index
    %c0_63 = arith.constant 0 : index
    %c0_64 = arith.constant 0 : index
    %89 = vector.load %arg13[%c0_62, %c0_63, %c0_64] : memref<16x16x128xf32, #tpu.memory_space<vmem>>, vector<16x16x128xf32>
    %90 = arith.addf %89, %88 : vector<16x16x128xf32>
    %c0_65 = arith.constant 0 : index
    %c0_66 = arith.constant 0 : index
    %c0_67 = arith.constant 0 : index
    %91 = vector.load %arg13[%c0_65, %c0_66, %c0_67] : memref<16x16x128xf32, #tpu.memory_space<vmem>>, vector<16x16x128xf32>
    tpu.vector_store %arg13[%c0_65, %c0_66, %c0_67], %90 {strides = array<i32>} : memref<16x16x128xf32, #tpu.memory_space<vmem>>, vector<16x16x128xf32>,
    %c2_68 = arith.constant 2 : index
    %c0_69 = arith.constant 0 : index
    %c0_70 = arith.constant 0 : index
    %92 = vector.load %arg12[%c2_68, %c0_69, %c0_70] : memref<22x22x128xf32, #tpu.memory_space<vmem>>, vector<16x16x128xf32>
    %c14 = arith.constant 14 : index
    %c0_71 = arith.constant 0 : index
    %93 = vector.load %arg3[%c14, %c0_71] : memref<49x128xf32, #tpu.memory_space<vmem>>, vector<1x128xf32>
    %94 = vector.shape_cast %93 : vector<1x128xf32> to vector<1x1x128xf32>
    %95 = vector.broadcast %94 : vector<1x1x128xf32> to vector<16x16x128xf32>
    %96 = arith.mulf %92, %95 : vector<16x16x128xf32>
    %c2_72 = arith.constant 2 : index
    %c1_73 = arith.constant 1 : index
    %c0_74 = arith.constant 0 : index
    %97 = vector.load %arg12[%c2_72, %c1_73, %c0_74] : memref<22x22x128xf32, #tpu.memory_space<vmem>>, vector<16x16x128xf32>
    %c15 = arith.constant 15 : index
    %c0_75 = arith.constant 0 : index
    %98 = vector.load %arg3[%c15, %c0_75] : memref<49x128xf32, #tpu.memory_space<vmem>>, vector<1x128xf32>
    %99 = vector.shape_cast %98 : vector<1x128xf32> to vector<1x1x128xf32>
    %100 = vector.broadcast %99 : vector<1x1x128xf32> to vector<16x16x128xf32>
    %101 = arith.mulf %97, %100 : vector<16x16x128xf32>
    %102 = arith.addf %96, %101 : vector<16x16x128xf32>
    %c2_76 = arith.constant 2 : index
    %c2_77 = arith.constant 2 : index
    %c0_78 = arith.constant 0 : index
    %103 = vector.load %arg12[%c2_76, %c2_77, %c0_78] : memref<22x22x128xf32, #tpu.memory_space<vmem>>, vector<16x16x128xf32>
    %c16 = arith.constant 16 : index
    %c0_79 = arith.constant 0 : index
    %104 = vector.load %arg3[%c16, %c0_79] : memref<49x128xf32, #tpu.memory_space<vmem>>, vector<1x128xf32>
    %105 = vector.shape_cast %104 : vector<1x128xf32> to vector<1x1x128xf32>
    %106 = vector.broadcast %105 : vector<1x1x128xf32> to vector<16x16x128xf32>
    %107 = arith.mulf %103, %106 : vector<16x16x128xf32>
    %108 = arith.addf %102, %107 : vector<16x16x128xf32>
    %c2_80 = arith.constant 2 : index
    %c3_81 = arith.constant 3 : index
    %c0_82 = arith.constant 0 : index
    %109 = vector.load %arg12[%c2_80, %c3_81, %c0_82] : memref<22x22x128xf32, #tpu.memory_space<vmem>>, vector<16x16x128xf32>
    %c17 = arith.constant 17 : index
    %c0_83 = arith.constant 0 : index
    %110 = vector.load %arg3[%c17, %c0_83] : memref<49x128xf32, #tpu.memory_space<vmem>>, vector<1x128xf32>
    %111 = vector.shape_cast %110 : vector<1x128xf32> to vector<1x1x128xf32>
    %112 = vector.broadcast %111 : vector<1x1x128xf32> to vector<16x16x128xf32>
    %113 = arith.mulf %109, %112 : vector<16x16x128xf32>
    %114 = arith.addf %108, %113 : vector<16x16x128xf32>
    %c2_84 = arith.constant 2 : index
    %c4_85 = arith.constant 4 : index
    %c0_86 = arith.constant 0 : index
    %115 = vector.load %arg12[%c2_84, %c4_85, %c0_86] : memref<22x22x128xf32, #tpu.memory_space<vmem>>, vector<16x16x128xf32>
    %c18 = arith.constant 18 : index
    %c0_87 = arith.constant 0 : index
    %116 = vector.load %arg3[%c18, %c0_87] : memref<49x128xf32, #tpu.memory_space<vmem>>, vector<1x128xf32>
    %117 = vector.shape_cast %116 : vector<1x128xf32> to vector<1x1x128xf32>
    %118 = vector.broadcast %117 : vector<1x1x128xf32> to vector<16x16x128xf32>
    %119 = arith.mulf %115, %118 : vector<16x16x128xf32>
    %120 = arith.addf %114, %119 : vector<16x16x128xf32>
    %c2_88 = arith.constant 2 : index
    %c5_89 = arith.constant 5 : index
    %c0_90 = arith.constant 0 : index
    %121 = vector.load %arg12[%c2_88, %c5_89, %c0_90] : memref<22x22x128xf32, #tpu.memory_space<vmem>>, vector<16x16x128xf32>
    %c19 = arith.constant 19 : index
    %c0_91 = arith.constant 0 : index
    %122 = vector.load %arg3[%c19, %c0_91] : memref<49x128xf32, #tpu.memory_space<vmem>>, vector<1x128xf32>
    %123 = vector.shape_cast %122 : vector<1x128xf32> to vector<1x1x128xf32>
    %124 = vector.broadcast %123 : vector<1x1x128xf32> to vector<16x16x128xf32>
    %125 = arith.mulf %121, %124 : vector<16x16x128xf32>
    %126 = arith.addf %120, %125 : vector<16x16x128xf32>
    %c2_92 = arith.constant 2 : index
    %c6_93 = arith.constant 6 : index
    %c0_94 = arith.constant 0 : index
    %127 = vector.load %arg12[%c2_92, %c6_93, %c0_94] : memref<22x22x128xf32, #tpu.memory_space<vmem>>, vector<16x16x128xf32>
    %c20 = arith.constant 20 : index
    %c0_95 = arith.constant 0 : index
    %128 = vector.load %arg3[%c20, %c0_95] : memref<49x128xf32, #tpu.memory_space<vmem>>, vector<1x128xf32>
    %129 = vector.shape_cast %128 : vector<1x128xf32> to vector<1x1x128xf32>
    %130 = vector.broadcast %129 : vector<1x1x128xf32> to vector<16x16x128xf32>
    %131 = arith.mulf %127, %130 : vector<16x16x128xf32>
    %132 = arith.addf %126, %131 : vector<16x16x128xf32>
    %c0_96 = arith.constant 0 : index
    %c0_97 = arith.constant 0 : index
    %c0_98 = arith.constant 0 : index
    %133 = vector.load %arg13[%c0_96, %c0_97, %c0_98] : memref<16x16x128xf32, #tpu.memory_space<vmem>>, vector<16x16x128xf32>
    %134 = arith.addf %133, %132 : vector<16x16x128xf32>
    %c0_99 = arith.constant 0 : index
    %c0_100 = arith.constant 0 : index
    %c0_101 = arith.constant 0 : index
    %135 = vector.load %arg13[%c0_99, %c0_100, %c0_101] : memref<16x16x128xf32, #tpu.memory_space<vmem>>, vector<16x16x128xf32>
    tpu.vector_store %arg13[%c0_99, %c0_100, %c0_101], %134 {strides = array<i32>} : memref<16x16x128xf32, #tpu.memory_space<vmem>>, vector<16x16x128xf32>,
    %c3_102 = arith.constant 3 : index
    %c0_103 = arith.constant 0 : index
    %c0_104 = arith.constant 0 : index
    %136 = vector.load %arg12[%c3_102, %c0_103, %c0_104] : memref<22x22x128xf32, #tpu.memory_space<vmem>>, vector<16x16x128xf32>
    %c21 = arith.constant 21 : index
    %c0_105 = arith.constant 0 : index
    %137 = vector.load %arg3[%c21, %c0_105] : memref<49x128xf32, #tpu.memory_space<vmem>>, vector<1x128xf32>
    %138 = vector.shape_cast %137 : vector<1x128xf32> to vector<1x1x128xf32>
    %139 = vector.broadcast %138 : vector<1x1x128xf32> to vector<16x16x128xf32>
    %140 = arith.mulf %136, %139 : vector<16x16x128xf32>
    %c3_106 = arith.constant 3 : index
    %c1_107 = arith.constant 1 : index
    %c0_108 = arith.constant 0 : index
    %141 = vector.load %arg12[%c3_106, %c1_107, %c0_108] : memref<22x22x128xf32, #tpu.memory_space<vmem>>, vector<16x16x128xf32>
    %c22 = arith.constant 22 : index
    %c0_109 = arith.constant 0 : index
    %142 = vector.load %arg3[%c22, %c0_109] : memref<49x128xf32, #tpu.memory_space<vmem>>, vector<1x128xf32>
    %143 = vector.shape_cast %142 : vector<1x128xf32> to vector<1x1x128xf32>
    %144 = vector.broadcast %143 : vector<1x1x128xf32> to vector<16x16x128xf32>
    %145 = arith.mulf %141, %144 : vector<16x16x128xf32>
    %146 = arith.addf %140, %145 : vector<16x16x128xf32>
    %c3_110 = arith.constant 3 : index
    %c2_111 = arith.constant 2 : index
    %c0_112 = arith.constant 0 : index
    %147 = vector.load %arg12[%c3_110, %c2_111, %c0_112] : memref<22x22x128xf32, #tpu.memory_space<vmem>>, vector<16x16x128xf32>
    %c23 = arith.constant 23 : index
    %c0_113 = arith.constant 0 : index
    %148 = vector.load %arg3[%c23, %c0_113] : memref<49x128xf32, #tpu.memory_space<vmem>>, vector<1x128xf32>
    %149 = vector.shape_cast %148 : vector<1x128xf32> to vector<1x1x128xf32>
    %150 = vector.broadcast %149 : vector<1x1x128xf32> to vector<16x16x128xf32>
    %151 = arith.mulf %147, %150 : vector<16x16x128xf32>
    %152 = arith.addf %146, %151 : vector<16x16x128xf32>
    %c3_114 = arith.constant 3 : index
    %c3_115 = arith.constant 3 : index
    %c0_116 = arith.constant 0 : index
    %153 = vector.load %arg12[%c3_114, %c3_115, %c0_116] : memref<22x22x128xf32, #tpu.memory_space<vmem>>, vector<16x16x128xf32>
    %c24 = arith.constant 24 : index
    %c0_117 = arith.constant 0 : index
    %154 = vector.load %arg3[%c24, %c0_117] : memref<49x128xf32, #tpu.memory_space<vmem>>, vector<1x128xf32>
    %155 = vector.shape_cast %154 : vector<1x128xf32> to vector<1x1x128xf32>
    %156 = vector.broadcast %155 : vector<1x1x128xf32> to vector<16x16x128xf32>
    %157 = arith.mulf %153, %156 : vector<16x16x128xf32>
    %158 = arith.addf %152, %157 : vector<16x16x128xf32>
    %c3_118 = arith.constant 3 : index
    %c4_119 = arith.constant 4 : index
    %c0_120 = arith.constant 0 : index
    %159 = vector.load %arg12[%c3_118, %c4_119, %c0_120] : memref<22x22x128xf32, #tpu.memory_space<vmem>>, vector<16x16x128xf32>
    %c25 = arith.constant 25 : index
    %c0_121 = arith.constant 0 : index
    %160 = vector.load %arg3[%c25, %c0_121] : memref<49x128xf32, #tpu.memory_space<vmem>>, vector<1x128xf32>
    %161 = vector.shape_cast %160 : vector<1x128xf32> to vector<1x1x128xf32>
    %162 = vector.broadcast %161 : vector<1x1x128xf32> to vector<16x16x128xf32>
    %163 = arith.mulf %159, %162 : vector<16x16x128xf32>
    %164 = arith.addf %158, %163 : vector<16x16x128xf32>
    %c3_122 = arith.constant 3 : index
    %c5_123 = arith.constant 5 : index
    %c0_124 = arith.constant 0 : index
    %165 = vector.load %arg12[%c3_122, %c5_123, %c0_124] : memref<22x22x128xf32, #tpu.memory_space<vmem>>, vector<16x16x128xf32>
    %c26 = arith.constant 26 : index
    %c0_125 = arith.constant 0 : index
    %166 = vector.load %arg3[%c26, %c0_125] : memref<49x128xf32, #tpu.memory_space<vmem>>, vector<1x128xf32>
    %167 = vector.shape_cast %166 : vector<1x128xf32> to vector<1x1x128xf32>
    %168 = vector.broadcast %167 : vector<1x1x128xf32> to vector<16x16x128xf32>
    %169 = arith.mulf %165, %168 : vector<16x16x128xf32>
    %170 = arith.addf %164, %169 : vector<16x16x128xf32>
    %c3_126 = arith.constant 3 : index
    %c6_127 = arith.constant 6 : index
    %c0_128 = arith.constant 0 : index
    %171 = vector.load %arg12[%c3_126, %c6_127, %c0_128] : memref<22x22x128xf32, #tpu.memory_space<vmem>>, vector<16x16x128xf32>
    %c27 = arith.constant 27 : index
    %c0_129 = arith.constant 0 : index
    %172 = vector.load %arg3[%c27, %c0_129] : memref<49x128xf32, #tpu.memory_space<vmem>>, vector<1x128xf32>
    %173 = vector.shape_cast %172 : vector<1x128xf32> to vector<1x1x128xf32>
    %174 = vector.broadcast %173 : vector<1x1x128xf32> to vector<16x16x128xf32>
    %175 = arith.mulf %171, %174 : vector<16x16x128xf32>
    %176 = arith.addf %170, %175 : vector<16x16x128xf32>
    %c0_130 = arith.constant 0 : index
    %c0_131 = arith.constant 0 : index
    %c0_132 = arith.constant 0 : index
    %177 = vector.load %arg13[%c0_130, %c0_131, %c0_132] : memref<16x16x128xf32, #tpu.memory_space<vmem>>, vector<16x16x128xf32>
    %178 = arith.addf %177, %176 : vector<16x16x128xf32>
    %c0_133 = arith.constant 0 : index
    %c0_134 = arith.constant 0 : index
    %c0_135 = arith.constant 0 : index
    %179 = vector.load %arg13[%c0_133, %c0_134, %c0_135] : memref<16x16x128xf32, #tpu.memory_space<vmem>>, vector<16x16x128xf32>
    tpu.vector_store %arg13[%c0_133, %c0_134, %c0_135], %178 {strides = array<i32>} : memref<16x16x128xf32, #tpu.memory_space<vmem>>, vector<16x16x128xf32>,
    %c4_136 = arith.constant 4 : index
    %c0_137 = arith.constant 0 : index
    %c0_138 = arith.constant 0 : index
    %180 = vector.load %arg12[%c4_136, %c0_137, %c0_138] : memref<22x22x128xf32, #tpu.memory_space<vmem>>, vector<16x16x128xf32>
    %c28 = arith.constant 28 : index
    %c0_139 = arith.constant 0 : index
    %181 = vector.load %arg3[%c28, %c0_139] : memref<49x128xf32, #tpu.memory_space<vmem>>, vector<1x128xf32>
    %182 = vector.shape_cast %181 : vector<1x128xf32> to vector<1x1x128xf32>
    %183 = vector.broadcast %182 : vector<1x1x128xf32> to vector<16x16x128xf32>
    %184 = arith.mulf %180, %183 : vector<16x16x128xf32>
    %c4_140 = arith.constant 4 : index
    %c1_141 = arith.constant 1 : index
    %c0_142 = arith.constant 0 : index
    %185 = vector.load %arg12[%c4_140, %c1_141, %c0_142] : memref<22x22x128xf32, #tpu.memory_space<vmem>>, vector<16x16x128xf32>
    %c29 = arith.constant 29 : index
    %c0_143 = arith.constant 0 : index
    %186 = vector.load %arg3[%c29, %c0_143] : memref<49x128xf32, #tpu.memory_space<vmem>>, vector<1x128xf32>
    %187 = vector.shape_cast %186 : vector<1x128xf32> to vector<1x1x128xf32>
    %188 = vector.broadcast %187 : vector<1x1x128xf32> to vector<16x16x128xf32>
    %189 = arith.mulf %185, %188 : vector<16x16x128xf32>
    %190 = arith.addf %184, %189 : vector<16x16x128xf32>
    %c4_144 = arith.constant 4 : index
    %c2_145 = arith.constant 2 : index
    %c0_146 = arith.constant 0 : index
    %191 = vector.load %arg12[%c4_144, %c2_145, %c0_146] : memref<22x22x128xf32, #tpu.memory_space<vmem>>, vector<16x16x128xf32>
    %c30 = arith.constant 30 : index
    %c0_147 = arith.constant 0 : index
    %192 = vector.load %arg3[%c30, %c0_147] : memref<49x128xf32, #tpu.memory_space<vmem>>, vector<1x128xf32>
    %193 = vector.shape_cast %192 : vector<1x128xf32> to vector<1x1x128xf32>
    %194 = vector.broadcast %193 : vector<1x1x128xf32> to vector<16x16x128xf32>
    %195 = arith.mulf %191, %194 : vector<16x16x128xf32>
    %196 = arith.addf %190, %195 : vector<16x16x128xf32>
    %c4_148 = arith.constant 4 : index
    %c3_149 = arith.constant 3 : index
    %c0_150 = arith.constant 0 : index
    %197 = vector.load %arg12[%c4_148, %c3_149, %c0_150] : memref<22x22x128xf32, #tpu.memory_space<vmem>>, vector<16x16x128xf32>
    %c31 = arith.constant 31 : index
    %c0_151 = arith.constant 0 : index
    %198 = vector.load %arg3[%c31, %c0_151] : memref<49x128xf32, #tpu.memory_space<vmem>>, vector<1x128xf32>
    %199 = vector.shape_cast %198 : vector<1x128xf32> to vector<1x1x128xf32>
    %200 = vector.broadcast %199 : vector<1x1x128xf32> to vector<16x16x128xf32>
    %201 = arith.mulf %197, %200 : vector<16x16x128xf32>
    %202 = arith.addf %196, %201 : vector<16x16x128xf32>
    %c4_152 = arith.constant 4 : index
    %c4_153 = arith.constant 4 : index
    %c0_154 = arith.constant 0 : index
    %203 = vector.load %arg12[%c4_152, %c4_153, %c0_154] : memref<22x22x128xf32, #tpu.memory_space<vmem>>, vector<16x16x128xf32>
    %c32 = arith.constant 32 : index
    %c0_155 = arith.constant 0 : index
    %204 = vector.load %arg3[%c32, %c0_155] : memref<49x128xf32, #tpu.memory_space<vmem>>, vector<1x128xf32>
    %205 = vector.shape_cast %204 : vector<1x128xf32> to vector<1x1x128xf32>
    %206 = vector.broadcast %205 : vector<1x1x128xf32> to vector<16x16x128xf32>
    %207 = arith.mulf %203, %206 : vector<16x16x128xf32>
    %208 = arith.addf %202, %207 : vector<16x16x128xf32>
    %c4_156 = arith.constant 4 : index
    %c5_157 = arith.constant 5 : index
    %c0_158 = arith.constant 0 : index
    %209 = vector.load %arg12[%c4_156, %c5_157, %c0_158] : memref<22x22x128xf32, #tpu.memory_space<vmem>>, vector<16x16x128xf32>
    %c33 = arith.constant 33 : index
    %c0_159 = arith.constant 0 : index
    %210 = vector.load %arg3[%c33, %c0_159] : memref<49x128xf32, #tpu.memory_space<vmem>>, vector<1x128xf32>
    %211 = vector.shape_cast %210 : vector<1x128xf32> to vector<1x1x128xf32>
    %212 = vector.broadcast %211 : vector<1x1x128xf32> to vector<16x16x128xf32>
    %213 = arith.mulf %209, %212 : vector<16x16x128xf32>
    %214 = arith.addf %208, %213 : vector<16x16x128xf32>
    %c4_160 = arith.constant 4 : index
    %c6_161 = arith.constant 6 : index
    %c0_162 = arith.constant 0 : index
    %215 = vector.load %arg12[%c4_160, %c6_161, %c0_162] : memref<22x22x128xf32, #tpu.memory_space<vmem>>, vector<16x16x128xf32>
    %c34 = arith.constant 34 : index
    %c0_163 = arith.constant 0 : index
    %216 = vector.load %arg3[%c34, %c0_163] : memref<49x128xf32, #tpu.memory_space<vmem>>, vector<1x128xf32>
    %217 = vector.shape_cast %216 : vector<1x128xf32> to vector<1x1x128xf32>
    %218 = vector.broadcast %217 : vector<1x1x128xf32> to vector<16x16x128xf32>
    %219 = arith.mulf %215, %218 : vector<16x16x128xf32>
    %220 = arith.addf %214, %219 : vector<16x16x128xf32>
    %c0_164 = arith.constant 0 : index
    %c0_165 = arith.constant 0 : index
    %c0_166 = arith.constant 0 : index
    %221 = vector.load %arg13[%c0_164, %c0_165, %c0_166] : memref<16x16x128xf32, #tpu.memory_space<vmem>>, vector<16x16x128xf32>
    %222 = arith.addf %221, %220 : vector<16x16x128xf32>
    %c0_167 = arith.constant 0 : index
    %c0_168 = arith.constant 0 : index
    %c0_169 = arith.constant 0 : index
    %223 = vector.load %arg13[%c0_167, %c0_168, %c0_169] : memref<16x16x128xf32, #tpu.memory_space<vmem>>, vector<16x16x128xf32>
    tpu.vector_store %arg13[%c0_167, %c0_168, %c0_169], %222 {strides = array<i32>} : memref<16x16x128xf32, #tpu.memory_space<vmem>>, vector<16x16x128xf32>,
    %c5_170 = arith.constant 5 : index
    %c0_171 = arith.constant 0 : index
    %c0_172 = arith.constant 0 : index
    %224 = vector.load %arg12[%c5_170, %c0_171, %c0_172] : memref<22x22x128xf32, #tpu.memory_space<vmem>>, vector<16x16x128xf32>
    %c35 = arith.constant 35 : index
    %c0_173 = arith.constant 0 : index
    %225 = vector.load %arg3[%c35, %c0_173] : memref<49x128xf32, #tpu.memory_space<vmem>>, vector<1x128xf32>
    %226 = vector.shape_cast %225 : vector<1x128xf32> to vector<1x1x128xf32>
    %227 = vector.broadcast %226 : vector<1x1x128xf32> to vector<16x16x128xf32>
    %228 = arith.mulf %224, %227 : vector<16x16x128xf32>
    %c5_174 = arith.constant 5 : index
    %c1_175 = arith.constant 1 : index
    %c0_176 = arith.constant 0 : index
    %229 = vector.load %arg12[%c5_174, %c1_175, %c0_176] : memref<22x22x128xf32, #tpu.memory_space<vmem>>, vector<16x16x128xf32>
    %c36 = arith.constant 36 : index
    %c0_177 = arith.constant 0 : index
    %230 = vector.load %arg3[%c36, %c0_177] : memref<49x128xf32, #tpu.memory_space<vmem>>, vector<1x128xf32>
    %231 = vector.shape_cast %230 : vector<1x128xf32> to vector<1x1x128xf32>
    %232 = vector.broadcast %231 : vector<1x1x128xf32> to vector<16x16x128xf32>
    %233 = arith.mulf %229, %232 : vector<16x16x128xf32>
    %234 = arith.addf %228, %233 : vector<16x16x128xf32>
    %c5_178 = arith.constant 5 : index
    %c2_179 = arith.constant 2 : index
    %c0_180 = arith.constant 0 : index
    %235 = vector.load %arg12[%c5_178, %c2_179, %c0_180] : memref<22x22x128xf32, #tpu.memory_space<vmem>>, vector<16x16x128xf32>
    %c37 = arith.constant 37 : index
    %c0_181 = arith.constant 0 : index
    %236 = vector.load %arg3[%c37, %c0_181] : memref<49x128xf32, #tpu.memory_space<vmem>>, vector<1x128xf32>
    %237 = vector.shape_cast %236 : vector<1x128xf32> to vector<1x1x128xf32>
    %238 = vector.broadcast %237 : vector<1x1x128xf32> to vector<16x16x128xf32>
    %239 = arith.mulf %235, %238 : vector<16x16x128xf32>
    %240 = arith.addf %234, %239 : vector<16x16x128xf32>
    %c5_182 = arith.constant 5 : index
    %c3_183 = arith.constant 3 : index
    %c0_184 = arith.constant 0 : index
    %241 = vector.load %arg12[%c5_182, %c3_183, %c0_184] : memref<22x22x128xf32, #tpu.memory_space<vmem>>, vector<16x16x128xf32>
    %c38 = arith.constant 38 : index
    %c0_185 = arith.constant 0 : index
    %242 = vector.load %arg3[%c38, %c0_185] : memref<49x128xf32, #tpu.memory_space<vmem>>, vector<1x128xf32>
    %243 = vector.shape_cast %242 : vector<1x128xf32> to vector<1x1x128xf32>
    %244 = vector.broadcast %243 : vector<1x1x128xf32> to vector<16x16x128xf32>
    %245 = arith.mulf %241, %244 : vector<16x16x128xf32>
    %246 = arith.addf %240, %245 : vector<16x16x128xf32>
    %c5_186 = arith.constant 5 : index
    %c4_187 = arith.constant 4 : index
    %c0_188 = arith.constant 0 : index
    %247 = vector.load %arg12[%c5_186, %c4_187, %c0_188] : memref<22x22x128xf32, #tpu.memory_space<vmem>>, vector<16x16x128xf32>
    %c39 = arith.constant 39 : index
    %c0_189 = arith.constant 0 : index
    %248 = vector.load %arg3[%c39, %c0_189] : memref<49x128xf32, #tpu.memory_space<vmem>>, vector<1x128xf32>
    %249 = vector.shape_cast %248 : vector<1x128xf32> to vector<1x1x128xf32>
    %250 = vector.broadcast %249 : vector<1x1x128xf32> to vector<16x16x128xf32>
    %251 = arith.mulf %247, %250 : vector<16x16x128xf32>
    %252 = arith.addf %246, %251 : vector<16x16x128xf32>
    %c5_190 = arith.constant 5 : index
    %c5_191 = arith.constant 5 : index
    %c0_192 = arith.constant 0 : index
    %253 = vector.load %arg12[%c5_190, %c5_191, %c0_192] : memref<22x22x128xf32, #tpu.memory_space<vmem>>, vector<16x16x128xf32>
    %c40 = arith.constant 40 : index
    %c0_193 = arith.constant 0 : index
    %254 = vector.load %arg3[%c40, %c0_193] : memref<49x128xf32, #tpu.memory_space<vmem>>, vector<1x128xf32>
    %255 = vector.shape_cast %254 : vector<1x128xf32> to vector<1x1x128xf32>
    %256 = vector.broadcast %255 : vector<1x1x128xf32> to vector<16x16x128xf32>
    %257 = arith.mulf %253, %256 : vector<16x16x128xf32>
    %258 = arith.addf %252, %257 : vector<16x16x128xf32>
    %c5_194 = arith.constant 5 : index
    %c6_195 = arith.constant 6 : index
    %c0_196 = arith.constant 0 : index
    %259 = vector.load %arg12[%c5_194, %c6_195, %c0_196] : memref<22x22x128xf32, #tpu.memory_space<vmem>>, vector<16x16x128xf32>
    %c41 = arith.constant 41 : index
    %c0_197 = arith.constant 0 : index
    %260 = vector.load %arg3[%c41, %c0_197] : memref<49x128xf32, #tpu.memory_space<vmem>>, vector<1x128xf32>
    %261 = vector.shape_cast %260 : vector<1x128xf32> to vector<1x1x128xf32>
    %262 = vector.broadcast %261 : vector<1x1x128xf32> to vector<16x16x128xf32>
    %263 = arith.mulf %259, %262 : vector<16x16x128xf32>
    %264 = arith.addf %258, %263 : vector<16x16x128xf32>
    %c0_198 = arith.constant 0 : index
    %c0_199 = arith.constant 0 : index
    %c0_200 = arith.constant 0 : index
    %265 = vector.load %arg13[%c0_198, %c0_199, %c0_200] : memref<16x16x128xf32, #tpu.memory_space<vmem>>, vector<16x16x128xf32>
    %266 = arith.addf %265, %264 : vector<16x16x128xf32>
    %c0_201 = arith.constant 0 : index
    %c0_202 = arith.constant 0 : index
    %c0_203 = arith.constant 0 : index
    %267 = vector.load %arg13[%c0_201, %c0_202, %c0_203] : memref<16x16x128xf32, #tpu.memory_space<vmem>>, vector<16x16x128xf32>
    tpu.vector_store %arg13[%c0_201, %c0_202, %c0_203], %266 {strides = array<i32>} : memref<16x16x128xf32, #tpu.memory_space<vmem>>, vector<16x16x128xf32>,
    %c6_204 = arith.constant 6 : index
    %c0_205 = arith.constant 0 : index
    %c0_206 = arith.constant 0 : index
    %268 = vector.load %arg12[%c6_204, %c0_205, %c0_206] : memref<22x22x128xf32, #tpu.memory_space<vmem>>, vector<16x16x128xf32>
    %c42 = arith.constant 42 : index
    %c0_207 = arith.constant 0 : index
    %269 = vector.load %arg3[%c42, %c0_207] : memref<49x128xf32, #tpu.memory_space<vmem>>, vector<1x128xf32>
    %270 = vector.shape_cast %269 : vector<1x128xf32> to vector<1x1x128xf32>
    %271 = vector.broadcast %270 : vector<1x1x128xf32> to vector<16x16x128xf32>
    %272 = arith.mulf %268, %271 : vector<16x16x128xf32>
    %c6_208 = arith.constant 6 : index
    %c1_209 = arith.constant 1 : index
    %c0_210 = arith.constant 0 : index
    %273 = vector.load %arg12[%c6_208, %c1_209, %c0_210] : memref<22x22x128xf32, #tpu.memory_space<vmem>>, vector<16x16x128xf32>
    %c43 = arith.constant 43 : index
    %c0_211 = arith.constant 0 : index
    %274 = vector.load %arg3[%c43, %c0_211] : memref<49x128xf32, #tpu.memory_space<vmem>>, vector<1x128xf32>
    %275 = vector.shape_cast %274 : vector<1x128xf32> to vector<1x1x128xf32>
    %276 = vector.broadcast %275 : vector<1x1x128xf32> to vector<16x16x128xf32>
    %277 = arith.mulf %273, %276 : vector<16x16x128xf32>
    %278 = arith.addf %272, %277 : vector<16x16x128xf32>
    %c6_212 = arith.constant 6 : index
    %c2_213 = arith.constant 2 : index
    %c0_214 = arith.constant 0 : index
    %279 = vector.load %arg12[%c6_212, %c2_213, %c0_214] : memref<22x22x128xf32, #tpu.memory_space<vmem>>, vector<16x16x128xf32>
    %c44 = arith.constant 44 : index
    %c0_215 = arith.constant 0 : index
    %280 = vector.load %arg3[%c44, %c0_215] : memref<49x128xf32, #tpu.memory_space<vmem>>, vector<1x128xf32>
    %281 = vector.shape_cast %280 : vector<1x128xf32> to vector<1x1x128xf32>
    %282 = vector.broadcast %281 : vector<1x1x128xf32> to vector<16x16x128xf32>
    %283 = arith.mulf %279, %282 : vector<16x16x128xf32>
    %284 = arith.addf %278, %283 : vector<16x16x128xf32>
    %c6_216 = arith.constant 6 : index
    %c3_217 = arith.constant 3 : index
    %c0_218 = arith.constant 0 : index
    %285 = vector.load %arg12[%c6_216, %c3_217, %c0_218] : memref<22x22x128xf32, #tpu.memory_space<vmem>>, vector<16x16x128xf32>
    %c45 = arith.constant 45 : index
    %c0_219 = arith.constant 0 : index
    %286 = vector.load %arg3[%c45, %c0_219] : memref<49x128xf32, #tpu.memory_space<vmem>>, vector<1x128xf32>
    %287 = vector.shape_cast %286 : vector<1x128xf32> to vector<1x1x128xf32>
    %288 = vector.broadcast %287 : vector<1x1x128xf32> to vector<16x16x128xf32>
    %289 = arith.mulf %285, %288 : vector<16x16x128xf32>
    %290 = arith.addf %284, %289 : vector<16x16x128xf32>
    %c6_220 = arith.constant 6 : index
    %c4_221 = arith.constant 4 : index
    %c0_222 = arith.constant 0 : index
    %291 = vector.load %arg12[%c6_220, %c4_221, %c0_222] : memref<22x22x128xf32, #tpu.memory_space<vmem>>, vector<16x16x128xf32>
    %c46 = arith.constant 46 : index
    %c0_223 = arith.constant 0 : index
    %292 = vector.load %arg3[%c46, %c0_223] : memref<49x128xf32, #tpu.memory_space<vmem>>, vector<1x128xf32>
    %293 = vector.shape_cast %292 : vector<1x128xf32> to vector<1x1x128xf32>
    %294 = vector.broadcast %293 : vector<1x1x128xf32> to vector<16x16x128xf32>
    %295 = arith.mulf %291, %294 : vector<16x16x128xf32>
    %296 = arith.addf %290, %295 : vector<16x16x128xf32>
    %c6_224 = arith.constant 6 : index
    %c5_225 = arith.constant 5 : index
    %c0_226 = arith.constant 0 : index
    %297 = vector.load %arg12[%c6_224, %c5_225, %c0_226] : memref<22x22x128xf32, #tpu.memory_space<vmem>>, vector<16x16x128xf32>
    %c47 = arith.constant 47 : index
    %c0_227 = arith.constant 0 : index
    %298 = vector.load %arg3[%c47, %c0_227] : memref<49x128xf32, #tpu.memory_space<vmem>>, vector<1x128xf32>
    %299 = vector.shape_cast %298 : vector<1x128xf32> to vector<1x1x128xf32>
    %300 = vector.broadcast %299 : vector<1x1x128xf32> to vector<16x16x128xf32>
    %301 = arith.mulf %297, %300 : vector<16x16x128xf32>
    %302 = arith.addf %296, %301 : vector<16x16x128xf32>
    %c6_228 = arith.constant 6 : index
    %c6_229 = arith.constant 6 : index
    %c0_230 = arith.constant 0 : index
    %303 = vector.load %arg12[%c6_228, %c6_229, %c0_230] : memref<22x22x128xf32, #tpu.memory_space<vmem>>, vector<16x16x128xf32>
    %c48 = arith.constant 48 : index
    %c0_231 = arith.constant 0 : index
    %304 = vector.load %arg3[%c48, %c0_231] : memref<49x128xf32, #tpu.memory_space<vmem>>, vector<1x128xf32>
    %305 = vector.shape_cast %304 : vector<1x128xf32> to vector<1x1x128xf32>
    %306 = vector.broadcast %305 : vector<1x1x128xf32> to vector<16x16x128xf32>
    %307 = arith.mulf %303, %306 : vector<16x16x128xf32>
    %308 = arith.addf %302, %307 : vector<16x16x128xf32>
    %c0_232 = arith.constant 0 : index
    %c0_233 = arith.constant 0 : index
    %c0_234 = arith.constant 0 : index
    %309 = vector.load %arg13[%c0_232, %c0_233, %c0_234] : memref<16x16x128xf32, #tpu.memory_space<vmem>>, vector<16x16x128xf32>
    %310 = arith.addf %309, %308 : vector<16x16x128xf32>
    %c0_235 = arith.constant 0 : index
    %c0_236 = arith.constant 0 : index
    %c0_237 = arith.constant 0 : index
    %311 = vector.load %arg13[%c0_235, %c0_236, %c0_237] : memref<16x16x128xf32, #tpu.memory_space<vmem>>, vector<16x16x128xf32>
    tpu.vector_store %arg13[%c0_235, %c0_236, %c0_237], %310 {strides = array<i32>} : memref<16x16x128xf32, #tpu.memory_space<vmem>>, vector<16x16x128xf32>,
    %c0_238 = arith.constant 0 : index
    %c0_239 = arith.constant 0 : index
    %c0_240 = arith.constant 0 : index
    %312 = vector.load %arg13[%c0_238, %c0_239, %c0_240] : memref<16x16x128xf32, #tpu.memory_space<vmem>>, vector<16x16x128xf32>
    %c0_241 = arith.constant 0 : index
    %c0_242 = arith.constant 0 : index
    %313 = vector.load %arg4[%c0_241, %c0_242] : memref<1x128xf32, #tpu.memory_space<vmem>>, vector<1x128xf32>
    %314 = vector.shape_cast %313 : vector<1x128xf32> to vector<1x1x128xf32>
    %315 = vector.broadcast %314 : vector<1x1x128xf32> to vector<16x16x128xf32>
    %316 = arith.addf %312, %315 : vector<16x16x128xf32>
    %317 = vector.shape_cast %316 : vector<16x16x128xf32> to vector<256x128xf32>
    %c3_243 = arith.constant 3 : index
    %c3_244 = arith.constant 3 : index
    %c0_245 = arith.constant 0 : index
    %318 = vector.load %arg12[%c3_243, %c3_244, %c0_245] : memref<22x22x128xf32, #tpu.memory_space<vmem>>, vector<16x16x128xf32>
    %319 = vector.shape_cast %318 : vector<16x16x128xf32> to vector<256x128xf32>
    %320 = tpu.iota {dimensions = array<i32: 1>} : vector<1x128xi32>
    %c4_i32 = arith.constant 4 : i32
    %321 = vector.broadcast %c4_i32 : i32 to vector<1x128xi32>
    %322 = arith.cmpi slt, %320, %321 : vector<1x128xi32>
    %323 = arith.extui %322 : vector<1x128xi1> to vector<1x128xi32>
    %324 = arith.sitofp %323 : vector<1x128xi32> to vector<1x128xf32>
    %325 = vector.broadcast %324 : vector<1x128xf32> to vector<256x128xf32>
    %326 = arith.mulf %317, %325 : vector<256x128xf32>
    %cst = arith.constant dense<0.000000e+00> : vector<256xf32>
    %327 = vector.multi_reduction <add>, %326, %cst [1] : vector<256x128xf32> to vector<256xf32>
    %328 = vector.shape_cast %327 : vector<256xf32> to vector<256x1xf32>
    %cst_246 = arith.constant 2.500000e-01 : f32
    %329 = vector.broadcast %cst_246 : f32 to vector<256x1xf32>
    %330 = arith.mulf %328, %329 : vector<256x1xf32>
    %331 = vector.broadcast %330 : vector<256x1xf32> to vector<256x128xf32>
    %332 = arith.subf %326, %331 : vector<256x128xf32>
    %333 = vector.broadcast %324 : vector<1x128xf32> to vector<256x128xf32>
    %334 = arith.mulf %332, %333 : vector<256x128xf32>
    %335 = arith.mulf %334, %334 : vector<256x128xf32>
    %cst_247 = arith.constant dense<0.000000e+00> : vector<256xf32>
    %336 = vector.multi_reduction <add>, %335, %cst_247 [1] : vector<256x128xf32> to vector<256xf32>
    %337 = vector.shape_cast %336 : vector<256xf32> to vector<256x1xf32>
    %cst_248 = arith.constant 2.500000e-01 : f32
    %338 = vector.broadcast %cst_248 : f32 to vector<256x1xf32>
    %339 = arith.mulf %337, %338 : vector<256x1xf32>
    %cst_249 = arith.constant 9.99999974E-6 : f32
    %340 = vector.broadcast %cst_249 : f32 to vector<256x1xf32>
    %341 = arith.addf %339, %340 : vector<256x1xf32>
    %342 = math.rsqrt %341 : vector<256x1xf32>
    %343 = vector.broadcast %342 : vector<256x1xf32> to vector<256x128xf32>
    %344 = arith.mulf %334, %343 : vector<256x128xf32>
    %c0_250 = arith.constant 0 : index
    %c0_251 = arith.constant 0 : index
    %345 = vector.load %arg5[%c0_250, %c0_251] : memref<1x128xf32, #tpu.memory_space<vmem>>, vector<1x128xf32>
    %346 = vector.broadcast %345 : vector<1x128xf32> to vector<256x128xf32>
    %347 = arith.mulf %344, %346 : vector<256x128xf32>
    %c0_252 = arith.constant 0 : index
    %c0_253 = arith.constant 0 : index
    %348 = vector.load %arg6[%c0_252, %c0_253] : memref<1x128xf32, #tpu.memory_space<vmem>>, vector<1x128xf32>
    %349 = vector.broadcast %348 : vector<1x128xf32> to vector<256x128xf32>
    %350 = arith.addf %347, %349 : vector<256x128xf32>
    %351 = arith.truncf %350 : vector<256x128xf32> to vector<256x128xbf16>
    %c0_254 = arith.constant 0 : index
    %c0_255 = arith.constant 0 : index
    %352 = vector.load %arg7[%c0_254, %c0_255] : memref<128x128xbf16, #tpu.memory_space<vmem>>, vector<128x128xbf16>
    %cst_256 = arith.constant dense<0.000000e+00> : vector<256x128xf32>
    %353 = tpu.matmul %351, %352, %cst_256 {dimension_numbers = #tpu.dot_dimension_numbers<[1], [0], [0], [1], [0, 0, 1, 1], [], []>} : vector<256x128xbf16>, vector<128x128xbf16>, vector<256x128xf32> -> vector<256x128xf32>
    %c0_257 = arith.constant 0 : index
    %c0_258 = arith.constant 0 : index
    %354 = vector.load %arg8[%c0_257, %c0_258] : memref<1x128xf32, #tpu.memory_space<vmem>>, vector<1x128xf32>
    %355 = vector.broadcast %354 : vector<1x128xf32> to vector<256x128xf32>
    %356 = arith.addf %353, %355 : vector<256x128xf32>
    %cst_259 = arith.constant 0.000000e+00 : f32
    %357 = vector.broadcast %cst_259 : f32 to vector<256x128xf32>
    %358 = arith.maximumf %356, %357 : vector<256x128xf32>
    %359 = arith.mulf %358, %358 : vector<256x128xf32>
    %360 = arith.truncf %359 : vector<256x128xf32> to vector<256x128xbf16>
    %c0_260 = arith.constant 0 : index
    %c0_261 = arith.constant 0 : index
    %361 = vector.load %arg9[%c0_260, %c0_261] : memref<128x128xbf16, #tpu.memory_space<vmem>>, vector<128x128xbf16>
    %cst_262 = arith.constant dense<0.000000e+00> : vector<256x128xf32>
    %362 = tpu.matmul %360, %361, %cst_262 {dimension_numbers = #tpu.dot_dimension_numbers<[1], [0], [0], [1], [0, 0, 1, 1], [], []>} : vector<256x128xbf16>, vector<128x128xbf16>, vector<256x128xf32> -> vector<256x128xf32>
    %c0_263 = arith.constant 0 : index
    %c0_264 = arith.constant 0 : index
    %363 = vector.load %arg10[%c0_263, %c0_264] : memref<1x128xf32, #tpu.memory_space<vmem>>, vector<1x128xf32>
    %364 = vector.broadcast %363 : vector<1x128xf32> to vector<256x128xf32>
    %365 = arith.addf %362, %364 : vector<256x128xf32>
    %366 = arith.addf %319, %365 : vector<256x128xf32>
    %367 = vector.shape_cast %366 : vector<256x128xf32> to vector<1x16x16x128xf32>
    %c0_265 = arith.constant 0 : index
    %c0_266 = arith.constant 0 : index
    %c0_267 = arith.constant 0 : index
    %c0_268 = arith.constant 0 : index
    %368 = vector.load %arg11[%c0_265, %c0_266, %c0_267, %c0_268] : memref<1x16x16x128xf32, #tpu.memory_space<vmem>>, vector<1x16x16x128xf32>
    tpu.vector_store %arg11[%c0_265, %c0_266, %c0_267, %c0_268], %367 {strides = array<i32>} : memref<1x16x16x128xf32, #tpu.memory_space<vmem>>, vector<1x16x16x128xf32>,
    return
  }
  func.func @transform_1(%arg0: i32, %arg1: i32) -> (i32, i32) {
    %c0_i32 = arith.constant 0 : i32
    %c0_i32_0 = arith.constant 0 : i32
    %c0_i32_1 = arith.constant 0 : i32
    return %c0_i32, %c0_i32_0 : i32, i32
  }
  func.func @transform_2(%arg0: i32, %arg1: i32) -> (i32, i32) {
    %c0_i32 = arith.constant 0 : i32
    %c0_i32_0 = arith.constant 0 : i32
    %c0_i32_1 = arith.constant 0 : i32
    return %c0_i32, %c0_i32_0 : i32, i32
  }
  func.func @transform_3(%arg0: i32, %arg1: i32) -> (i32, i32) {
    %c0_i32 = arith.constant 0 : i32
    %c0_i32_0 = arith.constant 0 : i32
    %c0_i32_1 = arith.constant 0 : i32
    return %c0_i32, %c0_i32_0 : i32, i32
  }
  func.func @transform_4(%arg0: i32, %arg1: i32) -> (i32, i32) {
    %c0_i32 = arith.constant 0 : i32
    %c0_i32_0 = arith.constant 0 : i32
    %c0_i32_1 = arith.constant 0 : i32
    return %c0_i32, %c0_i32_0 : i32, i32
  }
  func.func @transform_5(%arg0: i32, %arg1: i32) -> (i32, i32) {
    %c0_i32 = arith.constant 0 : i32
    %c0_i32_0 = arith.constant 0 : i32
    %c0_i32_1 = arith.constant 0 : i32
    return %c0_i32, %c0_i32_0 : i32, i32
  }
  func.func @transform_6(%arg0: i32, %arg1: i32) -> (i32, i32) {
    %c0_i32 = arith.constant 0 : i32
    %c0_i32_0 = arith.constant 0 : i32
    %c0_i32_1 = arith.constant 0 : i32
    return %c0_i32, %c0_i32_0 : i32, i32
  }
  func.func @transform_7(%arg0: i32, %arg1: i32) -> (i32, i32) {
    %c0_i32 = arith.constant 0 : i32
    %c0_i32_0 = arith.constant 0 : i32
    %c0_i32_1 = arith.constant 0 : i32
    return %c0_i32, %c0_i32_0 : i32, i32
  }
  func.func @transform_8(%arg0: i32, %arg1: i32) -> (i32, i32) {
    %c0_i32 = arith.constant 0 : i32
    %c0_i32_0 = arith.constant 0 : i32
    %c0_i32_1 = arith.constant 0 : i32
    return %c0_i32, %c0_i32_0 : i32, i32
  }
  func.func @transform_9(%arg0: i32, %arg1: i32) -> (i32, i32, i32, i32) {
    %c0_i32 = arith.constant 0 : i32
    %c0_i32_0 = arith.constant 0 : i32
    %c0_i32_1 = arith.constant 0 : i32
    return %arg0, %arg1, %c0_i32, %c0_i32_0 : i32, i32, i32, i32
  }
}

</mosaic_0001>

<llo_original>
// kernel: tpu_custom_call.1
$region0: #{tpu_custom_call.1}
  #allocation0 [shape = 'u32[]', space=smem, size = 0x4, offset = 0x4, fixed_abs, tag = 'smem constant byte address 0x4 - core index']
  #allocation1 [shape = 'u32[144,128]{1,0:T(1,128)}', space=vmem, size = 0x12000, scoped, tag = 'internal scratch']
  #allocation2 [shape = 'f32[22,22,128]{2,1,0:T(8,128)}', space=vmem, size = 0x42000, scoped, tag = 'scratch operand']
  #allocation3 [shape = 'f32[16,16,128]{2,1,0:T(8,128)}', space=vmem, size = 0x20000, scoped, tag = 'scratch operand']
  #allocation4 [shape = 's32[1]{0}', space=sflag, size = 0x4, scoped, tag = 'scratch operand']
  #allocation20 [shape = 's32[]', space=sflag, size = 0x4, offset = 0, fixed_abs, tag = 'sflag constant byte address 0x0 - dummy sync flag']
  %s0 = inlined_call_operand.hbm [shape: f32[2,22,22,128], index: 0, kind: input, shape index: {}]
  %s1 = inlined_call_operand.hbm [shape: f32[49,128], index: 1, kind: input, shape index: {}]
  %s2 = inlined_call_operand.hbm [shape: f32[1,128], index: 2, kind: input, shape index: {}]
  %s3 = inlined_call_operand.hbm [shape: f32[1,128], index: 3, kind: input, shape index: {}]
  %s4 = inlined_call_operand.hbm [shape: f32[1,128], index: 4, kind: input, shape index: {}]
  %s5 = inlined_call_operand.hbm [shape: bf16[128,128], index: 5, kind: input, shape index: {}]
  %s6 = inlined_call_operand.hbm [shape: f32[1,128], index: 6, kind: input, shape index: {}]
  %s7 = inlined_call_operand.hbm [shape: bf16[128,128], index: 7, kind: input, shape index: {}]
  %s8 = inlined_call_operand.hbm [shape: f32[1,128], index: 8, kind: input, shape index: {}]
  %s9 = inlined_call_operand.hbm [shape: f32[2,16,16,128], index: 9, kind: output, shape index: {}]
  %s10 = sld [smem:[#allocation0]]
  $region97: #{tpu_custom_call.1} parent=0
    _
  %s12 = ssub.s32 1, %s10
  %s13 = scalar_select 0, %s12, %s10
  $region1: #{tpu_custom_call.1} parent=0
    #allocation5 [shape = 'u8[28672]{0}', space=vmem, size = 0x7000, scoped, tag = 'input window, operand 1, single buffered']
    #allocation6 [shape = 's32[2]{0}', space=sflag, size = 0x8, scoped, tag = 'scoped memory for tpu_custom_call.1']
    #allocation7 [shape = 's32[2]{0}', space=sflag, size = 0x8, scoped, tag = 'scoped memory for tpu_custom_call.1']
    #allocation8 [shape = 'u8[512]{0}', space=vmem, size = 0x400, scoped, tag = 'input window, operand 2, single buffered']
    #allocation9 [shape = 's32[1]{0}', space=sflag, size = 0x4, scoped, tag = 'scoped memory for tpu_custom_call.1']
    #allocation10 [shape = 'u8[512]{0}', space=vmem, size = 0x400, scoped, tag = 'input window, operand 3, single buffered']
    #allocation11 [shape = 'u8[512]{0}', space=vmem, size = 0x400, scoped, tag = 'input window, operand 4, single buffered']
    #allocation12 [shape = 's32[1]{0}', space=sflag, size = 0x4, scoped, tag = 'scoped memory for tpu_custom_call.1']
    #allocation13 [shape = 'u8[32768]{0}', space=vmem, size = 0x8000, scoped, tag = 'input window, operand 5, single buffered']
    #allocation14 [shape = 'u8[512]{0}', space=vmem, size = 0x400, scoped, tag = 'input window, operand 6, single buffered']
    #allocation15 [shape = 's32[1]{0}', space=sflag, size = 0x4, scoped, tag = 'scoped memory for tpu_custom_call.1']
    #allocation16 [shape = 'u8[32768]{0}', space=vmem, size = 0x8000, scoped, tag = 'input window, operand 7, single buffered']
    #allocation17 [shape = 'u8[512]{0}', space=vmem, size = 0x400, scoped, tag = 'input window, operand 8, single buffered']
    #allocation18 [shape = 's32[1]{0}', space=sflag, size = 0x4, scoped, tag = 'scoped memory for tpu_custom_call.1']
    #allocation19 [shape = 'u8[262144]{0}', space=vmem, size = 0x40000, scoped, tag = 'output window, operand 0']
    %14 = vsyncpa [#allocation6], 0
    %15 = vsyncpa [#allocation9], 0
    %16 = vsyncpa [#allocation12], 0
    %17 = vsyncpa [#allocation15], 0
    %18 = vsyncpa [#allocation18], 0
    %19 = vsyncpa [#allocation7], 0
    %s20 = scalar_lea.sflag [#allocation7], 1
    %21 = vsyncpa %s20, 0
    loop: start=0, step=1, limit=4
    $region2: #{tpu_custom_call.1} parent=1 // loop_pre_header
      _
    $region3: #{tpu_custom_call.1} parent=1 // loop_header
      %s23 = sphi 0, %s27
      %p24 = scmp.ge.s32.totalorder %s23, 4
      %s30 = sphi 0, %s42
      %s31 = sphi 0, %s38
      %s32 = sphi 0, %s30
      %s33 = sphi 0, %s31
      %s34 = sphi 0, %s32
      %s35 = sphi 0, %s33
      %s43 = sphi 0, %s43
      %s45 = sphi 0, %s43
      %s46 = sphi 0, %s45
      %s60 = sphi 0, %s46
      %s64 = sphi 0, %s64
      %s66 = sphi 0, %s64
      %s67 = sphi 0, %s66
      %s81 = sphi 0, %s67
      %s85 = sphi 0, %s85
      %s87 = sphi 0, %s85
      %s88 = sphi 0, %s87
      %s102 = sphi 0, %s88
      %s106 = sphi 0, %s106
      %s108 = sphi 0, %s106
      %s109 = sphi 0, %s108
      %s123 = sphi 0, %s109
      %s127 = sphi 0, %s127
      %s129 = sphi 0, %s127
      %s130 = sphi 0, %s129
      %s144 = sphi 0, %s130
      %s148 = sphi 0, %s148
      %s150 = sphi 0, %s148
      %s151 = sphi 0, %s150
      %s165 = sphi 0, %s151
      %s169 = sphi 0, %s169
      %s171 = sphi 0, %s169
      %s172 = sphi 0, %s171
      %s186 = sphi 0, %s172
      %s190 = sphi 0, %s190
      %s192 = sphi 0, %s190
      %s193 = sphi 0, %s192
      %s207 = sphi 0, %s193
      %s215 = sphi 0, %s217
      %s218 = sphi 0, %s215
      %s219 = sphi 0, %s218
      %s235 = sphi 0, %s219
    $region4: #{tpu_custom_call.1} parent=1 // loop_header_branch
      %26 = sbr.rel (%p24) target = $region8
    $region5: #{tpu_custom_call.1} parent=1 // loop_body
      %s28 = ssub.s32 %s23, 1
      %s29 = ssub.s32 %s23, 2
      %s36 = sadd.s32 1, %s31
      %p37 = scmp.ge.s32.totalorder %s36, 1
      %s38 = scalar_select %p37, 0, %s36
      %s39 = sadd.s32 1, %s30
      %s40 = scalar_select %p37, %s39, %s30
      %p41 = scmp.ge.s32.totalorder %s40, 2
      %s42 = scalar_select %p41, 0, %s40
      %s44 = sadd.s32 %s43, 1
      %p47 = scmp.eq.s32.totalorder %s23, 1
      %p48 = scmp.ne.s32.totalorder %s43, %s45
      %p49 = scmp.eq.s32.totalorder %s23, 0
      %p50 = por %p48, %p49
      %p51 = scmp.ne.s32.totalorder %s43, %s45
      %p52 = scmp.eq.s32.totalorder %s28, 1
      %p53 = por %p51, %p52
      %p54 = scmp.ne.s32.totalorder %s45, %s46
      %p55 = scmp.eq.s32.totalorder %s28, 0
      %p56 = por %p54, %p55
      %p57 = scmp.ne.s32.totalorder %s45, %s46
      %p58 = scmp.eq.s32.totalorder %s29, 1
      %p59 = por %p57, %p58
      %p61 = scmp.ne.s32.totalorder %s46, %s60
      %p62 = scmp.eq.s32.totalorder %s29, 0
      %p63 = por %p61, %p62
      %s65 = sadd.s32 %s64, 1
      %p68 = scmp.eq.s32.totalorder %s23, 1
      %p69 = scmp.ne.s32.totalorder %s64, %s66
      %p70 = scmp.eq.s32.totalorder %s23, 0
      %p71 = por %p69, %p70
      %p72 = scmp.ne.s32.totalorder %s64, %s66
      %p73 = scmp.eq.s32.totalorder %s28, 1
      %p74 = por %p72, %p73
      %p75 = scmp.ne.s32.totalorder %s66, %s67
      %p76 = scmp.eq.s32.totalorder %s28, 0
      %p77 = por %p75, %p76
      %p78 = scmp.ne.s32.totalorder %s66, %s67
      %p79 = scmp.eq.s32.totalorder %s29, 1
      %p80 = por %p78, %p79
      %p82 = scmp.ne.s32.totalorder %s67, %s81
      %p83 = scmp.eq.s32.totalorder %s29, 0
      %p84 = por %p82, %p83
      %s86 = sadd.s32 %s85, 1
      %p89 = scmp.eq.s32.totalorder %s23, 1
      %p90 = scmp.ne.s32.totalorder %s85, %s87
      %p91 = scmp.eq.s32.totalorder %s23, 0
      %p92 = por %p90, %p91
      %p93 = scmp.ne.s32.totalorder %s85, %s87
      %p94 = scmp.eq.s32.totalorder %s28, 1
      %p95 = por %p93, %p94
      %p96 = scmp.ne.s32.totalorder %s87, %s88
      %p97 = scmp.eq.s32.totalorder %s28, 0
      %p98 = por %p96, %p97
      %p99 = scmp.ne.s32.totalorder %s87, %s88
      %p100 = scmp.eq.s32.totalorder %s29, 1
      %p101 = por %p99, %p100
      %p103 = scmp.ne.s32.totalorder %s88, %s102
      %p104 = scmp.eq.s32.totalorder %s29, 0
      %p105 = por %p103, %p104
      %s107 = sadd.s32 %s106, 1
      %p110 = scmp.eq.s32.totalorder %s23, 1
      %p111 = scmp.ne.s32.totalorder %s106, %s108
      %p112 = scmp.eq.s32.totalorder %s23, 0
      %p113 = por %p111, %p112
      %p114 = scmp.ne.s32.totalorder %s106, %s108
      %p115 = scmp.eq.s32.totalorder %s28, 1
      %p116 = por %p114, %p115
      %p117 = scmp.ne.s32.totalorder %s108, %s109
      %p118 = scmp.eq.s32.totalorder %s28, 0
      %p119 = por %p117, %p118
      %p120 = scmp.ne.s32.totalorder %s108, %s109
      %p121 = scmp.eq.s32.totalorder %s29, 1
      %p122 = por %p120, %p121
      %p124 = scmp.ne.s32.totalorder %s109, %s123
      %p125 = scmp.eq.s32.totalorder %s29, 0
      %p126 = por %p124, %p125
      %s128 = sadd.s32 %s127, 1
      %p131 = scmp.eq.s32.totalorder %s23, 1
      %p132 = scmp.ne.s32.totalorder %s127, %s129
      %p133 = scmp.eq.s32.totalorder %s23, 0
      %p134 = por %p132, %p133
      %p135 = scmp.ne.s32.totalorder %s127, %s129
      %p136 = scmp.eq.s32.totalorder %s28, 1
      %p137 = por %p135, %p136
      %p138 = scmp.ne.s32.totalorder %s129, %s130
      %p139 = scmp.eq.s32.totalorder %s28, 0
      %p140 = por %p138, %p139
      %p141 = scmp.ne.s32.totalorder %s129, %s130
      %p142 = scmp.eq.s32.totalorder %s29, 1
      %p143 = por %p141, %p142
      %p145 = scmp.ne.s32.totalorder %s130, %s144
      %p146 = scmp.eq.s32.totalorder %s29, 0
      %p147 = por %p145, %p146
      %s149 = sadd.s32 %s148, 1
      %p152 = scmp.eq.s32.totalorder %s23, 1
      %p153 = scmp.ne.s32.totalorder %s148, %s150
      %p154 = scmp.eq.s32.totalorder %s23, 0
      %p155 = por %p153, %p154
      %p156 = scmp.ne.s32.totalorder %s148, %s150
      %p157 = scmp.eq.s32.totalorder %s28, 1
      %p158 = por %p156, %p157
      %p159 = scmp.ne.s32.totalorder %s150, %s151
      %p160 = scmp.eq.s32.totalorder %s28, 0
      %p161 = por %p159, %p160
      %p162 = scmp.ne.s32.totalorder %s150, %s151
      %p163 = scmp.eq.s32.totalorder %s29, 1
      %p164 = por %p162, %p163
      %p166 = scmp.ne.s32.totalorder %s151, %s165
      %p167 = scmp.eq.s32.totalorder %s29, 0
      %p168 = por %p166, %p167
      %s170 = sadd.s32 %s169, 1
      %p173 = scmp.eq.s32.totalorder %s23, 1
      %p174 = scmp.ne.s32.totalorder %s169, %s171
      %p175 = scmp.eq.s32.totalorder %s23, 0
      %p176 = por %p174, %p175
      %p177 = scmp.ne.s32.totalorder %s169, %s171
      %p178 = scmp.eq.s32.totalorder %s28, 1
      %p179 = por %p177, %p178
      %p180 = scmp.ne.s32.totalorder %s171, %s172
      %p181 = scmp.eq.s32.totalorder %s28, 0
      %p182 = por %p180, %p181
      %p183 = scmp.ne.s32.totalorder %s171, %s172
      %p184 = scmp.eq.s32.totalorder %s29, 1
      %p185 = por %p183, %p184
      %p187 = scmp.ne.s32.totalorder %s172, %s186
      %p188 = scmp.eq.s32.totalorder %s29, 0
      %p189 = por %p187, %p188
      %s191 = sadd.s32 %s190, 1
      %p194 = scmp.eq.s32.totalorder %s23, 1
      %p195 = scmp.ne.s32.totalorder %s190, %s192
      %p196 = scmp.eq.s32.totalorder %s23, 0
      %p197 = por %p195, %p196
      %p198 = scmp.ne.s32.totalorder %s190, %s192
      %p199 = scmp.eq.s32.totalorder %s28, 1
      %p200 = por %p198, %p199
      %p201 = scmp.ne.s32.totalorder %s192, %s193
      %p202 = scmp.eq.s32.totalorder %s28, 0
      %p203 = por %p201, %p202
      %p204 = scmp.ne.s32.totalorder %s192, %s193
      %p205 = scmp.eq.s32.totalorder %s29, 1
      %p206 = por %p204, %p205
      %p208 = scmp.ne.s32.totalorder %s193, %s207
      %p209 = scmp.eq.s32.totalorder %s29, 0
      %p210 = por %p208, %p209
      %s211 = ssub.s32 %s30, %s42
      %s212 = ssub.s32 %s31, %s38
      %s213 = sor.u32 %s211, %s212
      %p214 = scmp.eq.s32.totalorder %s213, 0
      %s216 = sadd.s32 %s215, 1
      %s217 = scalar_select %p214, %s215, %s216
      %p220 = pneg %p214
      %p221 = scmp.eq.s32.totalorder %s23, 1
      %p222 = por %p220, %p221
      %p223 = scmp.ne.s32.totalorder %s215, %s218
      %p224 = scmp.eq.s32.totalorder %s23, 0
      %p225 = por %p223, %p224
      %p226 = scmp.ne.s32.totalorder %s215, %s218
      %p227 = scmp.eq.s32.totalorder %s28, 1
      %p228 = por %p226, %p227
      %p229 = scmp.ne.s32.totalorder %s218, %s219
      %p230 = scmp.eq.s32.totalorder %s28, 0
      %p231 = por %p229, %p230
      %p232 = scmp.ne.s32.totalorder %s218, %s219
      %p233 = scmp.eq.s32.totalorder %s29, 1
      %p234 = por %p232, %p233
      %p236 = scmp.ne.s32.totalorder %s219, %s235
      %p237 = scmp.eq.s32.totalorder %s29, 0
      %p238 = por %p236, %p237
      %p239 = scmp.le.s32.totalorder 1, %s23
      %p240 = scmp.lt.s32.totalorder %s23, 3
      %p241 = pnand %p239, %p240
      %p242 = pneg %p241
      // Predicated region
      $region9: #{tpu_custom_call.1} parent=5 // pred_check
        _
      $region10: #{tpu_custom_call.1} parent=5 // pred_check_branch
        %244 = sbr.rel (%p241) target = $region12
      $region11: #{tpu_custom_call.1} parent=5 // pred_region
        %s245 = ssub.s32 %s23, 1
        // Predicated region
        $region13: #{tpu_custom_call.1} parent=11 // pred_check
          %p246 = pneg %p56
        $region14: #{tpu_custom_call.1} parent=11 // pred_check_branch
          %248 = sbr.rel (%p246) target = $region16
        $region15: #{tpu_custom_call.1} parent=11 // pred_region
          %s250 = ssub.s32 896, 896
          %251 = vsyncadd [#allocation6], %s250
          %s252 = sshll.u32 [#allocation5], 4
          %s253 = int_to_ptr.vmem [resolvable:$true] %s252
          %258 = dma.hbm_to_vmem [thread:$0]  %s1, 896, %s253, [#allocation6], 128, 128, 8
        $region16: #{tpu_custom_call.1} parent=11 // pred_fallthru
          _
        // Predicated region
        $region17: #{tpu_custom_call.1} parent=11 // pred_check
          %p259 = pneg %p77
        $region18: #{tpu_custom_call.1} parent=11 // pred_check_branch
          %261 = sbr.rel (%p259) target = $region20
        $region19: #{tpu_custom_call.1} parent=11 // pred_region
          %s263 = ssub.s32 16, 16
          %264 = vsyncadd [#allocation9], %s263
          %s266 = sshll.u32 [#allocation8], 4
          %s267 = int_to_ptr.vmem [resolvable:$true] %s266
          %269 = dma.hbm_to_vmem [thread:$0]  %s2, 16, %s267, [#allocation9]
        $region20: #{tpu_custom_call.1} parent=11 // pred_fallthru
          _
        // Predicated region
        $region21: #{tpu_custom_call.1} parent=11 // pred_check
          %p270 = pneg %p98
        $region22: #{tpu_custom_call.1} parent=11 // pred_check_branch
          %272 = sbr.rel (%p270) target = $region24
        $region23: #{tpu_custom_call.1} parent=11 // pred_region
          %s274 = ssub.s32 16, 16
          %275 = vsyncadd [#allocation9], %s274
          %s277 = sshll.u32 [#allocation10], 4
          %s278 = int_to_ptr.vmem [resolvable:$true] %s277
          %280 = dma.hbm_to_vmem [thread:$0]  %s3, 16, %s278, [#allocation9]
        $region24: #{tpu_custom_call.1} parent=11 // pred_fallthru
          _
        // Predicated region
        $region25: #{tpu_custom_call.1} parent=11 // pred_check
          %p281 = pneg %p119
        $region26: #{tpu_custom_call.1} parent=11 // pred_check_branch
          %283 = sbr.rel (%p281) target = $region28
        $region27: #{tpu_custom_call.1} parent=11 // pred_region
          %s285 = ssub.s32 16, 16
          %286 = vsyncadd [#allocation12], %s285
          %s288 = sshll.u32 [#allocation11], 4
          %s289 = int_to_ptr.vmem [resolvable:$true] %s288
          %291 = dma.hbm_to_vmem [thread:$0]  %s4, 16, %s289, [#allocation12]
        $region28: #{tpu_custom_call.1} parent=11 // pred_fallthru
          _
        // Predicated region
        $region29: #{tpu_custom_call.1} parent=11 // pred_check
          %p292 = pneg %p140
        $region30: #{tpu_custom_call.1} parent=11 // pred_check_branch
          %294 = sbr.rel (%p292) target = $region32
        $region31: #{tpu_custom_call.1} parent=11 // pred_region
          %s296 = ssub.s32 1024, 1024
          %297 = vsyncadd [#allocation12], %s296
          %s298 = sshll.u32 [#allocation13], 4
          %s299 = int_to_ptr.vmem [resolvable:$true] %s298
          %304 = dma.hbm_to_vmem [thread:$0]  %s5, 1024, %s299, [#allocation12], 64, 64, 4
        $region32: #{tpu_custom_call.1} parent=11 // pred_fallthru
          _
        // Predicated region
        $region33: #{tpu_custom_call.1} parent=11 // pred_check
          %p305 = pneg %p161
        $region34: #{tpu_custom_call.1} parent=11 // pred_check_branch
          %307 = sbr.rel (%p305) target = $region36
        $region35: #{tpu_custom_call.1} parent=11 // pred_region
          %s309 = ssub.s32 16, 16
          %310 = vsyncadd [#allocation15], %s309
          %s312 = sshll.u32 [#allocation14], 4
          %s313 = int_to_ptr.vmem [resolvable:$true] %s312
          %315 = dma.hbm_to_vmem [thread:$0]  %s6, 16, %s313, [#allocation15]
        $region36: #{tpu_custom_call.1} parent=11 // pred_fallthru
          _
        // Predicated region
        $region37: #{tpu_custom_call.1} parent=11 // pred_check
          %p316 = pneg %p182
        $region38: #{tpu_custom_call.1} parent=11 // pred_check_branch
          %318 = sbr.rel (%p316) target = $region40
        $region39: #{tpu_custom_call.1} parent=11 // pred_region
          %s320 = ssub.s32 1024, 1024
          %321 = vsyncadd [#allocation15], %s320
          %s322 = sshll.u32 [#allocation16], 4
          %s323 = int_to_ptr.vmem [resolvable:$true] %s322
          %328 = dma.hbm_to_vmem [thread:$0]  %s7, 1024, %s323, [#allocation15], 64, 64, 4
        $region40: #{tpu_custom_call.1} parent=11 // pred_fallthru
          _
        // Predicated region
        $region41: #{tpu_custom_call.1} parent=11 // pred_check
          %p329 = pneg %p203
        $region42: #{tpu_custom_call.1} parent=11 // pred_check_branch
          %331 = sbr.rel (%p329) target = $region44
        $region43: #{tpu_custom_call.1} parent=11 // pred_region
          %s333 = ssub.s32 16, 16
          %334 = vsyncadd [#allocation18], %s333
          %s336 = sshll.u32 [#allocation17], 4
          %s337 = int_to_ptr.vmem [resolvable:$true] %s336
          %339 = dma.hbm_to_vmem [thread:$0]  %s8, 16, %s337, [#allocation18]
        $region44: #{tpu_custom_call.1} parent=11 // pred_fallthru
          _
      $region12: #{tpu_custom_call.1} parent=5 // pred_fallthru
        _
      %p340 = scmp.lt.s32.totalorder %s23, 2
      // Predicated region
      $region45: #{tpu_custom_call.1} parent=5 // pred_check
        %p341 = pneg %p340
      $region46: #{tpu_custom_call.1} parent=5 // pred_check_branch
        %343 = sbr.rel (%p341) target = $region48
      $region47: #{tpu_custom_call.1} parent=5 // pred_region
        _
      $region48: #{tpu_custom_call.1} parent=5 // pred_fallthru
        _
      %p344 = scmp.le.s32.totalorder 1, %s23
      %p345 = scmp.lt.s32.totalorder %s23, 3
      %p346 = pnand %p344, %p345
      %p347 = pneg %p346
      // Predicated region
      $region49: #{tpu_custom_call.1} parent=5 // pred_check
        _
      $region50: #{tpu_custom_call.1} parent=5 // pred_check_branch
        %349 = sbr.rel (%p346) target = $region52
      $region51: #{tpu_custom_call.1} parent=5 // pred_region
        %s350 = ssub.s32 %s23, 1
        // Predicated region
        $region53: #{tpu_custom_call.1} parent=51 // pred_check
          %p351 = pneg %p56
        $region54: #{tpu_custom_call.1} parent=51 // pred_check_branch
          %353 = sbr.rel (%p351) target = $region56
        $region55: #{tpu_custom_call.1} parent=51 // pred_region
          %354 = dma.done [#allocation6], 896
        $region56: #{tpu_custom_call.1} parent=51 // pred_fallthru
          _
        // Predicated region
        $region57: #{tpu_custom_call.1} parent=51 // pred_check
          %p355 = pneg %p77
        $region58: #{tpu_custom_call.1} parent=51 // pred_check_branch
          %357 = sbr.rel (%p355) target = $region60
        $region59: #{tpu_custom_call.1} parent=51 // pred_region
          %358 = dma.done [#allocation9], 16
        $region60: #{tpu_custom_call.1} parent=51 // pred_fallthru
          _
        // Predicated region
        $region61: #{tpu_custom_call.1} parent=51 // pred_check
          %p359 = pneg %p98
        $region62: #{tpu_custom_call.1} parent=51 // pred_check_branch
          %361 = sbr.rel (%p359) target = $region64
        $region63: #{tpu_custom_call.1} parent=51 // pred_region
          %362 = dma.done [#allocation9], 16
        $region64: #{tpu_custom_call.1} parent=51 // pred_fallthru
          _
        // Predicated region
        $region65: #{tpu_custom_call.1} parent=51 // pred_check
          %p363 = pneg %p119
        $region66: #{tpu_custom_call.1} parent=51 // pred_check_branch
          %365 = sbr.rel (%p363) target = $region68
        $region67: #{tpu_custom_call.1} parent=51 // pred_region
          %366 = dma.done [#allocation12], 16
        $region68: #{tpu_custom_call.1} parent=51 // pred_fallthru
          _
        // Predicated region
        $region69: #{tpu_custom_call.1} parent=51 // pred_check
          %p367 = pneg %p140
        $region70: #{tpu_custom_call.1} parent=51 // pred_check_branch
          %369 = sbr.rel (%p367) target = $region72
        $region71: #{tpu_custom_call.1} parent=51 // pred_region
          %370 = dma.done [#allocation12], 1024
        $region72: #{tpu_custom_call.1} parent=51 // pred_fallthru
          _
        // Predicated region
        $region73: #{tpu_custom_call.1} parent=51 // pred_check
          %p371 = pneg %p161
        $region74: #{tpu_custom_call.1} parent=51 // pred_check_branch
          %373 = sbr.rel (%p371) target = $region76
        $region75: #{tpu_custom_call.1} parent=51 // pred_region
          %374 = dma.done [#allocation15], 16
        $region76: #{tpu_custom_call.1} parent=51 // pred_fallthru
          _
        // Predicated region
        $region77: #{tpu_custom_call.1} parent=51 // pred_check
          %p375 = pneg %p182
        $region78: #{tpu_custom_call.1} parent=51 // pred_check_branch
          %377 = sbr.rel (%p375) target = $region80
        $region79: #{tpu_custom_call.1} parent=51 // pred_region
          %378 = dma.done [#allocation15], 1024
        $region80: #{tpu_custom_call.1} parent=51 // pred_fallthru
          _
        // Predicated region
        $region81: #{tpu_custom_call.1} parent=51 // pred_check
          %p379 = pneg %p203
        $region82: #{tpu_custom_call.1} parent=51 // pred_check_branch
          %381 = sbr.rel (%p379) target = $region84
        $region83: #{tpu_custom_call.1} parent=51 // pred_region
          %382 = dma.done [#allocation18], 16
        $region84: #{tpu_custom_call.1} parent=51 // pred_fallthru
          _
        %p383 = pneg %p56
        %p384 = pneg %p53
        %p385 = pneg %p77
        %p386 = pneg %p74
        %p387 = pneg %p98
        %p388 = pneg %p95
        %p389 = pneg %p119
        %p390 = pneg %p116
        %p391 = pneg %p140
        %p392 = pneg %p137
        %p393 = pneg %p161
        %p394 = pneg %p158
        %p395 = pneg %p182
        %p396 = pneg %p179
        %p397 = pneg %p203
        %p398 = pneg %p200
        %p399 = pneg %p231
        %p400 = pneg %p228
        %s401 = sand.u32 %s218, 1
        %s402 = scalar_lea.sflag [#allocation7], %s401
        %s403 = sand.u32 %s218, 1
        %s404 = smul.addr %s403, 256
        %s405 = scalar_lea.vmem [#allocation19], %s404
        %s406 = smul.u32 16, %s33
        %s408 = smul.u32 %s33, 16
        %s409 = smul.u32 %s408, 24
        %s410 = smul.u32 %s32, 528
        %s411 = sadd.s32 %s409, %s410
        %s412 = smul.addr %s411, 16
        %s413 = scalar_lea.hbm %s0, %s412
        %s415 = sshll.u32 [#allocation2], 4
        %s416 = int_to_ptr.vmem [resolvable:$true] %s415
        %418 = dma.hbm_to_vmem [thread:$0]  %s413, 7744, %s416, [#allocation4], 384, 384, 22
        %s419 = smul.u32 22, 22
        %s420 = smul.u32 %s419, 1
        %s421 = sshll.u32 %s420, 4
        %422 = dma.done [#allocation4], %s421
        %v423 = vld [vmem:[#allocation2] sm:$0xff]
        %v424 = vld [vmem:[#allocation2 + $0x8] sm:$0xff]
        %v425 = vld [vmem:[#allocation2 + $0x18] sm:$0xff]
        %v426 = vld [vmem:[#allocation2 + $0x20] sm:$0xff]
        %v427 = vld [vmem:[#allocation2 + $0x30] sm:$0xff]
        %v428 = vld [vmem:[#allocation2 + $0x38] sm:$0xff]
        %v429 = vld [vmem:[#allocation2 + $0x48] sm:$0xff]
        %v430 = vld [vmem:[#allocation2 + $0x50] sm:$0xff]
        %v431 = vld [vmem:[#allocation2 + $0x60] sm:$0xff]
        %v432 = vld [vmem:[#allocation2 + $0x68] sm:$0xff]
        %v433 = vld [vmem:[#allocation2 + $0x78] sm:$0xff]
        %v434 = vld [vmem:[#allocation2 + $0x80] sm:$0xff]
        %v435 = vld [vmem:[#allocation2 + $0x90] sm:$0xff]
        %v436 = vld [vmem:[#allocation2 + $0x98] sm:$0xff]
        %v437 = vld [vmem:[#allocation2 + $0xa8] sm:$0xff]
        %v438 = vld [vmem:[#allocation2 + $0xb0] sm:$0xff]
        %v439 = vld [vmem:[#allocation2 + $0xc0] sm:$0xff]
        %v440 = vld [vmem:[#allocation2 + $0xc8] sm:$0xff]
        %v441 = vld [vmem:[#allocation2 + $0xd8] sm:$0xff]
        %v442 = vld [vmem:[#allocation2 + $0xe0] sm:$0xff]
        %v443 = vld [vmem:[#allocation2 + $0xf0] sm:$0xff]
        %v444 = vld [vmem:[#allocation2 + $0xf8] sm:$0xff]
        %v445 = vld [vmem:[#allocation2 + $0x108] sm:$0xff]
        %v446 = vld [vmem:[#allocation2 + $0x110] sm:$0xff]
        %v447 = vld [vmem:[#allocation2 + $0x120] sm:$0xff]
        %v448 = vld [vmem:[#allocation2 + $0x128] sm:$0xff]
        %v449 = vld [vmem:[#allocation2 + $0x138] sm:$0xff]
        %v450 = vld [vmem:[#allocation2 + $0x140] sm:$0xff]
        %v451 = vld [vmem:[#allocation2 + $0x150] sm:$0xff]
        %v452 = vld [vmem:[#allocation2 + $0x158] sm:$0xff]
        %v453 = vld [vmem:[#allocation2 + $0x168] sm:$0xff]
        %v454 = vld [vmem:[#allocation2 + $0x170] sm:$0xff]
        %v455 = vld [vmem:[#allocation5] sm:$0x1]
        %v456 = vlaneseq
        %v457 = vshrl.u32 %v456, 7
        %v458 = vsub.s32 0, %v457
        %v459 = vrot.slane %v455, %v458
        %v460 = vmul.f32 %v423, %v459
        %v461 = vmul.f32 %v424, %v459
        %v462 = vmul.f32 %v425, %v459
        %v463 = vmul.f32 %v426, %v459
        %v464 = vmul.f32 %v427, %v459
        %v465 = vmul.f32 %v428, %v459
        %v466 = vmul.f32 %v429, %v459
        %v467 = vmul.f32 %v430, %v459
        %v468 = vmul.f32 %v431, %v459
        %v469 = vmul.f32 %v432, %v459
        %v470 = vmul.f32 %v433, %v459
        %v471 = vmul.f32 %v434, %v459
        %v472 = vmul.f32 %v435, %v459
        %v473 = vmul.f32 %v436, %v459
        %v474 = vmul.f32 %v437, %v459
        %v475 = vmul.f32 %v438, %v459
        %v476 = vmul.f32 %v439, %v459
        %v477 = vmul.f32 %v440, %v459
        %v478 = vmul.f32 %v441, %v459
        %v479 = vmul.f32 %v442, %v459
        %v480 = vmul.f32 %v443, %v459
        %v481 = vmul.f32 %v444, %v459
        %v482 = vmul.f32 %v445, %v459
        %v483 = vmul.f32 %v446, %v459
        %v484 = vmul.f32 %v447, %v459
        %v485 = vmul.f32 %v448, %v459
        %v486 = vmul.f32 %v449, %v459
        %v487 = vmul.f32 %v450, %v459
        %v488 = vmul.f32 %v451, %v459
        %v489 = vmul.f32 %v452, %v459
        %v490 = vmul.f32 %v453, %v459
        %v491 = vmul.f32 %v454, %v459
        %v492 = vld [vmem:[#allocation2 + $0x1] sm:$0xff]
        %v493 = vld [vmem:[#allocation2 + $0x9] sm:$0xff]
        %v494 = vld [vmem:[#allocation2 + $0x19] sm:$0xff]
        %v495 = vld [vmem:[#allocation2 + $0x21] sm:$0xff]
        %v496 = vld [vmem:[#allocation2 + $0x31] sm:$0xff]
        %v497 = vld [vmem:[#allocation2 + $0x39] sm:$0xff]
        %v498 = vld [vmem:[#allocation2 + $0x49] sm:$0xff]
        %v499 = vld [vmem:[#allocation2 + $0x51] sm:$0xff]
        %v500 = vld [vmem:[#allocation2 + $0x61] sm:$0xff]
        %v501 = vld [vmem:[#allocation2 + $0x69] sm:$0xff]
        %v502 = vld [vmem:[#allocation2 + $0x79] sm:$0xff]
        %v503 = vld [vmem:[#allocation2 + $0x81] sm:$0xff]
        %v504 = vld [vmem:[#allocation2 + $0x91] sm:$0xff]
        %v505 = vld [vmem:[#allocation2 + $0x99] sm:$0xff]
        %v506 = vld [vmem:[#allocation2 + $0xa9] sm:$0xff]
        %v507 = vld [vmem:[#allocation2 + $0xb1] sm:$0xff]
        %v508 = vld [vmem:[#allocation2 + $0xc1] sm:$0xff]
        %v509 = vld [vmem:[#allocation2 + $0xc9] sm:$0xff]
        %v510 = vld [vmem:[#allocation2 + $0xd9] sm:$0xff]
        %v511 = vld [vmem:[#allocation2 + $0xe1] sm:$0xff]
        %v512 = vld [vmem:[#allocation2 + $0xf1] sm:$0xff]
        %v513 = vld [vmem:[#allocation2 + $0xf9] sm:$0xff]
        %v514 = vld [vmem:[#allocation2 + $0x109] sm:$0xff]
        %v515 = vld [vmem:[#allocation2 + $0x111] sm:$0xff]
        %v516 = vld [vmem:[#allocation2 + $0x121] sm:$0xff]
        %v517 = vld [vmem:[#allocation2 + $0x129] sm:$0xff]
        %v518 = vld [vmem:[#allocation2 + $0x139] sm:$0xff]
        %v519 = vld [vmem:[#allocation2 + $0x141] sm:$0xff]
        %v520 = vld [vmem:[#allocation2 + $0x151] sm:$0xff]
        %v521 = vld [vmem:[#allocation2 + $0x159] sm:$0xff]
        %v522 = vld [vmem:[#allocation2 + $0x169] sm:$0xff]
        %v523 = vld [vmem:[#allocation2 + $0x171] sm:$0xff]
        %v524 = vld [vmem:[#allocation5 + $0x1] sm:$0x1]
        %v525 = vlaneseq
        %v526 = vshrl.u32 %v525, 7
        %v527 = vsub.s32 0, %v526
        %v528 = vrot.slane %v524, %v527
        %v529 = vmul.f32 %v492, %v528
        %v530 = vmul.f32 %v493, %v528
        %v531 = vmul.f32 %v494, %v528
        %v532 = vmul.f32 %v495, %v528
        %v533 = vmul.f32 %v496, %v528
        %v534 = vmul.f32 %v497, %v528
        %v535 = vmul.f32 %v498, %v528
        %v536 = vmul.f32 %v499, %v528
        %v537 = vmul.f32 %v500, %v528
        %v538 = vmul.f32 %v501, %v528
        %v539 = vmul.f32 %v502, %v528
        %v540 = vmul.f32 %v503, %v528
        %v541 = vmul.f32 %v504, %v528
        %v542 = vmul.f32 %v505, %v528
        %v543 = vmul.f32 %v506, %v528
        %v544 = vmul.f32 %v507, %v528
        %v545 = vmul.f32 %v508, %v528
        %v546 = vmul.f32 %v509, %v528
        %v547 = vmul.f32 %v510, %v528
        %v548 = vmul.f32 %v511, %v528
        %v549 = vmul.f32 %v512, %v528
        %v550 = vmul.f32 %v513, %v528
        %v551 = vmul.f32 %v514, %v528
        %v552 = vmul.f32 %v515, %v528
        %v553 = vmul.f32 %v516, %v528
        %v554 = vmul.f32 %v517, %v528
        %v555 = vmul.f32 %v518, %v528
        %v556 = vmul.f32 %v519, %v528
        %v557 = vmul.f32 %v520, %v528
        %v558 = vmul.f32 %v521, %v528
        %v559 = vmul.f32 %v522, %v528
        %v560 = vmul.f32 %v523, %v528
        %v561 = vadd.f32 %v460, %v529
        %v562 = vadd.f32 %v461, %v530
        %v563 = vadd.f32 %v462, %v531
        %v564 = vadd.f32 %v463, %v532
        %v565 = vadd.f32 %v464, %v533
        %v566 = vadd.f32 %v465, %v534
        %v567 = vadd.f32 %v466, %v535
        %v568 = vadd.f32 %v467, %v536
        %v569 = vadd.f32 %v468, %v537
        %v570 = vadd.f32 %v469, %v538
        %v571 = vadd.f32 %v470, %v539
        %v572 = vadd.f32 %v471, %v540
        %v573 = vadd.f32 %v472, %v541
        %v574 = vadd.f32 %v473, %v542
        %v575 = vadd.f32 %v474, %v543
        %v576 = vadd.f32 %v475, %v544
        %v577 = vadd.f32 %v476, %v545
        %v578 = vadd.f32 %v477, %v546
        %v579 = vadd.f32 %v478, %v547
        %v580 = vadd.f32 %v479, %v548
        %v581 = vadd.f32 %v480, %v549
        %v582 = vadd.f32 %v481, %v550
        %v583 = vadd.f32 %v482, %v551
        %v584 = vadd.f32 %v483, %v552
        %v585 = vadd.f32 %v484, %v553
        %v586 = vadd.f32 %v485, %v554
        %v587 = vadd.f32 %v486, %v555
        %v588 = vadd.f32 %v487, %v556
        %v589 = vadd.f32 %v488, %v557
        %v590 = vadd.f32 %v489, %v558
        %v591 = vadd.f32 %v490, %v559
        %v592 = vadd.f32 %v491, %v560
        %v593 = vld [vmem:[#allocation2 + $0x2] sm:$0xff]
        %v594 = vld [vmem:[#allocation2 + $0xa] sm:$0xff]
        %v595 = vld [vmem:[#allocation2 + $0x1a] sm:$0xff]
        %v596 = vld [vmem:[#allocation2 + $0x22] sm:$0xff]
        %v597 = vld [vmem:[#allocation2 + $0x32] sm:$0xff]
        %v598 = vld [vmem:[#allocation2 + $0x3a] sm:$0xff]
        %v599 = vld [vmem:[#allocation2 + $0x4a] sm:$0xff]
        %v600 = vld [vmem:[#allocation2 + $0x52] sm:$0xff]
        %v601 = vld [vmem:[#allocation2 + $0x62] sm:$0xff]
        %v602 = vld [vmem:[#allocation2 + $0x6a] sm:$0xff]
        %v603 = vld [vmem:[#allocation2 + $0x7a] sm:$0xff]
        %v604 = vld [vmem:[#allocation2 + $0x82] sm:$0xff]
        %v605 = vld [vmem:[#allocation2 + $0x92] sm:$0xff]
        %v606 = vld [vmem:[#allocation2 + $0x9a] sm:$0xff]
        %v607 = vld [vmem:[#allocation2 + $0xaa] sm:$0xff]
        %v608 = vld [vmem:[#allocation2 + $0xb2] sm:$0xff]
        %v609 = vld [vmem:[#allocation2 + $0xc2] sm:$0xff]
        %v610 = vld [vmem:[#allocation2 + $0xca] sm:$0xff]
        %v611 = vld [vmem:[#allocation2 + $0xda] sm:$0xff]
        %v612 = vld [vmem:[#allocation2 + $0xe2] sm:$0xff]
        %v613 = vld [vmem:[#allocation2 + $0xf2] sm:$0xff]
        %v614 = vld [vmem:[#allocation2 + $0xfa] sm:$0xff]
        %v615 = vld [vmem:[#allocation2 + $0x10a] sm:$0xff]
        %v616 = vld [vmem:[#allocation2 + $0x112] sm:$0xff]
        %v617 = vld [vmem:[#allocation2 + $0x122] sm:$0xff]
        %v618 = vld [vmem:[#allocation2 + $0x12a] sm:$0xff]
        %v619 = vld [vmem:[#allocation2 + $0x13a] sm:$0xff]
        %v620 = vld [vmem:[#allocation2 + $0x142] sm:$0xff]
        %v621 = vld [vmem:[#allocation2 + $0x152] sm:$0xff]
        %v622 = vld [vmem:[#allocation2 + $0x15a] sm:$0xff]
        %v623 = vld [vmem:[#allocation2 + $0x16a] sm:$0xff]
        %v624 = vld [vmem:[#allocation2 + $0x172] sm:$0xff]
        %v625 = vld [vmem:[#allocation5 + $0x2] sm:$0x1]
        %v626 = vlaneseq
        %v627 = vshrl.u32 %v626, 7
        %v628 = vsub.s32 0, %v627
        %v629 = vrot.slane %v625, %v628
        %v630 = vmul.f32 %v593, %v629
        %v631 = vmul.f32 %v594, %v629
        %v632 = vmul.f32 %v595, %v629
        %v633 = vmul.f32 %v596, %v629
        %v634 = vmul.f32 %v597, %v629
        %v635 = vmul.f32 %v598, %v629
        %v636 = vmul.f32 %v599, %v629
        %v637 = vmul.f32 %v600, %v629
        %v638 = vmul.f32 %v601, %v629
        %v639 = vmul.f32 %v602, %v629
        %v640 = vmul.f32 %v603, %v629
        %v641 = vmul.f32 %v604, %v629
        %v642 = vmul.f32 %v605, %v629
        %v643 = vmul.f32 %v606, %v629
        %v644 = vmul.f32 %v607, %v629
        %v645 = vmul.f32 %v608, %v629
        %v646 = vmul.f32 %v609, %v629
        %v647 = vmul.f32 %v610, %v629
        %v648 = vmul.f32 %v611, %v629
        %v649 = vmul.f32 %v612, %v629
        %v650 = vmul.f32 %v613, %v629
        %v651 = vmul.f32 %v614, %v629
        %v652 = vmul.f32 %v615, %v629
        %v653 = vmul.f32 %v616, %v629
        %v654 = vmul.f32 %v617, %v629
        %v655 = vmul.f32 %v618, %v629
        %v656 = vmul.f32 %v619, %v629
        %v657 = vmul.f32 %v620, %v629
        %v658 = vmul.f32 %v621, %v629
        %v659 = vmul.f32 %v622, %v629
        %v660 = vmul.f32 %v623, %v629
        %v661 = vmul.f32 %v624, %v629
        %v662 = vadd.f32 %v561, %v630
        %v663 = vadd.f32 %v562, %v631
        %v664 = vadd.f32 %v563, %v632
        %v665 = vadd.f32 %v564, %v633
        %v666 = vadd.f32 %v565, %v634
        %v667 = vadd.f32 %v566, %v635
        %v668 = vadd.f32 %v567, %v636
        %v669 = vadd.f32 %v568, %v637
        %v670 = vadd.f32 %v569, %v638
        %v671 = vadd.f32 %v570, %v639
        %v672 = vadd.f32 %v571, %v640
        %v673 = vadd.f32 %v572, %v641
        %v674 = vadd.f32 %v573, %v642
        %v675 = vadd.f32 %v574, %v643
        %v676 = vadd.f32 %v575, %v644
        %v677 = vadd.f32 %v576, %v645
        %v678 = vadd.f32 %v577, %v646
        %v679 = vadd.f32 %v578, %v647
        %v680 = vadd.f32 %v579, %v648
        %v681 = vadd.f32 %v580, %v649
        %v682 = vadd.f32 %v581, %v650
        %v683 = vadd.f32 %v582, %v651
        %v684 = vadd.f32 %v583, %v652
        %v685 = vadd.f32 %v584, %v653
        %v686 = vadd.f32 %v585, %v654
        %v687 = vadd.f32 %v586, %v655
        %v688 = vadd.f32 %v587, %v656
        %v689 = vadd.f32 %v588, %v657
        %v690 = vadd.f32 %v589, %v658
        %v691 = vadd.f32 %v590, %v659
        %v692 = vadd.f32 %v591, %v660
        %v693 = vadd.f32 %v592, %v661
        %v694 = vld [vmem:[#allocation2 + $0x3] sm:$0xff]
        %v695 = vld [vmem:[#allocation2 + $0xb] sm:$0xff]
        %v696 = vld [vmem:[#allocation2 + $0x1b] sm:$0xff]
        %v697 = vld [vmem:[#allocation2 + $0x23] sm:$0xff]
        %v698 = vld [vmem:[#allocation2 + $0x33] sm:$0xff]
        %v699 = vld [vmem:[#allocation2 + $0x3b] sm:$0xff]
        %v700 = vld [vmem:[#allocation2 + $0x4b] sm:$0xff]
        %v701 = vld [vmem:[#allocation2 + $0x53] sm:$0xff]
        %v702 = vld [vmem:[#allocation2 + $0x63] sm:$0xff]
        %v703 = vld [vmem:[#allocation2 + $0x6b] sm:$0xff]
        %v704 = vld [vmem:[#allocation2 + $0x7b] sm:$0xff]
        %v705 = vld [vmem:[#allocation2 + $0x83] sm:$0xff]
        %v706 = vld [vmem:[#allocation2 + $0x93] sm:$0xff]
        %v707 = vld [vmem:[#allocation2 + $0x9b] sm:$0xff]
        %v708 = vld [vmem:[#allocation2 + $0xab] sm:$0xff]
        %v709 = vld [vmem:[#allocation2 + $0xb3] sm:$0xff]
        %v710 = vld [vmem:[#allocation2 + $0xc3] sm:$0xff]
        %v711 = vld [vmem:[#allocation2 + $0xcb] sm:$0xff]
        %v712 = vld [vmem:[#allocation2 + $0xdb] sm:$0xff]
        %v713 = vld [vmem:[#allocation2 + $0xe3] sm:$0xff]
        %v714 = vld [vmem:[#allocation2 + $0xf3] sm:$0xff]
        %v715 = vld [vmem:[#allocation2 + $0xfb] sm:$0xff]
        %v716 = vld [vmem:[#allocation2 + $0x10b] sm:$0xff]
        %v717 = vld [vmem:[#allocation2 + $0x113] sm:$0xff]
        %v718 = vld [vmem:[#allocation2 + $0x123] sm:$0xff]
        %v719 = vld [vmem:[#allocation2 + $0x12b] sm:$0xff]
        %v720 = vld [vmem:[#allocation2 + $0x13b] sm:$0xff]
        %v721 = vld [vmem:[#allocation2 + $0x143] sm:$0xff]
        %v722 = vld [vmem:[#allocation2 + $0x153] sm:$0xff]
        %v723 = vld [vmem:[#allocation2 + $0x15b] sm:$0xff]
        %v724 = vld [vmem:[#allocation2 + $0x16b] sm:$0xff]
        %v725 = vld [vmem:[#allocation2 + $0x173] sm:$0xff]
        %v726 = vld [vmem:[#allocation5 + $0x3] sm:$0x1]
        %v727 = vlaneseq
        %v728 = vshrl.u32 %v727, 7
        %v729 = vsub.s32 0, %v728
        %v730 = vrot.slane %v726, %v729
        %v731 = vmul.f32 %v694, %v730
        %v732 = vmul.f32 %v695, %v730
        %v733 = vmul.f32 %v696, %v730
        %v734 = vmul.f32 %v697, %v730
        %v735 = vmul.f32 %v698, %v730
        %v736 = vmul.f32 %v699, %v730
        %v737 = vmul.f32 %v700, %v730
        %v738 = vmul.f32 %v701, %v730
        %v739 = vmul.f32 %v702, %v730
        %v740 = vmul.f32 %v703, %v730
        %v741 = vmul.f32 %v704, %v730
        %v742 = vmul.f32 %v705, %v730
        %v743 = vmul.f32 %v706, %v730
        %v744 = vmul.f32 %v707, %v730
        %v745 = vmul.f32 %v708, %v730
        %v746 = vmul.f32 %v709, %v730
        %v747 = vmul.f32 %v710, %v730
        %v748 = vmul.f32 %v711, %v730
        %v749 = vmul.f32 %v712, %v730
        %v750 = vmul.f32 %v713, %v730
        %v751 = vmul.f32 %v714, %v730
        %v752 = vmul.f32 %v715, %v730
        %v753 = vmul.f32 %v716, %v730
        %v754 = vmul.f32 %v717, %v730
        %v755 = vmul.f32 %v718, %v730
        %v756 = vmul.f32 %v719, %v730
        %v757 = vmul.f32 %v720, %v730
        %v758 = vmul.f32 %v721, %v730
        %v759 = vmul.f32 %v722, %v730
        %v760 = vmul.f32 %v723, %v730
        %v761 = vmul.f32 %v724, %v730
        %v762 = vmul.f32 %v725, %v730
        %v763 = vadd.f32 %v662, %v731
        %v764 = vadd.f32 %v663, %v732
        %v765 = vadd.f32 %v664, %v733
        %v766 = vadd.f32 %v665, %v734
        %v767 = vadd.f32 %v666, %v735
        %v768 = vadd.f32 %v667, %v736
        %v769 = vadd.f32 %v668, %v737
        %v770 = vadd.f32 %v669, %v738
        %v771 = vadd.f32 %v670, %v739
        %v772 = vadd.f32 %v671, %v740
        %v773 = vadd.f32 %v672, %v741
        %v774 = vadd.f32 %v673, %v742
        %v775 = vadd.f32 %v674, %v743
        %v776 = vadd.f32 %v675, %v744
        %v777 = vadd.f32 %v676, %v745
        %v778 = vadd.f32 %v677, %v746
        %v779 = vadd.f32 %v678, %v747
        %v780 = vadd.f32 %v679, %v748
        %v781 = vadd.f32 %v680, %v749
        %v782 = vadd.f32 %v681, %v750
        %v783 = vadd.f32 %v682, %v751
        %v784 = vadd.f32 %v683, %v752
        %v785 = vadd.f32 %v684, %v753
        %v786 = vadd.f32 %v685, %v754
        %v787 = vadd.f32 %v686, %v755
        %v788 = vadd.f32 %v687, %v756
        %v789 = vadd.f32 %v688, %v757
        %v790 = vadd.f32 %v689, %v758
        %v791 = vadd.f32 %v690, %v759
        %v792 = vadd.f32 %v691, %v760
        %v793 = vadd.f32 %v692, %v761
        %v794 = vadd.f32 %v693, %v762
        %v795 = vld [vmem:[#allocation2 + $0x4] sm:$0xff]
        %v796 = vld [vmem:[#allocation2 + $0xc] sm:$0xff]
        %v797 = vld [vmem:[#allocation2 + $0x1c] sm:$0xff]
        %v798 = vld [vmem:[#allocation2 + $0x24] sm:$0xff]
        %v799 = vld [vmem:[#allocation2 + $0x34] sm:$0xff]
        %v800 = vld [vmem:[#allocation2 + $0x3c] sm:$0xff]
        %v801 = vld [vmem:[#allocation2 + $0x4c] sm:$0xff]
        %v802 = vld [vmem:[#allocation2 + $0x54] sm:$0xff]
        %v803 = vld [vmem:[#allocation2 + $0x64] sm:$0xff]
        %v804 = vld [vmem:[#allocation2 + $0x6c] sm:$0xff]
        %v805 = vld [vmem:[#allocation2 + $0x7c] sm:$0xff]
        %v806 = vld [vmem:[#allocation2 + $0x84] sm:$0xff]
        %v807 = vld [vmem:[#allocation2 + $0x94] sm:$0xff]
        %v808 = vld [vmem:[#allocation2 + $0x9c] sm:$0xff]
        %v809 = vld [vmem:[#allocation2 + $0xac] sm:$0xff]
        %v810 = vld [vmem:[#allocation2 + $0xb4] sm:$0xff]
        %v811 = vld [vmem:[#allocation2 + $0xc4] sm:$0xff]
        %v812 = vld [vmem:[#allocation2 + $0xcc] sm:$0xff]
        %v813 = vld [vmem:[#allocation2 + $0xdc] sm:$0xff]
        %v814 = vld [vmem:[#allocation2 + $0xe4] sm:$0xff]
        %v815 = vld [vmem:[#allocation2 + $0xf4] sm:$0xff]
        %v816 = vld [vmem:[#allocation2 + $0xfc] sm:$0xff]
        %v817 = vld [vmem:[#allocation2 + $0x10c] sm:$0xff]
        %v818 = vld [vmem:[#allocation2 + $0x114] sm:$0xff]
        %v819 = vld [vmem:[#allocation2 + $0x124] sm:$0xff]
        %v820 = vld [vmem:[#allocation2 + $0x12c] sm:$0xff]
        %v821 = vld [vmem:[#allocation2 + $0x13c] sm:$0xff]
        %v822 = vld [vmem:[#allocation2 + $0x144] sm:$0xff]
        %v823 = vld [vmem:[#allocation2 + $0x154] sm:$0xff]
        %v824 = vld [vmem:[#allocation2 + $0x15c] sm:$0xff]
        %v825 = vld [vmem:[#allocation2 + $0x16c] sm:$0xff]
        %v826 = vld [vmem:[#allocation2 + $0x174] sm:$0xff]
        %v827 = vld [vmem:[#allocation5 + $0x4] sm:$0x1]
        %v828 = vlaneseq
        %v829 = vshrl.u32 %v828, 7
        %v830 = vsub.s32 0, %v829
        %v831 = vrot.slane %v827, %v830
        %v832 = vmul.f32 %v795, %v831
        %v833 = vmul.f32 %v796, %v831
        %v834 = vmul.f32 %v797, %v831
        %v835 = vmul.f32 %v798, %v831
        %v836 = vmul.f32 %v799, %v831
        %v837 = vmul.f32 %v800, %v831
        %v838 = vmul.f32 %v801, %v831
        %v839 = vmul.f32 %v802, %v831
        %v840 = vmul.f32 %v803, %v831
        %v841 = vmul.f32 %v804, %v831
        %v842 = vmul.f32 %v805, %v831
        %v843 = vmul.f32 %v806, %v831
        %v844 = vmul.f32 %v807, %v831
        %v845 = vmul.f32 %v808, %v831
        %v846 = vmul.f32 %v809, %v831
        %v847 = vmul.f32 %v810, %v831
        %v848 = vmul.f32 %v811, %v831
        %v849 = vmul.f32 %v812, %v831
        %v850 = vmul.f32 %v813, %v831
        %v851 = vmul.f32 %v814, %v831
        %v852 = vmul.f32 %v815, %v831
        %v853 = vmul.f32 %v816, %v831
        %v854 = vmul.f32 %v817, %v831
        %v855 = vmul.f32 %v818, %v831
        %v856 = vmul.f32 %v819, %v831
        %v857 = vmul.f32 %v820, %v831
        %v858 = vmul.f32 %v821, %v831
        %v859 = vmul.f32 %v822, %v831
        %v860 = vmul.f32 %v823, %v831
        %v861 = vmul.f32 %v824, %v831
        %v862 = vmul.f32 %v825, %v831
        %v863 = vmul.f32 %v826, %v831
        %v864 = vadd.f32 %v763, %v832
        %v865 = vadd.f32 %v764, %v833
        %v866 = vadd.f32 %v765, %v834
        %v867 = vadd.f32 %v766, %v835
        %v868 = vadd.f32 %v767, %v836
        %v869 = vadd.f32 %v768, %v837
        %v870 = vadd.f32 %v769, %v838
        %v871 = vadd.f32 %v770, %v839
        %v872 = vadd.f32 %v771, %v840
        %v873 = vadd.f32 %v772, %v841
        %v874 = vadd.f32 %v773, %v842
        %v875 = vadd.f32 %v774, %v843
        %v876 = vadd.f32 %v775, %v844
        %v877 = vadd.f32 %v776, %v845
        %v878 = vadd.f32 %v777, %v846
        %v879 = vadd.f32 %v778, %v847
        %v880 = vadd.f32 %v779, %v848
        %v881 = vadd.f32 %v780, %v849
        %v882 = vadd.f32 %v781, %v850
        %v883 = vadd.f32 %v782, %v851
        %v884 = vadd.f32 %v783, %v852
        %v885 = vadd.f32 %v784, %v853
        %v886 = vadd.f32 %v785, %v854
        %v887 = vadd.f32 %v786, %v855
        %v888 = vadd.f32 %v787, %v856
        %v889 = vadd.f32 %v788, %v857
        %v890 = vadd.f32 %v789, %v858
        %v891 = vadd.f32 %v790, %v859
        %v892 = vadd.f32 %v791, %v860
        %v893 = vadd.f32 %v792, %v861
        %v894 = vadd.f32 %v793, %v862
        %v895 = vadd.f32 %v794, %v863
        %v896 = vld [vmem:[#allocation2 + $0x5] sm:$0xff]
        %v897 = vld [vmem:[#allocation2 + $0xd] sm:$0xff]
        %v898 = vld [vmem:[#allocation2 + $0x1d] sm:$0xff]
        %v899 = vld [vmem:[#allocation2 + $0x25] sm:$0xff]
        %v900 = vld [vmem:[#allocation2 + $0x35] sm:$0xff]
        %v901 = vld [vmem:[#allocation2 + $0x3d] sm:$0xff]
        %v902 = vld [vmem:[#allocation2 + $0x4d] sm:$0xff]
        %v903 = vld [vmem:[#allocation2 + $0x55] sm:$0xff]
        %v904 = vld [vmem:[#allocation2 + $0x65] sm:$0xff]
        %v905 = vld [vmem:[#allocation2 + $0x6d] sm:$0xff]
        %v906 = vld [vmem:[#allocation2 + $0x7d] sm:$0xff]
        %v907 = vld [vmem:[#allocation2 + $0x85] sm:$0xff]
        %v908 = vld [vmem:[#allocation2 + $0x95] sm:$0xff]
        %v909 = vld [vmem:[#allocation2 + $0x9d] sm:$0xff]
        %v910 = vld [vmem:[#allocation2 + $0xad] sm:$0xff]
        %v911 = vld [vmem:[#allocation2 + $0xb5] sm:$0xff]
        %v912 = vld [vmem:[#allocation2 + $0xc5] sm:$0xff]
        %v913 = vld [vmem:[#allocation2 + $0xcd] sm:$0xff]
        %v914 = vld [vmem:[#allocation2 + $0xdd] sm:$0xff]
        %v915 = vld [vmem:[#allocation2 + $0xe5] sm:$0xff]
        %v916 = vld [vmem:[#allocation2 + $0xf5] sm:$0xff]
        %v917 = vld [vmem:[#allocation2 + $0xfd] sm:$0xff]
        %v918 = vld [vmem:[#allocation2 + $0x10d] sm:$0xff]
        %v919 = vld [vmem:[#allocation2 + $0x115] sm:$0xff]
        %v920 = vld [vmem:[#allocation2 + $0x125] sm:$0xff]
        %v921 = vld [vmem:[#allocation2 + $0x12d] sm:$0xff]
        %v922 = vld [vmem:[#allocation2 + $0x13d] sm:$0xff]
        %v923 = vld [vmem:[#allocation2 + $0x145] sm:$0xff]
        %v924 = vld [vmem:[#allocation2 + $0x155] sm:$0xff]
        %v925 = vld [vmem:[#allocation2 + $0x15d] sm:$0xff]
        %v926 = vld [vmem:[#allocation2 + $0x16d] sm:$0xff]
        %v927 = vld [vmem:[#allocation2 + $0x175] sm:$0xff]
        %v928 = vld [vmem:[#allocation5 + $0x5] sm:$0x1]
        %v929 = vlaneseq
        %v930 = vshrl.u32 %v929, 7
        %v931 = vsub.s32 0, %v930
        %v932 = vrot.slane %v928, %v931
        %v933 = vmul.f32 %v896, %v932
        %v934 = vmul.f32 %v897, %v932
        %v935 = vmul.f32 %v898, %v932
        %v936 = vmul.f32 %v899, %v932
        %v937 = vmul.f32 %v900, %v932
        %v938 = vmul.f32 %v901, %v932
        %v939 = vmul.f32 %v902, %v932
        %v940 = vmul.f32 %v903, %v932
        %v941 = vmul.f32 %v904, %v932
        %v942 = vmul.f32 %v905, %v932
        %v943 = vmul.f32 %v906, %v932
        %v944 = vmul.f32 %v907, %v932
        %v945 = vmul.f32 %v908, %v932
        %v946 = vmul.f32 %v909, %v932
        %v947 = vmul.f32 %v910, %v932
        %v948 = vmul.f32 %v911, %v932
        %v949 = vmul.f32 %v912, %v932
        %v950 = vmul.f32 %v913, %v932
        %v951 = vmul.f32 %v914, %v932
        %v952 = vmul.f32 %v915, %v932
        %v953 = vmul.f32 %v916, %v932
        %v954 = vmul.f32 %v917, %v932
        %v955 = vmul.f32 %v918, %v932
        %v956 = vmul.f32 %v919, %v932
        %v957 = vmul.f32 %v920, %v932
        %v958 = vmul.f32 %v921, %v932
        %v959 = vmul.f32 %v922, %v932
        %v960 = vmul.f32 %v923, %v932
        %v961 = vmul.f32 %v924, %v932
        %v962 = vmul.f32 %v925, %v932
        %v963 = vmul.f32 %v926, %v932
        %v964 = vmul.f32 %v927, %v932
        %v965 = vadd.f32 %v864, %v933
        %v966 = vadd.f32 %v865, %v934
        %v967 = vadd.f32 %v866, %v935
        %v968 = vadd.f32 %v867, %v936
        %v969 = vadd.f32 %v868, %v937
        %v970 = vadd.f32 %v869, %v938
        %v971 = vadd.f32 %v870, %v939
        %v972 = vadd.f32 %v871, %v940
        %v973 = vadd.f32 %v872, %v941
        %v974 = vadd.f32 %v873, %v942
        %v975 = vadd.f32 %v874, %v943
        %v976 = vadd.f32 %v875, %v944
        %v977 = vadd.f32 %v876, %v945
        %v978 = vadd.f32 %v877, %v946
        %v979 = vadd.f32 %v878, %v947
        %v980 = vadd.f32 %v879, %v948
        %v981 = vadd.f32 %v880, %v949
        %v982 = vadd.f32 %v881, %v950
        %v983 = vadd.f32 %v882, %v951
        %v984 = vadd.f32 %v883, %v952
        %v985 = vadd.f32 %v884, %v953
        %v986 = vadd.f32 %v885, %v954
        %v987 = vadd.f32 %v886, %v955
        %v988 = vadd.f32 %v887, %v956
        %v989 = vadd.f32 %v888, %v957
        %v990 = vadd.f32 %v889, %v958
        %v991 = vadd.f32 %v890, %v959
        %v992 = vadd.f32 %v891, %v960
        %v993 = vadd.f32 %v892, %v961
        %v994 = vadd.f32 %v893, %v962
        %v995 = vadd.f32 %v894, %v963
        %v996 = vadd.f32 %v895, %v964
        %v997 = vld [vmem:[#allocation2 + $0x6] sm:$0xff]
        %v998 = vld [vmem:[#allocation2 + $0xe] sm:$0xff]
        %v999 = vld [vmem:[#allocation2 + $0x1e] sm:$0xff]
        %v1000 = vld [vmem:[#allocation2 + $0x26] sm:$0xff]
        %v1001 = vld [vmem:[#allocation2 + $0x36] sm:$0xff]
        %v1002 = vld [vmem:[#allocation2 + $0x3e] sm:$0xff]
        %v1003 = vld [vmem:[#allocation2 + $0x4e] sm:$0xff]
        %v1004 = vld [vmem:[#allocation2 + $0x56] sm:$0xff]
        %v1005 = vld [vmem:[#allocation2 + $0x66] sm:$0xff]
        %v1006 = vld [vmem:[#allocation2 + $0x6e] sm:$0xff]
        %v1007 = vld [vmem:[#allocation2 + $0x7e] sm:$0xff]
        %v1008 = vld [vmem:[#allocation2 + $0x86] sm:$0xff]
        %v1009 = vld [vmem:[#allocation2 + $0x96] sm:$0xff]
        %v1010 = vld [vmem:[#allocation2 + $0x9e] sm:$0xff]
        %v1011 = vld [vmem:[#allocation2 + $0xae] sm:$0xff]
        %v1012 = vld [vmem:[#allocation2 + $0xb6] sm:$0xff]
        %v1013 = vld [vmem:[#allocation2 + $0xc6] sm:$0xff]
        %v1014 = vld [vmem:[#allocation2 + $0xce] sm:$0xff]
        %v1015 = vld [vmem:[#allocation2 + $0xde] sm:$0xff]
        %v1016 = vld [vmem:[#allocation2 + $0xe6] sm:$0xff]
        %v1017 = vld [vmem:[#allocation2 + $0xf6] sm:$0xff]
        %v1018 = vld [vmem:[#allocation2 + $0xfe] sm:$0xff]
        %v1019 = vld [vmem:[#allocation2 + $0x10e] sm:$0xff]
        %v1020 = vld [vmem:[#allocation2 + $0x116] sm:$0xff]
        %v1021 = vld [vmem:[#allocation2 + $0x126] sm:$0xff]
        %v1022 = vld [vmem:[#allocation2 + $0x12e] sm:$0xff]
        %v1023 = vld [vmem:[#allocation2 + $0x13e] sm:$0xff]
        %v1024 = vld [vmem:[#allocation2 + $0x146] sm:$0xff]
        %v1025 = vld [vmem:[#allocation2 + $0x156] sm:$0xff]
        %v1026 = vld [vmem:[#allocation2 + $0x15e] sm:$0xff]
        %v1027 = vld [vmem:[#allocation2 + $0x16e] sm:$0xff]
        %v1028 = vld [vmem:[#allocation2 + $0x176] sm:$0xff]
        %v1029 = vld [vmem:[#allocation5 + $0x6] sm:$0x1]
        %v1030 = vlaneseq
        %v1031 = vshrl.u32 %v1030, 7
        %v1032 = vsub.s32 0, %v1031
        %v1033 = vrot.slane %v1029, %v1032
        %v1034 = vmul.f32 %v997, %v1033
        %v1035 = vmul.f32 %v998, %v1033
        %v1036 = vmul.f32 %v999, %v1033
        %v1037 = vmul.f32 %v1000, %v1033
        %v1038 = vmul.f32 %v1001, %v1033
        %v1039 = vmul.f32 %v1002, %v1033
        %v1040 = vmul.f32 %v1003, %v1033
        %v1041 = vmul.f32 %v1004, %v1033
        %v1042 = vmul.f32 %v1005, %v1033
        %v1043 = vmul.f32 %v1006, %v1033
        %v1044 = vmul.f32 %v1007, %v1033
        %v1045 = vmul.f32 %v1008, %v1033
        %v1046 = vmul.f32 %v1009, %v1033
        %v1047 = vmul.f32 %v1010, %v1033
        %v1048 = vmul.f32 %v1011, %v1033
        %v1049 = vmul.f32 %v1012, %v1033
        %v1050 = vmul.f32 %v1013, %v1033
        %v1051 = vmul.f32 %v1014, %v1033
        %v1052 = vmul.f32 %v1015, %v1033
        %v1053 = vmul.f32 %v1016, %v1033
        %v1054 = vmul.f32 %v1017, %v1033
        %v1055 = vmul.f32 %v1018, %v1033
        %v1056 = vmul.f32 %v1019, %v1033
        %v1057 = vmul.f32 %v1020, %v1033
        %v1058 = vmul.f32 %v1021, %v1033
        %v1059 = vmul.f32 %v1022, %v1033
        %v1060 = vmul.f32 %v1023, %v1033
        %v1061 = vmul.f32 %v1024, %v1033
        %v1062 = vmul.f32 %v1025, %v1033
        %v1063 = vmul.f32 %v1026, %v1033
        %v1064 = vmul.f32 %v1027, %v1033
        %v1065 = vmul.f32 %v1028, %v1033
        %v1066 = vadd.f32 %v965, %v1034
        %v1067 = vadd.f32 %v966, %v1035
        %v1068 = vadd.f32 %v967, %v1036
        %v1069 = vadd.f32 %v968, %v1037
        %v1070 = vadd.f32 %v969, %v1038
        %v1071 = vadd.f32 %v970, %v1039
        %v1072 = vadd.f32 %v971, %v1040
        %v1073 = vadd.f32 %v972, %v1041
        %v1074 = vadd.f32 %v973, %v1042
        %v1075 = vadd.f32 %v974, %v1043
        %v1076 = vadd.f32 %v975, %v1044
        %v1077 = vadd.f32 %v976, %v1045
        %v1078 = vadd.f32 %v977, %v1046
        %v1079 = vadd.f32 %v978, %v1047
        %v1080 = vadd.f32 %v979, %v1048
        %v1081 = vadd.f32 %v980, %v1049
        %v1082 = vadd.f32 %v981, %v1050
        %v1083 = vadd.f32 %v982, %v1051
        %v1084 = vadd.f32 %v983, %v1052
        %v1085 = vadd.f32 %v984, %v1053
        %v1086 = vadd.f32 %v985, %v1054
        %v1087 = vadd.f32 %v986, %v1055
        %v1088 = vadd.f32 %v987, %v1056
        %v1089 = vadd.f32 %v988, %v1057
        %v1090 = vadd.f32 %v989, %v1058
        %v1091 = vadd.f32 %v990, %v1059
        %v1092 = vadd.f32 %v991, %v1060
        %v1093 = vadd.f32 %v992, %v1061
        %v1094 = vadd.f32 %v993, %v1062
        %v1095 = vadd.f32 %v994, %v1063
        %v1096 = vadd.f32 %v995, %v1064
        %v1097 = vadd.f32 %v996, %v1065
        %1098 = vst [vmem:[#allocation3] sm:$0xff] %v1066
        %1099 = vst [vmem:[#allocation3 + $0x8] sm:$0xff] %v1067
        %1100 = vst [vmem:[#allocation3 + $0x10] sm:$0xff] %v1068
        %1101 = vst [vmem:[#allocation3 + $0x18] sm:$0xff] %v1069
        %1102 = vst [vmem:[#allocation3 + $0x20] sm:$0xff] %v1070
        %1103 = vst [vmem:[#allocation3 + $0x28] sm:$0xff] %v1071
        %1104 = vst [vmem:[#allocation3 + $0x30] sm:$0xff] %v1072
        %1105 = vst [vmem:[#allocation3 + $0x38] sm:$0xff] %v1073
        %1106 = vst [vmem:[#allocation3 + $0x40] sm:$0xff] %v1074
        %1107 = vst [vmem:[#allocation3 + $0x48] sm:$0xff] %v1075
        %1108 = vst [vmem:[#allocation3 + $0x50] sm:$0xff] %v1076
        %1109 = vst [vmem:[#allocation3 + $0x58] sm:$0xff] %v1077
        %1110 = vst [vmem:[#allocation3 + $0x60] sm:$0xff] %v1078
        %1111 = vst [vmem:[#allocation3 + $0x68] sm:$0xff] %v1079
        %1112 = vst [vmem:[#allocation3 + $0x70] sm:$0xff] %v1080
        %1113 = vst [vmem:[#allocation3 + $0x78] sm:$0xff] %v1081
        %1114 = vst [vmem:[#allocation3 + $0x80] sm:$0xff] %v1082
        %1115 = vst [vmem:[#allocation3 + $0x88] sm:$0xff] %v1083
        %1116 = vst [vmem:[#allocation3 + $0x90] sm:$0xff] %v1084
        %1117 = vst [vmem:[#allocation3 + $0x98] sm:$0xff] %v1085
        %1118 = vst [vmem:[#allocation3 + $0xa0] sm:$0xff] %v1086
        %1119 = vst [vmem:[#allocation3 + $0xa8] sm:$0xff] %v1087
        %1120 = vst [vmem:[#allocation3 + $0xb0] sm:$0xff] %v1088
        %1121 = vst [vmem:[#allocation3 + $0xb8] sm:$0xff] %v1089
        %1122 = vst [vmem:[#allocation3 + $0xc0] sm:$0xff] %v1090
        %1123 = vst [vmem:[#allocation3 + $0xc8] sm:$0xff] %v1091
        %1124 = vst [vmem:[#allocation3 + $0xd0] sm:$0xff] %v1092
        %1125 = vst [vmem:[#allocation3 + $0xd8] sm:$0xff] %v1093
        %1126 = vst [vmem:[#allocation3 + $0xe0] sm:$0xff] %v1094
        %1127 = vst [vmem:[#allocation3 + $0xe8] sm:$0xff] %v1095
        %1128 = vst [vmem:[#allocation3 + $0xf0] sm:$0xff] %v1096
        %1129 = vst [vmem:[#allocation3 + $0xf8] sm:$0xff] %v1097
        %s1130 = scalar_lea.vmem [#allocation2], 24
        %v1131 = vld [vmem:[%s1130] sm:$0xff]
        %v1132 = vld [vmem:[%s1130 + $0x8] sm:$0xff]
        %v1133 = vld [vmem:[%s1130 + $0x18] sm:$0xff]
        %v1134 = vld [vmem:[%s1130 + $0x20] sm:$0xff]
        %v1135 = vld [vmem:[%s1130 + $0x30] sm:$0xff]
        %v1136 = vld [vmem:[%s1130 + $0x38] sm:$0xff]
        %v1137 = vld [vmem:[%s1130 + $0x48] sm:$0xff]
        %v1138 = vld [vmem:[%s1130 + $0x50] sm:$0xff]
        %v1139 = vld [vmem:[%s1130 + $0x60] sm:$0xff]
        %v1140 = vld [vmem:[%s1130 + $0x68] sm:$0xff]
        %v1141 = vld [vmem:[%s1130 + $0x78] sm:$0xff]
        %v1142 = vld [vmem:[%s1130 + $0x80] sm:$0xff]
        %v1143 = vld [vmem:[%s1130 + $0x90] sm:$0xff]
        %v1144 = vld [vmem:[%s1130 + $0x98] sm:$0xff]
        %v1145 = vld [vmem:[%s1130 + $0xa8] sm:$0xff]
        %v1146 = vld [vmem:[%s1130 + $0xb0] sm:$0xff]
        %v1147 = vld [vmem:[%s1130 + $0xc0] sm:$0xff]
        %v1148 = vld [vmem:[%s1130 + $0xc8] sm:$0xff]
        %v1149 = vld [vmem:[%s1130 + $0xd8] sm:$0xff]
        %v1150 = vld [vmem:[%s1130 + $0xe0] sm:$0xff]
        %v1151 = vld [vmem:[%s1130 + $0xf0] sm:$0xff]
        %v1152 = vld [vmem:[%s1130 + $0xf8] sm:$0xff]
        %v1153 = vld [vmem:[%s1130 + $0x108] sm:$0xff]
        %v1154 = vld [vmem:[%s1130 + $0x110] sm:$0xff]
        %v1155 = vld [vmem:[%s1130 + $0x120] sm:$0xff]
        %v1156 = vld [vmem:[%s1130 + $0x128] sm:$0xff]
        %v1157 = vld [vmem:[%s1130 + $0x138] sm:$0xff]
        %v1158 = vld [vmem:[%s1130 + $0x140] sm:$0xff]
        %v1159 = vld [vmem:[%s1130 + $0x150] sm:$0xff]
        %v1160 = vld [vmem:[%s1130 + $0x158] sm:$0xff]
        %v1161 = vld [vmem:[%s1130 + $0x168] sm:$0xff]
        %v1162 = vld [vmem:[%s1130 + $0x170] sm:$0xff]
        %v1163 = vld [vmem:[#allocation5 + $0x7] sm:$0x1]
        %v1164 = vlaneseq
        %v1165 = vshrl.u32 %v1164, 7
        %v1166 = vsub.s32 0, %v1165
        %v1167 = vrot.slane %v1163, %v1166
        %v1168 = vmul.f32 %v1131, %v1167
        %v1169 = vmul.f32 %v1132, %v1167
        %v1170 = vmul.f32 %v1133, %v1167
        %v1171 = vmul.f32 %v1134, %v1167
        %v1172 = vmul.f32 %v1135, %v1167
        %v1173 = vmul.f32 %v1136, %v1167
        %v1174 = vmul.f32 %v1137, %v1167
        %v1175 = vmul.f32 %v1138, %v1167
        %v1176 = vmul.f32 %v1139, %v1167
        %v1177 = vmul.f32 %v1140, %v1167
        %v1178 = vmul.f32 %v1141, %v1167
        %v1179 = vmul.f32 %v1142, %v1167
        %v1180 = vmul.f32 %v1143, %v1167
        %v1181 = vmul.f32 %v1144, %v1167
        %v1182 = vmul.f32 %v1145, %v1167
        %v1183 = vmul.f32 %v1146, %v1167
        %v1184 = vmul.f32 %v1147, %v1167
        %v1185 = vmul.f32 %v1148, %v1167
        %v1186 = vmul.f32 %v1149, %v1167
        %v1187 = vmul.f32 %v1150, %v1167
        %v1188 = vmul.f32 %v1151, %v1167
        %v1189 = vmul.f32 %v1152, %v1167
        %v1190 = vmul.f32 %v1153, %v1167
        %v1191 = vmul.f32 %v1154, %v1167
        %v1192 = vmul.f32 %v1155, %v1167
        %v1193 = vmul.f32 %v1156, %v1167
        %v1194 = vmul.f32 %v1157, %v1167
        %v1195 = vmul.f32 %v1158, %v1167
        %v1196 = vmul.f32 %v1159, %v1167
        %v1197 = vmul.f32 %v1160, %v1167
        %v1198 = vmul.f32 %v1161, %v1167
        %v1199 = vmul.f32 %v1162, %v1167
        %v1200 = vld [vmem:[%s1130 + $0x1] sm:$0xff]
        %v1201 = vld [vmem:[%s1130 + $0x9] sm:$0xff]
        %v1202 = vld [vmem:[%s1130 + $0x19] sm:$0xff]
        %v1203 = vld [vmem:[%s1130 + $0x21] sm:$0xff]
        %v1204 = vld [vmem:[%s1130 + $0x31] sm:$0xff]
        %v1205 = vld [vmem:[%s1130 + $0x39] sm:$0xff]
        %v1206 = vld [vmem:[%s1130 + $0x49] sm:$0xff]
        %v1207 = vld [vmem:[%s1130 + $0x51] sm:$0xff]
        %v1208 = vld [vmem:[%s1130 + $0x61] sm:$0xff]
        %v1209 = vld [vmem:[%s1130 + $0x69] sm:$0xff]
        %v1210 = vld [vmem:[%s1130 + $0x79] sm:$0xff]
        %v1211 = vld [vmem:[%s1130 + $0x81] sm:$0xff]
        %v1212 = vld [vmem:[%s1130 + $0x91] sm:$0xff]
        %v1213 = vld [vmem:[%s1130 + $0x99] sm:$0xff]
        %v1214 = vld [vmem:[%s1130 + $0xa9] sm:$0xff]
        %v1215 = vld [vmem:[%s1130 + $0xb1] sm:$0xff]
        %v1216 = vld [vmem:[%s1130 + $0xc1] sm:$0xff]
        %v1217 = vld [vmem:[%s1130 + $0xc9] sm:$0xff]
        %v1218 = vld [vmem:[%s1130 + $0xd9] sm:$0xff]
        %v1219 = vld [vmem:[%s1130 + $0xe1] sm:$0xff]
        %v1220 = vld [vmem:[%s1130 + $0xf1] sm:$0xff]
        %v1221 = vld [vmem:[%s1130 + $0xf9] sm:$0xff]
        %v1222 = vld [vmem:[%s1130 + $0x109] sm:$0xff]
        %v1223 = vld [vmem:[%s1130 + $0x111] sm:$0xff]
        %v1224 = vld [vmem:[%s1130 + $0x121] sm:$0xff]
        %v1225 = vld [vmem:[%s1130 + $0x129] sm:$0xff]
        %v1226 = vld [vmem:[%s1130 + $0x139] sm:$0xff]
        %v1227 = vld [vmem:[%s1130 + $0x141] sm:$0xff]
        %v1228 = vld [vmem:[%s1130 + $0x151] sm:$0xff]
        %v1229 = vld [vmem:[%s1130 + $0x159] sm:$0xff]
        %v1230 = vld [vmem:[%s1130 + $0x169] sm:$0xff]
        %v1231 = vld [vmem:[%s1130 + $0x171] sm:$0xff]
        %v1232 = vld [vmem:[#allocation5 + $0x8] sm:$0x1]
        %v1233 = vlaneseq
        %v1234 = vshrl.u32 %v1233, 7
        %v1235 = vsub.s32 0, %v1234
        %v1236 = vrot.slane %v1232, %v1235
        %v1237 = vmul.f32 %v1200, %v1236
        %v1238 = vmul.f32 %v1201, %v1236
        %v1239 = vmul.f32 %v1202, %v1236
        %v1240 = vmul.f32 %v1203, %v1236
        %v1241 = vmul.f32 %v1204, %v1236
        %v1242 = vmul.f32 %v1205, %v1236
        %v1243 = vmul.f32 %v1206, %v1236
        %v1244 = vmul.f32 %v1207, %v1236
        %v1245 = vmul.f32 %v1208, %v1236
        %v1246 = vmul.f32 %v1209, %v1236
        %v1247 = vmul.f32 %v1210, %v1236
        %v1248 = vmul.f32 %v1211, %v1236
        %v1249 = vmul.f32 %v1212, %v1236
        %v1250 = vmul.f32 %v1213, %v1236
        %v1251 = vmul.f32 %v1214, %v1236
        %v1252 = vmul.f32 %v1215, %v1236
        %v1253 = vmul.f32 %v1216, %v1236
        %v1254 = vmul.f32 %v1217, %v1236
        %v1255 = vmul.f32 %v1218, %v1236
        %v1256 = vmul.f32 %v1219, %v1236
        %v1257 = vmul.f32 %v1220, %v1236
        %v1258 = vmul.f32 %v1221, %v1236
        %v1259 = vmul.f32 %v1222, %v1236
        %v1260 = vmul.f32 %v1223, %v1236
        %v1261 = vmul.f32 %v1224, %v1236
        %v1262 = vmul.f32 %v1225, %v1236
        %v1263 = vmul.f32 %v1226, %v1236
        %v1264 = vmul.f32 %v1227, %v1236
        %v1265 = vmul.f32 %v1228, %v1236
        %v1266 = vmul.f32 %v1229, %v1236
        %v1267 = vmul.f32 %v1230, %v1236
        %v1268 = vmul.f32 %v1231, %v1236
        %v1269 = vadd.f32 %v1168, %v1237
        %v1270 = vadd.f32 %v1169, %v1238
        %v1271 = vadd.f32 %v1170, %v1239
        %v1272 = vadd.f32 %v1171, %v1240
        %v1273 = vadd.f32 %v1172, %v1241
        %v1274 = vadd.f32 %v1173, %v1242
        %v1275 = vadd.f32 %v1174, %v1243
        %v1276 = vadd.f32 %v1175, %v1244
        %v1277 = vadd.f32 %v1176, %v1245
        %v1278 = vadd.f32 %v1177, %v1246
        %v1279 = vadd.f32 %v1178, %v1247
        %v1280 = vadd.f32 %v1179, %v1248
        %v1281 = vadd.f32 %v1180, %v1249
        %v1282 = vadd.f32 %v1181, %v1250
        %v1283 = vadd.f32 %v1182, %v1251
        %v1284 = vadd.f32 %v1183, %v1252
        %v1285 = vadd.f32 %v1184, %v1253
        %v1286 = vadd.f32 %v1185, %v1254
        %v1287 = vadd.f32 %v1186, %v1255
        %v1288 = vadd.f32 %v1187, %v1256
        %v1289 = vadd.f32 %v1188, %v1257
        %v1290 = vadd.f32 %v1189, %v1258
        %v1291 = vadd.f32 %v1190, %v1259
        %v1292 = vadd.f32 %v1191, %v1260
        %v1293 = vadd.f32 %v1192, %v1261
        %v1294 = vadd.f32 %v1193, %v1262
        %v1295 = vadd.f32 %v1194, %v1263
        %v1296 = vadd.f32 %v1195, %v1264
        %v1297 = vadd.f32 %v1196, %v1265
        %v1298 = vadd.f32 %v1197, %v1266
        %v1299 = vadd.f32 %v1198, %v1267
        %v1300 = vadd.f32 %v1199, %v1268
        %v1301 = vld [vmem:[%s1130 + $0x2] sm:$0xff]
        %v1302 = vld [vmem:[%s1130 + $0xa] sm:$0xff]
        %v1303 = vld [vmem:[%s1130 + $0x1a] sm:$0xff]
        %v1304 = vld [vmem:[%s1130 + $0x22] sm:$0xff]
        %v1305 = vld [vmem:[%s1130 + $0x32] sm:$0xff]
        %v1306 = vld [vmem:[%s1130 + $0x3a] sm:$0xff]
        %v1307 = vld [vmem:[%s1130 + $0x4a] sm:$0xff]
        %v1308 = vld [vmem:[%s1130 + $0x52] sm:$0xff]
        %v1309 = vld [vmem:[%s1130 + $0x62] sm:$0xff]
        %v1310 = vld [vmem:[%s1130 + $0x6a] sm:$0xff]
        %v1311 = vld [vmem:[%s1130 + $0x7a] sm:$0xff]
        %v1312 = vld [vmem:[%s1130 + $0x82] sm:$0xff]
        %v1313 = vld [vmem:[%s1130 + $0x92] sm:$0xff]
        %v1314 = vld [vmem:[%s1130 + $0x9a] sm:$0xff]
        %v1315 = vld [vmem:[%s1130 + $0xaa] sm:$0xff]
        %v1316 = vld [vmem:[%s1130 + $0xb2] sm:$0xff]
        %v1317 = vld [vmem:[%s1130 + $0xc2] sm:$0xff]
        %v1318 = vld [vmem:[%s1130 + $0xca] sm:$0xff]
        %v1319 = vld [vmem:[%s1130 + $0xda] sm:$0xff]
        %v1320 = vld [vmem:[%s1130 + $0xe2] sm:$0xff]
        %v1321 = vld [vmem:[%s1130 + $0xf2] sm:$0xff]
        %v1322 = vld [vmem:[%s1130 + $0xfa] sm:$0xff]
        %v1323 = vld [vmem:[%s1130 + $0x10a] sm:$0xff]
        %v1324 = vld [vmem:[%s1130 + $0x112] sm:$0xff]
        %v1325 = vld [vmem:[%s1130 + $0x122] sm:$0xff]
        %v1326 = vld [vmem:[%s1130 + $0x12a] sm:$0xff]
        %v1327 = vld [vmem:[%s1130 + $0x13a] sm:$0xff]
        %v1328 = vld [vmem:[%s1130 + $0x142] sm:$0xff]
        %v1329 = vld [vmem:[%s1130 + $0x152] sm:$0xff]
        %v1330 = vld [vmem:[%s1130 + $0x15a] sm:$0xff]
        %v1331 = vld [vmem:[%s1130 + $0x16a] sm:$0xff]
        %v1332 = vld [vmem:[%s1130 + $0x172] sm:$0xff]
        %v1333 = vld [vmem:[#allocation5 + $0x9] sm:$0x1]
        %v1334 = vlaneseq
        %v1335 = vshrl.u32 %v1334, 7
        %v1336 = vsub.s32 0, %v1335
        %v1337 = vrot.slane %v1333, %v1336
        %v1338 = vmul.f32 %v1301, %v1337
        %v1339 = vmul.f32 %v1302, %v1337
        %v1340 = vmul.f32 %v1303, %v1337
        %v1341 = vmul.f32 %v1304, %v1337
        %v1342 = vmul.f32 %v1305, %v1337
        %v1343 = vmul.f32 %v1306, %v1337
        %v1344 = vmul.f32 %v1307, %v1337
        %v1345 = vmul.f32 %v1308, %v1337
        %v1346 = vmul.f32 %v1309, %v1337
        %v1347 = vmul.f32 %v1310, %v1337
        %v1348 = vmul.f32 %v1311, %v1337
        %v1349 = vmul.f32 %v1312, %v1337
        %v1350 = vmul.f32 %v1313, %v1337
        %v1351 = vmul.f32 %v1314, %v1337
        %v1352 = vmul.f32 %v1315, %v1337
        %v1353 = vmul.f32 %v1316, %v1337
        %v1354 = vmul.f32 %v1317, %v1337
        %v1355 = vmul.f32 %v1318, %v1337
        %v1356 = vmul.f32 %v1319, %v1337
        %v1357 = vmul.f32 %v1320, %v1337
        %v1358 = vmul.f32 %v1321, %v1337
        %v1359 = vmul.f32 %v1322, %v1337
        %v1360 = vmul.f32 %v1323, %v1337
        %v1361 = vmul.f32 %v1324, %v1337
        %v1362 = vmul.f32 %v1325, %v1337
        %v1363 = vmul.f32 %v1326, %v1337
        %v1364 = vmul.f32 %v1327, %v1337
        %v1365 = vmul.f32 %v1328, %v1337
        %v1366 = vmul.f32 %v1329, %v1337
        %v1367 = vmul.f32 %v1330, %v1337
        %v1368 = vmul.f32 %v1331, %v1337
        %v1369 = vmul.f32 %v1332, %v1337
        %v1370 = vadd.f32 %v1269, %v1338
        %v1371 = vadd.f32 %v1270, %v1339
        %v1372 = vadd.f32 %v1271, %v1340
        %v1373 = vadd.f32 %v1272, %v1341
        %v1374 = vadd.f32 %v1273, %v1342
        %v1375 = vadd.f32 %v1274, %v1343
        %v1376 = vadd.f32 %v1275, %v1344
        %v1377 = vadd.f32 %v1276, %v1345
        %v1378 = vadd.f32 %v1277, %v1346
        %v1379 = vadd.f32 %v1278, %v1347
        %v1380 = vadd.f32 %v1279, %v1348
        %v1381 = vadd.f32 %v1280, %v1349
        %v1382 = vadd.f32 %v1281, %v1350
        %v1383 = vadd.f32 %v1282, %v1351
        %v1384 = vadd.f32 %v1283, %v1352
        %v1385 = vadd.f32 %v1284, %v1353
        %v1386 = vadd.f32 %v1285, %v1354
        %v1387 = vadd.f32 %v1286, %v1355
        %v1388 = vadd.f32 %v1287, %v1356
        %v1389 = vadd.f32 %v1288, %v1357
        %v1390 = vadd.f32 %v1289, %v1358
        %v1391 = vadd.f32 %v1290, %v1359
        %v1392 = vadd.f32 %v1291, %v1360
        %v1393 = vadd.f32 %v1292, %v1361
        %v1394 = vadd.f32 %v1293, %v1362
        %v1395 = vadd.f32 %v1294, %v1363
        %v1396 = vadd.f32 %v1295, %v1364
        %v1397 = vadd.f32 %v1296, %v1365
        %v1398 = vadd.f32 %v1297, %v1366
        %v1399 = vadd.f32 %v1298, %v1367
        %v1400 = vadd.f32 %v1299, %v1368
        %v1401 = vadd.f32 %v1300, %v1369
        %v1402 = vld [vmem:[%s1130 + $0x3] sm:$0xff]
        %v1403 = vld [vmem:[%s1130 + $0xb] sm:$0xff]
        %v1404 = vld [vmem:[%s1130 + $0x1b] sm:$0xff]
        %v1405 = vld [vmem:[%s1130 + $0x23] sm:$0xff]
        %v1406 = vld [vmem:[%s1130 + $0x33] sm:$0xff]
        %v1407 = vld [vmem:[%s1130 + $0x3b] sm:$0xff]
        %v1408 = vld [vmem:[%s1130 + $0x4b] sm:$0xff]
        %v1409 = vld [vmem:[%s1130 + $0x53] sm:$0xff]
        %v1410 = vld [vmem:[%s1130 + $0x63] sm:$0xff]
        %v1411 = vld [vmem:[%s1130 + $0x6b] sm:$0xff]
        %v1412 = vld [vmem:[%s1130 + $0x7b] sm:$0xff]
        %v1413 = vld [vmem:[%s1130 + $0x83] sm:$0xff]
        %v1414 = vld [vmem:[%s1130 + $0x93] sm:$0xff]
        %v1415 = vld [vmem:[%s1130 + $0x9b] sm:$0xff]
        %v1416 = vld [vmem:[%s1130 + $0xab] sm:$0xff]
        %v1417 = vld [vmem:[%s1130 + $0xb3] sm:$0xff]
        %v1418 = vld [vmem:[%s1130 + $0xc3] sm:$0xff]
        %v1419 = vld [vmem:[%s1130 + $0xcb] sm:$0xff]
        %v1420 = vld [vmem:[%s1130 + $0xdb] sm:$0xff]
        %v1421 = vld [vmem:[%s1130 + $0xe3] sm:$0xff]
        %v1422 = vld [vmem:[%s1130 + $0xf3] sm:$0xff]
        %v1423 = vld [vmem:[%s1130 + $0xfb] sm:$0xff]
        %v1424 = vld [vmem:[%s1130 + $0x10b] sm:$0xff]
        %v1425 = vld [vmem:[%s1130 + $0x113] sm:$0xff]
        %v1426 = vld [vmem:[%s1130 + $0x123] sm:$0xff]
        %v1427 = vld [vmem:[%s1130 + $0x12b] sm:$0xff]
        %v1428 = vld [vmem:[%s1130 + $0x13b] sm:$0xff]
        %v1429 = vld [vmem:[%s1130 + $0x143] sm:$0xff]
        %v1430 = vld [vmem:[%s1130 + $0x153] sm:$0xff]
        %v1431 = vld [vmem:[%s1130 + $0x15b] sm:$0xff]
        %v1432 = vld [vmem:[%s1130 + $0x16b] sm:$0xff]
        %v1433 = vld [vmem:[%s1130 + $0x173] sm:$0xff]
        %v1434 = vld [vmem:[#allocation5 + $0xa] sm:$0x1]
        %v1435 = vlaneseq
        %v1436 = vshrl.u32 %v1435, 7
        %v1437 = vsub.s32 0, %v1436
        %v1438 = vrot.slane %v1434, %v1437
        %v1439 = vmul.f32 %v1402, %v1438
        %v1440 = vmul.f32 %v1403, %v1438
        %v1441 = vmul.f32 %v1404, %v1438
        %v1442 = vmul.f32 %v1405, %v1438
        %v1443 = vmul.f32 %v1406, %v1438
        %v1444 = vmul.f32 %v1407, %v1438
        %v1445 = vmul.f32 %v1408, %v1438
        %v1446 = vmul.f32 %v1409, %v1438
        %v1447 = vmul.f32 %v1410, %v1438
        %v1448 = vmul.f32 %v1411, %v1438
        %v1449 = vmul.f32 %v1412, %v1438
        %v1450 = vmul.f32 %v1413, %v1438
        %v1451 = vmul.f32 %v1414, %v1438
        %v1452 = vmul.f32 %v1415, %v1438
        %v1453 = vmul.f32 %v1416, %v1438
        %v1454 = vmul.f32 %v1417, %v1438
        %v1455 = vmul.f32 %v1418, %v1438
        %v1456 = vmul.f32 %v1419, %v1438
        %v1457 = vmul.f32 %v1420, %v1438
        %v1458 = vmul.f32 %v1421, %v1438
        %v1459 = vmul.f32 %v1422, %v1438
        %v1460 = vmul.f32 %v1423, %v1438
        %v1461 = vmul.f32 %v1424, %v1438
        %v1462 = vmul.f32 %v1425, %v1438
        %v1463 = vmul.f32 %v1426, %v1438
        %v1464 = vmul.f32 %v1427, %v1438
        %v1465 = vmul.f32 %v1428, %v1438
        %v1466 = vmul.f32 %v1429, %v1438
        %v1467 = vmul.f32 %v1430, %v1438
        %v1468 = vmul.f32 %v1431, %v1438
        %v1469 = vmul.f32 %v1432, %v1438
        %v1470 = vmul.f32 %v1433, %v1438
        %v1471 = vadd.f32 %v1370, %v1439
        %v1472 = vadd.f32 %v1371, %v1440
        %v1473 = vadd.f32 %v1372, %v1441
        %v1474 = vadd.f32 %v1373, %v1442
        %v1475 = vadd.f32 %v1374, %v1443
        %v1476 = vadd.f32 %v1375, %v1444
        %v1477 = vadd.f32 %v1376, %v1445
        %v1478 = vadd.f32 %v1377, %v1446
        %v1479 = vadd.f32 %v1378, %v1447
        %v1480 = vadd.f32 %v1379, %v1448
        %v1481 = vadd.f32 %v1380, %v1449
        %v1482 = vadd.f32 %v1381, %v1450
        %v1483 = vadd.f32 %v1382, %v1451
        %v1484 = vadd.f32 %v1383, %v1452
        %v1485 = vadd.f32 %v1384, %v1453
        %v1486 = vadd.f32 %v1385, %v1454
        %v1487 = vadd.f32 %v1386, %v1455
        %v1488 = vadd.f32 %v1387, %v1456
        %v1489 = vadd.f32 %v1388, %v1457
        %v1490 = vadd.f32 %v1389, %v1458
        %v1491 = vadd.f32 %v1390, %v1459
        %v1492 = vadd.f32 %v1391, %v1460
        %v1493 = vadd.f32 %v1392, %v1461
        %v1494 = vadd.f32 %v1393, %v1462
        %v1495 = vadd.f32 %v1394, %v1463
        %v1496 = vadd.f32 %v1395, %v1464
        %v1497 = vadd.f32 %v1396, %v1465
        %v1498 = vadd.f32 %v1397, %v1466
        %v1499 = vadd.f32 %v1398, %v1467
        %v1500 = vadd.f32 %v1399, %v1468
        %v1501 = vadd.f32 %v1400, %v1469
        %v1502 = vadd.f32 %v1401, %v1470
        %v1503 = vld [vmem:[%s1130 + $0x4] sm:$0xff]
        %v1504 = vld [vmem:[%s1130 + $0xc] sm:$0xff]
        %v1505 = vld [vmem:[%s1130 + $0x1c] sm:$0xff]
        %v1506 = vld [vmem:[%s1130 + $0x24] sm:$0xff]
        %v1507 = vld [vmem:[%s1130 + $0x34] sm:$0xff]
        %v1508 = vld [vmem:[%s1130 + $0x3c] sm:$0xff]
        %v1509 = vld [vmem:[%s1130 + $0x4c] sm:$0xff]
        %v1510 = vld [vmem:[%s1130 + $0x54] sm:$0xff]
        %v1511 = vld [vmem:[%s1130 + $0x64] sm:$0xff]
        %v1512 = vld [vmem:[%s1130 + $0x6c] sm:$0xff]
        %v1513 = vld [vmem:[%s1130 + $0x7c] sm:$0xff]
        %v1514 = vld [vmem:[%s1130 + $0x84] sm:$0xff]
        %v1515 = vld [vmem:[%s1130 + $0x94] sm:$0xff]
        %v1516 = vld [vmem:[%s1130 + $0x9c] sm:$0xff]
        %v1517 = vld [vmem:[%s1130 + $0xac] sm:$0xff]
        %v1518 = vld [vmem:[%s1130 + $0xb4] sm:$0xff]
        %v1519 = vld [vmem:[%s1130 + $0xc4] sm:$0xff]
        %v1520 = vld [vmem:[%s1130 + $0xcc] sm:$0xff]
        %v1521 = vld [vmem:[%s1130 + $0xdc] sm:$0xff]
        %v1522 = vld [vmem:[%s1130 + $0xe4] sm:$0xff]
        %v1523 = vld [vmem:[%s1130 + $0xf4] sm:$0xff]
        %v1524 = vld [vmem:[%s1130 + $0xfc] sm:$0xff]
        %v1525 = vld [vmem:[%s1130 + $0x10c] sm:$0xff]
        %v1526 = vld [vmem:[%s1130 + $0x114] sm:$0xff]
        %v1527 = vld [vmem:[%s1130 + $0x124] sm:$0xff]
        %v1528 = vld [vmem:[%s1130 + $0x12c] sm:$0xff]
        %v1529 = vld [vmem:[%s1130 + $0x13c] sm:$0xff]
        %v1530 = vld [vmem:[%s1130 + $0x144] sm:$0xff]
        %v1531 = vld [vmem:[%s1130 + $0x154] sm:$0xff]
        %v1532 = vld [vmem:[%s1130 + $0x15c] sm:$0xff]
        %v1533 = vld [vmem:[%s1130 + $0x16c] sm:$0xff]
        %v1534 = vld [vmem:[%s1130 + $0x174] sm:$0xff]
        %v1535 = vld [vmem:[#allocation5 + $0xb] sm:$0x1]
        %v1536 = vlaneseq
        %v1537 = vshrl.u32 %v1536, 7
        %v1538 = vsub.s32 0, %v1537
        %v1539 = vrot.slane %v1535, %v1538
        %v1540 = vmul.f32 %v1503, %v1539
        %v1541 = vmul.f32 %v1504, %v1539
        %v1542 = vmul.f32 %v1505, %v1539
        %v1543 = vmul.f32 %v1506, %v1539
        %v1544 = vmul.f32 %v1507, %v1539
        %v1545 = vmul.f32 %v1508, %v1539
        %v1546 = vmul.f32 %v1509, %v1539
        %v1547 = vmul.f32 %v1510, %v1539
        %v1548 = vmul.f32 %v1511, %v1539
        %v1549 = vmul.f32 %v1512, %v1539
        %v1550 = vmul.f32 %v1513, %v1539
        %v1551 = vmul.f32 %v1514, %v1539
        %v1552 = vmul.f32 %v1515, %v1539
        %v1553 = vmul.f32 %v1516, %v1539
        %v1554 = vmul.f32 %v1517, %v1539
        %v1555 = vmul.f32 %v1518, %v1539
        %v1556 = vmul.f32 %v1519, %v1539
        %v1557 = vmul.f32 %v1520, %v1539
        %v1558 = vmul.f32 %v1521, %v1539
        %v1559 = vmul.f32 %v1522, %v1539
        %v1560 = vmul.f32 %v1523, %v1539
        %v1561 = vmul.f32 %v1524, %v1539
        %v1562 = vmul.f32 %v1525, %v1539
        %v1563 = vmul.f32 %v1526, %v1539
        %v1564 = vmul.f32 %v1527, %v1539
        %v1565 = vmul.f32 %v1528, %v1539
        %v1566 = vmul.f32 %v1529, %v1539
        %v1567 = vmul.f32 %v1530, %v1539
        %v1568 = vmul.f32 %v1531, %v1539
        %v1569 = vmul.f32 %v1532, %v1539
        %v1570 = vmul.f32 %v1533, %v1539
        %v1571 = vmul.f32 %v1534, %v1539
        %v1572 = vadd.f32 %v1471, %v1540
        %v1573 = vadd.f32 %v1472, %v1541
        %v1574 = vadd.f32 %v1473, %v1542
        %v1575 = vadd.f32 %v1474, %v1543
        %v1576 = vadd.f32 %v1475, %v1544
        %v1577 = vadd.f32 %v1476, %v1545
        %v1578 = vadd.f32 %v1477, %v1546
        %v1579 = vadd.f32 %v1478, %v1547
        %v1580 = vadd.f32 %v1479, %v1548
        %v1581 = vadd.f32 %v1480, %v1549
        %v1582 = vadd.f32 %v1481, %v1550
        %v1583 = vadd.f32 %v1482, %v1551
        %v1584 = vadd.f32 %v1483, %v1552
        %v1585 = vadd.f32 %v1484, %v1553
        %v1586 = vadd.f32 %v1485, %v1554
        %v1587 = vadd.f32 %v1486, %v1555
        %v1588 = vadd.f32 %v1487, %v1556
        %v1589 = vadd.f32 %v1488, %v1557
        %v1590 = vadd.f32 %v1489, %v1558
        %v1591 = vadd.f32 %v1490, %v1559
        %v1592 = vadd.f32 %v1491, %v1560
        %v1593 = vadd.f32 %v1492, %v1561
        %v1594 = vadd.f32 %v1493, %v1562
        %v1595 = vadd.f32 %v1494, %v1563
        %v1596 = vadd.f32 %v1495, %v1564
        %v1597 = vadd.f32 %v1496, %v1565
        %v1598 = vadd.f32 %v1497, %v1566
        %v1599 = vadd.f32 %v1498, %v1567
        %v1600 = vadd.f32 %v1499, %v1568
        %v1601 = vadd.f32 %v1500, %v1569
        %v1602 = vadd.f32 %v1501, %v1570
        %v1603 = vadd.f32 %v1502, %v1571
        %v1604 = vld [vmem:[%s1130 + $0x5] sm:$0xff]
        %v1605 = vld [vmem:[%s1130 + $0xd] sm:$0xff]
        %v1606 = vld [vmem:[%s1130 + $0x1d] sm:$0xff]
        %v1607 = vld [vmem:[%s1130 + $0x25] sm:$0xff]
        %v1608 = vld [vmem:[%s1130 + $0x35] sm:$0xff]
        %v1609 = vld [vmem:[%s1130 + $0x3d] sm:$0xff]
        %v1610 = vld [vmem:[%s1130 + $0x4d] sm:$0xff]
        %v1611 = vld [vmem:[%s1130 + $0x55] sm:$0xff]
        %v1612 = vld [vmem:[%s1130 + $0x65] sm:$0xff]
        %v1613 = vld [vmem:[%s1130 + $0x6d] sm:$0xff]
        %v1614 = vld [vmem:[%s1130 + $0x7d] sm:$0xff]
        %v1615 = vld [vmem:[%s1130 + $0x85] sm:$0xff]
        %v1616 = vld [vmem:[%s1130 + $0x95] sm:$0xff]
        %v1617 = vld [vmem:[%s1130 + $0x9d] sm:$0xff]
        %v1618 = vld [vmem:[%s1130 + $0xad] sm:$0xff]
        %v1619 = vld [vmem:[%s1130 + $0xb5] sm:$0xff]
        %v1620 = vld [vmem:[%s1130 + $0xc5] sm:$0xff]
        %v1621 = vld [vmem:[%s1130 + $0xcd] sm:$0xff]
        %v1622 = vld [vmem:[%s1130 + $0xdd] sm:$0xff]
        %v1623 = vld [vmem:[%s1130 + $0xe5] sm:$0xff]
        %v1624 = vld [vmem:[%s1130 + $0xf5] sm:$0xff]
        %v1625 = vld [vmem:[%s1130 + $0xfd] sm:$0xff]
        %v1626 = vld [vmem:[%s1130 + $0x10d] sm:$0xff]
        %v1627 = vld [vmem:[%s1130 + $0x115] sm:$0xff]
        %v1628 = vld [vmem:[%s1130 + $0x125] sm:$0xff]
        %v1629 = vld [vmem:[%s1130 + $0x12d] sm:$0xff]
        %v1630 = vld [vmem:[%s1130 + $0x13d] sm:$0xff]
        %v1631 = vld [vmem:[%s1130 + $0x145] sm:$0xff]
        %v1632 = vld [vmem:[%s1130 + $0x155] sm:$0xff]
        %v1633 = vld [vmem:[%s1130 + $0x15d] sm:$0xff]
        %v1634 = vld [vmem:[%s1130 + $0x16d] sm:$0xff]
        %v1635 = vld [vmem:[%s1130 + $0x175] sm:$0xff]
        %v1636 = vld [vmem:[#allocation5 + $0xc] sm:$0x1]
        %v1637 = vlaneseq
        %v1638 = vshrl.u32 %v1637, 7
        %v1639 = vsub.s32 0, %v1638
        %v1640 = vrot.slane %v1636, %v1639
        %v1641 = vmul.f32 %v1604, %v1640
        %v1642 = vmul.f32 %v1605, %v1640
        %v1643 = vmul.f32 %v1606, %v1640
        %v1644 = vmul.f32 %v1607, %v1640
        %v1645 = vmul.f32 %v1608, %v1640
        %v1646 = vmul.f32 %v1609, %v1640
        %v1647 = vmul.f32 %v1610, %v1640
        %v1648 = vmul.f32 %v1611, %v1640
        %v1649 = vmul.f32 %v1612, %v1640
        %v1650 = vmul.f32 %v1613, %v1640
        %v1651 = vmul.f32 %v1614, %v1640
        %v1652 = vmul.f32 %v1615, %v1640
        %v1653 = vmul.f32 %v1616, %v1640
        %v1654 = vmul.f32 %v1617, %v1640
        %v1655 = vmul.f32 %v1618, %v1640
        %v1656 = vmul.f32 %v1619, %v1640
        %v1657 = vmul.f32 %v1620, %v1640
        %v1658 = vmul.f32 %v1621, %v1640
        %v1659 = vmul.f32 %v1622, %v1640
        %v1660 = vmul.f32 %v1623, %v1640
        %v1661 = vmul.f32 %v1624, %v1640
        %v1662 = vmul.f32 %v1625, %v1640
        %v1663 = vmul.f32 %v1626, %v1640
        %v1664 = vmul.f32 %v1627, %v1640
        %v1665 = vmul.f32 %v1628, %v1640
        %v1666 = vmul.f32 %v1629, %v1640
        %v1667 = vmul.f32 %v1630, %v1640
        %v1668 = vmul.f32 %v1631, %v1640
        %v1669 = vmul.f32 %v1632, %v1640
        %v1670 = vmul.f32 %v1633, %v1640
        %v1671 = vmul.f32 %v1634, %v1640
        %v1672 = vmul.f32 %v1635, %v1640
        %v1673 = vadd.f32 %v1572, %v1641
        %v1674 = vadd.f32 %v1573, %v1642
        %v1675 = vadd.f32 %v1574, %v1643
        %v1676 = vadd.f32 %v1575, %v1644
        %v1677 = vadd.f32 %v1576, %v1645
        %v1678 = vadd.f32 %v1577, %v1646
        %v1679 = vadd.f32 %v1578, %v1647
        %v1680 = vadd.f32 %v1579, %v1648
        %v1681 = vadd.f32 %v1580, %v1649
        %v1682 = vadd.f32 %v1581, %v1650
        %v1683 = vadd.f32 %v1582, %v1651
        %v1684 = vadd.f32 %v1583, %v1652
        %v1685 = vadd.f32 %v1584, %v1653
        %v1686 = vadd.f32 %v1585, %v1654
        %v1687 = vadd.f32 %v1586, %v1655
        %v1688 = vadd.f32 %v1587, %v1656
        %v1689 = vadd.f32 %v1588, %v1657
        %v1690 = vadd.f32 %v1589, %v1658
        %v1691 = vadd.f32 %v1590, %v1659
        %v1692 = vadd.f32 %v1591, %v1660
        %v1693 = vadd.f32 %v1592, %v1661
        %v1694 = vadd.f32 %v1593, %v1662
        %v1695 = vadd.f32 %v1594, %v1663
        %v1696 = vadd.f32 %v1595, %v1664
        %v1697 = vadd.f32 %v1596, %v1665
        %v1698 = vadd.f32 %v1597, %v1666
        %v1699 = vadd.f32 %v1598, %v1667
        %v1700 = vadd.f32 %v1599, %v1668
        %v1701 = vadd.f32 %v1600, %v1669
        %v1702 = vadd.f32 %v1601, %v1670
        %v1703 = vadd.f32 %v1602, %v1671
        %v1704 = vadd.f32 %v1603, %v1672
        %v1705 = vld [vmem:[%s1130 + $0x6] sm:$0xff]
        %v1706 = vld [vmem:[%s1130 + $0xe] sm:$0xff]
        %v1707 = vld [vmem:[%s1130 + $0x1e] sm:$0xff]
        %v1708 = vld [vmem:[%s1130 + $0x26] sm:$0xff]
        %v1709 = vld [vmem:[%s1130 + $0x36] sm:$0xff]
        %v1710 = vld [vmem:[%s1130 + $0x3e] sm:$0xff]
        %v1711 = vld [vmem:[%s1130 + $0x4e] sm:$0xff]
        %v1712 = vld [vmem:[%s1130 + $0x56] sm:$0xff]
        %v1713 = vld [vmem:[%s1130 + $0x66] sm:$0xff]
        %v1714 = vld [vmem:[%s1130 + $0x6e] sm:$0xff]
        %v1715 = vld [vmem:[%s1130 + $0x7e] sm:$0xff]
        %v1716 = vld [vmem:[%s1130 + $0x86] sm:$0xff]
        %v1717 = vld [vmem:[%s1130 + $0x96] sm:$0xff]
        %v1718 = vld [vmem:[%s1130 + $0x9e] sm:$0xff]
        %v1719 = vld [vmem:[%s1130 + $0xae] sm:$0xff]
        %v1720 = vld [vmem:[%s1130 + $0xb6] sm:$0xff]
        %v1721 = vld [vmem:[%s1130 + $0xc6] sm:$0xff]
        %v1722 = vld [vmem:[%s1130 + $0xce] sm:$0xff]
        %v1723 = vld [vmem:[%s1130 + $0xde] sm:$0xff]
        %v1724 = vld [vmem:[%s1130 + $0xe6] sm:$0xff]
        %v1725 = vld [vmem:[%s1130 + $0xf6] sm:$0xff]
        %v1726 = vld [vmem:[%s1130 + $0xfe] sm:$0xff]
        %v1727 = vld [vmem:[%s1130 + $0x10e] sm:$0xff]
        %v1728 = vld [vmem:[%s1130 + $0x116] sm:$0xff]
        %v1729 = vld [vmem:[%s1130 + $0x126] sm:$0xff]
        %v1730 = vld [vmem:[%s1130 + $0x12e] sm:$0xff]
        %v1731 = vld [vmem:[%s1130 + $0x13e] sm:$0xff]
        %v1732 = vld [vmem:[%s1130 + $0x146] sm:$0xff]
        %v1733 = vld [vmem:[%s1130 + $0x156] sm:$0xff]
        %v1734 = vld [vmem:[%s1130 + $0x15e] sm:$0xff]
        %v1735 = vld [vmem:[%s1130 + $0x16e] sm:$0xff]
        %v1736 = vld [vmem:[%s1130 + $0x176] sm:$0xff]
        %v1737 = vld [vmem:[#allocation5 + $0xd] sm:$0x1]
        %v1738 = vlaneseq
        %v1739 = vshrl.u32 %v1738, 7
        %v1740 = vsub.s32 0, %v1739
        %v1741 = vrot.slane %v1737, %v1740
        %v1742 = vmul.f32 %v1705, %v1741
        %v1743 = vmul.f32 %v1706, %v1741
        %v1744 = vmul.f32 %v1707, %v1741
        %v1745 = vmul.f32 %v1708, %v1741
        %v1746 = vmul.f32 %v1709, %v1741
        %v1747 = vmul.f32 %v1710, %v1741
        %v1748 = vmul.f32 %v1711, %v1741
        %v1749 = vmul.f32 %v1712, %v1741
        %v1750 = vmul.f32 %v1713, %v1741
        %v1751 = vmul.f32 %v1714, %v1741
        %v1752 = vmul.f32 %v1715, %v1741
        %v1753 = vmul.f32 %v1716, %v1741
        %v1754 = vmul.f32 %v1717, %v1741
        %v1755 = vmul.f32 %v1718, %v1741
        %v1756 = vmul.f32 %v1719, %v1741
        %v1757 = vmul.f32 %v1720, %v1741
        %v1758 = vmul.f32 %v1721, %v1741
        %v1759 = vmul.f32 %v1722, %v1741
        %v1760 = vmul.f32 %v1723, %v1741
        %v1761 = vmul.f32 %v1724, %v1741
        %v1762 = vmul.f32 %v1725, %v1741
        %v1763 = vmul.f32 %v1726, %v1741
        %v1764 = vmul.f32 %v1727, %v1741
        %v1765 = vmul.f32 %v1728, %v1741
        %v1766 = vmul.f32 %v1729, %v1741
        %v1767 = vmul.f32 %v1730, %v1741
        %v1768 = vmul.f32 %v1731, %v1741
        %v1769 = vmul.f32 %v1732, %v1741
        %v1770 = vmul.f32 %v1733, %v1741
        %v1771 = vmul.f32 %v1734, %v1741
        %v1772 = vmul.f32 %v1735, %v1741
        %v1773 = vmul.f32 %v1736, %v1741
        %v1774 = vadd.f32 %v1673, %v1742
        %v1775 = vadd.f32 %v1674, %v1743
        %v1776 = vadd.f32 %v1675, %v1744
        %v1777 = vadd.f32 %v1676, %v1745
        %v1778 = vadd.f32 %v1677, %v1746
        %v1779 = vadd.f32 %v1678, %v1747
        %v1780 = vadd.f32 %v1679, %v1748
        %v1781 = vadd.f32 %v1680, %v1749
        %v1782 = vadd.f32 %v1681, %v1750
        %v1783 = vadd.f32 %v1682, %v1751
        %v1784 = vadd.f32 %v1683, %v1752
        %v1785 = vadd.f32 %v1684, %v1753
        %v1786 = vadd.f32 %v1685, %v1754
        %v1787 = vadd.f32 %v1686, %v1755
        %v1788 = vadd.f32 %v1687, %v1756
        %v1789 = vadd.f32 %v1688, %v1757
        %v1790 = vadd.f32 %v1689, %v1758
        %v1791 = vadd.f32 %v1690, %v1759
        %v1792 = vadd.f32 %v1691, %v1760
        %v1793 = vadd.f32 %v1692, %v1761
        %v1794 = vadd.f32 %v1693, %v1762
        %v1795 = vadd.f32 %v1694, %v1763
        %v1796 = vadd.f32 %v1695, %v1764
        %v1797 = vadd.f32 %v1696, %v1765
        %v1798 = vadd.f32 %v1697, %v1766
        %v1799 = vadd.f32 %v1698, %v1767
        %v1800 = vadd.f32 %v1699, %v1768
        %v1801 = vadd.f32 %v1700, %v1769
        %v1802 = vadd.f32 %v1701, %v1770
        %v1803 = vadd.f32 %v1702, %v1771
        %v1804 = vadd.f32 %v1703, %v1772
        %v1805 = vadd.f32 %v1704, %v1773
        %v1806 = vld [vmem:[#allocation3] sm:$0xff]
        %v1807 = vld [vmem:[#allocation3 + $0x8] sm:$0xff]
        %v1808 = vld [vmem:[#allocation3 + $0x10] sm:$0xff]
        %v1809 = vld [vmem:[#allocation3 + $0x18] sm:$0xff]
        %v1810 = vld [vmem:[#allocation3 + $0x20] sm:$0xff]
        %v1811 = vld [vmem:[#allocation3 + $0x28] sm:$0xff]
        %v1812 = vld [vmem:[#allocation3 + $0x30] sm:$0xff]
        %v1813 = vld [vmem:[#allocation3 + $0x38] sm:$0xff]
        %v1814 = vld [vmem:[#allocation3 + $0x40] sm:$0xff]
        %v1815 = vld [vmem:[#allocation3 + $0x48] sm:$0xff]
        %v1816 = vld [vmem:[#allocation3 + $0x50] sm:$0xff]
        %v1817 = vld [vmem:[#allocation3 + $0x58] sm:$0xff]
        %v1818 = vld [vmem:[#allocation3 + $0x60] sm:$0xff]
        %v1819 = vld [vmem:[#allocation3 + $0x68] sm:$0xff]
        %v1820 = vld [vmem:[#allocation3 + $0x70] sm:$0xff]
        %v1821 = vld [vmem:[#allocation3 + $0x78] sm:$0xff]
        %v1822 = vld [vmem:[#allocation3 + $0x80] sm:$0xff]
        %v1823 = vld [vmem:[#allocation3 + $0x88] sm:$0xff]
        %v1824 = vld [vmem:[#allocation3 + $0x90] sm:$0xff]
        %v1825 = vld [vmem:[#allocation3 + $0x98] sm:$0xff]
        %v1826 = vld [vmem:[#allocation3 + $0xa0] sm:$0xff]
        %v1827 = vld [vmem:[#allocation3 + $0xa8] sm:$0xff]
        %v1828 = vld [vmem:[#allocation3 + $0xb0] sm:$0xff]
        %v1829 = vld [vmem:[#allocation3 + $0xb8] sm:$0xff]
        %v1830 = vld [vmem:[#allocation3 + $0xc0] sm:$0xff]
        %v1831 = vld [vmem:[#allocation3 + $0xc8] sm:$0xff]
        %v1832 = vld [vmem:[#allocation3 + $0xd0] sm:$0xff]
        %v1833 = vld [vmem:[#allocation3 + $0xd8] sm:$0xff]
        %v1834 = vld [vmem:[#allocation3 + $0xe0] sm:$0xff]
        %v1835 = vld [vmem:[#allocation3 + $0xe8] sm:$0xff]
        %v1836 = vld [vmem:[#allocation3 + $0xf0] sm:$0xff]
        %v1837 = vld [vmem:[#allocation3 + $0xf8] sm:$0xff]
        %v1838 = vadd.f32 %v1806, %v1774
        %v1839 = vadd.f32 %v1807, %v1775
        %v1840 = vadd.f32 %v1808, %v1776
        %v1841 = vadd.f32 %v1809, %v1777
        %v1842 = vadd.f32 %v1810, %v1778
        %v1843 = vadd.f32 %v1811, %v1779
        %v1844 = vadd.f32 %v1812, %v1780
        %v1845 = vadd.f32 %v1813, %v1781
        %v1846 = vadd.f32 %v1814, %v1782
        %v1847 = vadd.f32 %v1815, %v1783
        %v1848 = vadd.f32 %v1816, %v1784
        %v1849 = vadd.f32 %v1817, %v1785
        %v1850 = vadd.f32 %v1818, %v1786
        %v1851 = vadd.f32 %v1819, %v1787
        %v1852 = vadd.f32 %v1820, %v1788
        %v1853 = vadd.f32 %v1821, %v1789
        %v1854 = vadd.f32 %v1822, %v1790
        %v1855 = vadd.f32 %v1823, %v1791
        %v1856 = vadd.f32 %v1824, %v1792
        %v1857 = vadd.f32 %v1825, %v1793
        %v1858 = vadd.f32 %v1826, %v1794
        %v1859 = vadd.f32 %v1827, %v1795
        %v1860 = vadd.f32 %v1828, %v1796
        %v1861 = vadd.f32 %v1829, %v1797
        %v1862 = vadd.f32 %v1830, %v1798
        %v1863 = vadd.f32 %v1831, %v1799
        %v1864 = vadd.f32 %v1832, %v1800
        %v1865 = vadd.f32 %v1833, %v1801
        %v1866 = vadd.f32 %v1834, %v1802
        %v1867 = vadd.f32 %v1835, %v1803
        %v1868 = vadd.f32 %v1836, %v1804
        %v1869 = vadd.f32 %v1837, %v1805
        %1870 = vst [vmem:[#allocation3] sm:$0xff] %v1838
        %1871 = vst [vmem:[#allocation3 + $0x8] sm:$0xff] %v1839
        %1872 = vst [vmem:[#allocation3 + $0x10] sm:$0xff] %v1840
        %1873 = vst [vmem:[#allocation3 + $0x18] sm:$0xff] %v1841
        %1874 = vst [vmem:[#allocation3 + $0x20] sm:$0xff] %v1842
        %1875 = vst [vmem:[#allocation3 + $0x28] sm:$0xff] %v1843
        %1876 = vst [vmem:[#allocation3 + $0x30] sm:$0xff] %v1844
        %1877 = vst [vmem:[#allocation3 + $0x38] sm:$0xff] %v1845
        %1878 = vst [vmem:[#allocation3 + $0x40] sm:$0xff] %v1846
        %1879 = vst [vmem:[#allocation3 + $0x48] sm:$0xff] %v1847
        %1880 = vst [vmem:[#allocation3 + $0x50] sm:$0xff] %v1848
        %1881 = vst [vmem:[#allocation3 + $0x58] sm:$0xff] %v1849
        %1882 = vst [vmem:[#allocation3 + $0x60] sm:$0xff] %v1850
        %1883 = vst [vmem:[#allocation3 + $0x68] sm:$0xff] %v1851
        %1884 = vst [vmem:[#allocation3 + $0x70] sm:$0xff] %v1852
        %1885 = vst [vmem:[#allocation3 + $0x78] sm:$0xff] %v1853
        %1886 = vst [vmem:[#allocation3 + $0x80] sm:$0xff] %v1854
        %1887 = vst [vmem:[#allocation3 + $0x88] sm:$0xff] %v1855
        %1888 = vst [vmem:[#allocation3 + $0x90] sm:$0xff] %v1856
        %1889 = vst [vmem:[#allocation3 + $0x98] sm:$0xff] %v1857
        %1890 = vst [vmem:[#allocation3 + $0xa0] sm:$0xff] %v1858
        %1891 = vst [vmem:[#allocation3 + $0xa8] sm:$0xff] %v1859
        %1892 = vst [vmem:[#allocation3 + $0xb0] sm:$0xff] %v1860
        %1893 = vst [vmem:[#allocation3 + $0xb8] sm:$0xff] %v1861
        %1894 = vst [vmem:[#allocation3 + $0xc0] sm:$0xff] %v1862
        %1895 = vst [vmem:[#allocation3 + $0xc8] sm:$0xff] %v1863
        %1896 = vst [vmem:[#allocation3 + $0xd0] sm:$0xff] %v1864
        %1897 = vst [vmem:[#allocation3 + $0xd8] sm:$0xff] %v1865
        %1898 = vst [vmem:[#allocation3 + $0xe0] sm:$0xff] %v1866
        %1899 = vst [vmem:[#allocation3 + $0xe8] sm:$0xff] %v1867
        %1900 = vst [vmem:[#allocation3 + $0xf0] sm:$0xff] %v1868
        %1901 = vst [vmem:[#allocation3 + $0xf8] sm:$0xff] %v1869
        %s1902 = scalar_lea.vmem [#allocation2], 48
        %v1903 = vld [vmem:[%s1902] sm:$0xff]
        %v1904 = vld [vmem:[%s1902 + $0x8] sm:$0xff]
        %v1905 = vld [vmem:[%s1902 + $0x18] sm:$0xff]
        %v1906 = vld [vmem:[%s1902 + $0x20] sm:$0xff]
        %v1907 = vld [vmem:[%s1902 + $0x30] sm:$0xff]
        %v1908 = vld [vmem:[%s1902 + $0x38] sm:$0xff]
        %v1909 = vld [vmem:[%s1902 + $0x48] sm:$0xff]
        %v1910 = vld [vmem:[%s1902 + $0x50] sm:$0xff]
        %v1911 = vld [vmem:[%s1902 + $0x60] sm:$0xff]
        %v1912 = vld [vmem:[%s1902 + $0x68] sm:$0xff]
        %v1913 = vld [vmem:[%s1902 + $0x78] sm:$0xff]
        %v1914 = vld [vmem:[%s1902 + $0x80] sm:$0xff]
        %v1915 = vld [vmem:[%s1902 + $0x90] sm:$0xff]
        %v1916 = vld [vmem:[%s1902 + $0x98] sm:$0xff]
        %v1917 = vld [vmem:[%s1902 + $0xa8] sm:$0xff]
        %v1918 = vld [vmem:[%s1902 + $0xb0] sm:$0xff]
        %v1919 = vld [vmem:[%s1902 + $0xc0] sm:$0xff]
        %v1920 = vld [vmem:[%s1902 + $0xc8] sm:$0xff]
        %v1921 = vld [vmem:[%s1902 + $0xd8] sm:$0xff]
        %v1922 = vld [vmem:[%s1902 + $0xe0] sm:$0xff]
        %v1923 = vld [vmem:[%s1902 + $0xf0] sm:$0xff]
        %v1924 = vld [vmem:[%s1902 + $0xf8] sm:$0xff]
        %v1925 = vld [vmem:[%s1902 + $0x108] sm:$0xff]
        %v1926 = vld [vmem:[%s1902 + $0x110] sm:$0xff]
        %v1927 = vld [vmem:[%s1902 + $0x120] sm:$0xff]
        %v1928 = vld [vmem:[%s1902 + $0x128] sm:$0xff]
        %v1929 = vld [vmem:[%s1902 + $0x138] sm:$0xff]
        %v1930 = vld [vmem:[%s1902 + $0x140] sm:$0xff]
        %v1931 = vld [vmem:[%s1902 + $0x150] sm:$0xff]
        %v1932 = vld [vmem:[%s1902 + $0x158] sm:$0xff]
        %v1933 = vld [vmem:[%s1902 + $0x168] sm:$0xff]
        %v1934 = vld [vmem:[%s1902 + $0x170] sm:$0xff]
        %v1935 = vld [vmem:[#allocation5 + $0xe] sm:$0x1]
        %v1936 = vlaneseq
        %v1937 = vshrl.u32 %v1936, 7
        %v1938 = vsub.s32 0, %v1937
        %v1939 = vrot.slane %v1935, %v1938
        %v1940 = vmul.f32 %v1903, %v1939
        %v1941 = vmul.f32 %v1904, %v1939
        %v1942 = vmul.f32 %v1905, %v1939
        %v1943 = vmul.f32 %v1906, %v1939
        %v1944 = vmul.f32 %v1907, %v1939
        %v1945 = vmul.f32 %v1908, %v1939
        %v1946 = vmul.f32 %v1909, %v1939
        %v1947 = vmul.f32 %v1910, %v1939
        %v1948 = vmul.f32 %v1911, %v1939
        %v1949 = vmul.f32 %v1912, %v1939
        %v1950 = vmul.f32 %v1913, %v1939
        %v1951 = vmul.f32 %v1914, %v1939
        %v1952 = vmul.f32 %v1915, %v1939
        %v1953 = vmul.f32 %v1916, %v1939
        %v1954 = vmul.f32 %v1917, %v1939
        %v1955 = vmul.f32 %v1918, %v1939
        %v1956 = vmul.f32 %v1919, %v1939
        %v1957 = vmul.f32 %v1920, %v1939
        %v1958 = vmul.f32 %v1921, %v1939
        %v1959 = vmul.f32 %v1922, %v1939
        %v1960 = vmul.f32 %v1923, %v1939
        %v1961 = vmul.f32 %v1924, %v1939
        %v1962 = vmul.f32 %v1925, %v1939
        %v1963 = vmul.f32 %v1926, %v1939
        %v1964 = vmul.f32 %v1927, %v1939
        %v1965 = vmul.f32 %v1928, %v1939
        %v1966 = vmul.f32 %v1929, %v1939
        %v1967 = vmul.f32 %v1930, %v1939
        %v1968 = vmul.f32 %v1931, %v1939
        %v1969 = vmul.f32 %v1932, %v1939
        %v1970 = vmul.f32 %v1933, %v1939
        %v1971 = vmul.f32 %v1934, %v1939
        %v1972 = vld [vmem:[%s1902 + $0x1] sm:$0xff]
        %v1973 = vld [vmem:[%s1902 + $0x9] sm:$0xff]
        %v1974 = vld [vmem:[%s1902 + $0x19] sm:$0xff]
        %v1975 = vld [vmem:[%s1902 + $0x21] sm:$0xff]
        %v1976 = vld [vmem:[%s1902 + $0x31] sm:$0xff]
        %v1977 = vld [vmem:[%s1902 + $0x39] sm:$0xff]
        %v1978 = vld [vmem:[%s1902 + $0x49] sm:$0xff]
        %v1979 = vld [vmem:[%s1902 + $0x51] sm:$0xff]
        %v1980 = vld [vmem:[%s1902 + $0x61] sm:$0xff]
        %v1981 = vld [vmem:[%s1902 + $0x69] sm:$0xff]
        %v1982 = vld [vmem:[%s1902 + $0x79] sm:$0xff]
        %v1983 = vld [vmem:[%s1902 + $0x81] sm:$0xff]
        %v1984 = vld [vmem:[%s1902 + $0x91] sm:$0xff]
        %v1985 = vld [vmem:[%s1902 + $0x99] sm:$0xff]
        %v1986 = vld [vmem:[%s1902 + $0xa9] sm:$0xff]
        %v1987 = vld [vmem:[%s1902 + $0xb1] sm:$0xff]
        %v1988 = vld [vmem:[%s1902 + $0xc1] sm:$0xff]
        %v1989 = vld [vmem:[%s1902 + $0xc9] sm:$0xff]
        %v1990 = vld [vmem:[%s1902 + $0xd9] sm:$0xff]
        %v1991 = vld [vmem:[%s1902 + $0xe1] sm:$0xff]
        %v1992 = vld [vmem:[%s1902 + $0xf1] sm:$0xff]
        %v1993 = vld [vmem:[%s1902 + $0xf9] sm:$0xff]
        %v1994 = vld [vmem:[%s1902 + $0x109] sm:$0xff]
        %v1995 = vld [vmem:[%s1902 + $0x111] sm:$0xff]
        %v1996 = vld [vmem:[%s1902 + $0x121] sm:$0xff]
        %v1997 = vld [vmem:[%s1902 + $0x129] sm:$0xff]
        %v1998 = vld [vmem:[%s1902 + $0x139] sm:$0xff]
        %v1999 = vld [vmem:[%s1902 + $0x141] sm:$0xff]
        %v2000 = vld [vmem:[%s1902 + $0x151] sm:$0xff]
        %v2001 = vld [vmem:[%s1902 + $0x159] sm:$0xff]
        %v2002 = vld [vmem:[%s1902 + $0x169] sm:$0xff]
        %v2003 = vld [vmem:[%s1902 + $0x171] sm:$0xff]
        %v2004 = vld [vmem:[#allocation5 + $0xf] sm:$0x1]
        %v2005 = vlaneseq
        %v2006 = vshrl.u32 %v2005, 7
        %v2007 = vsub.s32 0, %v2006
        %v2008 = vrot.slane %v2004, %v2007
        %v2009 = vmul.f32 %v1972, %v2008
        %v2010 = vmul.f32 %v1973, %v2008
        %v2011 = vmul.f32 %v1974, %v2008
        %v2012 = vmul.f32 %v1975, %v2008
        %v2013 = vmul.f32 %v1976, %v2008
        %v2014 = vmul.f32 %v1977, %v2008
        %v2015 = vmul.f32 %v1978, %v2008
        %v2016 = vmul.f32 %v1979, %v2008
        %v2017 = vmul.f32 %v1980, %v2008
        %v2018 = vmul.f32 %v1981, %v2008
        %v2019 = vmul.f32 %v1982, %v2008
        %v2020 = vmul.f32 %v1983, %v2008
        %v2021 = vmul.f32 %v1984, %v2008
        %v2022 = vmul.f32 %v1985, %v2008
        %v2023 = vmul.f32 %v1986, %v2008
        %v2024 = vmul.f32 %v1987, %v2008
        %v2025 = vmul.f32 %v1988, %v2008
        %v2026 = vmul.f32 %v1989, %v2008
        %v2027 = vmul.f32 %v1990, %v2008
        %v2028 = vmul.f32 %v1991, %v2008
        %v2029 = vmul.f32 %v1992, %v2008
        %v2030 = vmul.f32 %v1993, %v2008
        %v2031 = vmul.f32 %v1994, %v2008
        %v2032 = vmul.f32 %v1995, %v2008
        %v2033 = vmul.f32 %v1996, %v2008
        %v2034 = vmul.f32 %v1997, %v2008
        %v2035 = vmul.f32 %v1998, %v2008
        %v2036 = vmul.f32 %v1999, %v2008
        %v2037 = vmul.f32 %v2000, %v2008
        %v2038 = vmul.f32 %v2001, %v2008
        %v2039 = vmul.f32 %v2002, %v2008
        %v2040 = vmul.f32 %v2003, %v2008
        %v2041 = vadd.f32 %v1940, %v2009
        %v2042 = vadd.f32 %v1941, %v2010
        %v2043 = vadd.f32 %v1942, %v2011
        %v2044 = vadd.f32 %v1943, %v2012
        %v2045 = vadd.f32 %v1944, %v2013
        %v2046 = vadd.f32 %v1945, %v2014
        %v2047 = vadd.f32 %v1946, %v2015
        %v2048 = vadd.f32 %v1947, %v2016
        %v2049 = vadd.f32 %v1948, %v2017
        %v2050 = vadd.f32 %v1949, %v2018
        %v2051 = vadd.f32 %v1950, %v2019
        %v2052 = vadd.f32 %v1951, %v2020
        %v2053 = vadd.f32 %v1952, %v2021
        %v2054 = vadd.f32 %v1953, %v2022
        %v2055 = vadd.f32 %v1954, %v2023
        %v2056 = vadd.f32 %v1955, %v2024
        %v2057 = vadd.f32 %v1956, %v2025
        %v2058 = vadd.f32 %v1957, %v2026
        %v2059 = vadd.f32 %v1958, %v2027
        %v2060 = vadd.f32 %v1959, %v2028
        %v2061 = vadd.f32 %v1960, %v2029
        %v2062 = vadd.f32 %v1961, %v2030
        %v2063 = vadd.f32 %v1962, %v2031
        %v2064 = vadd.f32 %v1963, %v2032
        %v2065 = vadd.f32 %v1964, %v2033
        %v2066 = vadd.f32 %v1965, %v2034
        %v2067 = vadd.f32 %v1966, %v2035
        %v2068 = vadd.f32 %v1967, %v2036
        %v2069 = vadd.f32 %v1968, %v2037
        %v2070 = vadd.f32 %v1969, %v2038
        %v2071 = vadd.f32 %v1970, %v2039
        %v2072 = vadd.f32 %v1971, %v2040
        %v2073 = vld [vmem:[%s1902 + $0x2] sm:$0xff]
        %v2074 = vld [vmem:[%s1902 + $0xa] sm:$0xff]
        %v2075 = vld [vmem:[%s1902 + $0x1a] sm:$0xff]
        %v2076 = vld [vmem:[%s1902 + $0x22] sm:$0xff]
        %v2077 = vld [vmem:[%s1902 + $0x32] sm:$0xff]
        %v2078 = vld [vmem:[%s1902 + $0x3a] sm:$0xff]
        %v2079 = vld [vmem:[%s1902 + $0x4a] sm:$0xff]
        %v2080 = vld [vmem:[%s1902 + $0x52] sm:$0xff]
        %v2081 = vld [vmem:[%s1902 + $0x62] sm:$0xff]
        %v2082 = vld [vmem:[%s1902 + $0x6a] sm:$0xff]
        %v2083 = vld [vmem:[%s1902 + $0x7a] sm:$0xff]
        %v2084 = vld [vmem:[%s1902 + $0x82] sm:$0xff]
        %v2085 = vld [vmem:[%s1902 + $0x92] sm:$0xff]
        %v2086 = vld [vmem:[%s1902 + $0x9a] sm:$0xff]
        %v2087 = vld [vmem:[%s1902 + $0xaa] sm:$0xff]
        %v2088 = vld [vmem:[%s1902 + $0xb2] sm:$0xff]
        %v2089 = vld [vmem:[%s1902 + $0xc2] sm:$0xff]
        %v2090 = vld [vmem:[%s1902 + $0xca] sm:$0xff]
        %v2091 = vld [vmem:[%s1902 + $0xda] sm:$0xff]
        %v2092 = vld [vmem:[%s1902 + $0xe2] sm:$0xff]
        %v2093 = vld [vmem:[%s1902 + $0xf2] sm:$0xff]
        %v2094 = vld [vmem:[%s1902 + $0xfa] sm:$0xff]
        %v2095 = vld [vmem:[%s1902 + $0x10a] sm:$0xff]
        %v2096 = vld [vmem:[%s1902 + $0x112] sm:$0xff]
        %v2097 = vld [vmem:[%s1902 + $0x122] sm:$0xff]
        %v2098 = vld [vmem:[%s1902 + $0x12a] sm:$0xff]
        %v2099 = vld [vmem:[%s1902 + $0x13a] sm:$0xff]
        %v2100 = vld [vmem:[%s1902 + $0x142] sm:$0xff]
        %v2101 = vld [vmem:[%s1902 + $0x152] sm:$0xff]
        %v2102 = vld [vmem:[%s1902 + $0x15a] sm:$0xff]
        %v2103 = vld [vmem:[%s1902 + $0x16a] sm:$0xff]
        %v2104 = vld [vmem:[%s1902 + $0x172] sm:$0xff]
        %v2105 = vld [vmem:[#allocation5 + $0x10] sm:$0x1]
        %v2106 = vlaneseq
        %v2107 = vshrl.u32 %v2106, 7
        %v2108 = vsub.s32 0, %v2107
        %v2109 = vrot.slane %v2105, %v2108
        %v2110 = vmul.f32 %v2073, %v2109
        %v2111 = vmul.f32 %v2074, %v2109
        %v2112 = vmul.f32 %v2075, %v2109
        %v2113 = vmul.f32 %v2076, %v2109
        %v2114 = vmul.f32 %v2077, %v2109
        %v2115 = vmul.f32 %v2078, %v2109
        %v2116 = vmul.f32 %v2079, %v2109
        %v2117 = vmul.f32 %v2080, %v2109
        %v2118 = vmul.f32 %v2081, %v2109
        %v2119 = vmul.f32 %v2082, %v2109
        %v2120 = vmul.f32 %v2083, %v2109
        %v2121 = vmul.f32 %v2084, %v2109
        %v2122 = vmul.f32 %v2085, %v2109
        %v2123 = vmul.f32 %v2086, %v2109
        %v2124 = vmul.f32 %v2087, %v2109
        %v2125 = vmul.f32 %v2088, %v2109
        %v2126 = vmul.f32 %v2089, %v2109
        %v2127 = vmul.f32 %v2090, %v2109
        %v2128 = vmul.f32 %v2091, %v2109
        %v2129 = vmul.f32 %v2092, %v2109
        %v2130 = vmul.f32 %v2093, %v2109
        %v2131 = vmul.f32 %v2094, %v2109
        %v2132 = vmul.f32 %v2095, %v2109
        %v2133 = vmul.f32 %v2096, %v2109
        %v2134 = vmul.f32 %v2097, %v2109
        %v2135 = vmul.f32 %v2098, %v2109
        %v2136 = vmul.f32 %v2099, %v2109
        %v2137 = vmul.f32 %v2100, %v2109
        %v2138 = vmul.f32 %v2101, %v2109
        %v2139 = vmul.f32 %v2102, %v2109
        %v2140 = vmul.f32 %v2103, %v2109
        %v2141 = vmul.f32 %v2104, %v2109
        %v2142 = vadd.f32 %v2041, %v2110
        %v2143 = vadd.f32 %v2042, %v2111
        %v2144 = vadd.f32 %v2043, %v2112
        %v2145 = vadd.f32 %v2044, %v2113
        %v2146 = vadd.f32 %v2045, %v2114
        %v2147 = vadd.f32 %v2046, %v2115
        %v2148 = vadd.f32 %v2047, %v2116
        %v2149 = vadd.f32 %v2048, %v2117
        %v2150 = vadd.f32 %v2049, %v2118
        %v2151 = vadd.f32 %v2050, %v2119
        %v2152 = vadd.f32 %v2051, %v2120
        %v2153 = vadd.f32 %v2052, %v2121
        %v2154 = vadd.f32 %v2053, %v2122
        %v2155 = vadd.f32 %v2054, %v2123
        %v2156 = vadd.f32 %v2055, %v2124
        %v2157 = vadd.f32 %v2056, %v2125
        %v2158 = vadd.f32 %v2057, %v2126
        %v2159 = vadd.f32 %v2058, %v2127
        %v2160 = vadd.f32 %v2059, %v2128
        %v2161 = vadd.f32 %v2060, %v2129
        %v2162 = vadd.f32 %v2061, %v2130
        %v2163 = vadd.f32 %v2062, %v2131
        %v2164 = vadd.f32 %v2063, %v2132
        %v2165 = vadd.f32 %v2064, %v2133
        %v2166 = vadd.f32 %v2065, %v2134
        %v2167 = vadd.f32 %v2066, %v2135
        %v2168 = vadd.f32 %v2067, %v2136
        %v2169 = vadd.f32 %v2068, %v2137
        %v2170 = vadd.f32 %v2069, %v2138
        %v2171 = vadd.f32 %v2070, %v2139
        %v2172 = vadd.f32 %v2071, %v2140
        %v2173 = vadd.f32 %v2072, %v2141
        %v2174 = vld [vmem:[%s1902 + $0x3] sm:$0xff]
        %v2175 = vld [vmem:[%s1902 + $0xb] sm:$0xff]
        %v2176 = vld [vmem:[%s1902 + $0x1b] sm:$0xff]
        %v2177 = vld [vmem:[%s1902 + $0x23] sm:$0xff]
        %v2178 = vld [vmem:[%s1902 + $0x33] sm:$0xff]
        %v2179 = vld [vmem:[%s1902 + $0x3b] sm:$0xff]
        %v2180 = vld [vmem:[%s1902 + $0x4b] sm:$0xff]
        %v2181 = vld [vmem:[%s1902 + $0x53] sm:$0xff]
        %v2182 = vld [vmem:[%s1902 + $0x63] sm:$0xff]
        %v2183 = vld [vmem:[%s1902 + $0x6b] sm:$0xff]
        %v2184 = vld [vmem:[%s1902 + $0x7b] sm:$0xff]
        %v2185 = vld [vmem:[%s1902 + $0x83] sm:$0xff]
        %v2186 = vld [vmem:[%s1902 + $0x93] sm:$0xff]
        %v2187 = vld [vmem:[%s1902 + $0x9b] sm:$0xff]
        %v2188 = vld [vmem:[%s1902 + $0xab] sm:$0xff]
        %v2189 = vld [vmem:[%s1902 + $0xb3] sm:$0xff]
        %v2190 = vld [vmem:[%s1902 + $0xc3] sm:$0xff]
        %v2191 = vld [vmem:[%s1902 + $0xcb] sm:$0xff]
        %v2192 = vld [vmem:[%s1902 + $0xdb] sm:$0xff]
        %v2193 = vld [vmem:[%s1902 + $0xe3] sm:$0xff]
        %v2194 = vld [vmem:[%s1902 + $0xf3] sm:$0xff]
        %v2195 = vld [vmem:[%s1902 + $0xfb] sm:$0xff]
        %v2196 = vld [vmem:[%s1902 + $0x10b] sm:$0xff]
        %v2197 = vld [vmem:[%s1902 + $0x113] sm:$0xff]
        %v2198 = vld [vmem:[%s1902 + $0x123] sm:$0xff]
        %v2199 = vld [vmem:[%s1902 + $0x12b] sm:$0xff]
        %v2200 = vld [vmem:[%s1902 + $0x13b] sm:$0xff]
        %v2201 = vld [vmem:[%s1902 + $0x143] sm:$0xff]
        %v2202 = vld [vmem:[%s1902 + $0x153] sm:$0xff]
        %v2203 = vld [vmem:[%s1902 + $0x15b] sm:$0xff]
        %v2204 = vld [vmem:[%s1902 + $0x16b] sm:$0xff]
        %v2205 = vld [vmem:[%s1902 + $0x173] sm:$0xff]
        %v2206 = vld [vmem:[#allocation5 + $0x11] sm:$0x1]
        %v2207 = vlaneseq
        %v2208 = vshrl.u32 %v2207, 7
        %v2209 = vsub.s32 0, %v2208
        %v2210 = vrot.slane %v2206, %v2209
        %v2211 = vmul.f32 %v2174, %v2210
        %v2212 = vmul.f32 %v2175, %v2210
        %v2213 = vmul.f32 %v2176, %v2210
        %v2214 = vmul.f32 %v2177, %v2210
        %v2215 = vmul.f32 %v2178, %v2210
        %v2216 = vmul.f32 %v2179, %v2210
        %v2217 = vmul.f32 %v2180, %v2210
        %v2218 = vmul.f32 %v2181, %v2210
        %v2219 = vmul.f32 %v2182, %v2210
        %v2220 = vmul.f32 %v2183, %v2210
        %v2221 = vmul.f32 %v2184, %v2210
        %v2222 = vmul.f32 %v2185, %v2210
        %v2223 = vmul.f32 %v2186, %v2210
        %v2224 = vmul.f32 %v2187, %v2210
        %v2225 = vmul.f32 %v2188, %v2210
        %v2226 = vmul.f32 %v2189, %v2210
        %v2227 = vmul.f32 %v2190, %v2210
        %v2228 = vmul.f32 %v2191, %v2210
        %v2229 = vmul.f32 %v2192, %v2210
        %v2230 = vmul.f32 %v2193, %v2210
        %v2231 = vmul.f32 %v2194, %v2210
        %v2232 = vmul.f32 %v2195, %v2210
        %v2233 = vmul.f32 %v2196, %v2210
        %v2234 = vmul.f32 %v2197, %v2210
        %v2235 = vmul.f32 %v2198, %v2210
        %v2236 = vmul.f32 %v2199, %v2210
        %v2237 = vmul.f32 %v2200, %v2210
        %v2238 = vmul.f32 %v2201, %v2210
        %v2239 = vmul.f32 %v2202, %v2210
        %v2240 = vmul.f32 %v2203, %v2210
        %v2241 = vmul.f32 %v2204, %v2210
        %v2242 = vmul.f32 %v2205, %v2210
        %v2243 = vadd.f32 %v2142, %v2211
        %v2244 = vadd.f32 %v2143, %v2212
        %v2245 = vadd.f32 %v2144, %v2213
        %v2246 = vadd.f32 %v2145, %v2214
        %v2247 = vadd.f32 %v2146, %v2215
        %v2248 = vadd.f32 %v2147, %v2216
        %v2249 = vadd.f32 %v2148, %v2217
        %v2250 = vadd.f32 %v2149, %v2218
        %v2251 = vadd.f32 %v2150, %v2219
        %v2252 = vadd.f32 %v2151, %v2220
        %v2253 = vadd.f32 %v2152, %v2221
        %v2254 = vadd.f32 %v2153, %v2222
        %v2255 = vadd.f32 %v2154, %v2223
        %v2256 = vadd.f32 %v2155, %v2224
        %v2257 = vadd.f32 %v2156, %v2225
        %v2258 = vadd.f32 %v2157, %v2226
        %v2259 = vadd.f32 %v2158, %v2227
        %v2260 = vadd.f32 %v2159, %v2228
        %v2261 = vadd.f32 %v2160, %v2229
        %v2262 = vadd.f32 %v2161, %v2230
        %v2263 = vadd.f32 %v2162, %v2231
        %v2264 = vadd.f32 %v2163, %v2232
        %v2265 = vadd.f32 %v2164, %v2233
        %v2266 = vadd.f32 %v2165, %v2234
        %v2267 = vadd.f32 %v2166, %v2235
        %v2268 = vadd.f32 %v2167, %v2236
        %v2269 = vadd.f32 %v2168, %v2237
        %v2270 = vadd.f32 %v2169, %v2238
        %v2271 = vadd.f32 %v2170, %v2239
        %v2272 = vadd.f32 %v2171, %v2240
        %v2273 = vadd.f32 %v2172, %v2241
        %v2274 = vadd.f32 %v2173, %v2242
        %v2275 = vld [vmem:[%s1902 + $0x4] sm:$0xff]
        %v2276 = vld [vmem:[%s1902 + $0xc] sm:$0xff]
        %v2277 = vld [vmem:[%s1902 + $0x1c] sm:$0xff]
        %v2278 = vld [vmem:[%s1902 + $0x24] sm:$0xff]
        %v2279 = vld [vmem:[%s1902 + $0x34] sm:$0xff]
        %v2280 = vld [vmem:[%s1902 + $0x3c] sm:$0xff]
        %v2281 = vld [vmem:[%s1902 + $0x4c] sm:$0xff]
        %v2282 = vld [vmem:[%s1902 + $0x54] sm:$0xff]
        %v2283 = vld [vmem:[%s1902 + $0x64] sm:$0xff]
        %v2284 = vld [vmem:[%s1902 + $0x6c] sm:$0xff]
        %v2285 = vld [vmem:[%s1902 + $0x7c] sm:$0xff]
        %v2286 = vld [vmem:[%s1902 + $0x84] sm:$0xff]
        %v2287 = vld [vmem:[%s1902 + $0x94] sm:$0xff]
        %v2288 = vld [vmem:[%s1902 + $0x9c] sm:$0xff]
        %v2289 = vld [vmem:[%s1902 + $0xac] sm:$0xff]
        %v2290 = vld [vmem:[%s1902 + $0xb4] sm:$0xff]
        %v2291 = vld [vmem:[%s1902 + $0xc4] sm:$0xff]
        %v2292 = vld [vmem:[%s1902 + $0xcc] sm:$0xff]
        %v2293 = vld [vmem:[%s1902 + $0xdc] sm:$0xff]
        %v2294 = vld [vmem:[%s1902 + $0xe4] sm:$0xff]
        %v2295 = vld [vmem:[%s1902 + $0xf4] sm:$0xff]
        %v2296 = vld [vmem:[%s1902 + $0xfc] sm:$0xff]
        %v2297 = vld [vmem:[%s1902 + $0x10c] sm:$0xff]
        %v2298 = vld [vmem:[%s1902 + $0x114] sm:$0xff]
        %v2299 = vld [vmem:[%s1902 + $0x124] sm:$0xff]
        %v2300 = vld [vmem:[%s1902 + $0x12c] sm:$0xff]
        %v2301 = vld [vmem:[%s1902 + $0x13c] sm:$0xff]
        %v2302 = vld [vmem:[%s1902 + $0x144] sm:$0xff]
        %v2303 = vld [vmem:[%s1902 + $0x154] sm:$0xff]
        %v2304 = vld [vmem:[%s1902 + $0x15c] sm:$0xff]
        %v2305 = vld [vmem:[%s1902 + $0x16c] sm:$0xff]
        %v2306 = vld [vmem:[%s1902 + $0x174] sm:$0xff]
        %v2307 = vld [vmem:[#allocation5 + $0x12] sm:$0x1]
        %v2308 = vlaneseq
        %v2309 = vshrl.u32 %v2308, 7
        %v2310 = vsub.s32 0, %v2309
        %v2311 = vrot.slane %v2307, %v2310
        %v2312 = vmul.f32 %v2275, %v2311
        %v2313 = vmul.f32 %v2276, %v2311
        %v2314 = vmul.f32 %v2277, %v2311
        %v2315 = vmul.f32 %v2278, %v2311
        %v2316 = vmul.f32 %v2279, %v2311
        %v2317 = vmul.f32 %v2280, %v2311
        %v2318 = vmul.f32 %v2281, %v2311
        %v2319 = vmul.f32 %v2282, %v2311
        %v2320 = vmul.f32 %v2283, %v2311
        %v2321 = vmul.f32 %v2284, %v2311
        %v2322 = vmul.f32 %v2285, %v2311
        %v2323 = vmul.f32 %v2286, %v2311
        %v2324 = vmul.f32 %v2287, %v2311
        %v2325 = vmul.f32 %v2288, %v2311
        %v2326 = vmul.f32 %v2289, %v2311
        %v2327 = vmul.f32 %v2290, %v2311
        %v2328 = vmul.f32 %v2291, %v2311
        %v2329 = vmul.f32 %v2292, %v2311
        %v2330 = vmul.f32 %v2293, %v2311
        %v2331 = vmul.f32 %v2294, %v2311
        %v2332 = vmul.f32 %v2295, %v2311
        %v2333 = vmul.f32 %v2296, %v2311
        %v2334 = vmul.f32 %v2297, %v2311
        %v2335 = vmul.f32 %v2298, %v2311
        %v2336 = vmul.f32 %v2299, %v2311
        %v2337 = vmul.f32 %v2300, %v2311
        %v2338 = vmul.f32 %v2301, %v2311
        %v2339 = vmul.f32 %v2302, %v2311
        %v2340 = vmul.f32 %v2303, %v2311
        %v2341 = vmul.f32 %v2304, %v2311
        %v2342 = vmul.f32 %v2305, %v2311
        %v2343 = vmul.f32 %v2306, %v2311
        %v2344 = vadd.f32 %v2243, %v2312
        %v2345 = vadd.f32 %v2244, %v2313
        %v2346 = vadd.f32 %v2245, %v2314
        %v2347 = vadd.f32 %v2246, %v2315
        %v2348 = vadd.f32 %v2247, %v2316
        %v2349 = vadd.f32 %v2248, %v2317
        %v2350 = vadd.f32 %v2249, %v2318
        %v2351 = vadd.f32 %v2250, %v2319
        %v2352 = vadd.f32 %v2251, %v2320
        %v2353 = vadd.f32 %v2252, %v2321
        %v2354 = vadd.f32 %v2253, %v2322
        %v2355 = vadd.f32 %v2254, %v2323
        %v2356 = vadd.f32 %v2255, %v2324
        %v2357 = vadd.f32 %v2256, %v2325
        %v2358 = vadd.f32 %v2257, %v2326
        %v2359 = vadd.f32 %v2258, %v2327
        %v2360 = vadd.f32 %v2259, %v2328
        %v2361 = vadd.f32 %v2260, %v2329
        %v2362 = vadd.f32 %v2261, %v2330
        %v2363 = vadd.f32 %v2262, %v2331
        %v2364 = vadd.f32 %v2263, %v2332
        %v2365 = vadd.f32 %v2264, %v2333
        %v2366 = vadd.f32 %v2265, %v2334
        %v2367 = vadd.f32 %v2266, %v2335
        %v2368 = vadd.f32 %v2267, %v2336
        %v2369 = vadd.f32 %v2268, %v2337
        %v2370 = vadd.f32 %v2269, %v2338
        %v2371 = vadd.f32 %v2270, %v2339
        %v2372 = vadd.f32 %v2271, %v2340
        %v2373 = vadd.f32 %v2272, %v2341
        %v2374 = vadd.f32 %v2273, %v2342
        %v2375 = vadd.f32 %v2274, %v2343
        %v2376 = vld [vmem:[%s1902 + $0x5] sm:$0xff]
        %v2377 = vld [vmem:[%s1902 + $0xd] sm:$0xff]
        %v2378 = vld [vmem:[%s1902 + $0x1d] sm:$0xff]
        %v2379 = vld [vmem:[%s1902 + $0x25] sm:$0xff]
        %v2380 = vld [vmem:[%s1902 + $0x35] sm:$0xff]
        %v2381 = vld [vmem:[%s1902 + $0x3d] sm:$0xff]
        %v2382 = vld [vmem:[%s1902 + $0x4d] sm:$0xff]
        %v2383 = vld [vmem:[%s1902 + $0x55] sm:$0xff]
        %v2384 = vld [vmem:[%s1902 + $0x65] sm:$0xff]
        %v2385 = vld [vmem:[%s1902 + $0x6d] sm:$0xff]
        %v2386 = vld [vmem:[%s1902 + $0x7d] sm:$0xff]
        %v2387 = vld [vmem:[%s1902 + $0x85] sm:$0xff]
        %v2388 = vld [vmem:[%s1902 + $0x95] sm:$0xff]
        %v2389 = vld [vmem:[%s1902 + $0x9d] sm:$0xff]
        %v2390 = vld [vmem:[%s1902 + $0xad] sm:$0xff]
        %v2391 = vld [vmem:[%s1902 + $0xb5] sm:$0xff]
        %v2392 = vld [vmem:[%s1902 + $0xc5] sm:$0xff]
        %v2393 = vld [vmem:[%s1902 + $0xcd] sm:$0xff]
        %v2394 = vld [vmem:[%s1902 + $0xdd] sm:$0xff]
        %v2395 = vld [vmem:[%s1902 + $0xe5] sm:$0xff]
        %v2396 = vld [vmem:[%s1902 + $0xf5] sm:$0xff]
        %v2397 = vld [vmem:[%s1902 + $0xfd] sm:$0xff]
        %v2398 = vld [vmem:[%s1902 + $0x10d] sm:$0xff]
        %v2399 = vld [vmem:[%s1902 + $0x115] sm:$0xff]
        %v2400 = vld [vmem:[%s1902 + $0x125] sm:$0xff]
        %v2401 = vld [vmem:[%s1902 + $0x12d] sm:$0xff]
        %v2402 = vld [vmem:[%s1902 + $0x13d] sm:$0xff]
        %v2403 = vld [vmem:[%s1902 + $0x145] sm:$0xff]
        %v2404 = vld [vmem:[%s1902 + $0x155] sm:$0xff]
        %v2405 = vld [vmem:[%s1902 + $0x15d] sm:$0xff]
        %v2406 = vld [vmem:[%s1902 + $0x16d] sm:$0xff]
        %v2407 = vld [vmem:[%s1902 + $0x175] sm:$0xff]
        %v2408 = vld [vmem:[#allocation5 + $0x13] sm:$0x1]
        %v2409 = vlaneseq
        %v2410 = vshrl.u32 %v2409, 7
        %v2411 = vsub.s32 0, %v2410
        %v2412 = vrot.slane %v2408, %v2411
        %v2413 = vmul.f32 %v2376, %v2412
        %v2414 = vmul.f32 %v2377, %v2412
        %v2415 = vmul.f32 %v2378, %v2412
        %v2416 = vmul.f32 %v2379, %v2412
        %v2417 = vmul.f32 %v2380, %v2412
        %v2418 = vmul.f32 %v2381, %v2412
        %v2419 = vmul.f32 %v2382, %v2412
        %v2420 = vmul.f32 %v2383, %v2412
        %v2421 = vmul.f32 %v2384, %v2412
        %v2422 = vmul.f32 %v2385, %v2412
        %v2423 = vmul.f32 %v2386, %v2412
        %v2424 = vmul.f32 %v2387, %v2412
        %v2425 = vmul.f32 %v2388, %v2412
        %v2426 = vmul.f32 %v2389, %v2412
        %v2427 = vmul.f32 %v2390, %v2412
        %v2428 = vmul.f32 %v2391, %v2412
        %v2429 = vmul.f32 %v2392, %v2412
        %v2430 = vmul.f32 %v2393, %v2412
        %v2431 = vmul.f32 %v2394, %v2412
        %v2432 = vmul.f32 %v2395, %v2412
        %v2433 = vmul.f32 %v2396, %v2412
        %v2434 = vmul.f32 %v2397, %v2412
        %v2435 = vmul.f32 %v2398, %v2412
        %v2436 = vmul.f32 %v2399, %v2412
        %v2437 = vmul.f32 %v2400, %v2412
        %v2438 = vmul.f32 %v2401, %v2412
        %v2439 = vmul.f32 %v2402, %v2412
        %v2440 = vmul.f32 %v2403, %v2412
        %v2441 = vmul.f32 %v2404, %v2412
        %v2442 = vmul.f32 %v2405, %v2412
        %v2443 = vmul.f32 %v2406, %v2412
        %v2444 = vmul.f32 %v2407, %v2412
        %v2445 = vadd.f32 %v2344, %v2413
        %v2446 = vadd.f32 %v2345, %v2414
        %v2447 = vadd.f32 %v2346, %v2415
        %v2448 = vadd.f32 %v2347, %v2416
        %v2449 = vadd.f32 %v2348, %v2417
        %v2450 = vadd.f32 %v2349, %v2418
        %v2451 = vadd.f32 %v2350, %v2419
        %v2452 = vadd.f32 %v2351, %v2420
        %v2453 = vadd.f32 %v2352, %v2421
        %v2454 = vadd.f32 %v2353, %v2422
        %v2455 = vadd.f32 %v2354, %v2423
        %v2456 = vadd.f32 %v2355, %v2424
        %v2457 = vadd.f32 %v2356, %v2425
        %v2458 = vadd.f32 %v2357, %v2426
        %v2459 = vadd.f32 %v2358, %v2427
        %v2460 = vadd.f32 %v2359, %v2428
        %v2461 = vadd.f32 %v2360, %v2429
        %v2462 = vadd.f32 %v2361, %v2430
        %v2463 = vadd.f32 %v2362, %v2431
        %v2464 = vadd.f32 %v2363, %v2432
        %v2465 = vadd.f32 %v2364, %v2433
        %v2466 = vadd.f32 %v2365, %v2434
        %v2467 = vadd.f32 %v2366, %v2435
        %v2468 = vadd.f32 %v2367, %v2436
        %v2469 = vadd.f32 %v2368, %v2437
        %v2470 = vadd.f32 %v2369, %v2438
        %v2471 = vadd.f32 %v2370, %v2439
        %v2472 = vadd.f32 %v2371, %v2440
        %v2473 = vadd.f32 %v2372, %v2441
        %v2474 = vadd.f32 %v2373, %v2442
        %v2475 = vadd.f32 %v2374, %v2443
        %v2476 = vadd.f32 %v2375, %v2444
        %v2477 = vld [vmem:[%s1902 + $0x6] sm:$0xff]
        %v2478 = vld [vmem:[%s1902 + $0xe] sm:$0xff]
        %v2479 = vld [vmem:[%s1902 + $0x1e] sm:$0xff]
        %v2480 = vld [vmem:[%s1902 + $0x26] sm:$0xff]
        %v2481 = vld [vmem:[%s1902 + $0x36] sm:$0xff]
        %v2482 = vld [vmem:[%s1902 + $0x3e] sm:$0xff]
        %v2483 = vld [vmem:[%s1902 + $0x4e] sm:$0xff]
        %v2484 = vld [vmem:[%s1902 + $0x56] sm:$0xff]
        %v2485 = vld [vmem:[%s1902 + $0x66] sm:$0xff]
        %v2486 = vld [vmem:[%s1902 + $0x6e] sm:$0xff]
        %v2487 = vld [vmem:[%s1902 + $0x7e] sm:$0xff]
        %v2488 = vld [vmem:[%s1902 + $0x86] sm:$0xff]
        %v2489 = vld [vmem:[%s1902 + $0x96] sm:$0xff]
        %v2490 = vld [vmem:[%s1902 + $0x9e] sm:$0xff]
        %v2491 = vld [vmem:[%s1902 + $0xae] sm:$0xff]
        %v2492 = vld [vmem:[%s1902 + $0xb6] sm:$0xff]
        %v2493 = vld [vmem:[%s1902 + $0xc6] sm:$0xff]
        %v2494 = vld [vmem:[%s1902 + $0xce] sm:$0xff]
        %v2495 = vld [vmem:[%s1902 + $0xde] sm:$0xff]
        %v2496 = vld [vmem:[%s1902 + $0xe6] sm:$0xff]
        %v2497 = vld [vmem:[%s1902 + $0xf6] sm:$0xff]
        %v2498 = vld [vmem:[%s1902 + $0xfe] sm:$0xff]
        %v2499 = vld [vmem:[%s1902 + $0x10e] sm:$0xff]
        %v2500 = vld [vmem:[%s1902 + $0x116] sm:$0xff]
        %v2501 = vld [vmem:[%s1902 + $0x126] sm:$0xff]
        %v2502 = vld [vmem:[%s1902 + $0x12e] sm:$0xff]
        %v2503 = vld [vmem:[%s1902 + $0x13e] sm:$0xff]
        %v2504 = vld [vmem:[%s1902 + $0x146] sm:$0xff]
        %v2505 = vld [vmem:[%s1902 + $0x156] sm:$0xff]
        %v2506 = vld [vmem:[%s1902 + $0x15e] sm:$0xff]
        %v2507 = vld [vmem:[%s1902 + $0x16e] sm:$0xff]
        %v2508 = vld [vmem:[%s1902 + $0x176] sm:$0xff]
        %v2509 = vld [vmem:[#allocation5 + $0x14] sm:$0x1]
        %v2510 = vlaneseq
        %v2511 = vshrl.u32 %v2510, 7
        %v2512 = vsub.s32 0, %v2511
        %v2513 = vrot.slane %v2509, %v2512
        %v2514 = vmul.f32 %v2477, %v2513
        %v2515 = vmul.f32 %v2478, %v2513
        %v2516 = vmul.f32 %v2479, %v2513
        %v2517 = vmul.f32 %v2480, %v2513
        %v2518 = vmul.f32 %v2481, %v2513
        %v2519 = vmul.f32 %v2482, %v2513
        %v2520 = vmul.f32 %v2483, %v2513
        %v2521 = vmul.f32 %v2484, %v2513
        %v2522 = vmul.f32 %v2485, %v2513
        %v2523 = vmul.f32 %v2486, %v2513
        %v2524 = vmul.f32 %v2487, %v2513
        %v2525 = vmul.f32 %v2488, %v2513
        %v2526 = vmul.f32 %v2489, %v2513
        %v2527 = vmul.f32 %v2490, %v2513
        %v2528 = vmul.f32 %v2491, %v2513
        %v2529 = vmul.f32 %v2492, %v2513
        %v2530 = vmul.f32 %v2493, %v2513
        %v2531 = vmul.f32 %v2494, %v2513
        %v2532 = vmul.f32 %v2495, %v2513
        %v2533 = vmul.f32 %v2496, %v2513
        %v2534 = vmul.f32 %v2497, %v2513
        %v2535 = vmul.f32 %v2498, %v2513
        %v2536 = vmul.f32 %v2499, %v2513
        %v2537 = vmul.f32 %v2500, %v2513
        %v2538 = vmul.f32 %v2501, %v2513
        %v2539 = vmul.f32 %v2502, %v2513
        %v2540 = vmul.f32 %v2503, %v2513
        %v2541 = vmul.f32 %v2504, %v2513
        %v2542 = vmul.f32 %v2505, %v2513
        %v2543 = vmul.f32 %v2506, %v2513
        %v2544 = vmul.f32 %v2507, %v2513
        %v2545 = vmul.f32 %v2508, %v2513
        %v2546 = vadd.f32 %v2445, %v2514
        %v2547 = vadd.f32 %v2446, %v2515
        %v2548 = vadd.f32 %v2447, %v2516
        %v2549 = vadd.f32 %v2448, %v2517
        %v2550 = vadd.f32 %v2449, %v2518
        %v2551 = vadd.f32 %v2450, %v2519
        %v2552 = vadd.f32 %v2451, %v2520
        %v2553 = vadd.f32 %v2452, %v2521
        %v2554 = vadd.f32 %v2453, %v2522
        %v2555 = vadd.f32 %v2454, %v2523
        %v2556 = vadd.f32 %v2455, %v2524
        %v2557 = vadd.f32 %v2456, %v2525
        %v2558 = vadd.f32 %v2457, %v2526
        %v2559 = vadd.f32 %v2458, %v2527
        %v2560 = vadd.f32 %v2459, %v2528
        %v2561 = vadd.f32 %v2460, %v2529
        %v2562 = vadd.f32 %v2461, %v2530
        %v2563 = vadd.f32 %v2462, %v2531
        %v2564 = vadd.f32 %v2463, %v2532
        %v2565 = vadd.f32 %v2464, %v2533
        %v2566 = vadd.f32 %v2465, %v2534
        %v2567 = vadd.f32 %v2466, %v2535
        %v2568 = vadd.f32 %v2467, %v2536
        %v2569 = vadd.f32 %v2468, %v2537
        %v2570 = vadd.f32 %v2469, %v2538
        %v2571 = vadd.f32 %v2470, %v2539
        %v2572 = vadd.f32 %v2471, %v2540
        %v2573 = vadd.f32 %v2472, %v2541
        %v2574 = vadd.f32 %v2473, %v2542
        %v2575 = vadd.f32 %v2474, %v2543
        %v2576 = vadd.f32 %v2475, %v2544
        %v2577 = vadd.f32 %v2476, %v2545
        %v2578 = vld [vmem:[#allocation3] sm:$0xff]
        %v2579 = vld [vmem:[#allocation3 + $0x8] sm:$0xff]
        %v2580 = vld [vmem:[#allocation3 + $0x10] sm:$0xff]
        %v2581 = vld [vmem:[#allocation3 + $0x18] sm:$0xff]
        %v2582 = vld [vmem:[#allocation3 + $0x20] sm:$0xff]
        %v2583 = vld [vmem:[#allocation3 + $0x28] sm:$0xff]
        %v2584 = vld [vmem:[#allocation3 + $0x30] sm:$0xff]
        %v2585 = vld [vmem:[#allocation3 + $0x38] sm:$0xff]
        %v2586 = vld [vmem:[#allocation3 + $0x40] sm:$0xff]
        %v2587 = vld [vmem:[#allocation3 + $0x48] sm:$0xff]
        %v2588 = vld [vmem:[#allocation3 + $0x50] sm:$0xff]
        %v2589 = vld [vmem:[#allocation3 + $0x58] sm:$0xff]
        %v2590 = vld [vmem:[#allocation3 + $0x60] sm:$0xff]
        %v2591 = vld [vmem:[#allocation3 + $0x68] sm:$0xff]
        %v2592 = vld [vmem:[#allocation3 + $0x70] sm:$0xff]
        %v2593 = vld [vmem:[#allocation3 + $0x78] sm:$0xff]
        %v2594 = vld [vmem:[#allocation3 + $0x80] sm:$0xff]
        %v2595 = vld [vmem:[#allocation3 + $0x88] sm:$0xff]
        %v2596 = vld [vmem:[#allocation3 + $0x90] sm:$0xff]
        %v2597 = vld [vmem:[#allocation3 + $0x98] sm:$0xff]
        %v2598 = vld [vmem:[#allocation3 + $0xa0] sm:$0xff]
        %v2599 = vld [vmem:[#allocation3 + $0xa8] sm:$0xff]
        %v2600 = vld [vmem:[#allocation3 + $0xb0] sm:$0xff]
        %v2601 = vld [vmem:[#allocation3 + $0xb8] sm:$0xff]
        %v2602 = vld [vmem:[#allocation3 + $0xc0] sm:$0xff]
        %v2603 = vld [vmem:[#allocation3 + $0xc8] sm:$0xff]
        %v2604 = vld [vmem:[#allocation3 + $0xd0] sm:$0xff]
        %v2605 = vld [vmem:[#allocation3 + $0xd8] sm:$0xff]
        %v2606 = vld [vmem:[#allocation3 + $0xe0] sm:$0xff]
        %v2607 = vld [vmem:[#allocation3 + $0xe8] sm:$0xff]
        %v2608 = vld [vmem:[#allocation3 + $0xf0] sm:$0xff]
        %v2609 = vld [vmem:[#allocation3 + $0xf8] sm:$0xff]
        %v2610 = vadd.f32 %v2578, %v2546
        %v2611 = vadd.f32 %v2579, %v2547
        %v2612 = vadd.f32 %v2580, %v2548
        %v2613 = vadd.f32 %v2581, %v2549
        %v2614 = vadd.f32 %v2582, %v2550
        %v2615 = vadd.f32 %v2583, %v2551
        %v2616 = vadd.f32 %v2584, %v2552
        %v2617 = vadd.f32 %v2585, %v2553
        %v2618 = vadd.f32 %v2586, %v2554
        %v2619 = vadd.f32 %v2587, %v2555
        %v2620 = vadd.f32 %v2588, %v2556
        %v2621 = vadd.f32 %v2589, %v2557
        %v2622 = vadd.f32 %v2590, %v2558
        %v2623 = vadd.f32 %v2591, %v2559
        %v2624 = vadd.f32 %v2592, %v2560
        %v2625 = vadd.f32 %v2593, %v2561
        %v2626 = vadd.f32 %v2594, %v2562
        %v2627 = vadd.f32 %v2595, %v2563
        %v2628 = vadd.f32 %v2596, %v2564
        %v2629 = vadd.f32 %v2597, %v2565
        %v2630 = vadd.f32 %v2598, %v2566
        %v2631 = vadd.f32 %v2599, %v2567
        %v2632 = vadd.f32 %v2600, %v2568
        %v2633 = vadd.f32 %v2601, %v2569
        %v2634 = vadd.f32 %v2602, %v2570
        %v2635 = vadd.f32 %v2603, %v2571
        %v2636 = vadd.f32 %v2604, %v2572
        %v2637 = vadd.f32 %v2605, %v2573
        %v2638 = vadd.f32 %v2606, %v2574
        %v2639 = vadd.f32 %v2607, %v2575
        %v2640 = vadd.f32 %v2608, %v2576
        %v2641 = vadd.f32 %v2609, %v2577
        %2642 = vst [vmem:[#allocation3] sm:$0xff] %v2610
        %2643 = vst [vmem:[#allocation3 + $0x8] sm:$0xff] %v2611
        %2644 = vst [vmem:[#allocation3 + $0x10] sm:$0xff] %v2612
        %2645 = vst [vmem:[#allocation3 + $0x18] sm:$0xff] %v2613
        %2646 = vst [vmem:[#allocation3 + $0x20] sm:$0xff] %v2614
        %2647 = vst [vmem:[#allocation3 + $0x28] sm:$0xff] %v2615
        %2648 = vst [vmem:[#allocation3 + $0x30] sm:$0xff] %v2616
        %2649 = vst [vmem:[#allocation3 + $0x38] sm:$0xff] %v2617
        %2650 = vst [vmem:[#allocation3 + $0x40] sm:$0xff] %v2618
        %2651 = vst [vmem:[#allocation3 + $0x48] sm:$0xff] %v2619
        %2652 = vst [vmem:[#allocation3 + $0x50] sm:$0xff] %v2620
        %2653 = vst [vmem:[#allocation3 + $0x58] sm:$0xff] %v2621
        %2654 = vst [vmem:[#allocation3 + $0x60] sm:$0xff] %v2622
        %2655 = vst [vmem:[#allocation3 + $0x68] sm:$0xff] %v2623
        %2656 = vst [vmem:[#allocation3 + $0x70] sm:$0xff] %v2624
        %2657 = vst [vmem:[#allocation3 + $0x78] sm:$0xff] %v2625
        %2658 = vst [vmem:[#allocation3 + $0x80] sm:$0xff] %v2626
        %2659 = vst [vmem:[#allocation3 + $0x88] sm:$0xff] %v2627
        %2660 = vst [vmem:[#allocation3 + $0x90] sm:$0xff] %v2628
        %2661 = vst [vmem:[#allocation3 + $0x98] sm:$0xff] %v2629
        %2662 = vst [vmem:[#allocation3 + $0xa0] sm:$0xff] %v2630
        %2663 = vst [vmem:[#allocation3 + $0xa8] sm:$0xff] %v2631
        %2664 = vst [vmem:[#allocation3 + $0xb0] sm:$0xff] %v2632
        %2665 = vst [vmem:[#allocation3 + $0xb8] sm:$0xff] %v2633
        %2666 = vst [vmem:[#allocation3 + $0xc0] sm:$0xff] %v2634
        %2667 = vst [vmem:[#allocation3 + $0xc8] sm:$0xff] %v2635
        %2668 = vst [vmem:[#allocation3 + $0xd0] sm:$0xff] %v2636
        %2669 = vst [vmem:[#allocation3 + $0xd8] sm:$0xff] %v2637
        %2670 = vst [vmem:[#allocation3 + $0xe0] sm:$0xff] %v2638
        %2671 = vst [vmem:[#allocation3 + $0xe8] sm:$0xff] %v2639
        %2672 = vst [vmem:[#allocation3 + $0xf0] sm:$0xff] %v2640
        %2673 = vst [vmem:[#allocation3 + $0xf8] sm:$0xff] %v2641
        %s2674 = scalar_lea.vmem [#allocation2], 72
        %v2675 = vld [vmem:[%s2674] sm:$0xff]
        %v2676 = vld [vmem:[%s2674 + $0x8] sm:$0xff]
        %v2677 = vld [vmem:[%s2674 + $0x18] sm:$0xff]
        %v2678 = vld [vmem:[%s2674 + $0x20] sm:$0xff]
        %v2679 = vld [vmem:[%s2674 + $0x30] sm:$0xff]
        %v2680 = vld [vmem:[%s2674 + $0x38] sm:$0xff]
        %v2681 = vld [vmem:[%s2674 + $0x48] sm:$0xff]
        %v2682 = vld [vmem:[%s2674 + $0x50] sm:$0xff]
        %v2683 = vld [vmem:[%s2674 + $0x60] sm:$0xff]
        %v2684 = vld [vmem:[%s2674 + $0x68] sm:$0xff]
        %v2685 = vld [vmem:[%s2674 + $0x78] sm:$0xff]
        %v2686 = vld [vmem:[%s2674 + $0x80] sm:$0xff]
        %v2687 = vld [vmem:[%s2674 + $0x90] sm:$0xff]
        %v2688 = vld [vmem:[%s2674 + $0x98] sm:$0xff]
        %v2689 = vld [vmem:[%s2674 + $0xa8] sm:$0xff]
        %v2690 = vld [vmem:[%s2674 + $0xb0] sm:$0xff]
        %v2691 = vld [vmem:[%s2674 + $0xc0] sm:$0xff]
        %v2692 = vld [vmem:[%s2674 + $0xc8] sm:$0xff]
        %v2693 = vld [vmem:[%s2674 + $0xd8] sm:$0xff]
        %v2694 = vld [vmem:[%s2674 + $0xe0] sm:$0xff]
        %v2695 = vld [vmem:[%s2674 + $0xf0] sm:$0xff]
        %v2696 = vld [vmem:[%s2674 + $0xf8] sm:$0xff]
        %v2697 = vld [vmem:[%s2674 + $0x108] sm:$0xff]
        %v2698 = vld [vmem:[%s2674 + $0x110] sm:$0xff]
        %v2699 = vld [vmem:[%s2674 + $0x120] sm:$0xff]
        %v2700 = vld [vmem:[%s2674 + $0x128] sm:$0xff]
        %v2701 = vld [vmem:[%s2674 + $0x138] sm:$0xff]
        %v2702 = vld [vmem:[%s2674 + $0x140] sm:$0xff]
        %v2703 = vld [vmem:[%s2674 + $0x150] sm:$0xff]
        %v2704 = vld [vmem:[%s2674 + $0x158] sm:$0xff]
        %v2705 = vld [vmem:[%s2674 + $0x168] sm:$0xff]
        %v2706 = vld [vmem:[%s2674 + $0x170] sm:$0xff]
        %v2707 = vld [vmem:[#allocation5 + $0x15] sm:$0x1]
        %v2708 = vlaneseq
        %v2709 = vshrl.u32 %v2708, 7
        %v2710 = vsub.s32 0, %v2709
        %v2711 = vrot.slane %v2707, %v2710
        %v2712 = vmul.f32 %v2675, %v2711
        %v2713 = vmul.f32 %v2676, %v2711
        %v2714 = vmul.f32 %v2677, %v2711
        %v2715 = vmul.f32 %v2678, %v2711
        %v2716 = vmul.f32 %v2679, %v2711
        %v2717 = vmul.f32 %v2680, %v2711
        %v2718 = vmul.f32 %v2681, %v2711
        %v2719 = vmul.f32 %v2682, %v2711
        %v2720 = vmul.f32 %v2683, %v2711
        %v2721 = vmul.f32 %v2684, %v2711
        %v2722 = vmul.f32 %v2685, %v2711
        %v2723 = vmul.f32 %v2686, %v2711
        %v2724 = vmul.f32 %v2687, %v2711
        %v2725 = vmul.f32 %v2688, %v2711
        %v2726 = vmul.f32 %v2689, %v2711
        %v2727 = vmul.f32 %v2690, %v2711
        %v2728 = vmul.f32 %v2691, %v2711
        %v2729 = vmul.f32 %v2692, %v2711
        %v2730 = vmul.f32 %v2693, %v2711
        %v2731 = vmul.f32 %v2694, %v2711
        %v2732 = vmul.f32 %v2695, %v2711
        %v2733 = vmul.f32 %v2696, %v2711
        %v2734 = vmul.f32 %v2697, %v2711
        %v2735 = vmul.f32 %v2698, %v2711
        %v2736 = vmul.f32 %v2699, %v2711
        %v2737 = vmul.f32 %v2700, %v2711
        %v2738 = vmul.f32 %v2701, %v2711
        %v2739 = vmul.f32 %v2702, %v2711
        %v2740 = vmul.f32 %v2703, %v2711
        %v2741 = vmul.f32 %v2704, %v2711
        %v2742 = vmul.f32 %v2705, %v2711
        %v2743 = vmul.f32 %v2706, %v2711
        %v2744 = vld [vmem:[%s2674 + $0x1] sm:$0xff]
        %v2745 = vld [vmem:[%s2674 + $0x9] sm:$0xff]
        %v2746 = vld [vmem:[%s2674 + $0x19] sm:$0xff]
        %v2747 = vld [vmem:[%s2674 + $0x21] sm:$0xff]
        %v2748 = vld [vmem:[%s2674 + $0x31] sm:$0xff]
        %v2749 = vld [vmem:[%s2674 + $0x39] sm:$0xff]
        %v2750 = vld [vmem:[%s2674 + $0x49] sm:$0xff]
        %v2751 = vld [vmem:[%s2674 + $0x51] sm:$0xff]
        %v2752 = vld [vmem:[%s2674 + $0x61] sm:$0xff]
        %v2753 = vld [vmem:[%s2674 + $0x69] sm:$0xff]
        %v2754 = vld [vmem:[%s2674 + $0x79] sm:$0xff]
        %v2755 = vld [vmem:[%s2674 + $0x81] sm:$0xff]
        %v2756 = vld [vmem:[%s2674 + $0x91] sm:$0xff]
        %v2757 = vld [vmem:[%s2674 + $0x99] sm:$0xff]
        %v2758 = vld [vmem:[%s2674 + $0xa9] sm:$0xff]
        %v2759 = vld [vmem:[%s2674 + $0xb1] sm:$0xff]
        %v2760 = vld [vmem:[%s2674 + $0xc1] sm:$0xff]
        %v2761 = vld [vmem:[%s2674 + $0xc9] sm:$0xff]
        %v2762 = vld [vmem:[%s2674 + $0xd9] sm:$0xff]
        %v2763 = vld [vmem:[%s2674 + $0xe1] sm:$0xff]
        %v2764 = vld [vmem:[%s2674 + $0xf1] sm:$0xff]
        %v2765 = vld [vmem:[%s2674 + $0xf9] sm:$0xff]
        %v2766 = vld [vmem:[%s2674 + $0x109] sm:$0xff]
        %v2767 = vld [vmem:[%s2674 + $0x111] sm:$0xff]
        %v2768 = vld [vmem:[%s2674 + $0x121] sm:$0xff]
        %v2769 = vld [vmem:[%s2674 + $0x129] sm:$0xff]
        %v2770 = vld [vmem:[%s2674 + $0x139] sm:$0xff]
        %v2771 = vld [vmem:[%s2674 + $0x141] sm:$0xff]
        %v2772 = vld [vmem:[%s2674 + $0x151] sm:$0xff]
        %v2773 = vld [vmem:[%s2674 + $0x159] sm:$0xff]
        %v2774 = vld [vmem:[%s2674 + $0x169] sm:$0xff]
        %v2775 = vld [vmem:[%s2674 + $0x171] sm:$0xff]
        %v2776 = vld [vmem:[#allocation5 + $0x16] sm:$0x1]
        %v2777 = vlaneseq
        %v2778 = vshrl.u32 %v2777, 7
        %v2779 = vsub.s32 0, %v2778
        %v2780 = vrot.slane %v2776, %v2779
        %v2781 = vmul.f32 %v2744, %v2780
        %v2782 = vmul.f32 %v2745, %v2780
        %v2783 = vmul.f32 %v2746, %v2780
        %v2784 = vmul.f32 %v2747, %v2780
        %v2785 = vmul.f32 %v2748, %v2780
        %v2786 = vmul.f32 %v2749, %v2780
        %v2787 = vmul.f32 %v2750, %v2780
        %v2788 = vmul.f32 %v2751, %v2780
        %v2789 = vmul.f32 %v2752, %v2780
        %v2790 = vmul.f32 %v2753, %v2780
        %v2791 = vmul.f32 %v2754, %v2780
        %v2792 = vmul.f32 %v2755, %v2780
        %v2793 = vmul.f32 %v2756, %v2780
        %v2794 = vmul.f32 %v2757, %v2780
        %v2795 = vmul.f32 %v2758, %v2780
        %v2796 = vmul.f32 %v2759, %v2780
        %v2797 = vmul.f32 %v2760, %v2780
        %v2798 = vmul.f32 %v2761, %v2780
        %v2799 = vmul.f32 %v2762, %v2780
        %v2800 = vmul.f32 %v2763, %v2780
        %v2801 = vmul.f32 %v2764, %v2780
        %v2802 = vmul.f32 %v2765, %v2780
        %v2803 = vmul.f32 %v2766, %v2780
        %v2804 = vmul.f32 %v2767, %v2780
        %v2805 = vmul.f32 %v2768, %v2780
        %v2806 = vmul.f32 %v2769, %v2780
        %v2807 = vmul.f32 %v2770, %v2780
        %v2808 = vmul.f32 %v2771, %v2780
        %v2809 = vmul.f32 %v2772, %v2780
        %v2810 = vmul.f32 %v2773, %v2780
        %v2811 = vmul.f32 %v2774, %v2780
        %v2812 = vmul.f32 %v2775, %v2780
        %v2813 = vadd.f32 %v2712, %v2781
        %v2814 = vadd.f32 %v2713, %v2782
        %v2815 = vadd.f32 %v2714, %v2783
        %v2816 = vadd.f32 %v2715, %v2784
        %v2817 = vadd.f32 %v2716, %v2785
        %v2818 = vadd.f32 %v2717, %v2786
        %v2819 = vadd.f32 %v2718, %v2787
        %v2820 = vadd.f32 %v2719, %v2788
        %v2821 = vadd.f32 %v2720, %v2789
        %v2822 = vadd.f32 %v2721, %v2790
        %v2823 = vadd.f32 %v2722, %v2791
        %v2824 = vadd.f32 %v2723, %v2792
        %v2825 = vadd.f32 %v2724, %v2793
        %v2826 = vadd.f32 %v2725, %v2794
        %v2827 = vadd.f32 %v2726, %v2795
        %v2828 = vadd.f32 %v2727, %v2796
        %v2829 = vadd.f32 %v2728, %v2797
        %v2830 = vadd.f32 %v2729, %v2798
        %v2831 = vadd.f32 %v2730, %v2799
        %v2832 = vadd.f32 %v2731, %v2800
        %v2833 = vadd.f32 %v2732, %v2801
        %v2834 = vadd.f32 %v2733, %v2802
        %v2835 = vadd.f32 %v2734, %v2803
        %v2836 = vadd.f32 %v2735, %v2804
        %v2837 = vadd.f32 %v2736, %v2805
        %v2838 = vadd.f32 %v2737, %v2806
        %v2839 = vadd.f32 %v2738, %v2807
        %v2840 = vadd.f32 %v2739, %v2808
        %v2841 = vadd.f32 %v2740, %v2809
        %v2842 = vadd.f32 %v2741, %v2810
        %v2843 = vadd.f32 %v2742, %v2811
        %v2844 = vadd.f32 %v2743, %v2812
        %v2845 = vld [vmem:[%s2674 + $0x2] sm:$0xff]
        %v2846 = vld [vmem:[%s2674 + $0xa] sm:$0xff]
        %v2847 = vld [vmem:[%s2674 + $0x1a] sm:$0xff]
        %v2848 = vld [vmem:[%s2674 + $0x22] sm:$0xff]
        %v2849 = vld [vmem:[%s2674 + $0x32] sm:$0xff]
        %v2850 = vld [vmem:[%s2674 + $0x3a] sm:$0xff]
        %v2851 = vld [vmem:[%s2674 + $0x4a] sm:$0xff]
        %v2852 = vld [vmem:[%s2674 + $0x52] sm:$0xff]
        %v2853 = vld [vmem:[%s2674 + $0x62] sm:$0xff]
        %v2854 = vld [vmem:[%s2674 + $0x6a] sm:$0xff]
        %v2855 = vld [vmem:[%s2674 + $0x7a] sm:$0xff]
        %v2856 = vld [vmem:[%s2674 + $0x82] sm:$0xff]
        %v2857 = vld [vmem:[%s2674 + $0x92] sm:$0xff]
        %v2858 = vld [vmem:[%s2674 + $0x9a] sm:$0xff]
        %v2859 = vld [vmem:[%s2674 + $0xaa] sm:$0xff]
        %v2860 = vld [vmem:[%s2674 + $0xb2] sm:$0xff]
        %v2861 = vld [vmem:[%s2674 + $0xc2] sm:$0xff]
        %v2862 = vld [vmem:[%s2674 + $0xca] sm:$0xff]
        %v2863 = vld [vmem:[%s2674 + $0xda] sm:$0xff]
        %v2864 = vld [vmem:[%s2674 + $0xe2] sm:$0xff]
        %v2865 = vld [vmem:[%s2674 + $0xf2] sm:$0xff]
        %v2866 = vld [vmem:[%s2674 + $0xfa] sm:$0xff]
        %v2867 = vld [vmem:[%s2674 + $0x10a] sm:$0xff]
        %v2868 = vld [vmem:[%s2674 + $0x112] sm:$0xff]
        %v2869 = vld [vmem:[%s2674 + $0x122] sm:$0xff]
        %v2870 = vld [vmem:[%s2674 + $0x12a] sm:$0xff]
        %v2871 = vld [vmem:[%s2674 + $0x13a] sm:$0xff]
        %v2872 = vld [vmem:[%s2674 + $0x142] sm:$0xff]
        %v2873 = vld [vmem:[%s2674 + $0x152] sm:$0xff]
        %v2874 = vld [vmem:[%s2674 + $0x15a] sm:$0xff]
        %v2875 = vld [vmem:[%s2674 + $0x16a] sm:$0xff]
        %v2876 = vld [vmem:[%s2674 + $0x172] sm:$0xff]
        %v2877 = vld [vmem:[#allocation5 + $0x17] sm:$0x1]
        %v2878 = vlaneseq
        %v2879 = vshrl.u32 %v2878, 7
        %v2880 = vsub.s32 0, %v2879
        %v2881 = vrot.slane %v2877, %v2880
        %v2882 = vmul.f32 %v2845, %v2881
        %v2883 = vmul.f32 %v2846, %v2881
        %v2884 = vmul.f32 %v2847, %v2881
        %v2885 = vmul.f32 %v2848, %v2881
        %v2886 = vmul.f32 %v2849, %v2881
        %v2887 = vmul.f32 %v2850, %v2881
        %v2888 = vmul.f32 %v2851, %v2881
        %v2889 = vmul.f32 %v2852, %v2881
        %v2890 = vmul.f32 %v2853, %v2881
        %v2891 = vmul.f32 %v2854, %v2881
        %v2892 = vmul.f32 %v2855, %v2881
        %v2893 = vmul.f32 %v2856, %v2881
        %v2894 = vmul.f32 %v2857, %v2881
        %v2895 = vmul.f32 %v2858, %v2881
        %v2896 = vmul.f32 %v2859, %v2881
        %v2897 = vmul.f32 %v2860, %v2881
        %v2898 = vmul.f32 %v2861, %v2881
        %v2899 = vmul.f32 %v2862, %v2881
        %v2900 = vmul.f32 %v2863, %v2881
        %v2901 = vmul.f32 %v2864, %v2881
        %v2902 = vmul.f32 %v2865, %v2881
        %v2903 = vmul.f32 %v2866, %v2881
        %v2904 = vmul.f32 %v2867, %v2881
        %v2905 = vmul.f32 %v2868, %v2881
        %v2906 = vmul.f32 %v2869, %v2881
        %v2907 = vmul.f32 %v2870, %v2881
        %v2908 = vmul.f32 %v2871, %v2881
        %v2909 = vmul.f32 %v2872, %v2881
        %v2910 = vmul.f32 %v2873, %v2881
        %v2911 = vmul.f32 %v2874, %v2881
        %v2912 = vmul.f32 %v2875, %v2881
        %v2913 = vmul.f32 %v2876, %v2881
        %v2914 = vadd.f32 %v2813, %v2882
        %v2915 = vadd.f32 %v2814, %v2883
        %v2916 = vadd.f32 %v2815, %v2884
        %v2917 = vadd.f32 %v2816, %v2885
        %v2918 = vadd.f32 %v2817, %v2886
        %v2919 = vadd.f32 %v2818, %v2887
        %v2920 = vadd.f32 %v2819, %v2888
        %v2921 = vadd.f32 %v2820, %v2889
        %v2922 = vadd.f32 %v2821, %v2890
        %v2923 = vadd.f32 %v2822, %v2891
        %v2924 = vadd.f32 %v2823, %v2892
        %v2925 = vadd.f32 %v2824, %v2893
        %v2926 = vadd.f32 %v2825, %v2894
        %v2927 = vadd.f32 %v2826, %v2895
        %v2928 = vadd.f32 %v2827, %v2896
        %v2929 = vadd.f32 %v2828, %v2897
        %v2930 = vadd.f32 %v2829, %v2898
        %v2931 = vadd.f32 %v2830, %v2899
        %v2932 = vadd.f32 %v2831, %v2900
        %v2933 = vadd.f32 %v2832, %v2901
        %v2934 = vadd.f32 %v2833, %v2902
        %v2935 = vadd.f32 %v2834, %v2903
        %v2936 = vadd.f32 %v2835, %v2904
        %v2937 = vadd.f32 %v2836, %v2905
        %v2938 = vadd.f32 %v2837, %v2906
        %v2939 = vadd.f32 %v2838, %v2907
        %v2940 = vadd.f32 %v2839, %v2908
        %v2941 = vadd.f32 %v2840, %v2909
        %v2942 = vadd.f32 %v2841, %v2910
        %v2943 = vadd.f32 %v2842, %v2911
        %v2944 = vadd.f32 %v2843, %v2912
        %v2945 = vadd.f32 %v2844, %v2913
        %v2946 = vld [vmem:[%s2674 + $0x3] sm:$0xff]
        %v2947 = vld [vmem:[%s2674 + $0xb] sm:$0xff]
        %v2948 = vld [vmem:[%s2674 + $0x1b] sm:$0xff]
        %v2949 = vld [vmem:[%s2674 + $0x23] sm:$0xff]
        %v2950 = vld [vmem:[%s2674 + $0x33] sm:$0xff]
        %v2951 = vld [vmem:[%s2674 + $0x3b] sm:$0xff]
        %v2952 = vld [vmem:[%s2674 + $0x4b] sm:$0xff]
        %v2953 = vld [vmem:[%s2674 + $0x53] sm:$0xff]
        %v2954 = vld [vmem:[%s2674 + $0x63] sm:$0xff]
        %v2955 = vld [vmem:[%s2674 + $0x6b] sm:$0xff]
        %v2956 = vld [vmem:[%s2674 + $0x7b] sm:$0xff]
        %v2957 = vld [vmem:[%s2674 + $0x83] sm:$0xff]
        %v2958 = vld [vmem:[%s2674 + $0x93] sm:$0xff]
        %v2959 = vld [vmem:[%s2674 + $0x9b] sm:$0xff]
        %v2960 = vld [vmem:[%s2674 + $0xab] sm:$0xff]
        %v2961 = vld [vmem:[%s2674 + $0xb3] sm:$0xff]
        %v2962 = vld [vmem:[%s2674 + $0xc3] sm:$0xff]
        %v2963 = vld [vmem:[%s2674 + $0xcb] sm:$0xff]
        %v2964 = vld [vmem:[%s2674 + $0xdb] sm:$0xff]
        %v2965 = vld [vmem:[%s2674 + $0xe3] sm:$0xff]
        %v2966 = vld [vmem:[%s2674 + $0xf3] sm:$0xff]
        %v2967 = vld [vmem:[%s2674 + $0xfb] sm:$0xff]
        %v2968 = vld [vmem:[%s2674 + $0x10b] sm:$0xff]
        %v2969 = vld [vmem:[%s2674 + $0x113] sm:$0xff]
        %v2970 = vld [vmem:[%s2674 + $0x123] sm:$0xff]
        %v2971 = vld [vmem:[%s2674 + $0x12b] sm:$0xff]
        %v2972 = vld [vmem:[%s2674 + $0x13b] sm:$0xff]
        %v2973 = vld [vmem:[%s2674 + $0x143] sm:$0xff]
        %v2974 = vld [vmem:[%s2674 + $0x153] sm:$0xff]
        %v2975 = vld [vmem:[%s2674 + $0x15b] sm:$0xff]
        %v2976 = vld [vmem:[%s2674 + $0x16b] sm:$0xff]
        %v2977 = vld [vmem:[%s2674 + $0x173] sm:$0xff]
        %v2978 = vld [vmem:[#allocation5 + $0x18] sm:$0x1]
        %v2979 = vlaneseq
        %v2980 = vshrl.u32 %v2979, 7
        %v2981 = vsub.s32 0, %v2980
        %v2982 = vrot.slane %v2978, %v2981
        %v2983 = vmul.f32 %v2946, %v2982
        %v2984 = vmul.f32 %v2947, %v2982
        %v2985 = vmul.f32 %v2948, %v2982
        %v2986 = vmul.f32 %v2949, %v2982
        %v2987 = vmul.f32 %v2950, %v2982
        %v2988 = vmul.f32 %v2951, %v2982
        %v2989 = vmul.f32 %v2952, %v2982
        %v2990 = vmul.f32 %v2953, %v2982
        %v2991 = vmul.f32 %v2954, %v2982
        %v2992 = vmul.f32 %v2955, %v2982
        %v2993 = vmul.f32 %v2956, %v2982
        %v2994 = vmul.f32 %v2957, %v2982
        %v2995 = vmul.f32 %v2958, %v2982
        %v2996 = vmul.f32 %v2959, %v2982
        %v2997 = vmul.f32 %v2960, %v2982
        %v2998 = vmul.f32 %v2961, %v2982
        %v2999 = vmul.f32 %v2962, %v2982
        %v3000 = vmul.f32 %v2963, %v2982
        %v3001 = vmul.f32 %v2964, %v2982
        %v3002 = vmul.f32 %v2965, %v2982
        %v3003 = vmul.f32 %v2966, %v2982
        %v3004 = vmul.f32 %v2967, %v2982
        %v3005 = vmul.f32 %v2968, %v2982
        %v3006 = vmul.f32 %v2969, %v2982
        %v3007 = vmul.f32 %v2970, %v2982
        %v3008 = vmul.f32 %v2971, %v2982
        %v3009 = vmul.f32 %v2972, %v2982
        %v3010 = vmul.f32 %v2973, %v2982
        %v3011 = vmul.f32 %v2974, %v2982
        %v3012 = vmul.f32 %v2975, %v2982
        %v3013 = vmul.f32 %v2976, %v2982
        %v3014 = vmul.f32 %v2977, %v2982
        %v3015 = vadd.f32 %v2914, %v2983
        %v3016 = vadd.f32 %v2915, %v2984
        %v3017 = vadd.f32 %v2916, %v2985
        %v3018 = vadd.f32 %v2917, %v2986
        %v3019 = vadd.f32 %v2918, %v2987
        %v3020 = vadd.f32 %v2919, %v2988
        %v3021 = vadd.f32 %v2920, %v2989
        %v3022 = vadd.f32 %v2921, %v2990
        %v3023 = vadd.f32 %v2922, %v2991
        %v3024 = vadd.f32 %v2923, %v2992
        %v3025 = vadd.f32 %v2924, %v2993
        %v3026 = vadd.f32 %v2925, %v2994
        %v3027 = vadd.f32 %v2926, %v2995
        %v3028 = vadd.f32 %v2927, %v2996
        %v3029 = vadd.f32 %v2928, %v2997
        %v3030 = vadd.f32 %v2929, %v2998
        %v3031 = vadd.f32 %v2930, %v2999
        %v3032 = vadd.f32 %v2931, %v3000
        %v3033 = vadd.f32 %v2932, %v3001
        %v3034 = vadd.f32 %v2933, %v3002
        %v3035 = vadd.f32 %v2934, %v3003
        %v3036 = vadd.f32 %v2935, %v3004
        %v3037 = vadd.f32 %v2936, %v3005
        %v3038 = vadd.f32 %v2937, %v3006
        %v3039 = vadd.f32 %v2938, %v3007
        %v3040 = vadd.f32 %v2939, %v3008
        %v3041 = vadd.f32 %v2940, %v3009
        %v3042 = vadd.f32 %v2941, %v3010
        %v3043 = vadd.f32 %v2942, %v3011
        %v3044 = vadd.f32 %v2943, %v3012
        %v3045 = vadd.f32 %v2944, %v3013
        %v3046 = vadd.f32 %v2945, %v3014
        %v3047 = vld [vmem:[%s2674 + $0x4] sm:$0xff]
        %v3048 = vld [vmem:[%s2674 + $0xc] sm:$0xff]
        %v3049 = vld [vmem:[%s2674 + $0x1c] sm:$0xff]
        %v3050 = vld [vmem:[%s2674 + $0x24] sm:$0xff]
        %v3051 = vld [vmem:[%s2674 + $0x34] sm:$0xff]
        %v3052 = vld [vmem:[%s2674 + $0x3c] sm:$0xff]
        %v3053 = vld [vmem:[%s2674 + $0x4c] sm:$0xff]
        %v3054 = vld [vmem:[%s2674 + $0x54] sm:$0xff]
        %v3055 = vld [vmem:[%s2674 + $0x64] sm:$0xff]
        %v3056 = vld [vmem:[%s2674 + $0x6c] sm:$0xff]
        %v3057 = vld [vmem:[%s2674 + $0x7c] sm:$0xff]
        %v3058 = vld [vmem:[%s2674 + $0x84] sm:$0xff]
        %v3059 = vld [vmem:[%s2674 + $0x94] sm:$0xff]
        %v3060 = vld [vmem:[%s2674 + $0x9c] sm:$0xff]
        %v3061 = vld [vmem:[%s2674 + $0xac] sm:$0xff]
        %v3062 = vld [vmem:[%s2674 + $0xb4] sm:$0xff]
        %v3063 = vld [vmem:[%s2674 + $0xc4] sm:$0xff]
        %v3064 = vld [vmem:[%s2674 + $0xcc] sm:$0xff]
        %v3065 = vld [vmem:[%s2674 + $0xdc] sm:$0xff]
        %v3066 = vld [vmem:[%s2674 + $0xe4] sm:$0xff]
        %v3067 = vld [vmem:[%s2674 + $0xf4] sm:$0xff]
        %v3068 = vld [vmem:[%s2674 + $0xfc] sm:$0xff]
        %v3069 = vld [vmem:[%s2674 + $0x10c] sm:$0xff]
        %v3070 = vld [vmem:[%s2674 + $0x114] sm:$0xff]
        %v3071 = vld [vmem:[%s2674 + $0x124] sm:$0xff]
        %v3072 = vld [vmem:[%s2674 + $0x12c] sm:$0xff]
        %v3073 = vld [vmem:[%s2674 + $0x13c] sm:$0xff]
        %v3074 = vld [vmem:[%s2674 + $0x144] sm:$0xff]
        %v3075 = vld [vmem:[%s2674 + $0x154] sm:$0xff]
        %v3076 = vld [vmem:[%s2674 + $0x15c] sm:$0xff]
        %v3077 = vld [vmem:[%s2674 + $0x16c] sm:$0xff]
        %v3078 = vld [vmem:[%s2674 + $0x174] sm:$0xff]
        %v3079 = vld [vmem:[#allocation5 + $0x19] sm:$0x1]
        %v3080 = vlaneseq
        %v3081 = vshrl.u32 %v3080, 7
        %v3082 = vsub.s32 0, %v3081
        %v3083 = vrot.slane %v3079, %v3082
        %v3084 = vmul.f32 %v3047, %v3083
        %v3085 = vmul.f32 %v3048, %v3083
        %v3086 = vmul.f32 %v3049, %v3083
        %v3087 = vmul.f32 %v3050, %v3083
        %v3088 = vmul.f32 %v3051, %v3083
        %v3089 = vmul.f32 %v3052, %v3083
        %v3090 = vmul.f32 %v3053, %v3083
        %v3091 = vmul.f32 %v3054, %v3083
        %v3092 = vmul.f32 %v3055, %v3083
        %v3093 = vmul.f32 %v3056, %v3083
        %v3094 = vmul.f32 %v3057, %v3083
        %v3095 = vmul.f32 %v3058, %v3083
        %v3096 = vmul.f32 %v3059, %v3083
        %v3097 = vmul.f32 %v3060, %v3083
        %v3098 = vmul.f32 %v3061, %v3083
        %v3099 = vmul.f32 %v3062, %v3083
        %v3100 = vmul.f32 %v3063, %v3083
        %v3101 = vmul.f32 %v3064, %v3083
        %v3102 = vmul.f32 %v3065, %v3083
        %v3103 = vmul.f32 %v3066, %v3083
        %v3104 = vmul.f32 %v3067, %v3083
        %v3105 = vmul.f32 %v3068, %v3083
        %v3106 = vmul.f32 %v3069, %v3083
        %v3107 = vmul.f32 %v3070, %v3083
        %v3108 = vmul.f32 %v3071, %v3083
        %v3109 = vmul.f32 %v3072, %v3083
        %v3110 = vmul.f32 %v3073, %v3083
        %v3111 = vmul.f32 %v3074, %v3083
        %v3112 = vmul.f32 %v3075, %v3083
        %v3113 = vmul.f32 %v3076, %v3083
        %v3114 = vmul.f32 %v3077, %v3083
        %v3115 = vmul.f32 %v3078, %v3083
        %v3116 = vadd.f32 %v3015, %v3084
        %v3117 = vadd.f32 %v3016, %v3085
        %v3118 = vadd.f32 %v3017, %v3086
        %v3119 = vadd.f32 %v3018, %v3087
        %v3120 = vadd.f32 %v3019, %v3088
        %v3121 = vadd.f32 %v3020, %v3089
        %v3122 = vadd.f32 %v3021, %v3090
        %v3123 = vadd.f32 %v3022, %v3091
        %v3124 = vadd.f32 %v3023, %v3092
        %v3125 = vadd.f32 %v3024, %v3093
        %v3126 = vadd.f32 %v3025, %v3094
        %v3127 = vadd.f32 %v3026, %v3095
        %v3128 = vadd.f32 %v3027, %v3096
        %v3129 = vadd.f32 %v3028, %v3097
        %v3130 = vadd.f32 %v3029, %v3098
        %v3131 = vadd.f32 %v3030, %v3099
        %v3132 = vadd.f32 %v3031, %v3100
        %v3133 = vadd.f32 %v3032, %v3101
        %v3134 = vadd.f32 %v3033, %v3102
        %v3135 = vadd.f32 %v3034, %v3103
        %v3136 = vadd.f32 %v3035, %v3104
        %v3137 = vadd.f32 %v3036, %v3105
        %v3138 = vadd.f32 %v3037, %v3106
        %v3139 = vadd.f32 %v3038, %v3107
        %v3140 = vadd.f32 %v3039, %v3108
        %v3141 = vadd.f32 %v3040, %v3109
        %v3142 = vadd.f32 %v3041, %v3110
        %v3143 = vadd.f32 %v3042, %v3111
        %v3144 = vadd.f32 %v3043, %v3112
        %v3145 = vadd.f32 %v3044, %v3113
        %v3146 = vadd.f32 %v3045, %v3114
        %v3147 = vadd.f32 %v3046, %v3115
        %v3148 = vld [vmem:[%s2674 + $0x5] sm:$0xff]
        %v3149 = vld [vmem:[%s2674 + $0xd] sm:$0xff]
        %v3150 = vld [vmem:[%s2674 + $0x1d] sm:$0xff]
        %v3151 = vld [vmem:[%s2674 + $0x25] sm:$0xff]
        %v3152 = vld [vmem:[%s2674 + $0x35] sm:$0xff]
        %v3153 = vld [vmem:[%s2674 + $0x3d] sm:$0xff]
        %v3154 = vld [vmem:[%s2674 + $0x4d] sm:$0xff]
        %v3155 = vld [vmem:[%s2674 + $0x55] sm:$0xff]
        %v3156 = vld [vmem:[%s2674 + $0x65] sm:$0xff]
        %v3157 = vld [vmem:[%s2674 + $0x6d] sm:$0xff]
        %v3158 = vld [vmem:[%s2674 + $0x7d] sm:$0xff]
        %v3159 = vld [vmem:[%s2674 + $0x85] sm:$0xff]
        %v3160 = vld [vmem:[%s2674 + $0x95] sm:$0xff]
        %v3161 = vld [vmem:[%s2674 + $0x9d] sm:$0xff]
        %v3162 = vld [vmem:[%s2674 + $0xad] sm:$0xff]
        %v3163 = vld [vmem:[%s2674 + $0xb5] sm:$0xff]
        %v3164 = vld [vmem:[%s2674 + $0xc5] sm:$0xff]
        %v3165 = vld [vmem:[%s2674 + $0xcd] sm:$0xff]
        %v3166 = vld [vmem:[%s2674 + $0xdd] sm:$0xff]
        %v3167 = vld [vmem:[%s2674 + $0xe5] sm:$0xff]
        %v3168 = vld [vmem:[%s2674 + $0xf5] sm:$0xff]
        %v3169 = vld [vmem:[%s2674 + $0xfd] sm:$0xff]
        %v3170 = vld [vmem:[%s2674 + $0x10d] sm:$0xff]
        %v3171 = vld [vmem:[%s2674 + $0x115] sm:$0xff]
        %v3172 = vld [vmem:[%s2674 + $0x125] sm:$0xff]
        %v3173 = vld [vmem:[%s2674 + $0x12d] sm:$0xff]
        %v3174 = vld [vmem:[%s2674 + $0x13d] sm:$0xff]
        %v3175 = vld [vmem:[%s2674 + $0x145] sm:$0xff]
        %v3176 = vld [vmem:[%s2674 + $0x155] sm:$0xff]
        %v3177 = vld [vmem:[%s2674 + $0x15d] sm:$0xff]
        %v3178 = vld [vmem:[%s2674 + $0x16d] sm:$0xff]
        %v3179 = vld [vmem:[%s2674 + $0x175] sm:$0xff]
        %v3180 = vld [vmem:[#allocation5 + $0x1a] sm:$0x1]
        %v3181 = vlaneseq
        %v3182 = vshrl.u32 %v3181, 7
        %v3183 = vsub.s32 0, %v3182
        %v3184 = vrot.slane %v3180, %v3183
        %v3185 = vmul.f32 %v3148, %v3184
        %v3186 = vmul.f32 %v3149, %v3184
        %v3187 = vmul.f32 %v3150, %v3184
        %v3188 = vmul.f32 %v3151, %v3184
        %v3189 = vmul.f32 %v3152, %v3184
        %v3190 = vmul.f32 %v3153, %v3184
        %v3191 = vmul.f32 %v3154, %v3184
        %v3192 = vmul.f32 %v3155, %v3184
        %v3193 = vmul.f32 %v3156, %v3184
        %v3194 = vmul.f32 %v3157, %v3184
        %v3195 = vmul.f32 %v3158, %v3184
        %v3196 = vmul.f32 %v3159, %v3184
        %v3197 = vmul.f32 %v3160, %v3184
        %v3198 = vmul.f32 %v3161, %v3184
        %v3199 = vmul.f32 %v3162, %v3184
        %v3200 = vmul.f32 %v3163, %v3184
        %v3201 = vmul.f32 %v3164, %v3184
        %v3202 = vmul.f32 %v3165, %v3184
        %v3203 = vmul.f32 %v3166, %v3184
        %v3204 = vmul.f32 %v3167, %v3184
        %v3205 = vmul.f32 %v3168, %v3184
        %v3206 = vmul.f32 %v3169, %v3184
        %v3207 = vmul.f32 %v3170, %v3184
        %v3208 = vmul.f32 %v3171, %v3184
        %v3209 = vmul.f32 %v3172, %v3184
        %v3210 = vmul.f32 %v3173, %v3184
        %v3211 = vmul.f32 %v3174, %v3184
        %v3212 = vmul.f32 %v3175, %v3184
        %v3213 = vmul.f32 %v3176, %v3184
        %v3214 = vmul.f32 %v3177, %v3184
        %v3215 = vmul.f32 %v3178, %v3184
        %v3216 = vmul.f32 %v3179, %v3184
        %v3217 = vadd.f32 %v3116, %v3185
        %v3218 = vadd.f32 %v3117, %v3186
        %v3219 = vadd.f32 %v3118, %v3187
        %v3220 = vadd.f32 %v3119, %v3188
        %v3221 = vadd.f32 %v3120, %v3189
        %v3222 = vadd.f32 %v3121, %v3190
        %v3223 = vadd.f32 %v3122, %v3191
        %v3224 = vadd.f32 %v3123, %v3192
        %v3225 = vadd.f32 %v3124, %v3193
        %v3226 = vadd.f32 %v3125, %v3194
        %v3227 = vadd.f32 %v3126, %v3195
        %v3228 = vadd.f32 %v3127, %v3196
        %v3229 = vadd.f32 %v3128, %v3197
        %v3230 = vadd.f32 %v3129, %v3198
        %v3231 = vadd.f32 %v3130, %v3199
        %v3232 = vadd.f32 %v3131, %v3200
        %v3233 = vadd.f32 %v3132, %v3201
        %v3234 = vadd.f32 %v3133, %v3202
        %v3235 = vadd.f32 %v3134, %v3203
        %v3236 = vadd.f32 %v3135, %v3204
        %v3237 = vadd.f32 %v3136, %v3205
        %v3238 = vadd.f32 %v3137, %v3206
        %v3239 = vadd.f32 %v3138, %v3207
        %v3240 = vadd.f32 %v3139, %v3208
        %v3241 = vadd.f32 %v3140, %v3209
        %v3242 = vadd.f32 %v3141, %v3210
        %v3243 = vadd.f32 %v3142, %v3211
        %v3244 = vadd.f32 %v3143, %v3212
        %v3245 = vadd.f32 %v3144, %v3213
        %v3246 = vadd.f32 %v3145, %v3214
        %v3247 = vadd.f32 %v3146, %v3215
        %v3248 = vadd.f32 %v3147, %v3216
        %v3249 = vld [vmem:[%s2674 + $0x6] sm:$0xff]
        %v3250 = vld [vmem:[%s2674 + $0xe] sm:$0xff]
        %v3251 = vld [vmem:[%s2674 + $0x1e] sm:$0xff]
        %v3252 = vld [vmem:[%s2674 + $0x26] sm:$0xff]
        %v3253 = vld [vmem:[%s2674 + $0x36] sm:$0xff]
        %v3254 = vld [vmem:[%s2674 + $0x3e] sm:$0xff]
        %v3255 = vld [vmem:[%s2674 + $0x4e] sm:$0xff]
        %v3256 = vld [vmem:[%s2674 + $0x56] sm:$0xff]
        %v3257 = vld [vmem:[%s2674 + $0x66] sm:$0xff]
        %v3258 = vld [vmem:[%s2674 + $0x6e] sm:$0xff]
        %v3259 = vld [vmem:[%s2674 + $0x7e] sm:$0xff]
        %v3260 = vld [vmem:[%s2674 + $0x86] sm:$0xff]
        %v3261 = vld [vmem:[%s2674 + $0x96] sm:$0xff]
        %v3262 = vld [vmem:[%s2674 + $0x9e] sm:$0xff]
        %v3263 = vld [vmem:[%s2674 + $0xae] sm:$0xff]
        %v3264 = vld [vmem:[%s2674 + $0xb6] sm:$0xff]
        %v3265 = vld [vmem:[%s2674 + $0xc6] sm:$0xff]
        %v3266 = vld [vmem:[%s2674 + $0xce] sm:$0xff]
        %v3267 = vld [vmem:[%s2674 + $0xde] sm:$0xff]
        %v3268 = vld [vmem:[%s2674 + $0xe6] sm:$0xff]
        %v3269 = vld [vmem:[%s2674 + $0xf6] sm:$0xff]
        %v3270 = vld [vmem:[%s2674 + $0xfe] sm:$0xff]
        %v3271 = vld [vmem:[%s2674 + $0x10e] sm:$0xff]
        %v3272 = vld [vmem:[%s2674 + $0x116] sm:$0xff]
        %v3273 = vld [vmem:[%s2674 + $0x126] sm:$0xff]
        %v3274 = vld [vmem:[%s2674 + $0x12e] sm:$0xff]
        %v3275 = vld [vmem:[%s2674 + $0x13e] sm:$0xff]
        %v3276 = vld [vmem:[%s2674 + $0x146] sm:$0xff]
        %v3277 = vld [vmem:[%s2674 + $0x156] sm:$0xff]
        %v3278 = vld [vmem:[%s2674 + $0x15e] sm:$0xff]
        %v3279 = vld [vmem:[%s2674 + $0x16e] sm:$0xff]
        %v3280 = vld [vmem:[%s2674 + $0x176] sm:$0xff]
        %v3281 = vld [vmem:[#allocation5 + $0x1b] sm:$0x1]
        %v3282 = vlaneseq
        %v3283 = vshrl.u32 %v3282, 7
        %v3284 = vsub.s32 0, %v3283
        %v3285 = vrot.slane %v3281, %v3284
        %v3286 = vmul.f32 %v3249, %v3285
        %v3287 = vmul.f32 %v3250, %v3285
        %v3288 = vmul.f32 %v3251, %v3285
        %v3289 = vmul.f32 %v3252, %v3285
        %v3290 = vmul.f32 %v3253, %v3285
        %v3291 = vmul.f32 %v3254, %v3285
        %v3292 = vmul.f32 %v3255, %v3285
        %v3293 = vmul.f32 %v3256, %v3285
        %v3294 = vmul.f32 %v3257, %v3285
        %v3295 = vmul.f32 %v3258, %v3285
        %v3296 = vmul.f32 %v3259, %v3285
        %v3297 = vmul.f32 %v3260, %v3285
        %v3298 = vmul.f32 %v3261, %v3285
        %v3299 = vmul.f32 %v3262, %v3285
        %v3300 = vmul.f32 %v3263, %v3285
        %v3301 = vmul.f32 %v3264, %v3285
        %v3302 = vmul.f32 %v3265, %v3285
        %v3303 = vmul.f32 %v3266, %v3285
        %v3304 = vmul.f32 %v3267, %v3285
        %v3305 = vmul.f32 %v3268, %v3285
        %v3306 = vmul.f32 %v3269, %v3285
        %v3307 = vmul.f32 %v3270, %v3285
        %v3308 = vmul.f32 %v3271, %v3285
        %v3309 = vmul.f32 %v3272, %v3285
        %v3310 = vmul.f32 %v3273, %v3285
        %v3311 = vmul.f32 %v3274, %v3285
        %v3312 = vmul.f32 %v3275, %v3285
        %v3313 = vmul.f32 %v3276, %v3285
        %v3314 = vmul.f32 %v3277, %v3285
        %v3315 = vmul.f32 %v3278, %v3285
        %v3316 = vmul.f32 %v3279, %v3285
        %v3317 = vmul.f32 %v3280, %v3285
        %v3318 = vadd.f32 %v3217, %v3286
        %v3319 = vadd.f32 %v3218, %v3287
        %v3320 = vadd.f32 %v3219, %v3288
        %v3321 = vadd.f32 %v3220, %v3289
        %v3322 = vadd.f32 %v3221, %v3290
        %v3323 = vadd.f32 %v3222, %v3291
        %v3324 = vadd.f32 %v3223, %v3292
        %v3325 = vadd.f32 %v3224, %v3293
        %v3326 = vadd.f32 %v3225, %v3294
        %v3327 = vadd.f32 %v3226, %v3295
        %v3328 = vadd.f32 %v3227, %v3296
        %v3329 = vadd.f32 %v3228, %v3297
        %v3330 = vadd.f32 %v3229, %v3298
        %v3331 = vadd.f32 %v3230, %v3299
        %v3332 = vadd.f32 %v3231, %v3300
        %v3333 = vadd.f32 %v3232, %v3301
        %v3334 = vadd.f32 %v3233, %v3302
        %v3335 = vadd.f32 %v3234, %v3303
        %v3336 = vadd.f32 %v3235, %v3304
        %v3337 = vadd.f32 %v3236, %v3305
        %v3338 = vadd.f32 %v3237, %v3306
        %v3339 = vadd.f32 %v3238, %v3307
        %v3340 = vadd.f32 %v3239, %v3308
        %v3341 = vadd.f32 %v3240, %v3309
        %v3342 = vadd.f32 %v3241, %v3310
        %v3343 = vadd.f32 %v3242, %v3311
        %v3344 = vadd.f32 %v3243, %v3312
        %v3345 = vadd.f32 %v3244, %v3313
        %v3346 = vadd.f32 %v3245, %v3314
        %v3347 = vadd.f32 %v3246, %v3315
        %v3348 = vadd.f32 %v3247, %v3316
        %v3349 = vadd.f32 %v3248, %v3317
        %v3350 = vld [vmem:[#allocation3] sm:$0xff]
        %v3351 = vld [vmem:[#allocation3 + $0x8] sm:$0xff]
        %v3352 = vld [vmem:[#allocation3 + $0x10] sm:$0xff]
        %v3353 = vld [vmem:[#allocation3 + $0x18] sm:$0xff]
        %v3354 = vld [vmem:[#allocation3 + $0x20] sm:$0xff]
        %v3355 = vld [vmem:[#allocation3 + $0x28] sm:$0xff]
        %v3356 = vld [vmem:[#allocation3 + $0x30] sm:$0xff]
        %v3357 = vld [vmem:[#allocation3 + $0x38] sm:$0xff]
        %v3358 = vld [vmem:[#allocation3 + $0x40] sm:$0xff]
        %v3359 = vld [vmem:[#allocation3 + $0x48] sm:$0xff]
        %v3360 = vld [vmem:[#allocation3 + $0x50] sm:$0xff]
        %v3361 = vld [vmem:[#allocation3 + $0x58] sm:$0xff]
        %v3362 = vld [vmem:[#allocation3 + $0x60] sm:$0xff]
        %v3363 = vld [vmem:[#allocation3 + $0x68] sm:$0xff]
        %v3364 = vld [vmem:[#allocation3 + $0x70] sm:$0xff]
        %v3365 = vld [vmem:[#allocation3 + $0x78] sm:$0xff]
        %v3366 = vld [vmem:[#allocation3 + $0x80] sm:$0xff]
        %v3367 = vld [vmem:[#allocation3 + $0x88] sm:$0xff]
        %v3368 = vld [vmem:[#allocation3 + $0x90] sm:$0xff]
        %v3369 = vld [vmem:[#allocation3 + $0x98] sm:$0xff]
        %v3370 = vld [vmem:[#allocation3 + $0xa0] sm:$0xff]
        %v3371 = vld [vmem:[#allocation3 + $0xa8] sm:$0xff]
        %v3372 = vld [vmem:[#allocation3 + $0xb0] sm:$0xff]
        %v3373 = vld [vmem:[#allocation3 + $0xb8] sm:$0xff]
        %v3374 = vld [vmem:[#allocation3 + $0xc0] sm:$0xff]
        %v3375 = vld [vmem:[#allocation3 + $0xc8] sm:$0xff]
        %v3376 = vld [vmem:[#allocation3 + $0xd0] sm:$0xff]
        %v3377 = vld [vmem:[#allocation3 + $0xd8] sm:$0xff]
        %v3378 = vld [vmem:[#allocation3 + $0xe0] sm:$0xff]
        %v3379 = vld [vmem:[#allocation3 + $0xe8] sm:$0xff]
        %v3380 = vld [vmem:[#allocation3 + $0xf0] sm:$0xff]
        %v3381 = vld [vmem:[#allocation3 + $0xf8] sm:$0xff]
        %v3382 = vadd.f32 %v3350, %v3318
        %v3383 = vadd.f32 %v3351, %v3319
        %v3384 = vadd.f32 %v3352, %v3320
        %v3385 = vadd.f32 %v3353, %v3321
        %v3386 = vadd.f32 %v3354, %v3322
        %v3387 = vadd.f32 %v3355, %v3323
        %v3388 = vadd.f32 %v3356, %v3324
        %v3389 = vadd.f32 %v3357, %v3325
        %v3390 = vadd.f32 %v3358, %v3326
        %v3391 = vadd.f32 %v3359, %v3327
        %v3392 = vadd.f32 %v3360, %v3328
        %v3393 = vadd.f32 %v3361, %v3329
        %v3394 = vadd.f32 %v3362, %v3330
        %v3395 = vadd.f32 %v3363, %v3331
        %v3396 = vadd.f32 %v3364, %v3332
        %v3397 = vadd.f32 %v3365, %v3333
        %v3398 = vadd.f32 %v3366, %v3334
        %v3399 = vadd.f32 %v3367, %v3335
        %v3400 = vadd.f32 %v3368, %v3336
        %v3401 = vadd.f32 %v3369, %v3337
        %v3402 = vadd.f32 %v3370, %v3338
        %v3403 = vadd.f32 %v3371, %v3339
        %v3404 = vadd.f32 %v3372, %v3340
        %v3405 = vadd.f32 %v3373, %v3341
        %v3406 = vadd.f32 %v3374, %v3342
        %v3407 = vadd.f32 %v3375, %v3343
        %v3408 = vadd.f32 %v3376, %v3344
        %v3409 = vadd.f32 %v3377, %v3345
        %v3410 = vadd.f32 %v3378, %v3346
        %v3411 = vadd.f32 %v3379, %v3347
        %v3412 = vadd.f32 %v3380, %v3348
        %v3413 = vadd.f32 %v3381, %v3349
        %3414 = vst [vmem:[#allocation3] sm:$0xff] %v3382
        %3415 = vst [vmem:[#allocation3 + $0x8] sm:$0xff] %v3383
        %3416 = vst [vmem:[#allocation3 + $0x10] sm:$0xff] %v3384
        %3417 = vst [vmem:[#allocation3 + $0x18] sm:$0xff] %v3385
        %3418 = vst [vmem:[#allocation3 + $0x20] sm:$0xff] %v3386
        %3419 = vst [vmem:[#allocation3 + $0x28] sm:$0xff] %v3387
        %3420 = vst [vmem:[#allocation3 + $0x30] sm:$0xff] %v3388
        %3421 = vst [vmem:[#allocation3 + $0x38] sm:$0xff] %v3389
        %3422 = vst [vmem:[#allocation3 + $0x40] sm:$0xff] %v3390
        %3423 = vst [vmem:[#allocation3 + $0x48] sm:$0xff] %v3391
        %3424 = vst [vmem:[#allocation3 + $0x50] sm:$0xff] %v3392
        %3425 = vst [vmem:[#allocation3 + $0x58] sm:$0xff] %v3393
        %3426 = vst [vmem:[#allocation3 + $0x60] sm:$0xff] %v3394
        %3427 = vst [vmem:[#allocation3 + $0x68] sm:$0xff] %v3395
        %3428 = vst [vmem:[#allocation3 + $0x70] sm:$0xff] %v3396
        %3429 = vst [vmem:[#allocation3 + $0x78] sm:$0xff] %v3397
        %3430 = vst [vmem:[#allocation3 + $0x80] sm:$0xff] %v3398
        %3431 = vst [vmem:[#allocation3 + $0x88] sm:$0xff] %v3399
        %3432 = vst [vmem:[#allocation3 + $0x90] sm:$0xff] %v3400
        %3433 = vst [vmem:[#allocation3 + $0x98] sm:$0xff] %v3401
        %3434 = vst [vmem:[#allocation3 + $0xa0] sm:$0xff] %v3402
        %3435 = vst [vmem:[#allocation3 + $0xa8] sm:$0xff] %v3403
        %3436 = vst [vmem:[#allocation3 + $0xb0] sm:$0xff] %v3404
        %3437 = vst [vmem:[#allocation3 + $0xb8] sm:$0xff] %v3405
        %3438 = vst [vmem:[#allocation3 + $0xc0] sm:$0xff] %v3406
        %3439 = vst [vmem:[#allocation3 + $0xc8] sm:$0xff] %v3407
        %3440 = vst [vmem:[#allocation3 + $0xd0] sm:$0xff] %v3408
        %3441 = vst [vmem:[#allocation3 + $0xd8] sm:$0xff] %v3409
        %3442 = vst [vmem:[#allocation3 + $0xe0] sm:$0xff] %v3410
        %3443 = vst [vmem:[#allocation3 + $0xe8] sm:$0xff] %v3411
        %3444 = vst [vmem:[#allocation3 + $0xf0] sm:$0xff] %v3412
        %3445 = vst [vmem:[#allocation3 + $0xf8] sm:$0xff] %v3413
        %s3446 = scalar_lea.vmem [#allocation2], 96
        %v3447 = vld [vmem:[%s3446] sm:$0xff]
        %v3448 = vld [vmem:[%s3446 + $0x8] sm:$0xff]
        %v3449 = vld [vmem:[%s3446 + $0x18] sm:$0xff]
        %v3450 = vld [vmem:[%s3446 + $0x20] sm:$0xff]
        %v3451 = vld [vmem:[%s3446 + $0x30] sm:$0xff]
        %v3452 = vld [vmem:[%s3446 + $0x38] sm:$0xff]
        %v3453 = vld [vmem:[%s3446 + $0x48] sm:$0xff]
        %v3454 = vld [vmem:[%s3446 + $0x50] sm:$0xff]
        %v3455 = vld [vmem:[%s3446 + $0x60] sm:$0xff]
        %v3456 = vld [vmem:[%s3446 + $0x68] sm:$0xff]
        %v3457 = vld [vmem:[%s3446 + $0x78] sm:$0xff]
        %v3458 = vld [vmem:[%s3446 + $0x80] sm:$0xff]
        %v3459 = vld [vmem:[%s3446 + $0x90] sm:$0xff]
        %v3460 = vld [vmem:[%s3446 + $0x98] sm:$0xff]
        %v3461 = vld [vmem:[%s3446 + $0xa8] sm:$0xff]
        %v3462 = vld [vmem:[%s3446 + $0xb0] sm:$0xff]
        %v3463 = vld [vmem:[%s3446 + $0xc0] sm:$0xff]
        %v3464 = vld [vmem:[%s3446 + $0xc8] sm:$0xff]
        %v3465 = vld [vmem:[%s3446 + $0xd8] sm:$0xff]
        %v3466 = vld [vmem:[%s3446 + $0xe0] sm:$0xff]
        %v3467 = vld [vmem:[%s3446 + $0xf0] sm:$0xff]
        %v3468 = vld [vmem:[%s3446 + $0xf8] sm:$0xff]
        %v3469 = vld [vmem:[%s3446 + $0x108] sm:$0xff]
        %v3470 = vld [vmem:[%s3446 + $0x110] sm:$0xff]
        %v3471 = vld [vmem:[%s3446 + $0x120] sm:$0xff]
        %v3472 = vld [vmem:[%s3446 + $0x128] sm:$0xff]
        %v3473 = vld [vmem:[%s3446 + $0x138] sm:$0xff]
        %v3474 = vld [vmem:[%s3446 + $0x140] sm:$0xff]
        %v3475 = vld [vmem:[%s3446 + $0x150] sm:$0xff]
        %v3476 = vld [vmem:[%s3446 + $0x158] sm:$0xff]
        %v3477 = vld [vmem:[%s3446 + $0x168] sm:$0xff]
        %v3478 = vld [vmem:[%s3446 + $0x170] sm:$0xff]
        %v3479 = vld [vmem:[#allocation5 + $0x1c] sm:$0x1]
        %v3480 = vlaneseq
        %v3481 = vshrl.u32 %v3480, 7
        %v3482 = vsub.s32 0, %v3481
        %v3483 = vrot.slane %v3479, %v3482
        %v3484 = vmul.f32 %v3447, %v3483
        %v3485 = vmul.f32 %v3448, %v3483
        %v3486 = vmul.f32 %v3449, %v3483
        %v3487 = vmul.f32 %v3450, %v3483
        %v3488 = vmul.f32 %v3451, %v3483
        %v3489 = vmul.f32 %v3452, %v3483
        %v3490 = vmul.f32 %v3453, %v3483
        %v3491 = vmul.f32 %v3454, %v3483
        %v3492 = vmul.f32 %v3455, %v3483
        %v3493 = vmul.f32 %v3456, %v3483
        %v3494 = vmul.f32 %v3457, %v3483
        %v3495 = vmul.f32 %v3458, %v3483
        %v3496 = vmul.f32 %v3459, %v3483
        %v3497 = vmul.f32 %v3460, %v3483
        %v3498 = vmul.f32 %v3461, %v3483
        %v3499 = vmul.f32 %v3462, %v3483
        %v3500 = vmul.f32 %v3463, %v3483
        %v3501 = vmul.f32 %v3464, %v3483
        %v3502 = vmul.f32 %v3465, %v3483
        %v3503 = vmul.f32 %v3466, %v3483
        %v3504 = vmul.f32 %v3467, %v3483
        %v3505 = vmul.f32 %v3468, %v3483
        %v3506 = vmul.f32 %v3469, %v3483
        %v3507 = vmul.f32 %v3470, %v3483
        %v3508 = vmul.f32 %v3471, %v3483
        %v3509 = vmul.f32 %v3472, %v3483
        %v3510 = vmul.f32 %v3473, %v3483
        %v3511 = vmul.f32 %v3474, %v3483
        %v3512 = vmul.f32 %v3475, %v3483
        %v3513 = vmul.f32 %v3476, %v3483
        %v3514 = vmul.f32 %v3477, %v3483
        %v3515 = vmul.f32 %v3478, %v3483
        %v3516 = vld [vmem:[%s3446 + $0x1] sm:$0xff]
        %v3517 = vld [vmem:[%s3446 + $0x9] sm:$0xff]
        %v3518 = vld [vmem:[%s3446 + $0x19] sm:$0xff]
        %v3519 = vld [vmem:[%s3446 + $0x21] sm:$0xff]
        %v3520 = vld [vmem:[%s3446 + $0x31] sm:$0xff]
        %v3521 = vld [vmem:[%s3446 + $0x39] sm:$0xff]
        %v3522 = vld [vmem:[%s3446 + $0x49] sm:$0xff]
        %v3523 = vld [vmem:[%s3446 + $0x51] sm:$0xff]
        %v3524 = vld [vmem:[%s3446 + $0x61] sm:$0xff]
        %v3525 = vld [vmem:[%s3446 + $0x69] sm:$0xff]
        %v3526 = vld [vmem:[%s3446 + $0x79] sm:$0xff]
        %v3527 = vld [vmem:[%s3446 + $0x81] sm:$0xff]
        %v3528 = vld [vmem:[%s3446 + $0x91] sm:$0xff]
        %v3529 = vld [vmem:[%s3446 + $0x99] sm:$0xff]
        %v3530 = vld [vmem:[%s3446 + $0xa9] sm:$0xff]
        %v3531 = vld [vmem:[%s3446 + $0xb1] sm:$0xff]
        %v3532 = vld [vmem:[%s3446 + $0xc1] sm:$0xff]
        %v3533 = vld [vmem:[%s3446 + $0xc9] sm:$0xff]
        %v3534 = vld [vmem:[%s3446 + $0xd9] sm:$0xff]
        %v3535 = vld [vmem:[%s3446 + $0xe1] sm:$0xff]
        %v3536 = vld [vmem:[%s3446 + $0xf1] sm:$0xff]
        %v3537 = vld [vmem:[%s3446 + $0xf9] sm:$0xff]
        %v3538 = vld [vmem:[%s3446 + $0x109] sm:$0xff]
        %v3539 = vld [vmem:[%s3446 + $0x111] sm:$0xff]
        %v3540 = vld [vmem:[%s3446 + $0x121] sm:$0xff]
        %v3541 = vld [vmem:[%s3446 + $0x129] sm:$0xff]
        %v3542 = vld [vmem:[%s3446 + $0x139] sm:$0xff]
        %v3543 = vld [vmem:[%s3446 + $0x141] sm:$0xff]
        %v3544 = vld [vmem:[%s3446 + $0x151] sm:$0xff]
        %v3545 = vld [vmem:[%s3446 + $0x159] sm:$0xff]
        %v3546 = vld [vmem:[%s3446 + $0x169] sm:$0xff]
        %v3547 = vld [vmem:[%s3446 + $0x171] sm:$0xff]
        %v3548 = vld [vmem:[#allocation5 + $0x1d] sm:$0x1]
        %v3549 = vlaneseq
        %v3550 = vshrl.u32 %v3549, 7
        %v3551 = vsub.s32 0, %v3550
        %v3552 = vrot.slane %v3548, %v3551
        %v3553 = vmul.f32 %v3516, %v3552
        %v3554 = vmul.f32 %v3517, %v3552
        %v3555 = vmul.f32 %v3518, %v3552
        %v3556 = vmul.f32 %v3519, %v3552
        %v3557 = vmul.f32 %v3520, %v3552
        %v3558 = vmul.f32 %v3521, %v3552
        %v3559 = vmul.f32 %v3522, %v3552
        %v3560 = vmul.f32 %v3523, %v3552
        %v3561 = vmul.f32 %v3524, %v3552
        %v3562 = vmul.f32 %v3525, %v3552
        %v3563 = vmul.f32 %v3526, %v3552
        %v3564 = vmul.f32 %v3527, %v3552
        %v3565 = vmul.f32 %v3528, %v3552
        %v3566 = vmul.f32 %v3529, %v3552
        %v3567 = vmul.f32 %v3530, %v3552
        %v3568 = vmul.f32 %v3531, %v3552
        %v3569 = vmul.f32 %v3532, %v3552
        %v3570 = vmul.f32 %v3533, %v3552
        %v3571 = vmul.f32 %v3534, %v3552
        %v3572 = vmul.f32 %v3535, %v3552
        %v3573 = vmul.f32 %v3536, %v3552
        %v3574 = vmul.f32 %v3537, %v3552
        %v3575 = vmul.f32 %v3538, %v3552
        %v3576 = vmul.f32 %v3539, %v3552
        %v3577 = vmul.f32 %v3540, %v3552
        %v3578 = vmul.f32 %v3541, %v3552
        %v3579 = vmul.f32 %v3542, %v3552
        %v3580 = vmul.f32 %v3543, %v3552
        %v3581 = vmul.f32 %v3544, %v3552
        %v3582 = vmul.f32 %v3545, %v3552
        %v3583 = vmul.f32 %v3546, %v3552
        %v3584 = vmul.f32 %v3547, %v3552
        %v3585 = vadd.f32 %v3484, %v3553
        %v3586 = vadd.f32 %v3485, %v3554
        %v3587 = vadd.f32 %v3486, %v3555
        %v3588 = vadd.f32 %v3487, %v3556
        %v3589 = vadd.f32 %v3488, %v3557
        %v3590 = vadd.f32 %v3489, %v3558
        %v3591 = vadd.f32 %v3490, %v3559
        %v3592 = vadd.f32 %v3491, %v3560
        %v3593 = vadd.f32 %v3492, %v3561
        %v3594 = vadd.f32 %v3493, %v3562
        %v3595 = vadd.f32 %v3494, %v3563
        %v3596 = vadd.f32 %v3495, %v3564
        %v3597 = vadd.f32 %v3496, %v3565
        %v3598 = vadd.f32 %v3497, %v3566
        %v3599 = vadd.f32 %v3498, %v3567
        %v3600 = vadd.f32 %v3499, %v3568
        %v3601 = vadd.f32 %v3500, %v3569
        %v3602 = vadd.f32 %v3501, %v3570
        %v3603 = vadd.f32 %v3502, %v3571
        %v3604 = vadd.f32 %v3503, %v3572
        %v3605 = vadd.f32 %v3504, %v3573
        %v3606 = vadd.f32 %v3505, %v3574
        %v3607 = vadd.f32 %v3506, %v3575
        %v3608 = vadd.f32 %v3507, %v3576
        %v3609 = vadd.f32 %v3508, %v3577
        %v3610 = vadd.f32 %v3509, %v3578
        %v3611 = vadd.f32 %v3510, %v3579
        %v3612 = vadd.f32 %v3511, %v3580
        %v3613 = vadd.f32 %v3512, %v3581
        %v3614 = vadd.f32 %v3513, %v3582
        %v3615 = vadd.f32 %v3514, %v3583
        %v3616 = vadd.f32 %v3515, %v3584
        %v3617 = vld [vmem:[%s3446 + $0x2] sm:$0xff]
        %v3618 = vld [vmem:[%s3446 + $0xa] sm:$0xff]
        %v3619 = vld [vmem:[%s3446 + $0x1a] sm:$0xff]
        %v3620 = vld [vmem:[%s3446 + $0x22] sm:$0xff]
        %v3621 = vld [vmem:[%s3446 + $0x32] sm:$0xff]
        %v3622 = vld [vmem:[%s3446 + $0x3a] sm:$0xff]
        %v3623 = vld [vmem:[%s3446 + $0x4a] sm:$0xff]
        %v3624 = vld [vmem:[%s3446 + $0x52] sm:$0xff]
        %v3625 = vld [vmem:[%s3446 + $0x62] sm:$0xff]
        %v3626 = vld [vmem:[%s3446 + $0x6a] sm:$0xff]
        %v3627 = vld [vmem:[%s3446 + $0x7a] sm:$0xff]
        %v3628 = vld [vmem:[%s3446 + $0x82] sm:$0xff]
        %v3629 = vld [vmem:[%s3446 + $0x92] sm:$0xff]
        %v3630 = vld [vmem:[%s3446 + $0x9a] sm:$0xff]
        %v3631 = vld [vmem:[%s3446 + $0xaa] sm:$0xff]
        %v3632 = vld [vmem:[%s3446 + $0xb2] sm:$0xff]
        %v3633 = vld [vmem:[%s3446 + $0xc2] sm:$0xff]
        %v3634 = vld [vmem:[%s3446 + $0xca] sm:$0xff]
        %v3635 = vld [vmem:[%s3446 + $0xda] sm:$0xff]
        %v3636 = vld [vmem:[%s3446 + $0xe2] sm:$0xff]
        %v3637 = vld [vmem:[%s3446 + $0xf2] sm:$0xff]
        %v3638 = vld [vmem:[%s3446 + $0xfa] sm:$0xff]
        %v3639 = vld [vmem:[%s3446 + $0x10a] sm:$0xff]
        %v3640 = vld [vmem:[%s3446 + $0x112] sm:$0xff]
        %v3641 = vld [vmem:[%s3446 + $0x122] sm:$0xff]
        %v3642 = vld [vmem:[%s3446 + $0x12a] sm:$0xff]
        %v3643 = vld [vmem:[%s3446 + $0x13a] sm:$0xff]
        %v3644 = vld [vmem:[%s3446 + $0x142] sm:$0xff]
        %v3645 = vld [vmem:[%s3446 + $0x152] sm:$0xff]
        %v3646 = vld [vmem:[%s3446 + $0x15a] sm:$0xff]
        %v3647 = vld [vmem:[%s3446 + $0x16a] sm:$0xff]
        %v3648 = vld [vmem:[%s3446 + $0x172] sm:$0xff]
        %v3649 = vld [vmem:[#allocation5 + $0x1e] sm:$0x1]
        %v3650 = vlaneseq
        %v3651 = vshrl.u32 %v3650, 7
        %v3652 = vsub.s32 0, %v3651
        %v3653 = vrot.slane %v3649, %v3652
        %v3654 = vmul.f32 %v3617, %v3653
        %v3655 = vmul.f32 %v3618, %v3653
        %v3656 = vmul.f32 %v3619, %v3653
        %v3657 = vmul.f32 %v3620, %v3653
        %v3658 = vmul.f32 %v3621, %v3653
        %v3659 = vmul.f32 %v3622, %v3653
        %v3660 = vmul.f32 %v3623, %v3653
        %v3661 = vmul.f32 %v3624, %v3653
        %v3662 = vmul.f32 %v3625, %v3653
        %v3663 = vmul.f32 %v3626, %v3653
        %v3664 = vmul.f32 %v3627, %v3653
        %v3665 = vmul.f32 %v3628, %v3653
        %v3666 = vmul.f32 %v3629, %v3653
        %v3667 = vmul.f32 %v3630, %v3653
        %v3668 = vmul.f32 %v3631, %v3653
        %v3669 = vmul.f32 %v3632, %v3653
        %v3670 = vmul.f32 %v3633, %v3653
        %v3671 = vmul.f32 %v3634, %v3653
        %v3672 = vmul.f32 %v3635, %v3653
        %v3673 = vmul.f32 %v3636, %v3653
        %v3674 = vmul.f32 %v3637, %v3653
        %v3675 = vmul.f32 %v3638, %v3653
        %v3676 = vmul.f32 %v3639, %v3653
        %v3677 = vmul.f32 %v3640, %v3653
        %v3678 = vmul.f32 %v3641, %v3653
        %v3679 = vmul.f32 %v3642, %v3653
        %v3680 = vmul.f32 %v3643, %v3653
        %v3681 = vmul.f32 %v3644, %v3653
        %v3682 = vmul.f32 %v3645, %v3653
        %v3683 = vmul.f32 %v3646, %v3653
        %v3684 = vmul.f32 %v3647, %v3653
        %v3685 = vmul.f32 %v3648, %v3653
        %v3686 = vadd.f32 %v3585, %v3654
        %v3687 = vadd.f32 %v3586, %v3655
        %v3688 = vadd.f32 %v3587, %v3656
        %v3689 = vadd.f32 %v3588, %v3657
        %v3690 = vadd.f32 %v3589, %v3658
        %v3691 = vadd.f32 %v3590, %v3659
        %v3692 = vadd.f32 %v3591, %v3660
        %v3693 = vadd.f32 %v3592, %v3661
        %v3694 = vadd.f32 %v3593, %v3662
        %v3695 = vadd.f32 %v3594, %v3663
        %v3696 = vadd.f32 %v3595, %v3664
        %v3697 = vadd.f32 %v3596, %v3665
        %v3698 = vadd.f32 %v3597, %v3666
        %v3699 = vadd.f32 %v3598, %v3667
        %v3700 = vadd.f32 %v3599, %v3668
        %v3701 = vadd.f32 %v3600, %v3669
        %v3702 = vadd.f32 %v3601, %v3670
        %v3703 = vadd.f32 %v3602, %v3671
        %v3704 = vadd.f32 %v3603, %v3672
        %v3705 = vadd.f32 %v3604, %v3673
        %v3706 = vadd.f32 %v3605, %v3674
        %v3707 = vadd.f32 %v3606, %v3675
        %v3708 = vadd.f32 %v3607, %v3676
        %v3709 = vadd.f32 %v3608, %v3677
        %v3710 = vadd.f32 %v3609, %v3678
        %v3711 = vadd.f32 %v3610, %v3679
        %v3712 = vadd.f32 %v3611, %v3680
        %v3713 = vadd.f32 %v3612, %v3681
        %v3714 = vadd.f32 %v3613, %v3682
        %v3715 = vadd.f32 %v3614, %v3683
        %v3716 = vadd.f32 %v3615, %v3684
        %v3717 = vadd.f32 %v3616, %v3685
        %v3718 = vld [vmem:[%s3446 + $0x3] sm:$0xff]
        %v3719 = vld [vmem:[%s3446 + $0xb] sm:$0xff]
        %v3720 = vld [vmem:[%s3446 + $0x1b] sm:$0xff]
        %v3721 = vld [vmem:[%s3446 + $0x23] sm:$0xff]
        %v3722 = vld [vmem:[%s3446 + $0x33] sm:$0xff]
        %v3723 = vld [vmem:[%s3446 + $0x3b] sm:$0xff]
        %v3724 = vld [vmem:[%s3446 + $0x4b] sm:$0xff]
        %v3725 = vld [vmem:[%s3446 + $0x53] sm:$0xff]
        %v3726 = vld [vmem:[%s3446 + $0x63] sm:$0xff]
        %v3727 = vld [vmem:[%s3446 + $0x6b] sm:$0xff]
        %v3728 = vld [vmem:[%s3446 + $0x7b] sm:$0xff]
        %v3729 = vld [vmem:[%s3446 + $0x83] sm:$0xff]
        %v3730 = vld [vmem:[%s3446 + $0x93] sm:$0xff]
        %v3731 = vld [vmem:[%s3446 + $0x9b] sm:$0xff]
        %v3732 = vld [vmem:[%s3446 + $0xab] sm:$0xff]
        %v3733 = vld [vmem:[%s3446 + $0xb3] sm:$0xff]
        %v3734 = vld [vmem:[%s3446 + $0xc3] sm:$0xff]
        %v3735 = vld [vmem:[%s3446 + $0xcb] sm:$0xff]
        %v3736 = vld [vmem:[%s3446 + $0xdb] sm:$0xff]
        %v3737 = vld [vmem:[%s3446 + $0xe3] sm:$0xff]
        %v3738 = vld [vmem:[%s3446 + $0xf3] sm:$0xff]
        %v3739 = vld [vmem:[%s3446 + $0xfb] sm:$0xff]
        %v3740 = vld [vmem:[%s3446 + $0x10b] sm:$0xff]
        %v3741 = vld [vmem:[%s3446 + $0x113] sm:$0xff]
        %v3742 = vld [vmem:[%s3446 + $0x123] sm:$0xff]
        %v3743 = vld [vmem:[%s3446 + $0x12b] sm:$0xff]
        %v3744 = vld [vmem:[%s3446 + $0x13b] sm:$0xff]
        %v3745 = vld [vmem:[%s3446 + $0x143] sm:$0xff]
        %v3746 = vld [vmem:[%s3446 + $0x153] sm:$0xff]
        %v3747 = vld [vmem:[%s3446 + $0x15b] sm:$0xff]
        %v3748 = vld [vmem:[%s3446 + $0x16b] sm:$0xff]
        %v3749 = vld [vmem:[%s3446 + $0x173] sm:$0xff]
        %v3750 = vld [vmem:[#allocation5 + $0x1f] sm:$0x1]
        %v3751 = vlaneseq
        %v3752 = vshrl.u32 %v3751, 7
        %v3753 = vsub.s32 0, %v3752
        %v3754 = vrot.slane %v3750, %v3753
        %v3755 = vmul.f32 %v3718, %v3754
        %v3756 = vmul.f32 %v3719, %v3754
        %v3757 = vmul.f32 %v3720, %v3754
        %v3758 = vmul.f32 %v3721, %v3754
        %v3759 = vmul.f32 %v3722, %v3754
        %v3760 = vmul.f32 %v3723, %v3754
        %v3761 = vmul.f32 %v3724, %v3754
        %v3762 = vmul.f32 %v3725, %v3754
        %v3763 = vmul.f32 %v3726, %v3754
        %v3764 = vmul.f32 %v3727, %v3754
        %v3765 = vmul.f32 %v3728, %v3754
        %v3766 = vmul.f32 %v3729, %v3754
        %v3767 = vmul.f32 %v3730, %v3754
        %v3768 = vmul.f32 %v3731, %v3754
        %v3769 = vmul.f32 %v3732, %v3754
        %v3770 = vmul.f32 %v3733, %v3754
        %v3771 = vmul.f32 %v3734, %v3754
        %v3772 = vmul.f32 %v3735, %v3754
        %v3773 = vmul.f32 %v3736, %v3754
        %v3774 = vmul.f32 %v3737, %v3754
        %v3775 = vmul.f32 %v3738, %v3754
        %v3776 = vmul.f32 %v3739, %v3754
        %v3777 = vmul.f32 %v3740, %v3754
        %v3778 = vmul.f32 %v3741, %v3754
        %v3779 = vmul.f32 %v3742, %v3754
        %v3780 = vmul.f32 %v3743, %v3754
        %v3781 = vmul.f32 %v3744, %v3754
        %v3782 = vmul.f32 %v3745, %v3754
        %v3783 = vmul.f32 %v3746, %v3754
        %v3784 = vmul.f32 %v3747, %v3754
        %v3785 = vmul.f32 %v3748, %v3754
        %v3786 = vmul.f32 %v3749, %v3754
        %v3787 = vadd.f32 %v3686, %v3755
        %v3788 = vadd.f32 %v3687, %v3756
        %v3789 = vadd.f32 %v3688, %v3757
        %v3790 = vadd.f32 %v3689, %v3758
        %v3791 = vadd.f32 %v3690, %v3759
        %v3792 = vadd.f32 %v3691, %v3760
        %v3793 = vadd.f32 %v3692, %v3761
        %v3794 = vadd.f32 %v3693, %v3762
        %v3795 = vadd.f32 %v3694, %v3763
        %v3796 = vadd.f32 %v3695, %v3764
        %v3797 = vadd.f32 %v3696, %v3765
        %v3798 = vadd.f32 %v3697, %v3766
        %v3799 = vadd.f32 %v3698, %v3767
        %v3800 = vadd.f32 %v3699, %v3768
        %v3801 = vadd.f32 %v3700, %v3769
        %v3802 = vadd.f32 %v3701, %v3770
        %v3803 = vadd.f32 %v3702, %v3771
        %v3804 = vadd.f32 %v3703, %v3772
        %v3805 = vadd.f32 %v3704, %v3773
        %v3806 = vadd.f32 %v3705, %v3774
        %v3807 = vadd.f32 %v3706, %v3775
        %v3808 = vadd.f32 %v3707, %v3776
        %v3809 = vadd.f32 %v3708, %v3777
        %v3810 = vadd.f32 %v3709, %v3778
        %v3811 = vadd.f32 %v3710, %v3779
        %v3812 = vadd.f32 %v3711, %v3780
        %v3813 = vadd.f32 %v3712, %v3781
        %v3814 = vadd.f32 %v3713, %v3782
        %v3815 = vadd.f32 %v3714, %v3783
        %v3816 = vadd.f32 %v3715, %v3784
        %v3817 = vadd.f32 %v3716, %v3785
        %v3818 = vadd.f32 %v3717, %v3786
        %v3819 = vld [vmem:[%s3446 + $0x4] sm:$0xff]
        %v3820 = vld [vmem:[%s3446 + $0xc] sm:$0xff]
        %v3821 = vld [vmem:[%s3446 + $0x1c] sm:$0xff]
        %v3822 = vld [vmem:[%s3446 + $0x24] sm:$0xff]
        %v3823 = vld [vmem:[%s3446 + $0x34] sm:$0xff]
        %v3824 = vld [vmem:[%s3446 + $0x3c] sm:$0xff]
        %v3825 = vld [vmem:[%s3446 + $0x4c] sm:$0xff]
        %v3826 = vld [vmem:[%s3446 + $0x54] sm:$0xff]
        %v3827 = vld [vmem:[%s3446 + $0x64] sm:$0xff]
        %v3828 = vld [vmem:[%s3446 + $0x6c] sm:$0xff]
        %v3829 = vld [vmem:[%s3446 + $0x7c] sm:$0xff]
        %v3830 = vld [vmem:[%s3446 + $0x84] sm:$0xff]
        %v3831 = vld [vmem:[%s3446 + $0x94] sm:$0xff]
        %v3832 = vld [vmem:[%s3446 + $0x9c] sm:$0xff]
        %v3833 = vld [vmem:[%s3446 + $0xac] sm:$0xff]
        %v3834 = vld [vmem:[%s3446 + $0xb4] sm:$0xff]
        %v3835 = vld [vmem:[%s3446 + $0xc4] sm:$0xff]
        %v3836 = vld [vmem:[%s3446 + $0xcc] sm:$0xff]
        %v3837 = vld [vmem:[%s3446 + $0xdc] sm:$0xff]
        %v3838 = vld [vmem:[%s3446 + $0xe4] sm:$0xff]
        %v3839 = vld [vmem:[%s3446 + $0xf4] sm:$0xff]
        %v3840 = vld [vmem:[%s3446 + $0xfc] sm:$0xff]
        %v3841 = vld [vmem:[%s3446 + $0x10c] sm:$0xff]
        %v3842 = vld [vmem:[%s3446 + $0x114] sm:$0xff]
        %v3843 = vld [vmem:[%s3446 + $0x124] sm:$0xff]
        %v3844 = vld [vmem:[%s3446 + $0x12c] sm:$0xff]
        %v3845 = vld [vmem:[%s3446 + $0x13c] sm:$0xff]
        %v3846 = vld [vmem:[%s3446 + $0x144] sm:$0xff]
        %v3847 = vld [vmem:[%s3446 + $0x154] sm:$0xff]
        %v3848 = vld [vmem:[%s3446 + $0x15c] sm:$0xff]
        %v3849 = vld [vmem:[%s3446 + $0x16c] sm:$0xff]
        %v3850 = vld [vmem:[%s3446 + $0x174] sm:$0xff]
        %v3851 = vld [vmem:[#allocation5 + $0x20] sm:$0x1]
        %v3852 = vlaneseq
        %v3853 = vshrl.u32 %v3852, 7
        %v3854 = vsub.s32 0, %v3853
        %v3855 = vrot.slane %v3851, %v3854
        %v3856 = vmul.f32 %v3819, %v3855
        %v3857 = vmul.f32 %v3820, %v3855
        %v3858 = vmul.f32 %v3821, %v3855
        %v3859 = vmul.f32 %v3822, %v3855
        %v3860 = vmul.f32 %v3823, %v3855
        %v3861 = vmul.f32 %v3824, %v3855
        %v3862 = vmul.f32 %v3825, %v3855
        %v3863 = vmul.f32 %v3826, %v3855
        %v3864 = vmul.f32 %v3827, %v3855
        %v3865 = vmul.f32 %v3828, %v3855
        %v3866 = vmul.f32 %v3829, %v3855
        %v3867 = vmul.f32 %v3830, %v3855
        %v3868 = vmul.f32 %v3831, %v3855
        %v3869 = vmul.f32 %v3832, %v3855
        %v3870 = vmul.f32 %v3833, %v3855
        %v3871 = vmul.f32 %v3834, %v3855
        %v3872 = vmul.f32 %v3835, %v3855
        %v3873 = vmul.f32 %v3836, %v3855
        %v3874 = vmul.f32 %v3837, %v3855
        %v3875 = vmul.f32 %v3838, %v3855
        %v3876 = vmul.f32 %v3839, %v3855
        %v3877 = vmul.f32 %v3840, %v3855
        %v3878 = vmul.f32 %v3841, %v3855
        %v3879 = vmul.f32 %v3842, %v3855
        %v3880 = vmul.f32 %v3843, %v3855
        %v3881 = vmul.f32 %v3844, %v3855
        %v3882 = vmul.f32 %v3845, %v3855
        %v3883 = vmul.f32 %v3846, %v3855
        %v3884 = vmul.f32 %v3847, %v3855
        %v3885 = vmul.f32 %v3848, %v3855
        %v3886 = vmul.f32 %v3849, %v3855
        %v3887 = vmul.f32 %v3850, %v3855
        %v3888 = vadd.f32 %v3787, %v3856
        %v3889 = vadd.f32 %v3788, %v3857
        %v3890 = vadd.f32 %v3789, %v3858
        %v3891 = vadd.f32 %v3790, %v3859
        %v3892 = vadd.f32 %v3791, %v3860
        %v3893 = vadd.f32 %v3792, %v3861
        %v3894 = vadd.f32 %v3793, %v3862
        %v3895 = vadd.f32 %v3794, %v3863
        %v3896 = vadd.f32 %v3795, %v3864
        %v3897 = vadd.f32 %v3796, %v3865
        %v3898 = vadd.f32 %v3797, %v3866
        %v3899 = vadd.f32 %v3798, %v3867
        %v3900 = vadd.f32 %v3799, %v3868
        %v3901 = vadd.f32 %v3800, %v3869
        %v3902 = vadd.f32 %v3801, %v3870
        %v3903 = vadd.f32 %v3802, %v3871
        %v3904 = vadd.f32 %v3803, %v3872
        %v3905 = vadd.f32 %v3804, %v3873
        %v3906 = vadd.f32 %v3805, %v3874
        %v3907 = vadd.f32 %v3806, %v3875
        %v3908 = vadd.f32 %v3807, %v3876
        %v3909 = vadd.f32 %v3808, %v3877
        %v3910 = vadd.f32 %v3809, %v3878
        %v3911 = vadd.f32 %v3810, %v3879
        %v3912 = vadd.f32 %v3811, %v3880
        %v3913 = vadd.f32 %v3812, %v3881
        %v3914 = vadd.f32 %v3813, %v3882
        %v3915 = vadd.f32 %v3814, %v3883
        %v3916 = vadd.f32 %v3815, %v3884
        %v3917 = vadd.f32 %v3816, %v3885
        %v3918 = vadd.f32 %v3817, %v3886
        %v3919 = vadd.f32 %v3818, %v3887
        %v3920 = vld [vmem:[%s3446 + $0x5] sm:$0xff]
        %v3921 = vld [vmem:[%s3446 + $0xd] sm:$0xff]
        %v3922 = vld [vmem:[%s3446 + $0x1d] sm:$0xff]
        %v3923 = vld [vmem:[%s3446 + $0x25] sm:$0xff]
        %v3924 = vld [vmem:[%s3446 + $0x35] sm:$0xff]
        %v3925 = vld [vmem:[%s3446 + $0x3d] sm:$0xff]
        %v3926 = vld [vmem:[%s3446 + $0x4d] sm:$0xff]
        %v3927 = vld [vmem:[%s3446 + $0x55] sm:$0xff]
        %v3928 = vld [vmem:[%s3446 + $0x65] sm:$0xff]
        %v3929 = vld [vmem:[%s3446 + $0x6d] sm:$0xff]
        %v3930 = vld [vmem:[%s3446 + $0x7d] sm:$0xff]
        %v3931 = vld [vmem:[%s3446 + $0x85] sm:$0xff]
        %v3932 = vld [vmem:[%s3446 + $0x95] sm:$0xff]
        %v3933 = vld [vmem:[%s3446 + $0x9d] sm:$0xff]
        %v3934 = vld [vmem:[%s3446 + $0xad] sm:$0xff]
        %v3935 = vld [vmem:[%s3446 + $0xb5] sm:$0xff]
        %v3936 = vld [vmem:[%s3446 + $0xc5] sm:$0xff]
        %v3937 = vld [vmem:[%s3446 + $0xcd] sm:$0xff]
        %v3938 = vld [vmem:[%s3446 + $0xdd] sm:$0xff]
        %v3939 = vld [vmem:[%s3446 + $0xe5] sm:$0xff]
        %v3940 = vld [vmem:[%s3446 + $0xf5] sm:$0xff]
        %v3941 = vld [vmem:[%s3446 + $0xfd] sm:$0xff]
        %v3942 = vld [vmem:[%s3446 + $0x10d] sm:$0xff]
        %v3943 = vld [vmem:[%s3446 + $0x115] sm:$0xff]
        %v3944 = vld [vmem:[%s3446 + $0x125] sm:$0xff]
        %v3945 = vld [vmem:[%s3446 + $0x12d] sm:$0xff]
        %v3946 = vld [vmem:[%s3446 + $0x13d] sm:$0xff]
        %v3947 = vld [vmem:[%s3446 + $0x145] sm:$0xff]
        %v3948 = vld [vmem:[%s3446 + $0x155] sm:$0xff]
        %v3949 = vld [vmem:[%s3446 + $0x15d] sm:$0xff]
        %v3950 = vld [vmem:[%s3446 + $0x16d] sm:$0xff]
        %v3951 = vld [vmem:[%s3446 + $0x175] sm:$0xff]
        %v3952 = vld [vmem:[#allocation5 + $0x21] sm:$0x1]
        %v3953 = vlaneseq
        %v3954 = vshrl.u32 %v3953, 7
        %v3955 = vsub.s32 0, %v3954
        %v3956 = vrot.slane %v3952, %v3955
        %v3957 = vmul.f32 %v3920, %v3956
        %v3958 = vmul.f32 %v3921, %v3956
        %v3959 = vmul.f32 %v3922, %v3956
        %v3960 = vmul.f32 %v3923, %v3956
        %v3961 = vmul.f32 %v3924, %v3956
        %v3962 = vmul.f32 %v3925, %v3956
        %v3963 = vmul.f32 %v3926, %v3956
        %v3964 = vmul.f32 %v3927, %v3956
        %v3965 = vmul.f32 %v3928, %v3956
        %v3966 = vmul.f32 %v3929, %v3956
        %v3967 = vmul.f32 %v3930, %v3956
        %v3968 = vmul.f32 %v3931, %v3956
        %v3969 = vmul.f32 %v3932, %v3956
        %v3970 = vmul.f32 %v3933, %v3956
        %v3971 = vmul.f32 %v3934, %v3956
        %v3972 = vmul.f32 %v3935, %v3956
        %v3973 = vmul.f32 %v3936, %v3956
        %v3974 = vmul.f32 %v3937, %v3956
        %v3975 = vmul.f32 %v3938, %v3956
        %v3976 = vmul.f32 %v3939, %v3956
        %v3977 = vmul.f32 %v3940, %v3956
        %v3978 = vmul.f32 %v3941, %v3956
        %v3979 = vmul.f32 %v3942, %v3956
        %v3980 = vmul.f32 %v3943, %v3956
        %v3981 = vmul.f32 %v3944, %v3956
        %v3982 = vmul.f32 %v3945, %v3956
        %v3983 = vmul.f32 %v3946, %v3956
        %v3984 = vmul.f32 %v3947, %v3956
        %v3985 = vmul.f32 %v3948, %v3956
        %v3986 = vmul.f32 %v3949, %v3956
        %v3987 = vmul.f32 %v3950, %v3956
        %v3988 = vmul.f32 %v3951, %v3956
        %v3989 = vadd.f32 %v3888, %v3957
        %v3990 = vadd.f32 %v3889, %v3958
        %v3991 = vadd.f32 %v3890, %v3959
        %v3992 = vadd.f32 %v3891, %v3960
        %v3993 = vadd.f32 %v3892, %v3961
        %v3994 = vadd.f32 %v3893, %v3962
        %v3995 = vadd.f32 %v3894, %v3963
        %v3996 = vadd.f32 %v3895, %v3964
        %v3997 = vadd.f32 %v3896, %v3965
        %v3998 = vadd.f32 %v3897, %v3966
        %v3999 = vadd.f32 %v3898, %v3967
        %v4000 = vadd.f32 %v3899, %v3968
        %v4001 = vadd.f32 %v3900, %v3969
        %v4002 = vadd.f32 %v3901, %v3970
        %v4003 = vadd.f32 %v3902, %v3971
        %v4004 = vadd.f32 %v3903, %v3972
        %v4005 = vadd.f32 %v3904, %v3973
        %v4006 = vadd.f32 %v3905, %v3974
        %v4007 = vadd.f32 %v3906, %v3975
        %v4008 = vadd.f32 %v3907, %v3976
        %v4009 = vadd.f32 %v3908, %v3977
        %v4010 = vadd.f32 %v3909, %v3978
        %v4011 = vadd.f32 %v3910, %v3979
        %v4012 = vadd.f32 %v3911, %v3980
        %v4013 = vadd.f32 %v3912, %v3981
        %v4014 = vadd.f32 %v3913, %v3982
        %v4015 = vadd.f32 %v3914, %v3983
        %v4016 = vadd.f32 %v3915, %v3984
        %v4017 = vadd.f32 %v3916, %v3985
        %v4018 = vadd.f32 %v3917, %v3986
        %v4019 = vadd.f32 %v3918, %v3987
        %v4020 = vadd.f32 %v3919, %v3988
        %v4021 = vld [vmem:[%s3446 + $0x6] sm:$0xff]
        %v4022 = vld [vmem:[%s3446 + $0xe] sm:$0xff]
        %v4023 = vld [vmem:[%s3446 + $0x1e] sm:$0xff]
        %v4024 = vld [vmem:[%s3446 + $0x26] sm:$0xff]
        %v4025 = vld [vmem:[%s3446 + $0x36] sm:$0xff]
        %v4026 = vld [vmem:[%s3446 + $0x3e] sm:$0xff]
        %v4027 = vld [vmem:[%s3446 + $0x4e] sm:$0xff]
        %v4028 = vld [vmem:[%s3446 + $0x56] sm:$0xff]
        %v4029 = vld [vmem:[%s3446 + $0x66] sm:$0xff]
        %v4030 = vld [vmem:[%s3446 + $0x6e] sm:$0xff]
        %v4031 = vld [vmem:[%s3446 + $0x7e] sm:$0xff]
        %v4032 = vld [vmem:[%s3446 + $0x86] sm:$0xff]
        %v4033 = vld [vmem:[%s3446 + $0x96] sm:$0xff]
        %v4034 = vld [vmem:[%s3446 + $0x9e] sm:$0xff]
        %v4035 = vld [vmem:[%s3446 + $0xae] sm:$0xff]
        %v4036 = vld [vmem:[%s3446 + $0xb6] sm:$0xff]
        %v4037 = vld [vmem:[%s3446 + $0xc6] sm:$0xff]
        %v4038 = vld [vmem:[%s3446 + $0xce] sm:$0xff]
        %v4039 = vld [vmem:[%s3446 + $0xde] sm:$0xff]
        %v4040 = vld [vmem:[%s3446 + $0xe6] sm:$0xff]
        %v4041 = vld [vmem:[%s3446 + $0xf6] sm:$0xff]
        %v4042 = vld [vmem:[%s3446 + $0xfe] sm:$0xff]
        %v4043 = vld [vmem:[%s3446 + $0x10e] sm:$0xff]
        %v4044 = vld [vmem:[%s3446 + $0x116] sm:$0xff]
        %v4045 = vld [vmem:[%s3446 + $0x126] sm:$0xff]
        %v4046 = vld [vmem:[%s3446 + $0x12e] sm:$0xff]
        %v4047 = vld [vmem:[%s3446 + $0x13e] sm:$0xff]
        %v4048 = vld [vmem:[%s3446 + $0x146] sm:$0xff]
        %v4049 = vld [vmem:[%s3446 + $0x156] sm:$0xff]
        %v4050 = vld [vmem:[%s3446 + $0x15e] sm:$0xff]
        %v4051 = vld [vmem:[%s3446 + $0x16e] sm:$0xff]
        %v4052 = vld [vmem:[%s3446 + $0x176] sm:$0xff]
        %v4053 = vld [vmem:[#allocation5 + $0x22] sm:$0x1]
        %v4054 = vlaneseq
        %v4055 = vshrl.u32 %v4054, 7
        %v4056 = vsub.s32 0, %v4055
        %v4057 = vrot.slane %v4053, %v4056
        %v4058 = vmul.f32 %v4021, %v4057
        %v4059 = vmul.f32 %v4022, %v4057
        %v4060 = vmul.f32 %v4023, %v4057
        %v4061 = vmul.f32 %v4024, %v4057
        %v4062 = vmul.f32 %v4025, %v4057
        %v4063 = vmul.f32 %v4026, %v4057
        %v4064 = vmul.f32 %v4027, %v4057
        %v4065 = vmul.f32 %v4028, %v4057
        %v4066 = vmul.f32 %v4029, %v4057
        %v4067 = vmul.f32 %v4030, %v4057
        %v4068 = vmul.f32 %v4031, %v4057
        %v4069 = vmul.f32 %v4032, %v4057
        %v4070 = vmul.f32 %v4033, %v4057
        %v4071 = vmul.f32 %v4034, %v4057
        %v4072 = vmul.f32 %v4035, %v4057
        %v4073 = vmul.f32 %v4036, %v4057
        %v4074 = vmul.f32 %v4037, %v4057
        %v4075 = vmul.f32 %v4038, %v4057
        %v4076 = vmul.f32 %v4039, %v4057
        %v4077 = vmul.f32 %v4040, %v4057
        %v4078 = vmul.f32 %v4041, %v4057
        %v4079 = vmul.f32 %v4042, %v4057
        %v4080 = vmul.f32 %v4043, %v4057
        %v4081 = vmul.f32 %v4044, %v4057
        %v4082 = vmul.f32 %v4045, %v4057
        %v4083 = vmul.f32 %v4046, %v4057
        %v4084 = vmul.f32 %v4047, %v4057
        %v4085 = vmul.f32 %v4048, %v4057
        %v4086 = vmul.f32 %v4049, %v4057
        %v4087 = vmul.f32 %v4050, %v4057
        %v4088 = vmul.f32 %v4051, %v4057
        %v4089 = vmul.f32 %v4052, %v4057
        %v4090 = vadd.f32 %v3989, %v4058
        %v4091 = vadd.f32 %v3990, %v4059
        %v4092 = vadd.f32 %v3991, %v4060
        %v4093 = vadd.f32 %v3992, %v4061
        %v4094 = vadd.f32 %v3993, %v4062
        %v4095 = vadd.f32 %v3994, %v4063
        %v4096 = vadd.f32 %v3995, %v4064
        %v4097 = vadd.f32 %v3996, %v4065
        %v4098 = vadd.f32 %v3997, %v4066
        %v4099 = vadd.f32 %v3998, %v4067
        %v4100 = vadd.f32 %v3999, %v4068
        %v4101 = vadd.f32 %v4000, %v4069
        %v4102 = vadd.f32 %v4001, %v4070
        %v4103 = vadd.f32 %v4002, %v4071
        %v4104 = vadd.f32 %v4003, %v4072
        %v4105 = vadd.f32 %v4004, %v4073
        %v4106 = vadd.f32 %v4005, %v4074
        %v4107 = vadd.f32 %v4006, %v4075
        %v4108 = vadd.f32 %v4007, %v4076
        %v4109 = vadd.f32 %v4008, %v4077
        %v4110 = vadd.f32 %v4009, %v4078
        %v4111 = vadd.f32 %v4010, %v4079
        %v4112 = vadd.f32 %v4011, %v4080
        %v4113 = vadd.f32 %v4012, %v4081
        %v4114 = vadd.f32 %v4013, %v4082
        %v4115 = vadd.f32 %v4014, %v4083
        %v4116 = vadd.f32 %v4015, %v4084
        %v4117 = vadd.f32 %v4016, %v4085
        %v4118 = vadd.f32 %v4017, %v4086
        %v4119 = vadd.f32 %v4018, %v4087
        %v4120 = vadd.f32 %v4019, %v4088
        %v4121 = vadd.f32 %v4020, %v4089
        %v4122 = vld [vmem:[#allocation3] sm:$0xff]
        %v4123 = vld [vmem:[#allocation3 + $0x8] sm:$0xff]
        %v4124 = vld [vmem:[#allocation3 + $0x10] sm:$0xff]
        %v4125 = vld [vmem:[#allocation3 + $0x18] sm:$0xff]
        %v4126 = vld [vmem:[#allocation3 + $0x20] sm:$0xff]
        %v4127 = vld [vmem:[#allocation3 + $0x28] sm:$0xff]
        %v4128 = vld [vmem:[#allocation3 + $0x30] sm:$0xff]
        %v4129 = vld [vmem:[#allocation3 + $0x38] sm:$0xff]
        %v4130 = vld [vmem:[#allocation3 + $0x40] sm:$0xff]
        %v4131 = vld [vmem:[#allocation3 + $0x48] sm:$0xff]
        %v4132 = vld [vmem:[#allocation3 + $0x50] sm:$0xff]
        %v4133 = vld [vmem:[#allocation3 + $0x58] sm:$0xff]
        %v4134 = vld [vmem:[#allocation3 + $0x60] sm:$0xff]
        %v4135 = vld [vmem:[#allocation3 + $0x68] sm:$0xff]
        %v4136 = vld [vmem:[#allocation3 + $0x70] sm:$0xff]
        %v4137 = vld [vmem:[#allocation3 + $0x78] sm:$0xff]
        %v4138 = vld [vmem:[#allocation3 + $0x80] sm:$0xff]
        %v4139 = vld [vmem:[#allocation3 + $0x88] sm:$0xff]
        %v4140 = vld [vmem:[#allocation3 + $0x90] sm:$0xff]
        %v4141 = vld [vmem:[#allocation3 + $0x98] sm:$0xff]
        %v4142 = vld [vmem:[#allocation3 + $0xa0] sm:$0xff]
        %v4143 = vld [vmem:[#allocation3 + $0xa8] sm:$0xff]
        %v4144 = vld [vmem:[#allocation3 + $0xb0] sm:$0xff]
        %v4145 = vld [vmem:[#allocation3 + $0xb8] sm:$0xff]
        %v4146 = vld [vmem:[#allocation3 + $0xc0] sm:$0xff]
        %v4147 = vld [vmem:[#allocation3 + $0xc8] sm:$0xff]
        %v4148 = vld [vmem:[#allocation3 + $0xd0] sm:$0xff]
        %v4149 = vld [vmem:[#allocation3 + $0xd8] sm:$0xff]
        %v4150 = vld [vmem:[#allocation3 + $0xe0] sm:$0xff]
        %v4151 = vld [vmem:[#allocation3 + $0xe8] sm:$0xff]
        %v4152 = vld [vmem:[#allocation3 + $0xf0] sm:$0xff]
        %v4153 = vld [vmem:[#allocation3 + $0xf8] sm:$0xff]
        %v4154 = vadd.f32 %v4122, %v4090
        %v4155 = vadd.f32 %v4123, %v4091
        %v4156 = vadd.f32 %v4124, %v4092
        %v4157 = vadd.f32 %v4125, %v4093
        %v4158 = vadd.f32 %v4126, %v4094
        %v4159 = vadd.f32 %v4127, %v4095
        %v4160 = vadd.f32 %v4128, %v4096
        %v4161 = vadd.f32 %v4129, %v4097
        %v4162 = vadd.f32 %v4130, %v4098
        %v4163 = vadd.f32 %v4131, %v4099
        %v4164 = vadd.f32 %v4132, %v4100
        %v4165 = vadd.f32 %v4133, %v4101
        %v4166 = vadd.f32 %v4134, %v4102
        %v4167 = vadd.f32 %v4135, %v4103
        %v4168 = vadd.f32 %v4136, %v4104
        %v4169 = vadd.f32 %v4137, %v4105
        %v4170 = vadd.f32 %v4138, %v4106
        %v4171 = vadd.f32 %v4139, %v4107
        %v4172 = vadd.f32 %v4140, %v4108
        %v4173 = vadd.f32 %v4141, %v4109
        %v4174 = vadd.f32 %v4142, %v4110
        %v4175 = vadd.f32 %v4143, %v4111
        %v4176 = vadd.f32 %v4144, %v4112
        %v4177 = vadd.f32 %v4145, %v4113
        %v4178 = vadd.f32 %v4146, %v4114
        %v4179 = vadd.f32 %v4147, %v4115
        %v4180 = vadd.f32 %v4148, %v4116
        %v4181 = vadd.f32 %v4149, %v4117
        %v4182 = vadd.f32 %v4150, %v4118
        %v4183 = vadd.f32 %v4151, %v4119
        %v4184 = vadd.f32 %v4152, %v4120
        %v4185 = vadd.f32 %v4153, %v4121
        %4186 = vst [vmem:[#allocation3] sm:$0xff] %v4154
        %4187 = vst [vmem:[#allocation3 + $0x8] sm:$0xff] %v4155
        %4188 = vst [vmem:[#allocation3 + $0x10] sm:$0xff] %v4156
        %4189 = vst [vmem:[#allocation3 + $0x18] sm:$0xff] %v4157
        %4190 = vst [vmem:[#allocation3 + $0x20] sm:$0xff] %v4158
        %4191 = vst [vmem:[#allocation3 + $0x28] sm:$0xff] %v4159
        %4192 = vst [vmem:[#allocation3 + $0x30] sm:$0xff] %v4160
        %4193 = vst [vmem:[#allocation3 + $0x38] sm:$0xff] %v4161
        %4194 = vst [vmem:[#allocation3 + $0x40] sm:$0xff] %v4162
        %4195 = vst [vmem:[#allocation3 + $0x48] sm:$0xff] %v4163
        %4196 = vst [vmem:[#allocation3 + $0x50] sm:$0xff] %v4164
        %4197 = vst [vmem:[#allocation3 + $0x58] sm:$0xff] %v4165
        %4198 = vst [vmem:[#allocation3 + $0x60] sm:$0xff] %v4166
        %4199 = vst [vmem:[#allocation3 + $0x68] sm:$0xff] %v4167
        %4200 = vst [vmem:[#allocation3 + $0x70] sm:$0xff] %v4168
        %4201 = vst [vmem:[#allocation3 + $0x78] sm:$0xff] %v4169
        %4202 = vst [vmem:[#allocation3 + $0x80] sm:$0xff] %v4170
        %4203 = vst [vmem:[#allocation3 + $0x88] sm:$0xff] %v4171
        %4204 = vst [vmem:[#allocation3 + $0x90] sm:$0xff] %v4172
        %4205 = vst [vmem:[#allocation3 + $0x98] sm:$0xff] %v4173
        %4206 = vst [vmem:[#allocation3 + $0xa0] sm:$0xff] %v4174
        %4207 = vst [vmem:[#allocation3 + $0xa8] sm:$0xff] %v4175
        %4208 = vst [vmem:[#allocation3 + $0xb0] sm:$0xff] %v4176
        %4209 = vst [vmem:[#allocation3 + $0xb8] sm:$0xff] %v4177
        %4210 = vst [vmem:[#allocation3 + $0xc0] sm:$0xff] %v4178
        %4211 = vst [vmem:[#allocation3 + $0xc8] sm:$0xff] %v4179
        %4212 = vst [vmem:[#allocation3 + $0xd0] sm:$0xff] %v4180
        %4213 = vst [vmem:[#allocation3 + $0xd8] sm:$0xff] %v4181
        %4214 = vst [vmem:[#allocation3 + $0xe0] sm:$0xff] %v4182
        %4215 = vst [vmem:[#allocation3 + $0xe8] sm:$0xff] %v4183
        %4216 = vst [vmem:[#allocation3 + $0xf0] sm:$0xff] %v4184
        %4217 = vst [vmem:[#allocation3 + $0xf8] sm:$0xff] %v4185
        %s4218 = scalar_lea.vmem [#allocation2], 120
        %v4219 = vld [vmem:[%s4218] sm:$0xff]
        %v4220 = vld [vmem:[%s4218 + $0x8] sm:$0xff]
        %v4221 = vld [vmem:[%s4218 + $0x18] sm:$0xff]
        %v4222 = vld [vmem:[%s4218 + $0x20] sm:$0xff]
        %v4223 = vld [vmem:[%s4218 + $0x30] sm:$0xff]
        %v4224 = vld [vmem:[%s4218 + $0x38] sm:$0xff]
        %v4225 = vld [vmem:[%s4218 + $0x48] sm:$0xff]
        %v4226 = vld [vmem:[%s4218 + $0x50] sm:$0xff]
        %v4227 = vld [vmem:[%s4218 + $0x60] sm:$0xff]
        %v4228 = vld [vmem:[%s4218 + $0x68] sm:$0xff]
        %v4229 = vld [vmem:[%s4218 + $0x78] sm:$0xff]
        %v4230 = vld [vmem:[%s4218 + $0x80] sm:$0xff]
        %v4231 = vld [vmem:[%s4218 + $0x90] sm:$0xff]
        %v4232 = vld [vmem:[%s4218 + $0x98] sm:$0xff]
        %v4233 = vld [vmem:[%s4218 + $0xa8] sm:$0xff]
        %v4234 = vld [vmem:[%s4218 + $0xb0] sm:$0xff]
        %v4235 = vld [vmem:[%s4218 + $0xc0] sm:$0xff]
        %v4236 = vld [vmem:[%s4218 + $0xc8] sm:$0xff]
        %v4237 = vld [vmem:[%s4218 + $0xd8] sm:$0xff]
        %v4238 = vld [vmem:[%s4218 + $0xe0] sm:$0xff]
        %v4239 = vld [vmem:[%s4218 + $0xf0] sm:$0xff]
        %v4240 = vld [vmem:[%s4218 + $0xf8] sm:$0xff]
        %v4241 = vld [vmem:[%s4218 + $0x108] sm:$0xff]
        %v4242 = vld [vmem:[%s4218 + $0x110] sm:$0xff]
        %v4243 = vld [vmem:[%s4218 + $0x120] sm:$0xff]
        %v4244 = vld [vmem:[%s4218 + $0x128] sm:$0xff]
        %v4245 = vld [vmem:[%s4218 + $0x138] sm:$0xff]
        %v4246 = vld [vmem:[%s4218 + $0x140] sm:$0xff]
        %v4247 = vld [vmem:[%s4218 + $0x150] sm:$0xff]
        %v4248 = vld [vmem:[%s4218 + $0x158] sm:$0xff]
        %v4249 = vld [vmem:[%s4218 + $0x168] sm:$0xff]
        %v4250 = vld [vmem:[%s4218 + $0x170] sm:$0xff]
        %v4251 = vld [vmem:[#allocation5 + $0x23] sm:$0x1]
        %v4252 = vlaneseq
        %v4253 = vshrl.u32 %v4252, 7
        %v4254 = vsub.s32 0, %v4253
        %v4255 = vrot.slane %v4251, %v4254
        %v4256 = vmul.f32 %v4219, %v4255
        %v4257 = vmul.f32 %v4220, %v4255
        %v4258 = vmul.f32 %v4221, %v4255
        %v4259 = vmul.f32 %v4222, %v4255
        %v4260 = vmul.f32 %v4223, %v4255
        %v4261 = vmul.f32 %v4224, %v4255
        %v4262 = vmul.f32 %v4225, %v4255
        %v4263 = vmul.f32 %v4226, %v4255
        %v4264 = vmul.f32 %v4227, %v4255
        %v4265 = vmul.f32 %v4228, %v4255
        %v4266 = vmul.f32 %v4229, %v4255
        %v4267 = vmul.f32 %v4230, %v4255
        %v4268 = vmul.f32 %v4231, %v4255
        %v4269 = vmul.f32 %v4232, %v4255
        %v4270 = vmul.f32 %v4233, %v4255
        %v4271 = vmul.f32 %v4234, %v4255
        %v4272 = vmul.f32 %v4235, %v4255
        %v4273 = vmul.f32 %v4236, %v4255
        %v4274 = vmul.f32 %v4237, %v4255
        %v4275 = vmul.f32 %v4238, %v4255
        %v4276 = vmul.f32 %v4239, %v4255
        %v4277 = vmul.f32 %v4240, %v4255
        %v4278 = vmul.f32 %v4241, %v4255
        %v4279 = vmul.f32 %v4242, %v4255
        %v4280 = vmul.f32 %v4243, %v4255
        %v4281 = vmul.f32 %v4244, %v4255
        %v4282 = vmul.f32 %v4245, %v4255
        %v4283 = vmul.f32 %v4246, %v4255
        %v4284 = vmul.f32 %v4247, %v4255
        %v4285 = vmul.f32 %v4248, %v4255
        %v4286 = vmul.f32 %v4249, %v4255
        %v4287 = vmul.f32 %v4250, %v4255
        %v4288 = vld [vmem:[%s4218 + $0x1] sm:$0xff]
        %v4289 = vld [vmem:[%s4218 + $0x9] sm:$0xff]
        %v4290 = vld [vmem:[%s4218 + $0x19] sm:$0xff]
        %v4291 = vld [vmem:[%s4218 + $0x21] sm:$0xff]
        %v4292 = vld [vmem:[%s4218 + $0x31] sm:$0xff]
        %v4293 = vld [vmem:[%s4218 + $0x39] sm:$0xff]
        %v4294 = vld [vmem:[%s4218 + $0x49] sm:$0xff]
        %v4295 = vld [vmem:[%s4218 + $0x51] sm:$0xff]
        %v4296 = vld [vmem:[%s4218 + $0x61] sm:$0xff]
        %v4297 = vld [vmem:[%s4218 + $0x69] sm:$0xff]
        %v4298 = vld [vmem:[%s4218 + $0x79] sm:$0xff]
        %v4299 = vld [vmem:[%s4218 + $0x81] sm:$0xff]
        %v4300 = vld [vmem:[%s4218 + $0x91] sm:$0xff]
        %v4301 = vld [vmem:[%s4218 + $0x99] sm:$0xff]
        %v4302 = vld [vmem:[%s4218 + $0xa9] sm:$0xff]
        %v4303 = vld [vmem:[%s4218 + $0xb1] sm:$0xff]
        %v4304 = vld [vmem:[%s4218 + $0xc1] sm:$0xff]
        %v4305 = vld [vmem:[%s4218 + $0xc9] sm:$0xff]
        %v4306 = vld [vmem:[%s4218 + $0xd9] sm:$0xff]
        %v4307 = vld [vmem:[%s4218 + $0xe1] sm:$0xff]
        %v4308 = vld [vmem:[%s4218 + $0xf1] sm:$0xff]
        %v4309 = vld [vmem:[%s4218 + $0xf9] sm:$0xff]
        %v4310 = vld [vmem:[%s4218 + $0x109] sm:$0xff]
        %v4311 = vld [vmem:[%s4218 + $0x111] sm:$0xff]
        %v4312 = vld [vmem:[%s4218 + $0x121] sm:$0xff]
        %v4313 = vld [vmem:[%s4218 + $0x129] sm:$0xff]
        %v4314 = vld [vmem:[%s4218 + $0x139] sm:$0xff]
        %v4315 = vld [vmem:[%s4218 + $0x141] sm:$0xff]
        %v4316 = vld [vmem:[%s4218 + $0x151] sm:$0xff]
        %v4317 = vld [vmem:[%s4218 + $0x159] sm:$0xff]
        %v4318 = vld [vmem:[%s4218 + $0x169] sm:$0xff]
        %v4319 = vld [vmem:[%s4218 + $0x171] sm:$0xff]
        %v4320 = vld [vmem:[#allocation5 + $0x24] sm:$0x1]
        %v4321 = vlaneseq
        %v4322 = vshrl.u32 %v4321, 7
        %v4323 = vsub.s32 0, %v4322
        %v4324 = vrot.slane %v4320, %v4323
        %v4325 = vmul.f32 %v4288, %v4324
        %v4326 = vmul.f32 %v4289, %v4324
        %v4327 = vmul.f32 %v4290, %v4324
        %v4328 = vmul.f32 %v4291, %v4324
        %v4329 = vmul.f32 %v4292, %v4324
        %v4330 = vmul.f32 %v4293, %v4324
        %v4331 = vmul.f32 %v4294, %v4324
        %v4332 = vmul.f32 %v4295, %v4324
        %v4333 = vmul.f32 %v4296, %v4324
        %v4334 = vmul.f32 %v4297, %v4324
        %v4335 = vmul.f32 %v4298, %v4324
        %v4336 = vmul.f32 %v4299, %v4324
        %v4337 = vmul.f32 %v4300, %v4324
        %v4338 = vmul.f32 %v4301, %v4324
        %v4339 = vmul.f32 %v4302, %v4324
        %v4340 = vmul.f32 %v4303, %v4324
        %v4341 = vmul.f32 %v4304, %v4324
        %v4342 = vmul.f32 %v4305, %v4324
        %v4343 = vmul.f32 %v4306, %v4324
        %v4344 = vmul.f32 %v4307, %v4324
        %v4345 = vmul.f32 %v4308, %v4324
        %v4346 = vmul.f32 %v4309, %v4324
        %v4347 = vmul.f32 %v4310, %v4324
        %v4348 = vmul.f32 %v4311, %v4324
        %v4349 = vmul.f32 %v4312, %v4324
        %v4350 = vmul.f32 %v4313, %v4324
        %v4351 = vmul.f32 %v4314, %v4324
        %v4352 = vmul.f32 %v4315, %v4324
        %v4353 = vmul.f32 %v4316, %v4324
        %v4354 = vmul.f32 %v4317, %v4324
        %v4355 = vmul.f32 %v4318, %v4324
        %v4356 = vmul.f32 %v4319, %v4324
        %v4357 = vadd.f32 %v4256, %v4325
        %v4358 = vadd.f32 %v4257, %v4326
        %v4359 = vadd.f32 %v4258, %v4327
        %v4360 = vadd.f32 %v4259, %v4328
        %v4361 = vadd.f32 %v4260, %v4329
        %v4362 = vadd.f32 %v4261, %v4330
        %v4363 = vadd.f32 %v4262, %v4331
        %v4364 = vadd.f32 %v4263, %v4332
        %v4365 = vadd.f32 %v4264, %v4333
        %v4366 = vadd.f32 %v4265, %v4334
        %v4367 = vadd.f32 %v4266, %v4335
        %v4368 = vadd.f32 %v4267, %v4336
        %v4369 = vadd.f32 %v4268, %v4337
        %v4370 = vadd.f32 %v4269, %v4338
        %v4371 = vadd.f32 %v4270, %v4339
        %v4372 = vadd.f32 %v4271, %v4340
        %v4373 = vadd.f32 %v4272, %v4341
        %v4374 = vadd.f32 %v4273, %v4342
        %v4375 = vadd.f32 %v4274, %v4343
        %v4376 = vadd.f32 %v4275, %v4344
        %v4377 = vadd.f32 %v4276, %v4345
        %v4378 = vadd.f32 %v4277, %v4346
        %v4379 = vadd.f32 %v4278, %v4347
        %v4380 = vadd.f32 %v4279, %v4348
        %v4381 = vadd.f32 %v4280, %v4349
        %v4382 = vadd.f32 %v4281, %v4350
        %v4383 = vadd.f32 %v4282, %v4351
        %v4384 = vadd.f32 %v4283, %v4352
        %v4385 = vadd.f32 %v4284, %v4353
        %v4386 = vadd.f32 %v4285, %v4354
        %v4387 = vadd.f32 %v4286, %v4355
        %v4388 = vadd.f32 %v4287, %v4356
        %v4389 = vld [vmem:[%s4218 + $0x2] sm:$0xff]
        %v4390 = vld [vmem:[%s4218 + $0xa] sm:$0xff]
        %v4391 = vld [vmem:[%s4218 + $0x1a] sm:$0xff]
        %v4392 = vld [vmem:[%s4218 + $0x22] sm:$0xff]
        %v4393 = vld [vmem:[%s4218 + $0x32] sm:$0xff]
        %v4394 = vld [vmem:[%s4218 + $0x3a] sm:$0xff]
        %v4395 = vld [vmem:[%s4218 + $0x4a] sm:$0xff]
        %v4396 = vld [vmem:[%s4218 + $0x52] sm:$0xff]
        %v4397 = vld [vmem:[%s4218 + $0x62] sm:$0xff]
        %v4398 = vld [vmem:[%s4218 + $0x6a] sm:$0xff]
        %v4399 = vld [vmem:[%s4218 + $0x7a] sm:$0xff]
        %v4400 = vld [vmem:[%s4218 + $0x82] sm:$0xff]
        %v4401 = vld [vmem:[%s4218 + $0x92] sm:$0xff]
        %v4402 = vld [vmem:[%s4218 + $0x9a] sm:$0xff]
        %v4403 = vld [vmem:[%s4218 + $0xaa] sm:$0xff]
        %v4404 = vld [vmem:[%s4218 + $0xb2] sm:$0xff]
        %v4405 = vld [vmem:[%s4218 + $0xc2] sm:$0xff]
        %v4406 = vld [vmem:[%s4218 + $0xca] sm:$0xff]
        %v4407 = vld [vmem:[%s4218 + $0xda] sm:$0xff]
        %v4408 = vld [vmem:[%s4218 + $0xe2] sm:$0xff]
        %v4409 = vld [vmem:[%s4218 + $0xf2] sm:$0xff]
        %v4410 = vld [vmem:[%s4218 + $0xfa] sm:$0xff]
        %v4411 = vld [vmem:[%s4218 + $0x10a] sm:$0xff]
        %v4412 = vld [vmem:[%s4218 + $0x112] sm:$0xff]
        %v4413 = vld [vmem:[%s4218 + $0x122] sm:$0xff]
        %v4414 = vld [vmem:[%s4218 + $0x12a] sm:$0xff]
        %v4415 = vld [vmem:[%s4218 + $0x13a] sm:$0xff]
        %v4416 = vld [vmem:[%s4218 + $0x142] sm:$0xff]
        %v4417 = vld [vmem:[%s4218 + $0x152] sm:$0xff]
        %v4418 = vld [vmem:[%s4218 + $0x15a] sm:$0xff]
        %v4419 = vld [vmem:[%s4218 + $0x16a] sm:$0xff]
        %v4420 = vld [vmem:[%s4218 + $0x172] sm:$0xff]
        %v4421 = vld [vmem:[#allocation5 + $0x25] sm:$0x1]
        %v4422 = vlaneseq
        %v4423 = vshrl.u32 %v4422, 7
        %v4424 = vsub.s32 0, %v4423
        %v4425 = vrot.slane %v4421, %v4424
        %v4426 = vmul.f32 %v4389, %v4425
        %v4427 = vmul.f32 %v4390, %v4425
        %v4428 = vmul.f32 %v4391, %v4425
        %v4429 = vmul.f32 %v4392, %v4425
        %v4430 = vmul.f32 %v4393, %v4425
        %v4431 = vmul.f32 %v4394, %v4425
        %v4432 = vmul.f32 %v4395, %v4425
        %v4433 = vmul.f32 %v4396, %v4425
        %v4434 = vmul.f32 %v4397, %v4425
        %v4435 = vmul.f32 %v4398, %v4425
        %v4436 = vmul.f32 %v4399, %v4425
        %v4437 = vmul.f32 %v4400, %v4425
        %v4438 = vmul.f32 %v4401, %v4425
        %v4439 = vmul.f32 %v4402, %v4425
        %v4440 = vmul.f32 %v4403, %v4425
        %v4441 = vmul.f32 %v4404, %v4425
        %v4442 = vmul.f32 %v4405, %v4425
        %v4443 = vmul.f32 %v4406, %v4425
        %v4444 = vmul.f32 %v4407, %v4425
        %v4445 = vmul.f32 %v4408, %v4425
        %v4446 = vmul.f32 %v4409, %v4425
        %v4447 = vmul.f32 %v4410, %v4425
        %v4448 = vmul.f32 %v4411, %v4425
        %v4449 = vmul.f32 %v4412, %v4425
        %v4450 = vmul.f32 %v4413, %v4425
        %v4451 = vmul.f32 %v4414, %v4425
        %v4452 = vmul.f32 %v4415, %v4425
        %v4453 = vmul.f32 %v4416, %v4425
        %v4454 = vmul.f32 %v4417, %v4425
        %v4455 = vmul.f32 %v4418, %v4425
        %v4456 = vmul.f32 %v4419, %v4425
        %v4457 = vmul.f32 %v4420, %v4425
        %v4458 = vadd.f32 %v4357, %v4426
        %v4459 = vadd.f32 %v4358, %v4427
        %v4460 = vadd.f32 %v4359, %v4428
        %v4461 = vadd.f32 %v4360, %v4429
        %v4462 = vadd.f32 %v4361, %v4430
        %v4463 = vadd.f32 %v4362, %v4431
        %v4464 = vadd.f32 %v4363, %v4432
        %v4465 = vadd.f32 %v4364, %v4433
        %v4466 = vadd.f32 %v4365, %v4434
        %v4467 = vadd.f32 %v4366, %v4435
        %v4468 = vadd.f32 %v4367, %v4436
        %v4469 = vadd.f32 %v4368, %v4437
        %v4470 = vadd.f32 %v4369, %v4438
        %v4471 = vadd.f32 %v4370, %v4439
        %v4472 = vadd.f32 %v4371, %v4440
        %v4473 = vadd.f32 %v4372, %v4441
        %v4474 = vadd.f32 %v4373, %v4442
        %v4475 = vadd.f32 %v4374, %v4443
        %v4476 = vadd.f32 %v4375, %v4444
        %v4477 = vadd.f32 %v4376, %v4445
        %v4478 = vadd.f32 %v4377, %v4446
        %v4479 = vadd.f32 %v4378, %v4447
        %v4480 = vadd.f32 %v4379, %v4448
        %v4481 = vadd.f32 %v4380, %v4449
        %v4482 = vadd.f32 %v4381, %v4450
        %v4483 = vadd.f32 %v4382, %v4451
        %v4484 = vadd.f32 %v4383, %v4452
        %v4485 = vadd.f32 %v4384, %v4453
        %v4486 = vadd.f32 %v4385, %v4454
        %v4487 = vadd.f32 %v4386, %v4455
        %v4488 = vadd.f32 %v4387, %v4456
        %v4489 = vadd.f32 %v4388, %v4457
        %v4490 = vld [vmem:[%s4218 + $0x3] sm:$0xff]
        %v4491 = vld [vmem:[%s4218 + $0xb] sm:$0xff]
        %v4492 = vld [vmem:[%s4218 + $0x1b] sm:$0xff]
        %v4493 = vld [vmem:[%s4218 + $0x23] sm:$0xff]
        %v4494 = vld [vmem:[%s4218 + $0x33] sm:$0xff]
        %v4495 = vld [vmem:[%s4218 + $0x3b] sm:$0xff]
        %v4496 = vld [vmem:[%s4218 + $0x4b] sm:$0xff]
        %v4497 = vld [vmem:[%s4218 + $0x53] sm:$0xff]
        %v4498 = vld [vmem:[%s4218 + $0x63] sm:$0xff]
        %v4499 = vld [vmem:[%s4218 + $0x6b] sm:$0xff]
        %v4500 = vld [vmem:[%s4218 + $0x7b] sm:$0xff]
        %v4501 = vld [vmem:[%s4218 + $0x83] sm:$0xff]
        %v4502 = vld [vmem:[%s4218 + $0x93] sm:$0xff]
        %v4503 = vld [vmem:[%s4218 + $0x9b] sm:$0xff]
        %v4504 = vld [vmem:[%s4218 + $0xab] sm:$0xff]
        %v4505 = vld [vmem:[%s4218 + $0xb3] sm:$0xff]
        %v4506 = vld [vmem:[%s4218 + $0xc3] sm:$0xff]
        %v4507 = vld [vmem:[%s4218 + $0xcb] sm:$0xff]
        %v4508 = vld [vmem:[%s4218 + $0xdb] sm:$0xff]
        %v4509 = vld [vmem:[%s4218 + $0xe3] sm:$0xff]
        %v4510 = vld [vmem:[%s4218 + $0xf3] sm:$0xff]
        %v4511 = vld [vmem:[%s4218 + $0xfb] sm:$0xff]
        %v4512 = vld [vmem:[%s4218 + $0x10b] sm:$0xff]
        %v4513 = vld [vmem:[%s4218 + $0x113] sm:$0xff]
        %v4514 = vld [vmem:[%s4218 + $0x123] sm:$0xff]
        %v4515 = vld [vmem:[%s4218 + $0x12b] sm:$0xff]
        %v4516 = vld [vmem:[%s4218 + $0x13b] sm:$0xff]
        %v4517 = vld [vmem:[%s4218 + $0x143] sm:$0xff]
        %v4518 = vld [vmem:[%s4218 + $0x153] sm:$0xff]
        %v4519 = vld [vmem:[%s4218 + $0x15b] sm:$0xff]
        %v4520 = vld [vmem:[%s4218 + $0x16b] sm:$0xff]
        %v4521 = vld [vmem:[%s4218 + $0x173] sm:$0xff]
        %v4522 = vld [vmem:[#allocation5 + $0x26] sm:$0x1]
        %v4523 = vlaneseq
        %v4524 = vshrl.u32 %v4523, 7
        %v4525 = vsub.s32 0, %v4524
        %v4526 = vrot.slane %v4522, %v4525
        %v4527 = vmul.f32 %v4490, %v4526
        %v4528 = vmul.f32 %v4491, %v4526
        %v4529 = vmul.f32 %v4492, %v4526
        %v4530 = vmul.f32 %v4493, %v4526
        %v4531 = vmul.f32 %v4494, %v4526
        %v4532 = vmul.f32 %v4495, %v4526
        %v4533 = vmul.f32 %v4496, %v4526
        %v4534 = vmul.f32 %v4497, %v4526
        %v4535 = vmul.f32 %v4498, %v4526
        %v4536 = vmul.f32 %v4499, %v4526
        %v4537 = vmul.f32 %v4500, %v4526
        %v4538 = vmul.f32 %v4501, %v4526
        %v4539 = vmul.f32 %v4502, %v4526
        %v4540 = vmul.f32 %v4503, %v4526
        %v4541 = vmul.f32 %v4504, %v4526
        %v4542 = vmul.f32 %v4505, %v4526
        %v4543 = vmul.f32 %v4506, %v4526
        %v4544 = vmul.f32 %v4507, %v4526
        %v4545 = vmul.f32 %v4508, %v4526
        %v4546 = vmul.f32 %v4509, %v4526
        %v4547 = vmul.f32 %v4510, %v4526
        %v4548 = vmul.f32 %v4511, %v4526
        %v4549 = vmul.f32 %v4512, %v4526
        %v4550 = vmul.f32 %v4513, %v4526
        %v4551 = vmul.f32 %v4514, %v4526
        %v4552 = vmul.f32 %v4515, %v4526
        %v4553 = vmul.f32 %v4516, %v4526
        %v4554 = vmul.f32 %v4517, %v4526
        %v4555 = vmul.f32 %v4518, %v4526
        %v4556 = vmul.f32 %v4519, %v4526
        %v4557 = vmul.f32 %v4520, %v4526
        %v4558 = vmul.f32 %v4521, %v4526
        %v4559 = vadd.f32 %v4458, %v4527
        %v4560 = vadd.f32 %v4459, %v4528
        %v4561 = vadd.f32 %v4460, %v4529
        %v4562 = vadd.f32 %v4461, %v4530
        %v4563 = vadd.f32 %v4462, %v4531
        %v4564 = vadd.f32 %v4463, %v4532
        %v4565 = vadd.f32 %v4464, %v4533
        %v4566 = vadd.f32 %v4465, %v4534
        %v4567 = vadd.f32 %v4466, %v4535
        %v4568 = vadd.f32 %v4467, %v4536
        %v4569 = vadd.f32 %v4468, %v4537
        %v4570 = vadd.f32 %v4469, %v4538
        %v4571 = vadd.f32 %v4470, %v4539
        %v4572 = vadd.f32 %v4471, %v4540
        %v4573 = vadd.f32 %v4472, %v4541
        %v4574 = vadd.f32 %v4473, %v4542
        %v4575 = vadd.f32 %v4474, %v4543
        %v4576 = vadd.f32 %v4475, %v4544
        %v4577 = vadd.f32 %v4476, %v4545
        %v4578 = vadd.f32 %v4477, %v4546
        %v4579 = vadd.f32 %v4478, %v4547
        %v4580 = vadd.f32 %v4479, %v4548
        %v4581 = vadd.f32 %v4480, %v4549
        %v4582 = vadd.f32 %v4481, %v4550
        %v4583 = vadd.f32 %v4482, %v4551
        %v4584 = vadd.f32 %v4483, %v4552
        %v4585 = vadd.f32 %v4484, %v4553
        %v4586 = vadd.f32 %v4485, %v4554
        %v4587 = vadd.f32 %v4486, %v4555
        %v4588 = vadd.f32 %v4487, %v4556
        %v4589 = vadd.f32 %v4488, %v4557
        %v4590 = vadd.f32 %v4489, %v4558
        %v4591 = vld [vmem:[%s4218 + $0x4] sm:$0xff]
        %v4592 = vld [vmem:[%s4218 + $0xc] sm:$0xff]
        %v4593 = vld [vmem:[%s4218 + $0x1c] sm:$0xff]
        %v4594 = vld [vmem:[%s4218 + $0x24] sm:$0xff]
        %v4595 = vld [vmem:[%s4218 + $0x34] sm:$0xff]
        %v4596 = vld [vmem:[%s4218 + $0x3c] sm:$0xff]
        %v4597 = vld [vmem:[%s4218 + $0x4c] sm:$0xff]
        %v4598 = vld [vmem:[%s4218 + $0x54] sm:$0xff]
        %v4599 = vld [vmem:[%s4218 + $0x64] sm:$0xff]
        %v4600 = vld [vmem:[%s4218 + $0x6c] sm:$0xff]
        %v4601 = vld [vmem:[%s4218 + $0x7c] sm:$0xff]
        %v4602 = vld [vmem:[%s4218 + $0x84] sm:$0xff]
        %v4603 = vld [vmem:[%s4218 + $0x94] sm:$0xff]
        %v4604 = vld [vmem:[%s4218 + $0x9c] sm:$0xff]
        %v4605 = vld [vmem:[%s4218 + $0xac] sm:$0xff]
        %v4606 = vld [vmem:[%s4218 + $0xb4] sm:$0xff]
        %v4607 = vld [vmem:[%s4218 + $0xc4] sm:$0xff]
        %v4608 = vld [vmem:[%s4218 + $0xcc] sm:$0xff]
        %v4609 = vld [vmem:[%s4218 + $0xdc] sm:$0xff]
        %v4610 = vld [vmem:[%s4218 + $0xe4] sm:$0xff]
        %v4611 = vld [vmem:[%s4218 + $0xf4] sm:$0xff]
        %v4612 = vld [vmem:[%s4218 + $0xfc] sm:$0xff]
        %v4613 = vld [vmem:[%s4218 + $0x10c] sm:$0xff]
        %v4614 = vld [vmem:[%s4218 + $0x114] sm:$0xff]
        %v4615 = vld [vmem:[%s4218 + $0x124] sm:$0xff]
        %v4616 = vld [vmem:[%s4218 + $0x12c] sm:$0xff]
        %v4617 = vld [vmem:[%s4218 + $0x13c] sm:$0xff]
        %v4618 = vld [vmem:[%s4218 + $0x144] sm:$0xff]
        %v4619 = vld [vmem:[%s4218 + $0x154] sm:$0xff]
        %v4620 = vld [vmem:[%s4218 + $0x15c] sm:$0xff]
        %v4621 = vld [vmem:[%s4218 + $0x16c] sm:$0xff]
        %v4622 = vld [vmem:[%s4218 + $0x174] sm:$0xff]
        %v4623 = vld [vmem:[#allocation5 + $0x27] sm:$0x1]
        %v4624 = vlaneseq
        %v4625 = vshrl.u32 %v4624, 7
        %v4626 = vsub.s32 0, %v4625
        %v4627 = vrot.slane %v4623, %v4626
        %v4628 = vmul.f32 %v4591, %v4627
        %v4629 = vmul.f32 %v4592, %v4627
        %v4630 = vmul.f32 %v4593, %v4627
        %v4631 = vmul.f32 %v4594, %v4627
        %v4632 = vmul.f32 %v4595, %v4627
        %v4633 = vmul.f32 %v4596, %v4627
        %v4634 = vmul.f32 %v4597, %v4627
        %v4635 = vmul.f32 %v4598, %v4627
        %v4636 = vmul.f32 %v4599, %v4627
        %v4637 = vmul.f32 %v4600, %v4627
        %v4638 = vmul.f32 %v4601, %v4627
        %v4639 = vmul.f32 %v4602, %v4627
        %v4640 = vmul.f32 %v4603, %v4627
        %v4641 = vmul.f32 %v4604, %v4627
        %v4642 = vmul.f32 %v4605, %v4627
        %v4643 = vmul.f32 %v4606, %v4627
        %v4644 = vmul.f32 %v4607, %v4627
        %v4645 = vmul.f32 %v4608, %v4627
        %v4646 = vmul.f32 %v4609, %v4627
        %v4647 = vmul.f32 %v4610, %v4627
        %v4648 = vmul.f32 %v4611, %v4627
        %v4649 = vmul.f32 %v4612, %v4627
        %v4650 = vmul.f32 %v4613, %v4627
        %v4651 = vmul.f32 %v4614, %v4627
        %v4652 = vmul.f32 %v4615, %v4627
        %v4653 = vmul.f32 %v4616, %v4627
        %v4654 = vmul.f32 %v4617, %v4627
        %v4655 = vmul.f32 %v4618, %v4627
        %v4656 = vmul.f32 %v4619, %v4627
        %v4657 = vmul.f32 %v4620, %v4627
        %v4658 = vmul.f32 %v4621, %v4627
        %v4659 = vmul.f32 %v4622, %v4627
        %v4660 = vadd.f32 %v4559, %v4628
        %v4661 = vadd.f32 %v4560, %v4629
        %v4662 = vadd.f32 %v4561, %v4630
        %v4663 = vadd.f32 %v4562, %v4631
        %v4664 = vadd.f32 %v4563, %v4632
        %v4665 = vadd.f32 %v4564, %v4633
        %v4666 = vadd.f32 %v4565, %v4634
        %v4667 = vadd.f32 %v4566, %v4635
        %v4668 = vadd.f32 %v4567, %v4636
        %v4669 = vadd.f32 %v4568, %v4637
        %v4670 = vadd.f32 %v4569, %v4638
        %v4671 = vadd.f32 %v4570, %v4639
        %v4672 = vadd.f32 %v4571, %v4640
        %v4673 = vadd.f32 %v4572, %v4641
        %v4674 = vadd.f32 %v4573, %v4642
        %v4675 = vadd.f32 %v4574, %v4643
        %v4676 = vadd.f32 %v4575, %v4644
        %v4677 = vadd.f32 %v4576, %v4645
        %v4678 = vadd.f32 %v4577, %v4646
        %v4679 = vadd.f32 %v4578, %v4647
        %v4680 = vadd.f32 %v4579, %v4648
        %v4681 = vadd.f32 %v4580, %v4649
        %v4682 = vadd.f32 %v4581, %v4650
        %v4683 = vadd.f32 %v4582, %v4651
        %v4684 = vadd.f32 %v4583, %v4652
        %v4685 = vadd.f32 %v4584, %v4653
        %v4686 = vadd.f32 %v4585, %v4654
        %v4687 = vadd.f32 %v4586, %v4655
        %v4688 = vadd.f32 %v4587, %v4656
        %v4689 = vadd.f32 %v4588, %v4657
        %v4690 = vadd.f32 %v4589, %v4658
        %v4691 = vadd.f32 %v4590, %v4659
        %v4692 = vld [vmem:[%s4218 + $0x5] sm:$0xff]
        %v4693 = vld [vmem:[%s4218 + $0xd] sm:$0xff]
        %v4694 = vld [vmem:[%s4218 + $0x1d] sm:$0xff]
        %v4695 = vld [vmem:[%s4218 + $0x25] sm:$0xff]
        %v4696 = vld [vmem:[%s4218 + $0x35] sm:$0xff]
        %v4697 = vld [vmem:[%s4218 + $0x3d] sm:$0xff]
        %v4698 = vld [vmem:[%s4218 + $0x4d] sm:$0xff]
        %v4699 = vld [vmem:[%s4218 + $0x55] sm:$0xff]
        %v4700 = vld [vmem:[%s4218 + $0x65] sm:$0xff]
        %v4701 = vld [vmem:[%s4218 + $0x6d] sm:$0xff]
        %v4702 = vld [vmem:[%s4218 + $0x7d] sm:$0xff]
        %v4703 = vld [vmem:[%s4218 + $0x85] sm:$0xff]
        %v4704 = vld [vmem:[%s4218 + $0x95] sm:$0xff]
        %v4705 = vld [vmem:[%s4218 + $0x9d] sm:$0xff]
        %v4706 = vld [vmem:[%s4218 + $0xad] sm:$0xff]
        %v4707 = vld [vmem:[%s4218 + $0xb5] sm:$0xff]
        %v4708 = vld [vmem:[%s4218 + $0xc5] sm:$0xff]
        %v4709 = vld [vmem:[%s4218 + $0xcd] sm:$0xff]
        %v4710 = vld [vmem:[%s4218 + $0xdd] sm:$0xff]
        %v4711 = vld [vmem:[%s4218 + $0xe5] sm:$0xff]
        %v4712 = vld [vmem:[%s4218 + $0xf5] sm:$0xff]
        %v4713 = vld [vmem:[%s4218 + $0xfd] sm:$0xff]
        %v4714 = vld [vmem:[%s4218 + $0x10d] sm:$0xff]
        %v4715 = vld [vmem:[%s4218 + $0x115] sm:$0xff]
        %v4716 = vld [vmem:[%s4218 + $0x125] sm:$0xff]
        %v4717 = vld [vmem:[%s4218 + $0x12d] sm:$0xff]
        %v4718 = vld [vmem:[%s4218 + $0x13d] sm:$0xff]
        %v4719 = vld [vmem:[%s4218 + $0x145] sm:$0xff]
        %v4720 = vld [vmem:[%s4218 + $0x155] sm:$0xff]
        %v4721 = vld [vmem:[%s4218 + $0x15d] sm:$0xff]
        %v4722 = vld [vmem:[%s4218 + $0x16d] sm:$0xff]
        %v4723 = vld [vmem:[%s4218 + $0x175] sm:$0xff]
        %v4724 = vld [vmem:[#allocation5 + $0x28] sm:$0x1]
        %v4725 = vlaneseq
        %v4726 = vshrl.u32 %v4725, 7
        %v4727 = vsub.s32 0, %v4726
        %v4728 = vrot.slane %v4724, %v4727
        %v4729 = vmul.f32 %v4692, %v4728
        %v4730 = vmul.f32 %v4693, %v4728
        %v4731 = vmul.f32 %v4694, %v4728
        %v4732 = vmul.f32 %v4695, %v4728
        %v4733 = vmul.f32 %v4696, %v4728
        %v4734 = vmul.f32 %v4697, %v4728
        %v4735 = vmul.f32 %v4698, %v4728
        %v4736 = vmul.f32 %v4699, %v4728
        %v4737 = vmul.f32 %v4700, %v4728
        %v4738 = vmul.f32 %v4701, %v4728
        %v4739 = vmul.f32 %v4702, %v4728
        %v4740 = vmul.f32 %v4703, %v4728
        %v4741 = vmul.f32 %v4704, %v4728
        %v4742 = vmul.f32 %v4705, %v4728
        %v4743 = vmul.f32 %v4706, %v4728
        %v4744 = vmul.f32 %v4707, %v4728
        %v4745 = vmul.f32 %v4708, %v4728
        %v4746 = vmul.f32 %v4709, %v4728
        %v4747 = vmul.f32 %v4710, %v4728
        %v4748 = vmul.f32 %v4711, %v4728
        %v4749 = vmul.f32 %v4712, %v4728
        %v4750 = vmul.f32 %v4713, %v4728
        %v4751 = vmul.f32 %v4714, %v4728
        %v4752 = vmul.f32 %v4715, %v4728
        %v4753 = vmul.f32 %v4716, %v4728
        %v4754 = vmul.f32 %v4717, %v4728
        %v4755 = vmul.f32 %v4718, %v4728
        %v4756 = vmul.f32 %v4719, %v4728
        %v4757 = vmul.f32 %v4720, %v4728
        %v4758 = vmul.f32 %v4721, %v4728
        %v4759 = vmul.f32 %v4722, %v4728
        %v4760 = vmul.f32 %v4723, %v4728
        %v4761 = vadd.f32 %v4660, %v4729
        %v4762 = vadd.f32 %v4661, %v4730
        %v4763 = vadd.f32 %v4662, %v4731
        %v4764 = vadd.f32 %v4663, %v4732
        %v4765 = vadd.f32 %v4664, %v4733
        %v4766 = vadd.f32 %v4665, %v4734
        %v4767 = vadd.f32 %v4666, %v4735
        %v4768 = vadd.f32 %v4667, %v4736
        %v4769 = vadd.f32 %v4668, %v4737
        %v4770 = vadd.f32 %v4669, %v4738
        %v4771 = vadd.f32 %v4670, %v4739
        %v4772 = vadd.f32 %v4671, %v4740
        %v4773 = vadd.f32 %v4672, %v4741
        %v4774 = vadd.f32 %v4673, %v4742
        %v4775 = vadd.f32 %v4674, %v4743
        %v4776 = vadd.f32 %v4675, %v4744
        %v4777 = vadd.f32 %v4676, %v4745
        %v4778 = vadd.f32 %v4677, %v4746
        %v4779 = vadd.f32 %v4678, %v4747
        %v4780 = vadd.f32 %v4679, %v4748
        %v4781 = vadd.f32 %v4680, %v4749
        %v4782 = vadd.f32 %v4681, %v4750
        %v4783 = vadd.f32 %v4682, %v4751
        %v4784 = vadd.f32 %v4683, %v4752
        %v4785 = vadd.f32 %v4684, %v4753
        %v4786 = vadd.f32 %v4685, %v4754
        %v4787 = vadd.f32 %v4686, %v4755
        %v4788 = vadd.f32 %v4687, %v4756
        %v4789 = vadd.f32 %v4688, %v4757
        %v4790 = vadd.f32 %v4689, %v4758
        %v4791 = vadd.f32 %v4690, %v4759
        %v4792 = vadd.f32 %v4691, %v4760
        %v4793 = vld [vmem:[%s4218 + $0x6] sm:$0xff]
        %v4794 = vld [vmem:[%s4218 + $0xe] sm:$0xff]
        %v4795 = vld [vmem:[%s4218 + $0x1e] sm:$0xff]
        %v4796 = vld [vmem:[%s4218 + $0x26] sm:$0xff]
        %v4797 = vld [vmem:[%s4218 + $0x36] sm:$0xff]
        %v4798 = vld [vmem:[%s4218 + $0x3e] sm:$0xff]
        %v4799 = vld [vmem:[%s4218 + $0x4e] sm:$0xff]
        %v4800 = vld [vmem:[%s4218 + $0x56] sm:$0xff]
        %v4801 = vld [vmem:[%s4218 + $0x66] sm:$0xff]
        %v4802 = vld [vmem:[%s4218 + $0x6e] sm:$0xff]
        %v4803 = vld [vmem:[%s4218 + $0x7e] sm:$0xff]
        %v4804 = vld [vmem:[%s4218 + $0x86] sm:$0xff]
        %v4805 = vld [vmem:[%s4218 + $0x96] sm:$0xff]
        %v4806 = vld [vmem:[%s4218 + $0x9e] sm:$0xff]
        %v4807 = vld [vmem:[%s4218 + $0xae] sm:$0xff]
        %v4808 = vld [vmem:[%s4218 + $0xb6] sm:$0xff]
        %v4809 = vld [vmem:[%s4218 + $0xc6] sm:$0xff]
        %v4810 = vld [vmem:[%s4218 + $0xce] sm:$0xff]
        %v4811 = vld [vmem:[%s4218 + $0xde] sm:$0xff]
        %v4812 = vld [vmem:[%s4218 + $0xe6] sm:$0xff]
        %v4813 = vld [vmem:[%s4218 + $0xf6] sm:$0xff]
        %v4814 = vld [vmem:[%s4218 + $0xfe] sm:$0xff]
        %v4815 = vld [vmem:[%s4218 + $0x10e] sm:$0xff]
        %v4816 = vld [vmem:[%s4218 + $0x116] sm:$0xff]
        %v4817 = vld [vmem:[%s4218 + $0x126] sm:$0xff]
        %v4818 = vld [vmem:[%s4218 + $0x12e] sm:$0xff]
        %v4819 = vld [vmem:[%s4218 + $0x13e] sm:$0xff]
        %v4820 = vld [vmem:[%s4218 + $0x146] sm:$0xff]
        %v4821 = vld [vmem:[%s4218 + $0x156] sm:$0xff]
        %v4822 = vld [vmem:[%s4218 + $0x15e] sm:$0xff]
        %v4823 = vld [vmem:[%s4218 + $0x16e] sm:$0xff]
        %v4824 = vld [vmem:[%s4218 + $0x176] sm:$0xff]
        %v4825 = vld [vmem:[#allocation5 + $0x29] sm:$0x1]
        %v4826 = vlaneseq
        %v4827 = vshrl.u32 %v4826, 7
        %v4828 = vsub.s32 0, %v4827
        %v4829 = vrot.slane %v4825, %v4828
        %v4830 = vmul.f32 %v4793, %v4829
        %v4831 = vmul.f32 %v4794, %v4829
        %v4832 = vmul.f32 %v4795, %v4829
        %v4833 = vmul.f32 %v4796, %v4829
        %v4834 = vmul.f32 %v4797, %v4829
        %v4835 = vmul.f32 %v4798, %v4829
        %v4836 = vmul.f32 %v4799, %v4829
        %v4837 = vmul.f32 %v4800, %v4829
        %v4838 = vmul.f32 %v4801, %v4829
        %v4839 = vmul.f32 %v4802, %v4829
        %v4840 = vmul.f32 %v4803, %v4829
        %v4841 = vmul.f32 %v4804, %v4829
        %v4842 = vmul.f32 %v4805, %v4829
        %v4843 = vmul.f32 %v4806, %v4829
        %v4844 = vmul.f32 %v4807, %v4829
        %v4845 = vmul.f32 %v4808, %v4829
        %v4846 = vmul.f32 %v4809, %v4829
        %v4847 = vmul.f32 %v4810, %v4829
        %v4848 = vmul.f32 %v4811, %v4829
        %v4849 = vmul.f32 %v4812, %v4829
        %v4850 = vmul.f32 %v4813, %v4829
        %v4851 = vmul.f32 %v4814, %v4829
        %v4852 = vmul.f32 %v4815, %v4829
        %v4853 = vmul.f32 %v4816, %v4829
        %v4854 = vmul.f32 %v4817, %v4829
        %v4855 = vmul.f32 %v4818, %v4829
        %v4856 = vmul.f32 %v4819, %v4829
        %v4857 = vmul.f32 %v4820, %v4829
        %v4858 = vmul.f32 %v4821, %v4829
        %v4859 = vmul.f32 %v4822, %v4829
        %v4860 = vmul.f32 %v4823, %v4829
        %v4861 = vmul.f32 %v4824, %v4829
        %v4862 = vadd.f32 %v4761, %v4830
        %v4863 = vadd.f32 %v4762, %v4831
        %v4864 = vadd.f32 %v4763, %v4832
        %v4865 = vadd.f32 %v4764, %v4833
        %v4866 = vadd.f32 %v4765, %v4834
        %v4867 = vadd.f32 %v4766, %v4835
        %v4868 = vadd.f32 %v4767, %v4836
        %v4869 = vadd.f32 %v4768, %v4837
        %v4870 = vadd.f32 %v4769, %v4838
        %v4871 = vadd.f32 %v4770, %v4839
        %v4872 = vadd.f32 %v4771, %v4840
        %v4873 = vadd.f32 %v4772, %v4841
        %v4874 = vadd.f32 %v4773, %v4842
        %v4875 = vadd.f32 %v4774, %v4843
        %v4876 = vadd.f32 %v4775, %v4844
        %v4877 = vadd.f32 %v4776, %v4845
        %v4878 = vadd.f32 %v4777, %v4846
        %v4879 = vadd.f32 %v4778, %v4847
        %v4880 = vadd.f32 %v4779, %v4848
        %v4881 = vadd.f32 %v4780, %v4849
        %v4882 = vadd.f32 %v4781, %v4850
        %v4883 = vadd.f32 %v4782, %v4851
        %v4884 = vadd.f32 %v4783, %v4852
        %v4885 = vadd.f32 %v4784, %v4853
        %v4886 = vadd.f32 %v4785, %v4854
        %v4887 = vadd.f32 %v4786, %v4855
        %v4888 = vadd.f32 %v4787, %v4856
        %v4889 = vadd.f32 %v4788, %v4857
        %v4890 = vadd.f32 %v4789, %v4858
        %v4891 = vadd.f32 %v4790, %v4859
        %v4892 = vadd.f32 %v4791, %v4860
        %v4893 = vadd.f32 %v4792, %v4861
        %v4894 = vld [vmem:[#allocation3] sm:$0xff]
        %v4895 = vld [vmem:[#allocation3 + $0x8] sm:$0xff]
        %v4896 = vld [vmem:[#allocation3 + $0x10] sm:$0xff]
        %v4897 = vld [vmem:[#allocation3 + $0x18] sm:$0xff]
        %v4898 = vld [vmem:[#allocation3 + $0x20] sm:$0xff]
        %v4899 = vld [vmem:[#allocation3 + $0x28] sm:$0xff]
        %v4900 = vld [vmem:[#allocation3 + $0x30] sm:$0xff]
        %v4901 = vld [vmem:[#allocation3 + $0x38] sm:$0xff]
        %v4902 = vld [vmem:[#allocation3 + $0x40] sm:$0xff]
        %v4903 = vld [vmem:[#allocation3 + $0x48] sm:$0xff]
        %v4904 = vld [vmem:[#allocation3 + $0x50] sm:$0xff]
        %v4905 = vld [vmem:[#allocation3 + $0x58] sm:$0xff]
        %v4906 = vld [vmem:[#allocation3 + $0x60] sm:$0xff]
        %v4907 = vld [vmem:[#allocation3 + $0x68] sm:$0xff]
        %v4908 = vld [vmem:[#allocation3 + $0x70] sm:$0xff]
        %v4909 = vld [vmem:[#allocation3 + $0x78] sm:$0xff]
        %v4910 = vld [vmem:[#allocation3 + $0x80] sm:$0xff]
        %v4911 = vld [vmem:[#allocation3 + $0x88] sm:$0xff]
        %v4912 = vld [vmem:[#allocation3 + $0x90] sm:$0xff]
        %v4913 = vld [vmem:[#allocation3 + $0x98] sm:$0xff]
        %v4914 = vld [vmem:[#allocation3 + $0xa0] sm:$0xff]
        %v4915 = vld [vmem:[#allocation3 + $0xa8] sm:$0xff]
        %v4916 = vld [vmem:[#allocation3 + $0xb0] sm:$0xff]
        %v4917 = vld [vmem:[#allocation3 + $0xb8] sm:$0xff]
        %v4918 = vld [vmem:[#allocation3 + $0xc0] sm:$0xff]
        %v4919 = vld [vmem:[#allocation3 + $0xc8] sm:$0xff]
        %v4920 = vld [vmem:[#allocation3 + $0xd0] sm:$0xff]
        %v4921 = vld [vmem:[#allocation3 + $0xd8] sm:$0xff]
        %v4922 = vld [vmem:[#allocation3 + $0xe0] sm:$0xff]
        %v4923 = vld [vmem:[#allocation3 + $0xe8] sm:$0xff]
        %v4924 = vld [vmem:[#allocation3 + $0xf0] sm:$0xff]
        %v4925 = vld [vmem:[#allocation3 + $0xf8] sm:$0xff]
        %v4926 = vadd.f32 %v4894, %v4862
        %v4927 = vadd.f32 %v4895, %v4863
        %v4928 = vadd.f32 %v4896, %v4864
        %v4929 = vadd.f32 %v4897, %v4865
        %v4930 = vadd.f32 %v4898, %v4866
        %v4931 = vadd.f32 %v4899, %v4867
        %v4932 = vadd.f32 %v4900, %v4868
        %v4933 = vadd.f32 %v4901, %v4869
        %v4934 = vadd.f32 %v4902, %v4870
        %v4935 = vadd.f32 %v4903, %v4871
        %v4936 = vadd.f32 %v4904, %v4872
        %v4937 = vadd.f32 %v4905, %v4873
        %v4938 = vadd.f32 %v4906, %v4874
        %v4939 = vadd.f32 %v4907, %v4875
        %v4940 = vadd.f32 %v4908, %v4876
        %v4941 = vadd.f32 %v4909, %v4877
        %v4942 = vadd.f32 %v4910, %v4878
        %v4943 = vadd.f32 %v4911, %v4879
        %v4944 = vadd.f32 %v4912, %v4880
        %v4945 = vadd.f32 %v4913, %v4881
        %v4946 = vadd.f32 %v4914, %v4882
        %v4947 = vadd.f32 %v4915, %v4883
        %v4948 = vadd.f32 %v4916, %v4884
        %v4949 = vadd.f32 %v4917, %v4885
        %v4950 = vadd.f32 %v4918, %v4886
        %v4951 = vadd.f32 %v4919, %v4887
        %v4952 = vadd.f32 %v4920, %v4888
        %v4953 = vadd.f32 %v4921, %v4889
        %v4954 = vadd.f32 %v4922, %v4890
        %v4955 = vadd.f32 %v4923, %v4891
        %v4956 = vadd.f32 %v4924, %v4892
        %v4957 = vadd.f32 %v4925, %v4893
        %4958 = vst [vmem:[#allocation3] sm:$0xff] %v4926
        %4959 = vst [vmem:[#allocation3 + $0x8] sm:$0xff] %v4927
        %4960 = vst [vmem:[#allocation3 + $0x10] sm:$0xff] %v4928
        %4961 = vst [vmem:[#allocation3 + $0x18] sm:$0xff] %v4929
        %4962 = vst [vmem:[#allocation3 + $0x20] sm:$0xff] %v4930
        %4963 = vst [vmem:[#allocation3 + $0x28] sm:$0xff] %v4931
        %4964 = vst [vmem:[#allocation3 + $0x30] sm:$0xff] %v4932
        %4965 = vst [vmem:[#allocation3 + $0x38] sm:$0xff] %v4933
        %4966 = vst [vmem:[#allocation3 + $0x40] sm:$0xff] %v4934
        %4967 = vst [vmem:[#allocation3 + $0x48] sm:$0xff] %v4935
        %4968 = vst [vmem:[#allocation3 + $0x50] sm:$0xff] %v4936
        %4969 = vst [vmem:[#allocation3 + $0x58] sm:$0xff] %v4937
        %4970 = vst [vmem:[#allocation3 + $0x60] sm:$0xff] %v4938
        %4971 = vst [vmem:[#allocation3 + $0x68] sm:$0xff] %v4939
        %4972 = vst [vmem:[#allocation3 + $0x70] sm:$0xff] %v4940
        %4973 = vst [vmem:[#allocation3 + $0x78] sm:$0xff] %v4941
        %4974 = vst [vmem:[#allocation3 + $0x80] sm:$0xff] %v4942
        %4975 = vst [vmem:[#allocation3 + $0x88] sm:$0xff] %v4943
        %4976 = vst [vmem:[#allocation3 + $0x90] sm:$0xff] %v4944
        %4977 = vst [vmem:[#allocation3 + $0x98] sm:$0xff] %v4945
        %4978 = vst [vmem:[#allocation3 + $0xa0] sm:$0xff] %v4946
        %4979 = vst [vmem:[#allocation3 + $0xa8] sm:$0xff] %v4947
        %4980 = vst [vmem:[#allocation3 + $0xb0] sm:$0xff] %v4948
        %4981 = vst [vmem:[#allocation3 + $0xb8] sm:$0xff] %v4949
        %4982 = vst [vmem:[#allocation3 + $0xc0] sm:$0xff] %v4950
        %4983 = vst [vmem:[#allocation3 + $0xc8] sm:$0xff] %v4951
        %4984 = vst [vmem:[#allocation3 + $0xd0] sm:$0xff] %v4952
        %4985 = vst [vmem:[#allocation3 + $0xd8] sm:$0xff] %v4953
        %4986 = vst [vmem:[#allocation3 + $0xe0] sm:$0xff] %v4954
        %4987 = vst [vmem:[#allocation3 + $0xe8] sm:$0xff] %v4955
        %4988 = vst [vmem:[#allocation3 + $0xf0] sm:$0xff] %v4956
        %4989 = vst [vmem:[#allocation3 + $0xf8] sm:$0xff] %v4957
        %s4990 = scalar_lea.vmem [#allocation2], 144
        %v4991 = vld [vmem:[%s4990] sm:$0xff]
        %v4992 = vld [vmem:[%s4990 + $0x8] sm:$0xff]
        %v4993 = vld [vmem:[%s4990 + $0x18] sm:$0xff]
        %v4994 = vld [vmem:[%s4990 + $0x20] sm:$0xff]
        %v4995 = vld [vmem:[%s4990 + $0x30] sm:$0xff]
        %v4996 = vld [vmem:[%s4990 + $0x38] sm:$0xff]
        %v4997 = vld [vmem:[%s4990 + $0x48] sm:$0xff]
        %v4998 = vld [vmem:[%s4990 + $0x50] sm:$0xff]
        %v4999 = vld [vmem:[%s4990 + $0x60] sm:$0xff]
        %v5000 = vld [vmem:[%s4990 + $0x68] sm:$0xff]
        %v5001 = vld [vmem:[%s4990 + $0x78] sm:$0xff]
        %v5002 = vld [vmem:[%s4990 + $0x80] sm:$0xff]
        %v5003 = vld [vmem:[%s4990 + $0x90] sm:$0xff]
        %v5004 = vld [vmem:[%s4990 + $0x98] sm:$0xff]
        %v5005 = vld [vmem:[%s4990 + $0xa8] sm:$0xff]
        %v5006 = vld [vmem:[%s4990 + $0xb0] sm:$0xff]
        %v5007 = vld [vmem:[%s4990 + $0xc0] sm:$0xff]
        %v5008 = vld [vmem:[%s4990 + $0xc8] sm:$0xff]
        %v5009 = vld [vmem:[%s4990 + $0xd8] sm:$0xff]
        %v5010 = vld [vmem:[%s4990 + $0xe0] sm:$0xff]
        %v5011 = vld [vmem:[%s4990 + $0xf0] sm:$0xff]
        %v5012 = vld [vmem:[%s4990 + $0xf8] sm:$0xff]
        %v5013 = vld [vmem:[%s4990 + $0x108] sm:$0xff]
        %v5014 = vld [vmem:[%s4990 + $0x110] sm:$0xff]
        %v5015 = vld [vmem:[%s4990 + $0x120] sm:$0xff]
        %v5016 = vld [vmem:[%s4990 + $0x128] sm:$0xff]
        %v5017 = vld [vmem:[%s4990 + $0x138] sm:$0xff]
        %v5018 = vld [vmem:[%s4990 + $0x140] sm:$0xff]
        %v5019 = vld [vmem:[%s4990 + $0x150] sm:$0xff]
        %v5020 = vld [vmem:[%s4990 + $0x158] sm:$0xff]
        %v5021 = vld [vmem:[%s4990 + $0x168] sm:$0xff]
        %v5022 = vld [vmem:[%s4990 + $0x170] sm:$0xff]
        %v5023 = vld [vmem:[#allocation5 + $0x2a] sm:$0x1]
        %v5024 = vlaneseq
        %v5025 = vshrl.u32 %v5024, 7
        %v5026 = vsub.s32 0, %v5025
        %v5027 = vrot.slane %v5023, %v5026
        %v5028 = vmul.f32 %v4991, %v5027
        %v5029 = vmul.f32 %v4992, %v5027
        %v5030 = vmul.f32 %v4993, %v5027
        %v5031 = vmul.f32 %v4994, %v5027
        %v5032 = vmul.f32 %v4995, %v5027
        %v5033 = vmul.f32 %v4996, %v5027
        %v5034 = vmul.f32 %v4997, %v5027
        %v5035 = vmul.f32 %v4998, %v5027
        %v5036 = vmul.f32 %v4999, %v5027
        %v5037 = vmul.f32 %v5000, %v5027
        %v5038 = vmul.f32 %v5001, %v5027
        %v5039 = vmul.f32 %v5002, %v5027
        %v5040 = vmul.f32 %v5003, %v5027
        %v5041 = vmul.f32 %v5004, %v5027
        %v5042 = vmul.f32 %v5005, %v5027
        %v5043 = vmul.f32 %v5006, %v5027
        %v5044 = vmul.f32 %v5007, %v5027
        %v5045 = vmul.f32 %v5008, %v5027
        %v5046 = vmul.f32 %v5009, %v5027
        %v5047 = vmul.f32 %v5010, %v5027
        %v5048 = vmul.f32 %v5011, %v5027
        %v5049 = vmul.f32 %v5012, %v5027
        %v5050 = vmul.f32 %v5013, %v5027
        %v5051 = vmul.f32 %v5014, %v5027
        %v5052 = vmul.f32 %v5015, %v5027
        %v5053 = vmul.f32 %v5016, %v5027
        %v5054 = vmul.f32 %v5017, %v5027
        %v5055 = vmul.f32 %v5018, %v5027
        %v5056 = vmul.f32 %v5019, %v5027
        %v5057 = vmul.f32 %v5020, %v5027
        %v5058 = vmul.f32 %v5021, %v5027
        %v5059 = vmul.f32 %v5022, %v5027
        %v5060 = vld [vmem:[%s4990 + $0x1] sm:$0xff]
        %v5061 = vld [vmem:[%s4990 + $0x9] sm:$0xff]
        %v5062 = vld [vmem:[%s4990 + $0x19] sm:$0xff]
        %v5063 = vld [vmem:[%s4990 + $0x21] sm:$0xff]
        %v5064 = vld [vmem:[%s4990 + $0x31] sm:$0xff]
        %v5065 = vld [vmem:[%s4990 + $0x39] sm:$0xff]
        %v5066 = vld [vmem:[%s4990 + $0x49] sm:$0xff]
        %v5067 = vld [vmem:[%s4990 + $0x51] sm:$0xff]
        %v5068 = vld [vmem:[%s4990 + $0x61] sm:$0xff]
        %v5069 = vld [vmem:[%s4990 + $0x69] sm:$0xff]
        %v5070 = vld [vmem:[%s4990 + $0x79] sm:$0xff]
        %v5071 = vld [vmem:[%s4990 + $0x81] sm:$0xff]
        %v5072 = vld [vmem:[%s4990 + $0x91] sm:$0xff]
        %v5073 = vld [vmem:[%s4990 + $0x99] sm:$0xff]
        %v5074 = vld [vmem:[%s4990 + $0xa9] sm:$0xff]
        %v5075 = vld [vmem:[%s4990 + $0xb1] sm:$0xff]
        %v5076 = vld [vmem:[%s4990 + $0xc1] sm:$0xff]
        %v5077 = vld [vmem:[%s4990 + $0xc9] sm:$0xff]
        %v5078 = vld [vmem:[%s4990 + $0xd9] sm:$0xff]
        %v5079 = vld [vmem:[%s4990 + $0xe1] sm:$0xff]
        %v5080 = vld [vmem:[%s4990 + $0xf1] sm:$0xff]
        %v5081 = vld [vmem:[%s4990 + $0xf9] sm:$0xff]
        %v5082 = vld [vmem:[%s4990 + $0x109] sm:$0xff]
        %v5083 = vld [vmem:[%s4990 + $0x111] sm:$0xff]
        %v5084 = vld [vmem:[%s4990 + $0x121] sm:$0xff]
        %v5085 = vld [vmem:[%s4990 + $0x129] sm:$0xff]
        %v5086 = vld [vmem:[%s4990 + $0x139] sm:$0xff]
        %v5087 = vld [vmem:[%s4990 + $0x141] sm:$0xff]
        %v5088 = vld [vmem:[%s4990 + $0x151] sm:$0xff]
        %v5089 = vld [vmem:[%s4990 + $0x159] sm:$0xff]
        %v5090 = vld [vmem:[%s4990 + $0x169] sm:$0xff]
        %v5091 = vld [vmem:[%s4990 + $0x171] sm:$0xff]
        %v5092 = vld [vmem:[#allocation5 + $0x2b] sm:$0x1]
        %v5093 = vlaneseq
        %v5094 = vshrl.u32 %v5093, 7
        %v5095 = vsub.s32 0, %v5094
        %v5096 = vrot.slane %v5092, %v5095
        %v5097 = vmul.f32 %v5060, %v5096
        %v5098 = vmul.f32 %v5061, %v5096
        %v5099 = vmul.f32 %v5062, %v5096
        %v5100 = vmul.f32 %v5063, %v5096
        %v5101 = vmul.f32 %v5064, %v5096
        %v5102 = vmul.f32 %v5065, %v5096
        %v5103 = vmul.f32 %v5066, %v5096
        %v5104 = vmul.f32 %v5067, %v5096
        %v5105 = vmul.f32 %v5068, %v5096
        %v5106 = vmul.f32 %v5069, %v5096
        %v5107 = vmul.f32 %v5070, %v5096
        %v5108 = vmul.f32 %v5071, %v5096
        %v5109 = vmul.f32 %v5072, %v5096
        %v5110 = vmul.f32 %v5073, %v5096
        %v5111 = vmul.f32 %v5074, %v5096
        %v5112 = vmul.f32 %v5075, %v5096
        %v5113 = vmul.f32 %v5076, %v5096
        %v5114 = vmul.f32 %v5077, %v5096
        %v5115 = vmul.f32 %v5078, %v5096
        %v5116 = vmul.f32 %v5079, %v5096
        %v5117 = vmul.f32 %v5080, %v5096
        %v5118 = vmul.f32 %v5081, %v5096
        %v5119 = vmul.f32 %v5082, %v5096
        %v5120 = vmul.f32 %v5083, %v5096
        %v5121 = vmul.f32 %v5084, %v5096
        %v5122 = vmul.f32 %v5085, %v5096
        %v5123 = vmul.f32 %v5086, %v5096
        %v5124 = vmul.f32 %v5087, %v5096
        %v5125 = vmul.f32 %v5088, %v5096
        %v5126 = vmul.f32 %v5089, %v5096
        %v5127 = vmul.f32 %v5090, %v5096
        %v5128 = vmul.f32 %v5091, %v5096
        %v5129 = vadd.f32 %v5028, %v5097
        %v5130 = vadd.f32 %v5029, %v5098
        %v5131 = vadd.f32 %v5030, %v5099
        %v5132 = vadd.f32 %v5031, %v5100
        %v5133 = vadd.f32 %v5032, %v5101
        %v5134 = vadd.f32 %v5033, %v5102
        %v5135 = vadd.f32 %v5034, %v5103
        %v5136 = vadd.f32 %v5035, %v5104
        %v5137 = vadd.f32 %v5036, %v5105
        %v5138 = vadd.f32 %v5037, %v5106
        %v5139 = vadd.f32 %v5038, %v5107
        %v5140 = vadd.f32 %v5039, %v5108
        %v5141 = vadd.f32 %v5040, %v5109
        %v5142 = vadd.f32 %v5041, %v5110
        %v5143 = vadd.f32 %v5042, %v5111
        %v5144 = vadd.f32 %v5043, %v5112
        %v5145 = vadd.f32 %v5044, %v5113
        %v5146 = vadd.f32 %v5045, %v5114
        %v5147 = vadd.f32 %v5046, %v5115
        %v5148 = vadd.f32 %v5047, %v5116
        %v5149 = vadd.f32 %v5048, %v5117
        %v5150 = vadd.f32 %v5049, %v5118
        %v5151 = vadd.f32 %v5050, %v5119
        %v5152 = vadd.f32 %v5051, %v5120
        %v5153 = vadd.f32 %v5052, %v5121
        %v5154 = vadd.f32 %v5053, %v5122
        %v5155 = vadd.f32 %v5054, %v5123
        %v5156 = vadd.f32 %v5055, %v5124
        %v5157 = vadd.f32 %v5056, %v5125
        %v5158 = vadd.f32 %v5057, %v5126
        %v5159 = vadd.f32 %v5058, %v5127
        %v5160 = vadd.f32 %v5059, %v5128
        %v5161 = vld [vmem:[%s4990 + $0x2] sm:$0xff]
        %v5162 = vld [vmem:[%s4990 + $0xa] sm:$0xff]
        %v5163 = vld [vmem:[%s4990 + $0x1a] sm:$0xff]
        %v5164 = vld [vmem:[%s4990 + $0x22] sm:$0xff]
        %v5165 = vld [vmem:[%s4990 + $0x32] sm:$0xff]
        %v5166 = vld [vmem:[%s4990 + $0x3a] sm:$0xff]
        %v5167 = vld [vmem:[%s4990 + $0x4a] sm:$0xff]
        %v5168 = vld [vmem:[%s4990 + $0x52] sm:$0xff]
        %v5169 = vld [vmem:[%s4990 + $0x62] sm:$0xff]
        %v5170 = vld [vmem:[%s4990 + $0x6a] sm:$0xff]
        %v5171 = vld [vmem:[%s4990 + $0x7a] sm:$0xff]
        %v5172 = vld [vmem:[%s4990 + $0x82] sm:$0xff]
        %v5173 = vld [vmem:[%s4990 + $0x92] sm:$0xff]
        %v5174 = vld [vmem:[%s4990 + $0x9a] sm:$0xff]
        %v5175 = vld [vmem:[%s4990 + $0xaa] sm:$0xff]
        %v5176 = vld [vmem:[%s4990 + $0xb2] sm:$0xff]
        %v5177 = vld [vmem:[%s4990 + $0xc2] sm:$0xff]
        %v5178 = vld [vmem:[%s4990 + $0xca] sm:$0xff]
        %v5179 = vld [vmem:[%s4990 + $0xda] sm:$0xff]
        %v5180 = vld [vmem:[%s4990 + $0xe2] sm:$0xff]
        %v5181 = vld [vmem:[%s4990 + $0xf2] sm:$0xff]
        %v5182 = vld [vmem:[%s4990 + $0xfa] sm:$0xff]
        %v5183 = vld [vmem:[%s4990 + $0x10a] sm:$0xff]
        %v5184 = vld [vmem:[%s4990 + $0x112] sm:$0xff]
        %v5185 = vld [vmem:[%s4990 + $0x122] sm:$0xff]
        %v5186 = vld [vmem:[%s4990 + $0x12a] sm:$0xff]
        %v5187 = vld [vmem:[%s4990 + $0x13a] sm:$0xff]
        %v5188 = vld [vmem:[%s4990 + $0x142] sm:$0xff]
        %v5189 = vld [vmem:[%s4990 + $0x152] sm:$0xff]
        %v5190 = vld [vmem:[%s4990 + $0x15a] sm:$0xff]
        %v5191 = vld [vmem:[%s4990 + $0x16a] sm:$0xff]
        %v5192 = vld [vmem:[%s4990 + $0x172] sm:$0xff]
        %v5193 = vld [vmem:[#allocation5 + $0x2c] sm:$0x1]
        %v5194 = vlaneseq
        %v5195 = vshrl.u32 %v5194, 7
        %v5196 = vsub.s32 0, %v5195
        %v5197 = vrot.slane %v5193, %v5196
        %v5198 = vmul.f32 %v5161, %v5197
        %v5199 = vmul.f32 %v5162, %v5197
        %v5200 = vmul.f32 %v5163, %v5197
        %v5201 = vmul.f32 %v5164, %v5197
        %v5202 = vmul.f32 %v5165, %v5197
        %v5203 = vmul.f32 %v5166, %v5197
        %v5204 = vmul.f32 %v5167, %v5197
        %v5205 = vmul.f32 %v5168, %v5197
        %v5206 = vmul.f32 %v5169, %v5197
        %v5207 = vmul.f32 %v5170, %v5197
        %v5208 = vmul.f32 %v5171, %v5197
        %v5209 = vmul.f32 %v5172, %v5197
        %v5210 = vmul.f32 %v5173, %v5197
        %v5211 = vmul.f32 %v5174, %v5197
        %v5212 = vmul.f32 %v5175, %v5197
        %v5213 = vmul.f32 %v5176, %v5197
        %v5214 = vmul.f32 %v5177, %v5197
        %v5215 = vmul.f32 %v5178, %v5197
        %v5216 = vmul.f32 %v5179, %v5197
        %v5217 = vmul.f32 %v5180, %v5197
        %v5218 = vmul.f32 %v5181, %v5197
        %v5219 = vmul.f32 %v5182, %v5197
        %v5220 = vmul.f32 %v5183, %v5197
        %v5221 = vmul.f32 %v5184, %v5197
        %v5222 = vmul.f32 %v5185, %v5197
        %v5223 = vmul.f32 %v5186, %v5197
        %v5224 = vmul.f32 %v5187, %v5197
        %v5225 = vmul.f32 %v5188, %v5197
        %v5226 = vmul.f32 %v5189, %v5197
        %v5227 = vmul.f32 %v5190, %v5197
        %v5228 = vmul.f32 %v5191, %v5197
        %v5229 = vmul.f32 %v5192, %v5197
        %v5230 = vadd.f32 %v5129, %v5198
        %v5231 = vadd.f32 %v5130, %v5199
        %v5232 = vadd.f32 %v5131, %v5200
        %v5233 = vadd.f32 %v5132, %v5201
        %v5234 = vadd.f32 %v5133, %v5202
        %v5235 = vadd.f32 %v5134, %v5203
        %v5236 = vadd.f32 %v5135, %v5204
        %v5237 = vadd.f32 %v5136, %v5205
        %v5238 = vadd.f32 %v5137, %v5206
        %v5239 = vadd.f32 %v5138, %v5207
        %v5240 = vadd.f32 %v5139, %v5208
        %v5241 = vadd.f32 %v5140, %v5209
        %v5242 = vadd.f32 %v5141, %v5210
        %v5243 = vadd.f32 %v5142, %v5211
        %v5244 = vadd.f32 %v5143, %v5212
        %v5245 = vadd.f32 %v5144, %v5213
        %v5246 = vadd.f32 %v5145, %v5214
        %v5247 = vadd.f32 %v5146, %v5215
        %v5248 = vadd.f32 %v5147, %v5216
        %v5249 = vadd.f32 %v5148, %v5217
        %v5250 = vadd.f32 %v5149, %v5218
        %v5251 = vadd.f32 %v5150, %v5219
        %v5252 = vadd.f32 %v5151, %v5220
        %v5253 = vadd.f32 %v5152, %v5221
        %v5254 = vadd.f32 %v5153, %v5222
        %v5255 = vadd.f32 %v5154, %v5223
        %v5256 = vadd.f32 %v5155, %v5224
        %v5257 = vadd.f32 %v5156, %v5225
        %v5258 = vadd.f32 %v5157, %v5226
        %v5259 = vadd.f32 %v5158, %v5227
        %v5260 = vadd.f32 %v5159, %v5228
        %v5261 = vadd.f32 %v5160, %v5229
        %v5262 = vld [vmem:[%s4990 + $0x3] sm:$0xff]
        %v5263 = vld [vmem:[%s4990 + $0xb] sm:$0xff]
        %v5264 = vld [vmem:[%s4990 + $0x1b] sm:$0xff]
        %v5265 = vld [vmem:[%s4990 + $0x23] sm:$0xff]
        %v5266 = vld [vmem:[%s4990 + $0x33] sm:$0xff]
        %v5267 = vld [vmem:[%s4990 + $0x3b] sm:$0xff]
        %v5268 = vld [vmem:[%s4990 + $0x4b] sm:$0xff]
        %v5269 = vld [vmem:[%s4990 + $0x53] sm:$0xff]
        %v5270 = vld [vmem:[%s4990 + $0x63] sm:$0xff]
        %v5271 = vld [vmem:[%s4990 + $0x6b] sm:$0xff]
        %v5272 = vld [vmem:[%s4990 + $0x7b] sm:$0xff]
        %v5273 = vld [vmem:[%s4990 + $0x83] sm:$0xff]
        %v5274 = vld [vmem:[%s4990 + $0x93] sm:$0xff]
        %v5275 = vld [vmem:[%s4990 + $0x9b] sm:$0xff]
        %v5276 = vld [vmem:[%s4990 + $0xab] sm:$0xff]
        %v5277 = vld [vmem:[%s4990 + $0xb3] sm:$0xff]
        %v5278 = vld [vmem:[%s4990 + $0xc3] sm:$0xff]
        %v5279 = vld [vmem:[%s4990 + $0xcb] sm:$0xff]
        %v5280 = vld [vmem:[%s4990 + $0xdb] sm:$0xff]
        %v5281 = vld [vmem:[%s4990 + $0xe3] sm:$0xff]
        %v5282 = vld [vmem:[%s4990 + $0xf3] sm:$0xff]
        %v5283 = vld [vmem:[%s4990 + $0xfb] sm:$0xff]
        %v5284 = vld [vmem:[%s4990 + $0x10b] sm:$0xff]
        %v5285 = vld [vmem:[%s4990 + $0x113] sm:$0xff]
        %v5286 = vld [vmem:[%s4990 + $0x123] sm:$0xff]
        %v5287 = vld [vmem:[%s4990 + $0x12b] sm:$0xff]
        %v5288 = vld [vmem:[%s4990 + $0x13b] sm:$0xff]
        %v5289 = vld [vmem:[%s4990 + $0x143] sm:$0xff]
        %v5290 = vld [vmem:[%s4990 + $0x153] sm:$0xff]
        %v5291 = vld [vmem:[%s4990 + $0x15b] sm:$0xff]
        %v5292 = vld [vmem:[%s4990 + $0x16b] sm:$0xff]
        %v5293 = vld [vmem:[%s4990 + $0x173] sm:$0xff]
        %v5294 = vld [vmem:[#allocation5 + $0x2d] sm:$0x1]
        %v5295 = vlaneseq
        %v5296 = vshrl.u32 %v5295, 7
        %v5297 = vsub.s32 0, %v5296
        %v5298 = vrot.slane %v5294, %v5297
        %v5299 = vmul.f32 %v5262, %v5298
        %v5300 = vmul.f32 %v5263, %v5298
        %v5301 = vmul.f32 %v5264, %v5298
        %v5302 = vmul.f32 %v5265, %v5298
        %v5303 = vmul.f32 %v5266, %v5298
        %v5304 = vmul.f32 %v5267, %v5298
        %v5305 = vmul.f32 %v5268, %v5298
        %v5306 = vmul.f32 %v5269, %v5298
        %v5307 = vmul.f32 %v5270, %v5298
        %v5308 = vmul.f32 %v5271, %v5298
        %v5309 = vmul.f32 %v5272, %v5298
        %v5310 = vmul.f32 %v5273, %v5298
        %v5311 = vmul.f32 %v5274, %v5298
        %v5312 = vmul.f32 %v5275, %v5298
        %v5313 = vmul.f32 %v5276, %v5298
        %v5314 = vmul.f32 %v5277, %v5298
        %v5315 = vmul.f32 %v5278, %v5298
        %v5316 = vmul.f32 %v5279, %v5298
        %v5317 = vmul.f32 %v5280, %v5298
        %v5318 = vmul.f32 %v5281, %v5298
        %v5319 = vmul.f32 %v5282, %v5298
        %v5320 = vmul.f32 %v5283, %v5298
        %v5321 = vmul.f32 %v5284, %v5298
        %v5322 = vmul.f32 %v5285, %v5298
        %v5323 = vmul.f32 %v5286, %v5298
        %v5324 = vmul.f32 %v5287, %v5298
        %v5325 = vmul.f32 %v5288, %v5298
        %v5326 = vmul.f32 %v5289, %v5298
        %v5327 = vmul.f32 %v5290, %v5298
        %v5328 = vmul.f32 %v5291, %v5298
        %v5329 = vmul.f32 %v5292, %v5298
        %v5330 = vmul.f32 %v5293, %v5298
        %v5331 = vadd.f32 %v5230, %v5299
        %v5332 = vadd.f32 %v5231, %v5300
        %v5333 = vadd.f32 %v5232, %v5301
        %v5334 = vadd.f32 %v5233, %v5302
        %v5335 = vadd.f32 %v5234, %v5303
        %v5336 = vadd.f32 %v5235, %v5304
        %v5337 = vadd.f32 %v5236, %v5305
        %v5338 = vadd.f32 %v5237, %v5306
        %v5339 = vadd.f32 %v5238, %v5307
        %v5340 = vadd.f32 %v5239, %v5308
        %v5341 = vadd.f32 %v5240, %v5309
        %v5342 = vadd.f32 %v5241, %v5310
        %v5343 = vadd.f32 %v5242, %v5311
        %v5344 = vadd.f32 %v5243, %v5312
        %v5345 = vadd.f32 %v5244, %v5313
        %v5346 = vadd.f32 %v5245, %v5314
        %v5347 = vadd.f32 %v5246, %v5315
        %v5348 = vadd.f32 %v5247, %v5316
        %v5349 = vadd.f32 %v5248, %v5317
        %v5350 = vadd.f32 %v5249, %v5318
        %v5351 = vadd.f32 %v5250, %v5319
        %v5352 = vadd.f32 %v5251, %v5320
        %v5353 = vadd.f32 %v5252, %v5321
        %v5354 = vadd.f32 %v5253, %v5322
        %v5355 = vadd.f32 %v5254, %v5323
        %v5356 = vadd.f32 %v5255, %v5324
        %v5357 = vadd.f32 %v5256, %v5325
        %v5358 = vadd.f32 %v5257, %v5326
        %v5359 = vadd.f32 %v5258, %v5327
        %v5360 = vadd.f32 %v5259, %v5328
        %v5361 = vadd.f32 %v5260, %v5329
        %v5362 = vadd.f32 %v5261, %v5330
        %v5363 = vld [vmem:[%s4990 + $0x4] sm:$0xff]
        %v5364 = vld [vmem:[%s4990 + $0xc] sm:$0xff]
        %v5365 = vld [vmem:[%s4990 + $0x1c] sm:$0xff]
        %v5366 = vld [vmem:[%s4990 + $0x24] sm:$0xff]
        %v5367 = vld [vmem:[%s4990 + $0x34] sm:$0xff]
        %v5368 = vld [vmem:[%s4990 + $0x3c] sm:$0xff]
        %v5369 = vld [vmem:[%s4990 + $0x4c] sm:$0xff]
        %v5370 = vld [vmem:[%s4990 + $0x54] sm:$0xff]
        %v5371 = vld [vmem:[%s4990 + $0x64] sm:$0xff]
        %v5372 = vld [vmem:[%s4990 + $0x6c] sm:$0xff]
        %v5373 = vld [vmem:[%s4990 + $0x7c] sm:$0xff]
        %v5374 = vld [vmem:[%s4990 + $0x84] sm:$0xff]
        %v5375 = vld [vmem:[%s4990 + $0x94] sm:$0xff]
        %v5376 = vld [vmem:[%s4990 + $0x9c] sm:$0xff]
        %v5377 = vld [vmem:[%s4990 + $0xac] sm:$0xff]
        %v5378 = vld [vmem:[%s4990 + $0xb4] sm:$0xff]
        %v5379 = vld [vmem:[%s4990 + $0xc4] sm:$0xff]
        %v5380 = vld [vmem:[%s4990 + $0xcc] sm:$0xff]
        %v5381 = vld [vmem:[%s4990 + $0xdc] sm:$0xff]
        %v5382 = vld [vmem:[%s4990 + $0xe4] sm:$0xff]
        %v5383 = vld [vmem:[%s4990 + $0xf4] sm:$0xff]
        %v5384 = vld [vmem:[%s4990 + $0xfc] sm:$0xff]
        %v5385 = vld [vmem:[%s4990 + $0x10c] sm:$0xff]
        %v5386 = vld [vmem:[%s4990 + $0x114] sm:$0xff]
        %v5387 = vld [vmem:[%s4990 + $0x124] sm:$0xff]
        %v5388 = vld [vmem:[%s4990 + $0x12c] sm:$0xff]
        %v5389 = vld [vmem:[%s4990 + $0x13c] sm:$0xff]
        %v5390 = vld [vmem:[%s4990 + $0x144] sm:$0xff]
        %v5391 = vld [vmem:[%s4990 + $0x154] sm:$0xff]
        %v5392 = vld [vmem:[%s4990 + $0x15c] sm:$0xff]
        %v5393 = vld [vmem:[%s4990 + $0x16c] sm:$0xff]
        %v5394 = vld [vmem:[%s4990 + $0x174] sm:$0xff]
        %v5395 = vld [vmem:[#allocation5 + $0x2e] sm:$0x1]
        %v5396 = vlaneseq
        %v5397 = vshrl.u32 %v5396, 7
        %v5398 = vsub.s32 0, %v5397
        %v5399 = vrot.slane %v5395, %v5398
        %v5400 = vmul.f32 %v5363, %v5399
        %v5401 = vmul.f32 %v5364, %v5399
        %v5402 = vmul.f32 %v5365, %v5399
        %v5403 = vmul.f32 %v5366, %v5399
        %v5404 = vmul.f32 %v5367, %v5399
        %v5405 = vmul.f32 %v5368, %v5399
        %v5406 = vmul.f32 %v5369, %v5399
        %v5407 = vmul.f32 %v5370, %v5399
        %v5408 = vmul.f32 %v5371, %v5399
        %v5409 = vmul.f32 %v5372, %v5399
        %v5410 = vmul.f32 %v5373, %v5399
        %v5411 = vmul.f32 %v5374, %v5399
        %v5412 = vmul.f32 %v5375, %v5399
        %v5413 = vmul.f32 %v5376, %v5399
        %v5414 = vmul.f32 %v5377, %v5399
        %v5415 = vmul.f32 %v5378, %v5399
        %v5416 = vmul.f32 %v5379, %v5399
        %v5417 = vmul.f32 %v5380, %v5399
        %v5418 = vmul.f32 %v5381, %v5399
        %v5419 = vmul.f32 %v5382, %v5399
        %v5420 = vmul.f32 %v5383, %v5399
        %v5421 = vmul.f32 %v5384, %v5399
        %v5422 = vmul.f32 %v5385, %v5399
        %v5423 = vmul.f32 %v5386, %v5399
        %v5424 = vmul.f32 %v5387, %v5399
        %v5425 = vmul.f32 %v5388, %v5399
        %v5426 = vmul.f32 %v5389, %v5399
        %v5427 = vmul.f32 %v5390, %v5399
        %v5428 = vmul.f32 %v5391, %v5399
        %v5429 = vmul.f32 %v5392, %v5399
        %v5430 = vmul.f32 %v5393, %v5399
        %v5431 = vmul.f32 %v5394, %v5399
        %v5432 = vadd.f32 %v5331, %v5400
        %v5433 = vadd.f32 %v5332, %v5401
        %v5434 = vadd.f32 %v5333, %v5402
        %v5435 = vadd.f32 %v5334, %v5403
        %v5436 = vadd.f32 %v5335, %v5404
        %v5437 = vadd.f32 %v5336, %v5405
        %v5438 = vadd.f32 %v5337, %v5406
        %v5439 = vadd.f32 %v5338, %v5407
        %v5440 = vadd.f32 %v5339, %v5408
        %v5441 = vadd.f32 %v5340, %v5409
        %v5442 = vadd.f32 %v5341, %v5410
        %v5443 = vadd.f32 %v5342, %v5411
        %v5444 = vadd.f32 %v5343, %v5412
        %v5445 = vadd.f32 %v5344, %v5413
        %v5446 = vadd.f32 %v5345, %v5414
        %v5447 = vadd.f32 %v5346, %v5415
        %v5448 = vadd.f32 %v5347, %v5416
        %v5449 = vadd.f32 %v5348, %v5417
        %v5450 = vadd.f32 %v5349, %v5418
        %v5451 = vadd.f32 %v5350, %v5419
        %v5452 = vadd.f32 %v5351, %v5420
        %v5453 = vadd.f32 %v5352, %v5421
        %v5454 = vadd.f32 %v5353, %v5422
        %v5455 = vadd.f32 %v5354, %v5423
        %v5456 = vadd.f32 %v5355, %v5424
        %v5457 = vadd.f32 %v5356, %v5425
        %v5458 = vadd.f32 %v5357, %v5426
        %v5459 = vadd.f32 %v5358, %v5427
        %v5460 = vadd.f32 %v5359, %v5428
        %v5461 = vadd.f32 %v5360, %v5429
        %v5462 = vadd.f32 %v5361, %v5430
        %v5463 = vadd.f32 %v5362, %v5431
        %v5464 = vld [vmem:[%s4990 + $0x5] sm:$0xff]
        %v5465 = vld [vmem:[%s4990 + $0xd] sm:$0xff]
        %v5466 = vld [vmem:[%s4990 + $0x1d] sm:$0xff]
        %v5467 = vld [vmem:[%s4990 + $0x25] sm:$0xff]
        %v5468 = vld [vmem:[%s4990 + $0x35] sm:$0xff]
        %v5469 = vld [vmem:[%s4990 + $0x3d] sm:$0xff]
        %v5470 = vld [vmem:[%s4990 + $0x4d] sm:$0xff]
        %v5471 = vld [vmem:[%s4990 + $0x55] sm:$0xff]
        %v5472 = vld [vmem:[%s4990 + $0x65] sm:$0xff]
        %v5473 = vld [vmem:[%s4990 + $0x6d] sm:$0xff]
        %v5474 = vld [vmem:[%s4990 + $0x7d] sm:$0xff]
        %v5475 = vld [vmem:[%s4990 + $0x85] sm:$0xff]
        %v5476 = vld [vmem:[%s4990 + $0x95] sm:$0xff]
        %v5477 = vld [vmem:[%s4990 + $0x9d] sm:$0xff]
        %v5478 = vld [vmem:[%s4990 + $0xad] sm:$0xff]
        %v5479 = vld [vmem:[%s4990 + $0xb5] sm:$0xff]
        %v5480 = vld [vmem:[%s4990 + $0xc5] sm:$0xff]
        %v5481 = vld [vmem:[%s4990 + $0xcd] sm:$0xff]
        %v5482 = vld [vmem:[%s4990 + $0xdd] sm:$0xff]
        %v5483 = vld [vmem:[%s4990 + $0xe5] sm:$0xff]
        %v5484 = vld [vmem:[%s4990 + $0xf5] sm:$0xff]
        %v5485 = vld [vmem:[%s4990 + $0xfd] sm:$0xff]
        %v5486 = vld [vmem:[%s4990 + $0x10d] sm:$0xff]
        %v5487 = vld [vmem:[%s4990 + $0x115] sm:$0xff]
        %v5488 = vld [vmem:[%s4990 + $0x125] sm:$0xff]
        %v5489 = vld [vmem:[%s4990 + $0x12d] sm:$0xff]
        %v5490 = vld [vmem:[%s4990 + $0x13d] sm:$0xff]
        %v5491 = vld [vmem:[%s4990 + $0x145] sm:$0xff]
        %v5492 = vld [vmem:[%s4990 + $0x155] sm:$0xff]
        %v5493 = vld [vmem:[%s4990 + $0x15d] sm:$0xff]
        %v5494 = vld [vmem:[%s4990 + $0x16d] sm:$0xff]
        %v5495 = vld [vmem:[%s4990 + $0x175] sm:$0xff]
        %v5496 = vld [vmem:[#allocation5 + $0x2f] sm:$0x1]
        %v5497 = vlaneseq
        %v5498 = vshrl.u32 %v5497, 7
        %v5499 = vsub.s32 0, %v5498
        %v5500 = vrot.slane %v5496, %v5499
        %v5501 = vmul.f32 %v5464, %v5500
        %v5502 = vmul.f32 %v5465, %v5500
        %v5503 = vmul.f32 %v5466, %v5500
        %v5504 = vmul.f32 %v5467, %v5500
        %v5505 = vmul.f32 %v5468, %v5500
        %v5506 = vmul.f32 %v5469, %v5500
        %v5507 = vmul.f32 %v5470, %v5500
        %v5508 = vmul.f32 %v5471, %v5500
        %v5509 = vmul.f32 %v5472, %v5500
        %v5510 = vmul.f32 %v5473, %v5500
        %v5511 = vmul.f32 %v5474, %v5500
        %v5512 = vmul.f32 %v5475, %v5500
        %v5513 = vmul.f32 %v5476, %v5500
        %v5514 = vmul.f32 %v5477, %v5500
        %v5515 = vmul.f32 %v5478, %v5500
        %v5516 = vmul.f32 %v5479, %v5500
        %v5517 = vmul.f32 %v5480, %v5500
        %v5518 = vmul.f32 %v5481, %v5500
        %v5519 = vmul.f32 %v5482, %v5500
        %v5520 = vmul.f32 %v5483, %v5500
        %v5521 = vmul.f32 %v5484, %v5500
        %v5522 = vmul.f32 %v5485, %v5500
        %v5523 = vmul.f32 %v5486, %v5500
        %v5524 = vmul.f32 %v5487, %v5500
        %v5525 = vmul.f32 %v5488, %v5500
        %v5526 = vmul.f32 %v5489, %v5500
        %v5527 = vmul.f32 %v5490, %v5500
        %v5528 = vmul.f32 %v5491, %v5500
        %v5529 = vmul.f32 %v5492, %v5500
        %v5530 = vmul.f32 %v5493, %v5500
        %v5531 = vmul.f32 %v5494, %v5500
        %v5532 = vmul.f32 %v5495, %v5500
        %v5533 = vadd.f32 %v5432, %v5501
        %v5534 = vadd.f32 %v5433, %v5502
        %v5535 = vadd.f32 %v5434, %v5503
        %v5536 = vadd.f32 %v5435, %v5504
        %v5537 = vadd.f32 %v5436, %v5505
        %v5538 = vadd.f32 %v5437, %v5506
        %v5539 = vadd.f32 %v5438, %v5507
        %v5540 = vadd.f32 %v5439, %v5508
        %v5541 = vadd.f32 %v5440, %v5509
        %v5542 = vadd.f32 %v5441, %v5510
        %v5543 = vadd.f32 %v5442, %v5511
        %v5544 = vadd.f32 %v5443, %v5512
        %v5545 = vadd.f32 %v5444, %v5513
        %v5546 = vadd.f32 %v5445, %v5514
        %v5547 = vadd.f32 %v5446, %v5515
        %v5548 = vadd.f32 %v5447, %v5516
        %v5549 = vadd.f32 %v5448, %v5517
        %v5550 = vadd.f32 %v5449, %v5518
        %v5551 = vadd.f32 %v5450, %v5519
        %v5552 = vadd.f32 %v5451, %v5520
        %v5553 = vadd.f32 %v5452, %v5521
        %v5554 = vadd.f32 %v5453, %v5522
        %v5555 = vadd.f32 %v5454, %v5523
        %v5556 = vadd.f32 %v5455, %v5524
        %v5557 = vadd.f32 %v5456, %v5525
        %v5558 = vadd.f32 %v5457, %v5526
        %v5559 = vadd.f32 %v5458, %v5527
        %v5560 = vadd.f32 %v5459, %v5528
        %v5561 = vadd.f32 %v5460, %v5529
        %v5562 = vadd.f32 %v5461, %v5530
        %v5563 = vadd.f32 %v5462, %v5531
        %v5564 = vadd.f32 %v5463, %v5532
        %v5565 = vld [vmem:[%s4990 + $0x6] sm:$0xff]
        %v5566 = vld [vmem:[%s4990 + $0xe] sm:$0xff]
        %v5567 = vld [vmem:[%s4990 + $0x1e] sm:$0xff]
        %v5568 = vld [vmem:[%s4990 + $0x26] sm:$0xff]
        %v5569 = vld [vmem:[%s4990 + $0x36] sm:$0xff]
        %v5570 = vld [vmem:[%s4990 + $0x3e] sm:$0xff]
        %v5571 = vld [vmem:[%s4990 + $0x4e] sm:$0xff]
        %v5572 = vld [vmem:[%s4990 + $0x56] sm:$0xff]
        %v5573 = vld [vmem:[%s4990 + $0x66] sm:$0xff]
        %v5574 = vld [vmem:[%s4990 + $0x6e] sm:$0xff]
        %v5575 = vld [vmem:[%s4990 + $0x7e] sm:$0xff]
        %v5576 = vld [vmem:[%s4990 + $0x86] sm:$0xff]
        %v5577 = vld [vmem:[%s4990 + $0x96] sm:$0xff]
        %v5578 = vld [vmem:[%s4990 + $0x9e] sm:$0xff]
        %v5579 = vld [vmem:[%s4990 + $0xae] sm:$0xff]
        %v5580 = vld [vmem:[%s4990 + $0xb6] sm:$0xff]
        %v5581 = vld [vmem:[%s4990 + $0xc6] sm:$0xff]
        %v5582 = vld [vmem:[%s4990 + $0xce] sm:$0xff]
        %v5583 = vld [vmem:[%s4990 + $0xde] sm:$0xff]
        %v5584 = vld [vmem:[%s4990 + $0xe6] sm:$0xff]
        %v5585 = vld [vmem:[%s4990 + $0xf6] sm:$0xff]
        %v5586 = vld [vmem:[%s4990 + $0xfe] sm:$0xff]
        %v5587 = vld [vmem:[%s4990 + $0x10e] sm:$0xff]
        %v5588 = vld [vmem:[%s4990 + $0x116] sm:$0xff]
        %v5589 = vld [vmem:[%s4990 + $0x126] sm:$0xff]
        %v5590 = vld [vmem:[%s4990 + $0x12e] sm:$0xff]
        %v5591 = vld [vmem:[%s4990 + $0x13e] sm:$0xff]
        %v5592 = vld [vmem:[%s4990 + $0x146] sm:$0xff]
        %v5593 = vld [vmem:[%s4990 + $0x156] sm:$0xff]
        %v5594 = vld [vmem:[%s4990 + $0x15e] sm:$0xff]
        %v5595 = vld [vmem:[%s4990 + $0x16e] sm:$0xff]
        %v5596 = vld [vmem:[%s4990 + $0x176] sm:$0xff]
        %v5597 = vld [vmem:[#allocation5 + $0x30] sm:$0x1]
        %v5598 = vlaneseq
        %v5599 = vshrl.u32 %v5598, 7
        %v5600 = vsub.s32 0, %v5599
        %v5601 = vrot.slane %v5597, %v5600
        %v5602 = vmul.f32 %v5565, %v5601
        %v5603 = vmul.f32 %v5566, %v5601
        %v5604 = vmul.f32 %v5567, %v5601
        %v5605 = vmul.f32 %v5568, %v5601
        %v5606 = vmul.f32 %v5569, %v5601
        %v5607 = vmul.f32 %v5570, %v5601
        %v5608 = vmul.f32 %v5571, %v5601
        %v5609 = vmul.f32 %v5572, %v5601
        %v5610 = vmul.f32 %v5573, %v5601
        %v5611 = vmul.f32 %v5574, %v5601
        %v5612 = vmul.f32 %v5575, %v5601
        %v5613 = vmul.f32 %v5576, %v5601
        %v5614 = vmul.f32 %v5577, %v5601
        %v5615 = vmul.f32 %v5578, %v5601
        %v5616 = vmul.f32 %v5579, %v5601
        %v5617 = vmul.f32 %v5580, %v5601
        %v5618 = vmul.f32 %v5581, %v5601
        %v5619 = vmul.f32 %v5582, %v5601
        %v5620 = vmul.f32 %v5583, %v5601
        %v5621 = vmul.f32 %v5584, %v5601
        %v5622 = vmul.f32 %v5585, %v5601
        %v5623 = vmul.f32 %v5586, %v5601
        %v5624 = vmul.f32 %v5587, %v5601
        %v5625 = vmul.f32 %v5588, %v5601
        %v5626 = vmul.f32 %v5589, %v5601
        %v5627 = vmul.f32 %v5590, %v5601
        %v5628 = vmul.f32 %v5591, %v5601
        %v5629 = vmul.f32 %v5592, %v5601
        %v5630 = vmul.f32 %v5593, %v5601
        %v5631 = vmul.f32 %v5594, %v5601
        %v5632 = vmul.f32 %v5595, %v5601
        %v5633 = vmul.f32 %v5596, %v5601
        %v5634 = vadd.f32 %v5533, %v5602
        %v5635 = vadd.f32 %v5534, %v5603
        %v5636 = vadd.f32 %v5535, %v5604
        %v5637 = vadd.f32 %v5536, %v5605
        %v5638 = vadd.f32 %v5537, %v5606
        %v5639 = vadd.f32 %v5538, %v5607
        %v5640 = vadd.f32 %v5539, %v5608
        %v5641 = vadd.f32 %v5540, %v5609
        %v5642 = vadd.f32 %v5541, %v5610
        %v5643 = vadd.f32 %v5542, %v5611
        %v5644 = vadd.f32 %v5543, %v5612
        %v5645 = vadd.f32 %v5544, %v5613
        %v5646 = vadd.f32 %v5545, %v5614
        %v5647 = vadd.f32 %v5546, %v5615
        %v5648 = vadd.f32 %v5547, %v5616
        %v5649 = vadd.f32 %v5548, %v5617
        %v5650 = vadd.f32 %v5549, %v5618
        %v5651 = vadd.f32 %v5550, %v5619
        %v5652 = vadd.f32 %v5551, %v5620
        %v5653 = vadd.f32 %v5552, %v5621
        %v5654 = vadd.f32 %v5553, %v5622
        %v5655 = vadd.f32 %v5554, %v5623
        %v5656 = vadd.f32 %v5555, %v5624
        %v5657 = vadd.f32 %v5556, %v5625
        %v5658 = vadd.f32 %v5557, %v5626
        %v5659 = vadd.f32 %v5558, %v5627
        %v5660 = vadd.f32 %v5559, %v5628
        %v5661 = vadd.f32 %v5560, %v5629
        %v5662 = vadd.f32 %v5561, %v5630
        %v5663 = vadd.f32 %v5562, %v5631
        %v5664 = vadd.f32 %v5563, %v5632
        %v5665 = vadd.f32 %v5564, %v5633
        %v5666 = vld [vmem:[#allocation3] sm:$0xff]
        %v5667 = vld [vmem:[#allocation3 + $0x8] sm:$0xff]
        %v5668 = vld [vmem:[#allocation3 + $0x10] sm:$0xff]
        %v5669 = vld [vmem:[#allocation3 + $0x18] sm:$0xff]
        %v5670 = vld [vmem:[#allocation3 + $0x20] sm:$0xff]
        %v5671 = vld [vmem:[#allocation3 + $0x28] sm:$0xff]
        %v5672 = vld [vmem:[#allocation3 + $0x30] sm:$0xff]
        %v5673 = vld [vmem:[#allocation3 + $0x38] sm:$0xff]
        %v5674 = vld [vmem:[#allocation3 + $0x40] sm:$0xff]
        %v5675 = vld [vmem:[#allocation3 + $0x48] sm:$0xff]
        %v5676 = vld [vmem:[#allocation3 + $0x50] sm:$0xff]
        %v5677 = vld [vmem:[#allocation3 + $0x58] sm:$0xff]
        %v5678 = vld [vmem:[#allocation3 + $0x60] sm:$0xff]
        %v5679 = vld [vmem:[#allocation3 + $0x68] sm:$0xff]
        %v5680 = vld [vmem:[#allocation3 + $0x70] sm:$0xff]
        %v5681 = vld [vmem:[#allocation3 + $0x78] sm:$0xff]
        %v5682 = vld [vmem:[#allocation3 + $0x80] sm:$0xff]
        %v5683 = vld [vmem:[#allocation3 + $0x88] sm:$0xff]
        %v5684 = vld [vmem:[#allocation3 + $0x90] sm:$0xff]
        %v5685 = vld [vmem:[#allocation3 + $0x98] sm:$0xff]
        %v5686 = vld [vmem:[#allocation3 + $0xa0] sm:$0xff]
        %v5687 = vld [vmem:[#allocation3 + $0xa8] sm:$0xff]
        %v5688 = vld [vmem:[#allocation3 + $0xb0] sm:$0xff]
        %v5689 = vld [vmem:[#allocation3 + $0xb8] sm:$0xff]
        %v5690 = vld [vmem:[#allocation3 + $0xc0] sm:$0xff]
        %v5691 = vld [vmem:[#allocation3 + $0xc8] sm:$0xff]
        %v5692 = vld [vmem:[#allocation3 + $0xd0] sm:$0xff]
        %v5693 = vld [vmem:[#allocation3 + $0xd8] sm:$0xff]
        %v5694 = vld [vmem:[#allocation3 + $0xe0] sm:$0xff]
        %v5695 = vld [vmem:[#allocation3 + $0xe8] sm:$0xff]
        %v5696 = vld [vmem:[#allocation3 + $0xf0] sm:$0xff]
        %v5697 = vld [vmem:[#allocation3 + $0xf8] sm:$0xff]
        %v5698 = vadd.f32 %v5666, %v5634
        %v5699 = vadd.f32 %v5667, %v5635
        %v5700 = vadd.f32 %v5668, %v5636
        %v5701 = vadd.f32 %v5669, %v5637
        %v5702 = vadd.f32 %v5670, %v5638
        %v5703 = vadd.f32 %v5671, %v5639
        %v5704 = vadd.f32 %v5672, %v5640
        %v5705 = vadd.f32 %v5673, %v5641
        %v5706 = vadd.f32 %v5674, %v5642
        %v5707 = vadd.f32 %v5675, %v5643
        %v5708 = vadd.f32 %v5676, %v5644
        %v5709 = vadd.f32 %v5677, %v5645
        %v5710 = vadd.f32 %v5678, %v5646
        %v5711 = vadd.f32 %v5679, %v5647
        %v5712 = vadd.f32 %v5680, %v5648
        %v5713 = vadd.f32 %v5681, %v5649
        %v5714 = vadd.f32 %v5682, %v5650
        %v5715 = vadd.f32 %v5683, %v5651
        %v5716 = vadd.f32 %v5684, %v5652
        %v5717 = vadd.f32 %v5685, %v5653
        %v5718 = vadd.f32 %v5686, %v5654
        %v5719 = vadd.f32 %v5687, %v5655
        %v5720 = vadd.f32 %v5688, %v5656
        %v5721 = vadd.f32 %v5689, %v5657
        %v5722 = vadd.f32 %v5690, %v5658
        %v5723 = vadd.f32 %v5691, %v5659
        %v5724 = vadd.f32 %v5692, %v5660
        %v5725 = vadd.f32 %v5693, %v5661
        %v5726 = vadd.f32 %v5694, %v5662
        %v5727 = vadd.f32 %v5695, %v5663
        %v5728 = vadd.f32 %v5696, %v5664
        %v5729 = vadd.f32 %v5697, %v5665
        %5730 = vst [vmem:[#allocation3] sm:$0xff] %v5698
        %5731 = vst [vmem:[#allocation3 + $0x8] sm:$0xff] %v5699
        %5732 = vst [vmem:[#allocation3 + $0x10] sm:$0xff] %v5700
        %5733 = vst [vmem:[#allocation3 + $0x18] sm:$0xff] %v5701
        %5734 = vst [vmem:[#allocation3 + $0x20] sm:$0xff] %v5702
        %5735 = vst [vmem:[#allocation3 + $0x28] sm:$0xff] %v5703
        %5736 = vst [vmem:[#allocation3 + $0x30] sm:$0xff] %v5704
        %5737 = vst [vmem:[#allocation3 + $0x38] sm:$0xff] %v5705
        %5738 = vst [vmem:[#allocation3 + $0x40] sm:$0xff] %v5706
        %5739 = vst [vmem:[#allocation3 + $0x48] sm:$0xff] %v5707
        %5740 = vst [vmem:[#allocation3 + $0x50] sm:$0xff] %v5708
        %5741 = vst [vmem:[#allocation3 + $0x58] sm:$0xff] %v5709
        %5742 = vst [vmem:[#allocation3 + $0x60] sm:$0xff] %v5710
        %5743 = vst [vmem:[#allocation3 + $0x68] sm:$0xff] %v5711
        %5744 = vst [vmem:[#allocation3 + $0x70] sm:$0xff] %v5712
        %5745 = vst [vmem:[#allocation3 + $0x78] sm:$0xff] %v5713
        %5746 = vst [vmem:[#allocation3 + $0x80] sm:$0xff] %v5714
        %5747 = vst [vmem:[#allocation3 + $0x88] sm:$0xff] %v5715
        %5748 = vst [vmem:[#allocation3 + $0x90] sm:$0xff] %v5716
        %5749 = vst [vmem:[#allocation3 + $0x98] sm:$0xff] %v5717
        %5750 = vst [vmem:[#allocation3 + $0xa0] sm:$0xff] %v5718
        %5751 = vst [vmem:[#allocation3 + $0xa8] sm:$0xff] %v5719
        %5752 = vst [vmem:[#allocation3 + $0xb0] sm:$0xff] %v5720
        %5753 = vst [vmem:[#allocation3 + $0xb8] sm:$0xff] %v5721
        %5754 = vst [vmem:[#allocation3 + $0xc0] sm:$0xff] %v5722
        %5755 = vst [vmem:[#allocation3 + $0xc8] sm:$0xff] %v5723
        %5756 = vst [vmem:[#allocation3 + $0xd0] sm:$0xff] %v5724
        %5757 = vst [vmem:[#allocation3 + $0xd8] sm:$0xff] %v5725
        %5758 = vst [vmem:[#allocation3 + $0xe0] sm:$0xff] %v5726
        %5759 = vst [vmem:[#allocation3 + $0xe8] sm:$0xff] %v5727
        %5760 = vst [vmem:[#allocation3 + $0xf0] sm:$0xff] %v5728
        %5761 = vst [vmem:[#allocation3 + $0xf8] sm:$0xff] %v5729
        %v5762 = vld [vmem:[#allocation3] sm:$0xff]
        %v5763 = vld [vmem:[#allocation3 + $0x8] sm:$0xff]
        %v5764 = vld [vmem:[#allocation3 + $0x10] sm:$0xff]
        %v5765 = vld [vmem:[#allocation3 + $0x18] sm:$0xff]
        %v5766 = vld [vmem:[#allocation3 + $0x20] sm:$0xff]
        %v5767 = vld [vmem:[#allocation3 + $0x28] sm:$0xff]
        %v5768 = vld [vmem:[#allocation3 + $0x30] sm:$0xff]
        %v5769 = vld [vmem:[#allocation3 + $0x38] sm:$0xff]
        %v5770 = vld [vmem:[#allocation3 + $0x40] sm:$0xff]
        %v5771 = vld [vmem:[#allocation3 + $0x48] sm:$0xff]
        %v5772 = vld [vmem:[#allocation3 + $0x50] sm:$0xff]
        %v5773 = vld [vmem:[#allocation3 + $0x58] sm:$0xff]
        %v5774 = vld [vmem:[#allocation3 + $0x60] sm:$0xff]
        %v5775 = vld [vmem:[#allocation3 + $0x68] sm:$0xff]
        %v5776 = vld [vmem:[#allocation3 + $0x70] sm:$0xff]
        %v5777 = vld [vmem:[#allocation3 + $0x78] sm:$0xff]
        %v5778 = vld [vmem:[#allocation3 + $0x80] sm:$0xff]
        %v5779 = vld [vmem:[#allocation3 + $0x88] sm:$0xff]
        %v5780 = vld [vmem:[#allocation3 + $0x90] sm:$0xff]
        %v5781 = vld [vmem:[#allocation3 + $0x98] sm:$0xff]
        %v5782 = vld [vmem:[#allocation3 + $0xa0] sm:$0xff]
        %v5783 = vld [vmem:[#allocation3 + $0xa8] sm:$0xff]
        %v5784 = vld [vmem:[#allocation3 + $0xb0] sm:$0xff]
        %v5785 = vld [vmem:[#allocation3 + $0xb8] sm:$0xff]
        %v5786 = vld [vmem:[#allocation3 + $0xc0] sm:$0xff]
        %v5787 = vld [vmem:[#allocation3 + $0xc8] sm:$0xff]
        %v5788 = vld [vmem:[#allocation3 + $0xd0] sm:$0xff]
        %v5789 = vld [vmem:[#allocation3 + $0xd8] sm:$0xff]
        %v5790 = vld [vmem:[#allocation3 + $0xe0] sm:$0xff]
        %v5791 = vld [vmem:[#allocation3 + $0xe8] sm:$0xff]
        %v5792 = vld [vmem:[#allocation3 + $0xf0] sm:$0xff]
        %v5793 = vld [vmem:[#allocation3 + $0xf8] sm:$0xff]
        %v5794 = vld [vmem:[#allocation8] sm:$0x1]
        %v5796 = vlaneseq
        %v5797 = vshrl.u32 %v5796, 7
        %v5798 = vsub.s32 0, %v5797
        %v5799 = vrot.slane %v5794, %v5798
        %v5801 = vadd.f32 %v5762, %v5799
        %v5802 = vadd.f32 %v5763, %v5799
        %v5803 = vadd.f32 %v5764, %v5799
        %v5804 = vadd.f32 %v5765, %v5799
        %v5805 = vadd.f32 %v5766, %v5799
        %v5806 = vadd.f32 %v5767, %v5799
        %v5807 = vadd.f32 %v5768, %v5799
        %v5808 = vadd.f32 %v5769, %v5799
        %v5809 = vadd.f32 %v5770, %v5799
        %v5810 = vadd.f32 %v5771, %v5799
        %v5811 = vadd.f32 %v5772, %v5799
        %v5812 = vadd.f32 %v5773, %v5799
        %v5813 = vadd.f32 %v5774, %v5799
        %v5814 = vadd.f32 %v5775, %v5799
        %v5815 = vadd.f32 %v5776, %v5799
        %v5816 = vadd.f32 %v5777, %v5799
        %v5817 = vadd.f32 %v5778, %v5799
        %v5818 = vadd.f32 %v5779, %v5799
        %v5819 = vadd.f32 %v5780, %v5799
        %v5820 = vadd.f32 %v5781, %v5799
        %v5821 = vadd.f32 %v5782, %v5799
        %v5822 = vadd.f32 %v5783, %v5799
        %v5823 = vadd.f32 %v5784, %v5799
        %v5824 = vadd.f32 %v5785, %v5799
        %v5825 = vadd.f32 %v5786, %v5799
        %v5826 = vadd.f32 %v5787, %v5799
        %v5827 = vadd.f32 %v5788, %v5799
        %v5828 = vadd.f32 %v5789, %v5799
        %v5829 = vadd.f32 %v5790, %v5799
        %v5830 = vadd.f32 %v5791, %v5799
        %v5831 = vadd.f32 %v5792, %v5799
        %v5832 = vadd.f32 %v5793, %v5799
        %v5833 = vld [vmem:[%s2674 + $0x3] sm:$0xff]
        %v5834 = vld [vmem:[%s2674 + $0xb] sm:$0xff]
        %v5835 = vld [vmem:[%s2674 + $0x1b] sm:$0xff]
        %v5836 = vld [vmem:[%s2674 + $0x23] sm:$0xff]
        %v5837 = vld [vmem:[%s2674 + $0x33] sm:$0xff]
        %v5838 = vld [vmem:[%s2674 + $0x3b] sm:$0xff]
        %v5839 = vld [vmem:[%s2674 + $0x4b] sm:$0xff]
        %v5840 = vld [vmem:[%s2674 + $0x53] sm:$0xff]
        %v5841 = vld [vmem:[%s2674 + $0x63] sm:$0xff]
        %v5842 = vld [vmem:[%s2674 + $0x6b] sm:$0xff]
        %v5843 = vld [vmem:[%s2674 + $0x7b] sm:$0xff]
        %v5844 = vld [vmem:[%s2674 + $0x83] sm:$0xff]
        %v5845 = vld [vmem:[%s2674 + $0x93] sm:$0xff]
        %v5846 = vld [vmem:[%s2674 + $0x9b] sm:$0xff]
        %v5847 = vld [vmem:[%s2674 + $0xab] sm:$0xff]
        %v5848 = vld [vmem:[%s2674 + $0xb3] sm:$0xff]
        %v5849 = vld [vmem:[%s2674 + $0xc3] sm:$0xff]
        %v5850 = vld [vmem:[%s2674 + $0xcb] sm:$0xff]
        %v5851 = vld [vmem:[%s2674 + $0xdb] sm:$0xff]
        %v5852 = vld [vmem:[%s2674 + $0xe3] sm:$0xff]
        %v5853 = vld [vmem:[%s2674 + $0xf3] sm:$0xff]
        %v5854 = vld [vmem:[%s2674 + $0xfb] sm:$0xff]
        %v5855 = vld [vmem:[%s2674 + $0x10b] sm:$0xff]
        %v5856 = vld [vmem:[%s2674 + $0x113] sm:$0xff]
        %v5857 = vld [vmem:[%s2674 + $0x123] sm:$0xff]
        %v5858 = vld [vmem:[%s2674 + $0x12b] sm:$0xff]
        %v5859 = vld [vmem:[%s2674 + $0x13b] sm:$0xff]
        %v5860 = vld [vmem:[%s2674 + $0x143] sm:$0xff]
        %v5861 = vld [vmem:[%s2674 + $0x153] sm:$0xff]
        %v5862 = vld [vmem:[%s2674 + $0x15b] sm:$0xff]
        %v5863 = vld [vmem:[%s2674 + $0x16b] sm:$0xff]
        %v5864 = vld [vmem:[%s2674 + $0x173] sm:$0xff]
        %v5865 = vlaneseq
        %v5866 = vand.u32 %v5865, 127
        %vm5867 = vcmp.lt.s32.totalorder %v5866, 4
        %v5868 = vsel %vm5867, 1, 0
        %v5869 = vcvt.s32.f32 %v5868
        %v5870 = vmul.f32 %v5801, %v5869
        %v5871 = vmul.f32 %v5802, %v5869
        %v5872 = vmul.f32 %v5803, %v5869
        %v5873 = vmul.f32 %v5804, %v5869
        %v5874 = vmul.f32 %v5805, %v5869
        %v5875 = vmul.f32 %v5806, %v5869
        %v5876 = vmul.f32 %v5807, %v5869
        %v5877 = vmul.f32 %v5808, %v5869
        %v5878 = vmul.f32 %v5809, %v5869
        %v5879 = vmul.f32 %v5810, %v5869
        %v5880 = vmul.f32 %v5811, %v5869
        %v5881 = vmul.f32 %v5812, %v5869
        %v5882 = vmul.f32 %v5813, %v5869
        %v5883 = vmul.f32 %v5814, %v5869
        %v5884 = vmul.f32 %v5815, %v5869
        %v5885 = vmul.f32 %v5816, %v5869
        %v5886 = vmul.f32 %v5817, %v5869
        %v5887 = vmul.f32 %v5818, %v5869
        %v5888 = vmul.f32 %v5819, %v5869
        %v5889 = vmul.f32 %v5820, %v5869
        %v5890 = vmul.f32 %v5821, %v5869
        %v5891 = vmul.f32 %v5822, %v5869
        %v5892 = vmul.f32 %v5823, %v5869
        %v5893 = vmul.f32 %v5824, %v5869
        %v5894 = vmul.f32 %v5825, %v5869
        %v5895 = vmul.f32 %v5826, %v5869
        %v5896 = vmul.f32 %v5827, %v5869
        %v5897 = vmul.f32 %v5828, %v5869
        %v5898 = vmul.f32 %v5829, %v5869
        %v5899 = vmul.f32 %v5830, %v5869
        %v5900 = vmul.f32 %v5831, %v5869
        %v5901 = vmul.f32 %v5832, %v5869
        %5902 = vadd.xlane.f32.xlu0 %v5870
        %v5903 = vpop.xlane.xlu0 %5902
        %5904 = vadd.xlane.f32.xlu0 %v5871
        %v5905 = vpop.xlane.xlu0 %5904
        %5906 = vadd.xlane.f32.xlu0 %v5872
        %v5907 = vpop.xlane.xlu0 %5906
        %5908 = vadd.xlane.f32.xlu0 %v5873
        %v5909 = vpop.xlane.xlu0 %5908
        %5910 = vadd.xlane.f32.xlu0 %v5874
        %v5911 = vpop.xlane.xlu0 %5910
        %5912 = vadd.xlane.f32.xlu0 %v5875
        %v5913 = vpop.xlane.xlu0 %5912
        %5914 = vadd.xlane.f32.xlu0 %v5876
        %v5915 = vpop.xlane.xlu0 %5914
        %5916 = vadd.xlane.f32.xlu0 %v5877
        %v5917 = vpop.xlane.xlu0 %5916
        %5918 = vadd.xlane.f32.xlu0 %v5878
        %v5919 = vpop.xlane.xlu0 %5918
        %5920 = vadd.xlane.f32.xlu0 %v5879
        %v5921 = vpop.xlane.xlu0 %5920
        %5922 = vadd.xlane.f32.xlu0 %v5880
        %v5923 = vpop.xlane.xlu0 %5922
        %5924 = vadd.xlane.f32.xlu0 %v5881
        %v5925 = vpop.xlane.xlu0 %5924
        %5926 = vadd.xlane.f32.xlu0 %v5882
        %v5927 = vpop.xlane.xlu0 %5926
        %5928 = vadd.xlane.f32.xlu0 %v5883
        %v5929 = vpop.xlane.xlu0 %5928
        %5930 = vadd.xlane.f32.xlu0 %v5884
        %v5931 = vpop.xlane.xlu0 %5930
        %5932 = vadd.xlane.f32.xlu0 %v5885
        %v5933 = vpop.xlane.xlu0 %5932
        %5934 = vadd.xlane.f32.xlu0 %v5886
        %v5935 = vpop.xlane.xlu0 %5934
        %5936 = vadd.xlane.f32.xlu0 %v5887
        %v5937 = vpop.xlane.xlu0 %5936
        %5938 = vadd.xlane.f32.xlu0 %v5888
        %v5939 = vpop.xlane.xlu0 %5938
        %5940 = vadd.xlane.f32.xlu0 %v5889
        %v5941 = vpop.xlane.xlu0 %5940
        %5942 = vadd.xlane.f32.xlu0 %v5890
        %v5943 = vpop.xlane.xlu0 %5942
        %5944 = vadd.xlane.f32.xlu0 %v5891
        %v5945 = vpop.xlane.xlu0 %5944
        %5946 = vadd.xlane.f32.xlu0 %v5892
        %v5947 = vpop.xlane.xlu0 %5946
        %5948 = vadd.xlane.f32.xlu0 %v5893
        %v5949 = vpop.xlane.xlu0 %5948
        %5950 = vadd.xlane.f32.xlu0 %v5894
        %v5951 = vpop.xlane.xlu0 %5950
        %5952 = vadd.xlane.f32.xlu0 %v5895
        %v5953 = vpop.xlane.xlu0 %5952
        %5954 = vadd.xlane.f32.xlu0 %v5896
        %v5955 = vpop.xlane.xlu0 %5954
        %5956 = vadd.xlane.f32.xlu0 %v5897
        %v5957 = vpop.xlane.xlu0 %5956
        %5958 = vadd.xlane.f32.xlu0 %v5898
        %v5959 = vpop.xlane.xlu0 %5958
        %5960 = vadd.xlane.f32.xlu0 %v5899
        %v5961 = vpop.xlane.xlu0 %5960
        %5962 = vadd.xlane.f32.xlu0 %v5900
        %v5963 = vpop.xlane.xlu0 %5962
        %5964 = vadd.xlane.f32.xlu0 %v5901
        %v5965 = vpop.xlane.xlu0 %5964
        %v5966 = vmul.f32 %v5903, 0.25
        %v5967 = vmul.f32 %v5905, 0.25
        %v5968 = vmul.f32 %v5907, 0.25
        %v5969 = vmul.f32 %v5909, 0.25
        %v5970 = vmul.f32 %v5911, 0.25
        %v5971 = vmul.f32 %v5913, 0.25
        %v5972 = vmul.f32 %v5915, 0.25
        %v5973 = vmul.f32 %v5917, 0.25
        %v5974 = vmul.f32 %v5919, 0.25
        %v5975 = vmul.f32 %v5921, 0.25
        %v5976 = vmul.f32 %v5923, 0.25
        %v5977 = vmul.f32 %v5925, 0.25
        %v5978 = vmul.f32 %v5927, 0.25
        %v5979 = vmul.f32 %v5929, 0.25
        %v5980 = vmul.f32 %v5931, 0.25
        %v5981 = vmul.f32 %v5933, 0.25
        %v5982 = vmul.f32 %v5935, 0.25
        %v5983 = vmul.f32 %v5937, 0.25
        %v5984 = vmul.f32 %v5939, 0.25
        %v5985 = vmul.f32 %v5941, 0.25
        %v5986 = vmul.f32 %v5943, 0.25
        %v5987 = vmul.f32 %v5945, 0.25
        %v5988 = vmul.f32 %v5947, 0.25
        %v5989 = vmul.f32 %v5949, 0.25
        %v5990 = vmul.f32 %v5951, 0.25
        %v5991 = vmul.f32 %v5953, 0.25
        %v5992 = vmul.f32 %v5955, 0.25
        %v5993 = vmul.f32 %v5957, 0.25
        %v5994 = vmul.f32 %v5959, 0.25
        %v5995 = vmul.f32 %v5961, 0.25
        %v5996 = vmul.f32 %v5963, 0.25
        %v5997 = vmul.f32 %v5965, 0.25
        %v5998 = vsub.f32 %v5870, %v5966
        %v5999 = vsub.f32 %v5871, %v5967
        %v6000 = vsub.f32 %v5872, %v5968
        %v6001 = vsub.f32 %v5873, %v5969
        %v6002 = vsub.f32 %v5874, %v5970
        %v6003 = vsub.f32 %v5875, %v5971
        %v6004 = vsub.f32 %v5876, %v5972
        %v6005 = vsub.f32 %v5877, %v5973
        %v6006 = vsub.f32 %v5878, %v5974
        %v6007 = vsub.f32 %v5879, %v5975
        %v6008 = vsub.f32 %v5880, %v5976
        %v6009 = vsub.f32 %v5881, %v5977
        %v6010 = vsub.f32 %v5882, %v5978
        %v6011 = vsub.f32 %v5883, %v5979
        %v6012 = vsub.f32 %v5884, %v5980
        %v6013 = vsub.f32 %v5885, %v5981
        %v6014 = vsub.f32 %v5886, %v5982
        %v6015 = vsub.f32 %v5887, %v5983
        %v6016 = vsub.f32 %v5888, %v5984
        %v6017 = vsub.f32 %v5889, %v5985
        %v6018 = vsub.f32 %v5890, %v5986
        %v6019 = vsub.f32 %v5891, %v5987
        %v6020 = vsub.f32 %v5892, %v5988
        %v6021 = vsub.f32 %v5893, %v5989
        %v6022 = vsub.f32 %v5894, %v5990
        %v6023 = vsub.f32 %v5895, %v5991
        %v6024 = vsub.f32 %v5896, %v5992
        %v6025 = vsub.f32 %v5897, %v5993
        %v6026 = vsub.f32 %v5898, %v5994
        %v6027 = vsub.f32 %v5899, %v5995
        %v6028 = vsub.f32 %v5900, %v5996
        %v6029 = vsub.f32 %v5901, %v5997
        %v6030 = vmul.f32 %v5998, %v5869
        %v6031 = vmul.f32 %v5999, %v5869
        %v6032 = vmul.f32 %v6000, %v5869
        %v6033 = vmul.f32 %v6001, %v5869
        %v6034 = vmul.f32 %v6002, %v5869
        %v6035 = vmul.f32 %v6003, %v5869
        %v6036 = vmul.f32 %v6004, %v5869
        %v6037 = vmul.f32 %v6005, %v5869
        %v6038 = vmul.f32 %v6006, %v5869
        %v6039 = vmul.f32 %v6007, %v5869
        %v6040 = vmul.f32 %v6008, %v5869
        %v6041 = vmul.f32 %v6009, %v5869
        %v6042 = vmul.f32 %v6010, %v5869
        %v6043 = vmul.f32 %v6011, %v5869
        %v6044 = vmul.f32 %v6012, %v5869
        %v6045 = vmul.f32 %v6013, %v5869
        %v6046 = vmul.f32 %v6014, %v5869
        %v6047 = vmul.f32 %v6015, %v5869
        %v6048 = vmul.f32 %v6016, %v5869
        %v6049 = vmul.f32 %v6017, %v5869
        %v6050 = vmul.f32 %v6018, %v5869
        %v6051 = vmul.f32 %v6019, %v5869
        %v6052 = vmul.f32 %v6020, %v5869
        %v6053 = vmul.f32 %v6021, %v5869
        %v6054 = vmul.f32 %v6022, %v5869
        %v6055 = vmul.f32 %v6023, %v5869
        %v6056 = vmul.f32 %v6024, %v5869
        %v6057 = vmul.f32 %v6025, %v5869
        %v6058 = vmul.f32 %v6026, %v5869
        %v6059 = vmul.f32 %v6027, %v5869
        %v6060 = vmul.f32 %v6028, %v5869
        %v6061 = vmul.f32 %v6029, %v5869
        %v6062 = vmul.f32 %v6030, %v6030
        %v6063 = vmul.f32 %v6031, %v6031
        %v6064 = vmul.f32 %v6032, %v6032
        %v6065 = vmul.f32 %v6033, %v6033
        %v6066 = vmul.f32 %v6034, %v6034
        %v6067 = vmul.f32 %v6035, %v6035
        %v6068 = vmul.f32 %v6036, %v6036
        %v6069 = vmul.f32 %v6037, %v6037
        %v6070 = vmul.f32 %v6038, %v6038
        %v6071 = vmul.f32 %v6039, %v6039
        %v6072 = vmul.f32 %v6040, %v6040
        %v6073 = vmul.f32 %v6041, %v6041
        %v6074 = vmul.f32 %v6042, %v6042
        %v6075 = vmul.f32 %v6043, %v6043
        %v6076 = vmul.f32 %v6044, %v6044
        %v6077 = vmul.f32 %v6045, %v6045
        %v6078 = vmul.f32 %v6046, %v6046
        %v6079 = vmul.f32 %v6047, %v6047
        %v6080 = vmul.f32 %v6048, %v6048
        %v6081 = vmul.f32 %v6049, %v6049
        %v6082 = vmul.f32 %v6050, %v6050
        %v6083 = vmul.f32 %v6051, %v6051
        %v6084 = vmul.f32 %v6052, %v6052
        %v6085 = vmul.f32 %v6053, %v6053
        %v6086 = vmul.f32 %v6054, %v6054
        %v6087 = vmul.f32 %v6055, %v6055
        %v6088 = vmul.f32 %v6056, %v6056
        %v6089 = vmul.f32 %v6057, %v6057
        %v6090 = vmul.f32 %v6058, %v6058
        %v6091 = vmul.f32 %v6059, %v6059
        %v6092 = vmul.f32 %v6060, %v6060
        %v6093 = vmul.f32 %v6061, %v6061
        %6094 = vadd.xlane.f32.xlu0 %v6062
        %v6095 = vpop.xlane.xlu0 %6094
        %6096 = vadd.xlane.f32.xlu0 %v6063
        %v6097 = vpop.xlane.xlu0 %6096
        %6098 = vadd.xlane.f32.xlu0 %v6064
        %v6099 = vpop.xlane.xlu0 %6098
        %6100 = vadd.xlane.f32.xlu0 %v6065
        %v6101 = vpop.xlane.xlu0 %6100
        %6102 = vadd.xlane.f32.xlu0 %v6066
        %v6103 = vpop.xlane.xlu0 %6102
        %6104 = vadd.xlane.f32.xlu0 %v6067
        %v6105 = vpop.xlane.xlu0 %6104
        %6106 = vadd.xlane.f32.xlu0 %v6068
        %v6107 = vpop.xlane.xlu0 %6106
        %6108 = vadd.xlane.f32.xlu0 %v6069
        %v6109 = vpop.xlane.xlu0 %6108
        %6110 = vadd.xlane.f32.xlu0 %v6070
        %v6111 = vpop.xlane.xlu0 %6110
        %6112 = vadd.xlane.f32.xlu0 %v6071
        %v6113 = vpop.xlane.xlu0 %6112
        %6114 = vadd.xlane.f32.xlu0 %v6072
        %v6115 = vpop.xlane.xlu0 %6114
        %6116 = vadd.xlane.f32.xlu0 %v6073
        %v6117 = vpop.xlane.xlu0 %6116
        %6118 = vadd.xlane.f32.xlu0 %v6074
        %v6119 = vpop.xlane.xlu0 %6118
        %6120 = vadd.xlane.f32.xlu0 %v6075
        %v6121 = vpop.xlane.xlu0 %6120
        %6122 = vadd.xlane.f32.xlu0 %v6076
        %v6123 = vpop.xlane.xlu0 %6122
        %6124 = vadd.xlane.f32.xlu0 %v6077
        %v6125 = vpop.xlane.xlu0 %6124
        %6126 = vadd.xlane.f32.xlu0 %v6078
        %v6127 = vpop.xlane.xlu0 %6126
        %6128 = vadd.xlane.f32.xlu0 %v6079
        %v6129 = vpop.xlane.xlu0 %6128
        %6130 = vadd.xlane.f32.xlu0 %v6080
        %v6131 = vpop.xlane.xlu0 %6130
        %6132 = vadd.xlane.f32.xlu0 %v6081
        %v6133 = vpop.xlane.xlu0 %6132
        %6134 = vadd.xlane.f32.xlu0 %v6082
        %v6135 = vpop.xlane.xlu0 %6134
        %6136 = vadd.xlane.f32.xlu0 %v6083
        %v6137 = vpop.xlane.xlu0 %6136
        %6138 = vadd.xlane.f32.xlu0 %v6084
        %v6139 = vpop.xlane.xlu0 %6138
        %6140 = vadd.xlane.f32.xlu0 %v6085
        %v6141 = vpop.xlane.xlu0 %6140
        %6142 = vadd.xlane.f32.xlu0 %v6086
        %v6143 = vpop.xlane.xlu0 %6142
        %6144 = vadd.xlane.f32.xlu0 %v6087
        %v6145 = vpop.xlane.xlu0 %6144
        %6146 = vadd.xlane.f32.xlu0 %v6088
        %v6147 = vpop.xlane.xlu0 %6146
        %6148 = vadd.xlane.f32.xlu0 %v6089
        %v6149 = vpop.xlane.xlu0 %6148
        %6150 = vadd.xlane.f32.xlu0 %v6090
        %v6151 = vpop.xlane.xlu0 %6150
        %6152 = vadd.xlane.f32.xlu0 %v6091
        %v6153 = vpop.xlane.xlu0 %6152
        %6154 = vadd.xlane.f32.xlu0 %v6092
        %v6155 = vpop.xlane.xlu0 %6154
        %6156 = vadd.xlane.f32.xlu0 %v6093
        %v6157 = vpop.xlane.xlu0 %6156
        %v6158 = vmul.f32 %v6095, 0.25
        %v6159 = vmul.f32 %v6097, 0.25
        %v6160 = vmul.f32 %v6099, 0.25
        %v6161 = vmul.f32 %v6101, 0.25
        %v6162 = vmul.f32 %v6103, 0.25
        %v6163 = vmul.f32 %v6105, 0.25
        %v6164 = vmul.f32 %v6107, 0.25
        %v6165 = vmul.f32 %v6109, 0.25
        %v6166 = vmul.f32 %v6111, 0.25
        %v6167 = vmul.f32 %v6113, 0.25
        %v6168 = vmul.f32 %v6115, 0.25
        %v6169 = vmul.f32 %v6117, 0.25
        %v6170 = vmul.f32 %v6119, 0.25
        %v6171 = vmul.f32 %v6121, 0.25
        %v6172 = vmul.f32 %v6123, 0.25
        %v6173 = vmul.f32 %v6125, 0.25
        %v6174 = vmul.f32 %v6127, 0.25
        %v6175 = vmul.f32 %v6129, 0.25
        %v6176 = vmul.f32 %v6131, 0.25
        %v6177 = vmul.f32 %v6133, 0.25
        %v6178 = vmul.f32 %v6135, 0.25
        %v6179 = vmul.f32 %v6137, 0.25
        %v6180 = vmul.f32 %v6139, 0.25
        %v6181 = vmul.f32 %v6141, 0.25
        %v6182 = vmul.f32 %v6143, 0.25
        %v6183 = vmul.f32 %v6145, 0.25
        %v6184 = vmul.f32 %v6147, 0.25
        %v6185 = vmul.f32 %v6149, 0.25
        %v6186 = vmul.f32 %v6151, 0.25
        %v6187 = vmul.f32 %v6153, 0.25
        %v6188 = vmul.f32 %v6155, 0.25
        %v6189 = vmul.f32 %v6157, 0.25
        %v6190 = vadd.f32 %v6158, 1e-05
        %v6191 = vadd.f32 %v6159, 1e-05
        %v6192 = vadd.f32 %v6160, 1e-05
        %v6193 = vadd.f32 %v6161, 1e-05
        %v6194 = vadd.f32 %v6162, 1e-05
        %v6195 = vadd.f32 %v6163, 1e-05
        %v6196 = vadd.f32 %v6164, 1e-05
        %v6197 = vadd.f32 %v6165, 1e-05
        %v6198 = vadd.f32 %v6166, 1e-05
        %v6199 = vadd.f32 %v6167, 1e-05
        %v6200 = vadd.f32 %v6168, 1e-05
        %v6201 = vadd.f32 %v6169, 1e-05
        %v6202 = vadd.f32 %v6170, 1e-05
        %v6203 = vadd.f32 %v6171, 1e-05
        %v6204 = vadd.f32 %v6172, 1e-05
        %v6205 = vadd.f32 %v6173, 1e-05
        %v6206 = vadd.f32 %v6174, 1e-05
        %v6207 = vadd.f32 %v6175, 1e-05
        %v6208 = vadd.f32 %v6176, 1e-05
        %v6209 = vadd.f32 %v6177, 1e-05
        %v6210 = vadd.f32 %v6178, 1e-05
        %v6211 = vadd.f32 %v6179, 1e-05
        %v6212 = vadd.f32 %v6180, 1e-05
        %v6213 = vadd.f32 %v6181, 1e-05
        %v6214 = vadd.f32 %v6182, 1e-05
        %v6215 = vadd.f32 %v6183, 1e-05
        %v6216 = vadd.f32 %v6184, 1e-05
        %v6217 = vadd.f32 %v6185, 1e-05
        %v6218 = vadd.f32 %v6186, 1e-05
        %v6219 = vadd.f32 %v6187, 1e-05
        %v6220 = vadd.f32 %v6188, 1e-05
        %v6221 = vadd.f32 %v6189, 1e-05
        %v6222 = vrsqrt.pop %v6190
        %v6223 = vrsqrt.pop %v6191
        %v6224 = vrsqrt.pop %v6192
        %v6225 = vrsqrt.pop %v6193
        %v6226 = vrsqrt.pop %v6194
        %v6227 = vrsqrt.pop %v6195
        %v6228 = vrsqrt.pop %v6196
        %v6229 = vrsqrt.pop %v6197
        %v6230 = vrsqrt.pop %v6198
        %v6231 = vrsqrt.pop %v6199
        %v6232 = vrsqrt.pop %v6200
        %v6233 = vrsqrt.pop %v6201
        %v6234 = vrsqrt.pop %v6202
        %v6235 = vrsqrt.pop %v6203
        %v6236 = vrsqrt.pop %v6204
        %v6237 = vrsqrt.pop %v6205
        %v6238 = vrsqrt.pop %v6206
        %v6239 = vrsqrt.pop %v6207
        %v6240 = vrsqrt.pop %v6208
        %v6241 = vrsqrt.pop %v6209
        %v6242 = vrsqrt.pop %v6210
        %v6243 = vrsqrt.pop %v6211
        %v6244 = vrsqrt.pop %v6212
        %v6245 = vrsqrt.pop %v6213
        %v6246 = vrsqrt.pop %v6214
        %v6247 = vrsqrt.pop %v6215
        %v6248 = vrsqrt.pop %v6216
        %v6249 = vrsqrt.pop %v6217
        %v6250 = vrsqrt.pop %v6218
        %v6251 = vrsqrt.pop %v6219
        %v6252 = vrsqrt.pop %v6220
        %v6253 = vrsqrt.pop %v6221
        %v6254 = vmul.f32 %v6030, %v6222
        %v6255 = vmul.f32 %v6031, %v6223
        %v6256 = vmul.f32 %v6032, %v6224
        %v6257 = vmul.f32 %v6033, %v6225
        %v6258 = vmul.f32 %v6034, %v6226
        %v6259 = vmul.f32 %v6035, %v6227
        %v6260 = vmul.f32 %v6036, %v6228
        %v6261 = vmul.f32 %v6037, %v6229
        %v6262 = vmul.f32 %v6038, %v6230
        %v6263 = vmul.f32 %v6039, %v6231
        %v6264 = vmul.f32 %v6040, %v6232
        %v6265 = vmul.f32 %v6041, %v6233
        %v6266 = vmul.f32 %v6042, %v6234
        %v6267 = vmul.f32 %v6043, %v6235
        %v6268 = vmul.f32 %v6044, %v6236
        %v6269 = vmul.f32 %v6045, %v6237
        %v6270 = vmul.f32 %v6046, %v6238
        %v6271 = vmul.f32 %v6047, %v6239
        %v6272 = vmul.f32 %v6048, %v6240
        %v6273 = vmul.f32 %v6049, %v6241
        %v6274 = vmul.f32 %v6050, %v6242
        %v6275 = vmul.f32 %v6051, %v6243
        %v6276 = vmul.f32 %v6052, %v6244
        %v6277 = vmul.f32 %v6053, %v6245
        %v6278 = vmul.f32 %v6054, %v6246
        %v6279 = vmul.f32 %v6055, %v6247
        %v6280 = vmul.f32 %v6056, %v6248
        %v6281 = vmul.f32 %v6057, %v6249
        %v6282 = vmul.f32 %v6058, %v6250
        %v6283 = vmul.f32 %v6059, %v6251
        %v6284 = vmul.f32 %v6060, %v6252
        %v6285 = vmul.f32 %v6061, %v6253
        %v6286 = vld [vmem:[#allocation10] sm:$0x1]
        %v6288 = vlaneseq
        %v6289 = vshrl.u32 %v6288, 7
        %v6290 = vsub.s32 0, %v6289
        %v6291 = vrot.slane %v6286, %v6290
        %v6293 = vmul.f32 %v6254, %v6291
        %v6294 = vmul.f32 %v6255, %v6291
        %v6295 = vmul.f32 %v6256, %v6291
        %v6296 = vmul.f32 %v6257, %v6291
        %v6297 = vmul.f32 %v6258, %v6291
        %v6298 = vmul.f32 %v6259, %v6291
        %v6299 = vmul.f32 %v6260, %v6291
        %v6300 = vmul.f32 %v6261, %v6291
        %v6301 = vmul.f32 %v6262, %v6291
        %v6302 = vmul.f32 %v6263, %v6291
        %v6303 = vmul.f32 %v6264, %v6291
        %v6304 = vmul.f32 %v6265, %v6291
        %v6305 = vmul.f32 %v6266, %v6291
        %v6306 = vmul.f32 %v6267, %v6291
        %v6307 = vmul.f32 %v6268, %v6291
        %v6308 = vmul.f32 %v6269, %v6291
        %v6309 = vmul.f32 %v6270, %v6291
        %v6310 = vmul.f32 %v6271, %v6291
        %v6311 = vmul.f32 %v6272, %v6291
        %v6312 = vmul.f32 %v6273, %v6291
        %v6313 = vmul.f32 %v6274, %v6291
        %v6314 = vmul.f32 %v6275, %v6291
        %v6315 = vmul.f32 %v6276, %v6291
        %v6316 = vmul.f32 %v6277, %v6291
        %v6317 = vmul.f32 %v6278, %v6291
        %v6318 = vmul.f32 %v6279, %v6291
        %v6319 = vmul.f32 %v6280, %v6291
        %v6320 = vmul.f32 %v6281, %v6291
        %v6321 = vmul.f32 %v6282, %v6291
        %v6322 = vmul.f32 %v6283, %v6291
        %v6323 = vmul.f32 %v6284, %v6291
        %v6324 = vmul.f32 %v6285, %v6291
        %v6325 = vld [vmem:[#allocation11] sm:$0x1]
        %v6327 = vlaneseq
        %v6328 = vshrl.u32 %v6327, 7
        %v6329 = vsub.s32 0, %v6328
        %v6330 = vrot.slane %v6325, %v6329
        %v6332 = vadd.f32 %v6293, %v6330
        %v6333 = vadd.f32 %v6294, %v6330
        %v6334 = vadd.f32 %v6295, %v6330
        %v6335 = vadd.f32 %v6296, %v6330
        %v6336 = vadd.f32 %v6297, %v6330
        %v6337 = vadd.f32 %v6298, %v6330
        %v6338 = vadd.f32 %v6299, %v6330
        %v6339 = vadd.f32 %v6300, %v6330
        %v6340 = vadd.f32 %v6301, %v6330
        %v6341 = vadd.f32 %v6302, %v6330
        %v6342 = vadd.f32 %v6303, %v6330
        %v6343 = vadd.f32 %v6304, %v6330
        %v6344 = vadd.f32 %v6305, %v6330
        %v6345 = vadd.f32 %v6306, %v6330
        %v6346 = vadd.f32 %v6307, %v6330
        %v6347 = vadd.f32 %v6308, %v6330
        %v6348 = vadd.f32 %v6309, %v6330
        %v6349 = vadd.f32 %v6310, %v6330
        %v6350 = vadd.f32 %v6311, %v6330
        %v6351 = vadd.f32 %v6312, %v6330
        %v6352 = vadd.f32 %v6313, %v6330
        %v6353 = vadd.f32 %v6314, %v6330
        %v6354 = vadd.f32 %v6315, %v6330
        %v6355 = vadd.f32 %v6316, %v6330
        %v6356 = vadd.f32 %v6317, %v6330
        %v6357 = vadd.f32 %v6318, %v6330
        %v6358 = vadd.f32 %v6319, %v6330
        %v6359 = vadd.f32 %v6320, %v6330
        %v6360 = vadd.f32 %v6321, %v6330
        %v6361 = vadd.f32 %v6322, %v6330
        %v6362 = vadd.f32 %v6323, %v6330
        %v6363 = vadd.f32 %v6324, %v6330
        %v6364 = vpack.c.bf16 %v6333, %v6332
        %v6365 = vpack.c.bf16 %v6335, %v6334
        %v6366 = vpack.c.bf16 %v6337, %v6336
        %v6367 = vpack.c.bf16 %v6339, %v6338
        %v6368 = vpack.c.bf16 %v6341, %v6340
        %v6369 = vpack.c.bf16 %v6343, %v6342
        %v6370 = vpack.c.bf16 %v6345, %v6344
        %v6371 = vpack.c.bf16 %v6347, %v6346
        %v6372 = vpack.c.bf16 %v6349, %v6348
        %v6373 = vpack.c.bf16 %v6351, %v6350
        %v6374 = vpack.c.bf16 %v6353, %v6352
        %v6375 = vpack.c.bf16 %v6355, %v6354
        %v6376 = vpack.c.bf16 %v6357, %v6356
        %v6377 = vpack.c.bf16 %v6359, %v6358
        %v6378 = vpack.c.bf16 %v6361, %v6360
        %v6379 = vpack.c.bf16 %v6363, %v6362
        %v6380 = vld [vmem:[#allocation13] sm:$0xf]
        %v6381 = vld [vmem:[#allocation13 + $0x4] sm:$0xf]
        %v6382 = vld [vmem:[#allocation13 + $0x8] sm:$0xf]
        %v6383 = vld [vmem:[#allocation13 + $0xc] sm:$0xf]
        %v6384 = vld [vmem:[#allocation13 + $0x10] sm:$0xf]
        %v6385 = vld [vmem:[#allocation13 + $0x14] sm:$0xf]
        %v6386 = vld [vmem:[#allocation13 + $0x18] sm:$0xf]
        %v6387 = vld [vmem:[#allocation13 + $0x1c] sm:$0xf]
        %v6388 = vld [vmem:[#allocation13 + $0x20] sm:$0xf]
        %v6389 = vld [vmem:[#allocation13 + $0x24] sm:$0xf]
        %v6390 = vld [vmem:[#allocation13 + $0x28] sm:$0xf]
        %v6391 = vld [vmem:[#allocation13 + $0x2c] sm:$0xf]
        %v6392 = vld [vmem:[#allocation13 + $0x30] sm:$0xf]
        %v6393 = vld [vmem:[#allocation13 + $0x34] sm:$0xf]
        %v6394 = vld [vmem:[#allocation13 + $0x38] sm:$0xf]
        %v6395 = vld [vmem:[#allocation13 + $0x3c] sm:$0xf]
        %v6396 = vld [vmem:[#allocation14] sm:$0x1]
        %v6398 = vlaneseq
        %v6399 = vshrl.u32 %v6398, 7
        %v6400 = vsub.s32 0, %v6399
        %v6401 = vrot.slane %v6396, %v6400
        %v6419 = vunpack.c.l.b16 %v6380
        %v6420 = vunpack.c.l.b16 %v6381
        %v6421 = vunpack.c.l.b16 %v6382
        %v6422 = vunpack.c.l.b16 %v6383
        %v6423 = vunpack.c.l.b16 %v6384
        %v6424 = vunpack.c.l.b16 %v6385
        %v6425 = vunpack.c.l.b16 %v6386
        %v6426 = vunpack.c.l.b16 %v6387
        %v6427 = vunpack.c.l.b16 %v6388
        %v6428 = vunpack.c.l.b16 %v6389
        %v6429 = vunpack.c.l.b16 %v6390
        %v6430 = vunpack.c.l.b16 %v6391
        %v6431 = vunpack.c.l.b16 %v6392
        %v6432 = vunpack.c.l.b16 %v6393
        %v6433 = vunpack.c.l.b16 %v6394
        %v6434 = vunpack.c.l.b16 %v6395
        %v6435 = vpack.c.b16 %v6420, %v6419
        %v6436 = vpack.c.b16 %v6422, %v6421
        %v6437 = vpack.c.b16 %v6424, %v6423
        %v6438 = vpack.c.b16 %v6426, %v6425
        %v6439 = vpack.c.b16 %v6428, %v6427
        %v6440 = vpack.c.b16 %v6430, %v6429
        %v6441 = vpack.c.b16 %v6432, %v6431
        %v6442 = vpack.c.b16 %v6434, %v6433
        %6451 = vmatprep.subr.bf16.mxu0 0
        %6452 = vmatpush1.bf16.msra.mxu0 %v6435
        %6453 = vmatprep.subr.bf16.mxu0 0
        %6454 = vmatpush1.bf16.msra.mxu0 %v6436
        %6455 = vmatprep.subr.bf16.mxu0 0
        %6456 = vmatpush1.bf16.msra.mxu0 %v6437
        %6457 = vmatprep.subr.bf16.mxu0 0
        %6458 = vmatpush1.bf16.msra.mxu0 %v6438
        %6459 = vmatprep.subr.bf16.mxu0 0
        %6460 = vmatpush1.bf16.msra.mxu0 %v6439
        %6461 = vmatprep.subr.bf16.mxu0 0
        %6462 = vmatpush1.bf16.msra.mxu0 %v6440
        %6463 = vmatprep.subr.bf16.mxu0 0
        %6464 = vmatpush1.bf16.msra.mxu0 %v6441
        %6465 = vmatprep.subr.bf16.mxu0 0
        %6466 = vmatpush1.bf16.msra.mxu0 %v6442
        %6467 = vmatprep.subr.bf16.mxu0 0
        %6468 = vmatpush1.bf16.msra.mxu0 0
        %6469 = vmatprep.subr.bf16.mxu0 0
        %6470 = vmatpush1.bf16.msra.mxu0 0
        %6471 = vmatprep.subr.bf16.mxu0 0
        %6472 = vmatpush1.bf16.msra.mxu0 0
        %6473 = vmatprep.subr.bf16.mxu0 0
        %6474 = vmatpush1.bf16.msra.mxu0 0
        %6475 = vmatprep.subr.bf16.mxu0 0
        %6476 = vmatpush1.bf16.msra.mxu0 0
        %6477 = vmatprep.subr.bf16.mxu0 0
        %6478 = vmatpush1.bf16.msra.mxu0 0
        %6479 = vmatprep.subr.bf16.mxu0 0
        %6480 = vmatpush1.bf16.msra.mxu0 0
        %6481 = vmatprep.subr.bf16.mxu0 0
        %6482 = vmatpush1.bf16.msra.mxu0 0
        %6483 = vmatprep.mubr.bf16.mxu0 0
        %6484 = vmatmul.mubr.bf16.gmra.mrb[0].mxu0 %v6364
        %v6485 = vpop.f32.mrb[0].mxu0
        %v6486 = vadd.f32 %v6401, %v6485
        %v6487 = vpop.f32.mrb[0].mxu0
        %v6488 = vpop.f32.mrb[0].mxu0
        %v6489 = vadd.f32 %v6401, %v6488
        %v6490 = vpop.f32.mrb[0].mxu0
        %6491 = vmatprep.mubr.bf16.mxu0 0
        %6492 = vmatmul.mubr.bf16.gmra.mrb[0].mxu0 %v6365
        %v6493 = vpop.f32.mrb[0].mxu0
        %v6494 = vadd.f32 %v6401, %v6493
        %v6495 = vpop.f32.mrb[0].mxu0
        %v6496 = vpop.f32.mrb[0].mxu0
        %v6497 = vadd.f32 %v6401, %v6496
        %v6498 = vpop.f32.mrb[0].mxu0
        %6499 = vmatprep.mubr.bf16.mxu0 0
        %6500 = vmatmul.mubr.bf16.gmra.mrb[0].mxu0 %v6366
        %v6501 = vpop.f32.mrb[0].mxu0
        %v6502 = vadd.f32 %v6401, %v6501
        %v6503 = vpop.f32.mrb[0].mxu0
        %v6504 = vpop.f32.mrb[0].mxu0
        %v6505 = vadd.f32 %v6401, %v6504
        %v6506 = vpop.f32.mrb[0].mxu0
        %6507 = vmatprep.mubr.bf16.mxu0 0
        %6508 = vmatmul.mubr.bf16.gmra.mrb[0].mxu0 %v6367
        %v6509 = vpop.f32.mrb[0].mxu0
        %v6510 = vadd.f32 %v6401, %v6509
        %v6511 = vpop.f32.mrb[0].mxu0
        %v6512 = vpop.f32.mrb[0].mxu0
        %v6513 = vadd.f32 %v6401, %v6512
        %v6514 = vpop.f32.mrb[0].mxu0
        %6515 = vmatprep.mubr.bf16.mxu0 0
        %6516 = vmatmul.mubr.bf16.gmra.mrb[0].mxu0 %v6368
        %v6517 = vpop.f32.mrb[0].mxu0
        %v6518 = vadd.f32 %v6401, %v6517
        %v6519 = vpop.f32.mrb[0].mxu0
        %v6520 = vpop.f32.mrb[0].mxu0
        %v6521 = vadd.f32 %v6401, %v6520
        %v6522 = vpop.f32.mrb[0].mxu0
        %6523 = vmatprep.mubr.bf16.mxu0 0
        %6524 = vmatmul.mubr.bf16.gmra.mrb[0].mxu0 %v6369
        %v6525 = vpop.f32.mrb[0].mxu0
        %v6526 = vadd.f32 %v6401, %v6525
        %v6527 = vpop.f32.mrb[0].mxu0
        %v6528 = vpop.f32.mrb[0].mxu0
        %v6529 = vadd.f32 %v6401, %v6528
        %v6530 = vpop.f32.mrb[0].mxu0
        %6531 = vmatprep.mubr.bf16.mxu0 0
        %6532 = vmatmul.mubr.bf16.gmra.mrb[0].mxu0 %v6370
        %v6533 = vpop.f32.mrb[0].mxu0
        %v6534 = vadd.f32 %v6401, %v6533
        %v6535 = vpop.f32.mrb[0].mxu0
        %v6536 = vpop.f32.mrb[0].mxu0
        %v6537 = vadd.f32 %v6401, %v6536
        %v6538 = vpop.f32.mrb[0].mxu0
        %6539 = vmatprep.mubr.bf16.mxu0 0
        %6540 = vmatmul.mubr.bf16.gmra.mrb[0].mxu0 %v6371
        %v6541 = vpop.f32.mrb[0].mxu0
        %v6542 = vadd.f32 %v6401, %v6541
        %v6543 = vpop.f32.mrb[0].mxu0
        %v6544 = vpop.f32.mrb[0].mxu0
        %v6545 = vadd.f32 %v6401, %v6544
        %v6546 = vpop.f32.mrb[0].mxu0
        %6547 = vmatprep.mubr.bf16.mxu0 0
        %6548 = vmatmul.mubr.bf16.gmra.mrb[0].mxu0 %v6372
        %v6549 = vpop.f32.mrb[0].mxu0
        %v6550 = vadd.f32 %v6401, %v6549
        %v6551 = vpop.f32.mrb[0].mxu0
        %v6552 = vpop.f32.mrb[0].mxu0
        %v6553 = vadd.f32 %v6401, %v6552
        %v6554 = vpop.f32.mrb[0].mxu0
        %6555 = vmatprep.mubr.bf16.mxu0 0
        %6556 = vmatmul.mubr.bf16.gmra.mrb[0].mxu0 %v6373
        %v6557 = vpop.f32.mrb[0].mxu0
        %v6558 = vadd.f32 %v6401, %v6557
        %v6559 = vpop.f32.mrb[0].mxu0
        %v6560 = vpop.f32.mrb[0].mxu0
        %v6561 = vadd.f32 %v6401, %v6560
        %v6562 = vpop.f32.mrb[0].mxu0
        %6563 = vmatprep.mubr.bf16.mxu0 0
        %6564 = vmatmul.mubr.bf16.gmra.mrb[0].mxu0 %v6374
        %v6565 = vpop.f32.mrb[0].mxu0
        %v6566 = vadd.f32 %v6401, %v6565
        %v6567 = vpop.f32.mrb[0].mxu0
        %v6568 = vpop.f32.mrb[0].mxu0
        %v6569 = vadd.f32 %v6401, %v6568
        %v6570 = vpop.f32.mrb[0].mxu0
        %6571 = vmatprep.mubr.bf16.mxu0 0
        %6572 = vmatmul.mubr.bf16.gmra.mrb[0].mxu0 %v6375
        %v6573 = vpop.f32.mrb[0].mxu0
        %v6574 = vadd.f32 %v6401, %v6573
        %v6575 = vpop.f32.mrb[0].mxu0
        %v6576 = vpop.f32.mrb[0].mxu0
        %v6577 = vadd.f32 %v6401, %v6576
        %v6578 = vpop.f32.mrb[0].mxu0
        %6579 = vmatprep.mubr.bf16.mxu0 0
        %6580 = vmatmul.mubr.bf16.gmra.mrb[0].mxu0 %v6376
        %v6581 = vpop.f32.mrb[0].mxu0
        %v6582 = vadd.f32 %v6401, %v6581
        %v6583 = vpop.f32.mrb[0].mxu0
        %v6584 = vpop.f32.mrb[0].mxu0
        %v6585 = vadd.f32 %v6401, %v6584
        %v6586 = vpop.f32.mrb[0].mxu0
        %6587 = vmatprep.mubr.bf16.mxu0 0
        %6588 = vmatmul.mubr.bf16.gmra.mrb[0].mxu0 %v6377
        %v6589 = vpop.f32.mrb[0].mxu0
        %v6590 = vadd.f32 %v6401, %v6589
        %v6591 = vpop.f32.mrb[0].mxu0
        %v6592 = vpop.f32.mrb[0].mxu0
        %v6593 = vadd.f32 %v6401, %v6592
        %v6594 = vpop.f32.mrb[0].mxu0
        %6595 = vmatprep.mubr.bf16.mxu0 0
        %6596 = vmatmul.mubr.bf16.gmra.mrb[0].mxu0 %v6378
        %v6597 = vpop.f32.mrb[0].mxu0
        %v6598 = vadd.f32 %v6401, %v6597
        %v6599 = vpop.f32.mrb[0].mxu0
        %v6600 = vpop.f32.mrb[0].mxu0
        %v6601 = vadd.f32 %v6401, %v6600
        %v6602 = vpop.f32.mrb[0].mxu0
        %6603 = vmatprep.mubr.bf16.mxu0 0
        %6604 = vmatmul.mubr.bf16.gmra.mrb[0].mxu0 %v6379
        %v6605 = vpop.f32.mrb[0].mxu0
        %v6606 = vadd.f32 %v6401, %v6605
        %v6607 = vpop.f32.mrb[0].mxu0
        %v6608 = vpop.f32.mrb[0].mxu0
        %v6609 = vadd.f32 %v6401, %v6608
        %v6610 = vpop.f32.mrb[0].mxu0
        %6611 = vdwg.mxu0
        %v6612 = vmax.f32 %v6486, 0.0
        %v6613 = vmax.f32 %v6489, 0.0
        %v6614 = vmax.f32 %v6494, 0.0
        %v6615 = vmax.f32 %v6497, 0.0
        %v6616 = vmax.f32 %v6502, 0.0
        %v6617 = vmax.f32 %v6505, 0.0
        %v6618 = vmax.f32 %v6510, 0.0
        %v6619 = vmax.f32 %v6513, 0.0
        %v6620 = vmax.f32 %v6518, 0.0
        %v6621 = vmax.f32 %v6521, 0.0
        %v6622 = vmax.f32 %v6526, 0.0
        %v6623 = vmax.f32 %v6529, 0.0
        %v6624 = vmax.f32 %v6534, 0.0
        %v6625 = vmax.f32 %v6537, 0.0
        %v6626 = vmax.f32 %v6542, 0.0
        %v6627 = vmax.f32 %v6545, 0.0
        %v6628 = vmax.f32 %v6550, 0.0
        %v6629 = vmax.f32 %v6553, 0.0
        %v6630 = vmax.f32 %v6558, 0.0
        %v6631 = vmax.f32 %v6561, 0.0
        %v6632 = vmax.f32 %v6566, 0.0
        %v6633 = vmax.f32 %v6569, 0.0
        %v6634 = vmax.f32 %v6574, 0.0
        %v6635 = vmax.f32 %v6577, 0.0
        %v6636 = vmax.f32 %v6582, 0.0
        %v6637 = vmax.f32 %v6585, 0.0
        %v6638 = vmax.f32 %v6590, 0.0
        %v6639 = vmax.f32 %v6593, 0.0
        %v6640 = vmax.f32 %v6598, 0.0
        %v6641 = vmax.f32 %v6601, 0.0
        %v6642 = vmax.f32 %v6606, 0.0
        %v6643 = vmax.f32 %v6609, 0.0
        %v6644 = vmul.f32 %v6612, %v6612
        %v6645 = vmul.f32 %v6613, %v6613
        %v6646 = vmul.f32 %v6614, %v6614
        %v6647 = vmul.f32 %v6615, %v6615
        %v6648 = vmul.f32 %v6616, %v6616
        %v6649 = vmul.f32 %v6617, %v6617
        %v6650 = vmul.f32 %v6618, %v6618
        %v6651 = vmul.f32 %v6619, %v6619
        %v6652 = vmul.f32 %v6620, %v6620
        %v6653 = vmul.f32 %v6621, %v6621
        %v6654 = vmul.f32 %v6622, %v6622
        %v6655 = vmul.f32 %v6623, %v6623
        %v6656 = vmul.f32 %v6624, %v6624
        %v6657 = vmul.f32 %v6625, %v6625
        %v6658 = vmul.f32 %v6626, %v6626
        %v6659 = vmul.f32 %v6627, %v6627
        %v6660 = vmul.f32 %v6628, %v6628
        %v6661 = vmul.f32 %v6629, %v6629
        %v6662 = vmul.f32 %v6630, %v6630
        %v6663 = vmul.f32 %v6631, %v6631
        %v6664 = vmul.f32 %v6632, %v6632
        %v6665 = vmul.f32 %v6633, %v6633
        %v6666 = vmul.f32 %v6634, %v6634
        %v6667 = vmul.f32 %v6635, %v6635
        %v6668 = vmul.f32 %v6636, %v6636
        %v6669 = vmul.f32 %v6637, %v6637
        %v6670 = vmul.f32 %v6638, %v6638
        %v6671 = vmul.f32 %v6639, %v6639
        %v6672 = vmul.f32 %v6640, %v6640
        %v6673 = vmul.f32 %v6641, %v6641
        %v6674 = vmul.f32 %v6642, %v6642
        %v6675 = vmul.f32 %v6643, %v6643
        %v6676 = vpack.c.bf16 %v6645, %v6644
        %v6677 = vpack.c.bf16 %v6647, %v6646
        %v6678 = vpack.c.bf16 %v6649, %v6648
        %v6679 = vpack.c.bf16 %v6651, %v6650
        %v6680 = vpack.c.bf16 %v6653, %v6652
        %v6681 = vpack.c.bf16 %v6655, %v6654
        %v6682 = vpack.c.bf16 %v6657, %v6656
        %v6683 = vpack.c.bf16 %v6659, %v6658
        %v6684 = vpack.c.bf16 %v6661, %v6660
        %v6685 = vpack.c.bf16 %v6663, %v6662
        %v6686 = vpack.c.bf16 %v6665, %v6664
        %v6687 = vpack.c.bf16 %v6667, %v6666
        %v6688 = vpack.c.bf16 %v6669, %v6668
        %v6689 = vpack.c.bf16 %v6671, %v6670
        %v6690 = vpack.c.bf16 %v6673, %v6672
        %v6691 = vpack.c.bf16 %v6675, %v6674
        %v6692 = vld [vmem:[#allocation16] sm:$0xf]
        %v6693 = vld [vmem:[#allocation16 + $0x4] sm:$0xf]
        %v6694 = vld [vmem:[#allocation16 + $0x8] sm:$0xf]
        %v6695 = vld [vmem:[#allocation16 + $0xc] sm:$0xf]
        %v6696 = vld [vmem:[#allocation16 + $0x10] sm:$0xf]
        %v6697 = vld [vmem:[#allocation16 + $0x14] sm:$0xf]
        %v6698 = vld [vmem:[#allocation16 + $0x18] sm:$0xf]
        %v6699 = vld [vmem:[#allocation16 + $0x1c] sm:$0xf]
        %v6700 = vld [vmem:[#allocation16 + $0x20] sm:$0xf]
        %v6701 = vld [vmem:[#allocation16 + $0x24] sm:$0xf]
        %v6702 = vld [vmem:[#allocation16 + $0x28] sm:$0xf]
        %v6703 = vld [vmem:[#allocation16 + $0x2c] sm:$0xf]
        %v6704 = vld [vmem:[#allocation16 + $0x30] sm:$0xf]
        %v6705 = vld [vmem:[#allocation16 + $0x34] sm:$0xf]
        %v6706 = vld [vmem:[#allocation16 + $0x38] sm:$0xf]
        %v6707 = vld [vmem:[#allocation16 + $0x3c] sm:$0xf]
        %v6708 = vld [vmem:[#allocation17] sm:$0x1]
        %v6710 = vlaneseq
        %v6711 = vshrl.u32 %v6710, 7
        %v6712 = vsub.s32 0, %v6711
        %v6713 = vrot.slane %v6708, %v6712
        %v6731 = vunpack.c.l.b16 %v6692
        %v6732 = vunpack.c.l.b16 %v6693
        %v6733 = vunpack.c.l.b16 %v6694
        %v6734 = vunpack.c.l.b16 %v6695
        %v6735 = vunpack.c.l.b16 %v6696
        %v6736 = vunpack.c.l.b16 %v6697
        %v6737 = vunpack.c.l.b16 %v6698
        %v6738 = vunpack.c.l.b16 %v6699
        %v6739 = vunpack.c.l.b16 %v6700
        %v6740 = vunpack.c.l.b16 %v6701
        %v6741 = vunpack.c.l.b16 %v6702
        %v6742 = vunpack.c.l.b16 %v6703
        %v6743 = vunpack.c.l.b16 %v6704
        %v6744 = vunpack.c.l.b16 %v6705
        %v6745 = vunpack.c.l.b16 %v6706
        %v6746 = vunpack.c.l.b16 %v6707
        %v6747 = vpack.c.b16 %v6732, %v6731
        %v6748 = vpack.c.b16 %v6734, %v6733
        %v6749 = vpack.c.b16 %v6736, %v6735
        %v6750 = vpack.c.b16 %v6738, %v6737
        %v6751 = vpack.c.b16 %v6740, %v6739
        %v6752 = vpack.c.b16 %v6742, %v6741
        %v6753 = vpack.c.b16 %v6744, %v6743
        %v6754 = vpack.c.b16 %v6746, %v6745
        %6763 = vmatprep.subr.bf16.mxu0 0
        %6764 = vmatpush1.bf16.msra.mxu0 %v6747
        %6765 = vmatprep.subr.bf16.mxu0 0
        %6766 = vmatpush1.bf16.msra.mxu0 %v6748
        %6767 = vmatprep.subr.bf16.mxu0 0
        %6768 = vmatpush1.bf16.msra.mxu0 %v6749
        %6769 = vmatprep.subr.bf16.mxu0 0
        %6770 = vmatpush1.bf16.msra.mxu0 %v6750
        %6771 = vmatprep.subr.bf16.mxu0 0
        %6772 = vmatpush1.bf16.msra.mxu0 %v6751
        %6773 = vmatprep.subr.bf16.mxu0 0
        %6774 = vmatpush1.bf16.msra.mxu0 %v6752
        %6775 = vmatprep.subr.bf16.mxu0 0
        %6776 = vmatpush1.bf16.msra.mxu0 %v6753
        %6777 = vmatprep.subr.bf16.mxu0 0
        %6778 = vmatpush1.bf16.msra.mxu0 %v6754
        %6779 = vmatprep.subr.bf16.mxu0 0
        %6780 = vmatpush1.bf16.msra.mxu0 0
        %6781 = vmatprep.subr.bf16.mxu0 0
        %6782 = vmatpush1.bf16.msra.mxu0 0
        %6783 = vmatprep.subr.bf16.mxu0 0
        %6784 = vmatpush1.bf16.msra.mxu0 0
        %6785 = vmatprep.subr.bf16.mxu0 0
        %6786 = vmatpush1.bf16.msra.mxu0 0
        %6787 = vmatprep.subr.bf16.mxu0 0
        %6788 = vmatpush1.bf16.msra.mxu0 0
        %6789 = vmatprep.subr.bf16.mxu0 0
        %6790 = vmatpush1.bf16.msra.mxu0 0
        %6791 = vmatprep.subr.bf16.mxu0 0
        %6792 = vmatpush1.bf16.msra.mxu0 0
        %6793 = vmatprep.subr.bf16.mxu0 0
        %6794 = vmatpush1.bf16.msra.mxu0 0
        %6795 = vmatprep.mubr.bf16.mxu0 0
        %6796 = vmatmul.mubr.bf16.gmra.mrb[0].mxu0 %v6676
        %v6797 = vpop.f32.mrb[0].mxu0
        %v6798 = vadd.f32 %v6713, %v6797
        %v6799 = vpop.f32.mrb[0].mxu0
        %v6800 = vpop.f32.mrb[0].mxu0
        %v6801 = vadd.f32 %v6713, %v6800
        %v6802 = vpop.f32.mrb[0].mxu0
        %6803 = vmatprep.mubr.bf16.mxu0 0
        %6804 = vmatmul.mubr.bf16.gmra.mrb[0].mxu0 %v6677
        %v6805 = vpop.f32.mrb[0].mxu0
        %v6806 = vadd.f32 %v6713, %v6805
        %v6807 = vpop.f32.mrb[0].mxu0
        %v6808 = vpop.f32.mrb[0].mxu0
        %v6809 = vadd.f32 %v6713, %v6808
        %v6810 = vpop.f32.mrb[0].mxu0
        %6811 = vmatprep.mubr.bf16.mxu0 0
        %6812 = vmatmul.mubr.bf16.gmra.mrb[0].mxu0 %v6678
        %v6813 = vpop.f32.mrb[0].mxu0
        %v6814 = vadd.f32 %v6713, %v6813
        %v6815 = vpop.f32.mrb[0].mxu0
        %v6816 = vpop.f32.mrb[0].mxu0
        %v6817 = vadd.f32 %v6713, %v6816
        %v6818 = vpop.f32.mrb[0].mxu0
        %6819 = vmatprep.mubr.bf16.mxu0 0
        %6820 = vmatmul.mubr.bf16.gmra.mrb[0].mxu0 %v6679
        %v6821 = vpop.f32.mrb[0].mxu0
        %v6822 = vadd.f32 %v6713, %v6821
        %v6823 = vpop.f32.mrb[0].mxu0
        %v6824 = vpop.f32.mrb[0].mxu0
        %v6825 = vadd.f32 %v6713, %v6824
        %v6826 = vpop.f32.mrb[0].mxu0
        %6827 = vmatprep.mubr.bf16.mxu0 0
        %6828 = vmatmul.mubr.bf16.gmra.mrb[0].mxu0 %v6680
        %v6829 = vpop.f32.mrb[0].mxu0
        %v6830 = vadd.f32 %v6713, %v6829
        %v6831 = vpop.f32.mrb[0].mxu0
        %v6832 = vpop.f32.mrb[0].mxu0
        %v6833 = vadd.f32 %v6713, %v6832
        %v6834 = vpop.f32.mrb[0].mxu0
        %6835 = vmatprep.mubr.bf16.mxu0 0
        %6836 = vmatmul.mubr.bf16.gmra.mrb[0].mxu0 %v6681
        %v6837 = vpop.f32.mrb[0].mxu0
        %v6838 = vadd.f32 %v6713, %v6837
        %v6839 = vpop.f32.mrb[0].mxu0
        %v6840 = vpop.f32.mrb[0].mxu0
        %v6841 = vadd.f32 %v6713, %v6840
        %v6842 = vpop.f32.mrb[0].mxu0
        %6843 = vmatprep.mubr.bf16.mxu0 0
        %6844 = vmatmul.mubr.bf16.gmra.mrb[0].mxu0 %v6682
        %v6845 = vpop.f32.mrb[0].mxu0
        %v6846 = vadd.f32 %v6713, %v6845
        %v6847 = vpop.f32.mrb[0].mxu0
        %v6848 = vpop.f32.mrb[0].mxu0
        %v6849 = vadd.f32 %v6713, %v6848
        %v6850 = vpop.f32.mrb[0].mxu0
        %6851 = vmatprep.mubr.bf16.mxu0 0
        %6852 = vmatmul.mubr.bf16.gmra.mrb[0].mxu0 %v6683
        %v6853 = vpop.f32.mrb[0].mxu0
        %v6854 = vadd.f32 %v6713, %v6853
        %v6855 = vpop.f32.mrb[0].mxu0
        %v6856 = vpop.f32.mrb[0].mxu0
        %v6857 = vadd.f32 %v6713, %v6856
        %v6858 = vpop.f32.mrb[0].mxu0
        %6859 = vmatprep.mubr.bf16.mxu0 0
        %6860 = vmatmul.mubr.bf16.gmra.mrb[0].mxu0 %v6684
        %v6861 = vpop.f32.mrb[0].mxu0
        %v6862 = vadd.f32 %v6713, %v6861
        %v6863 = vpop.f32.mrb[0].mxu0
        %v6864 = vpop.f32.mrb[0].mxu0
        %v6865 = vadd.f32 %v6713, %v6864
        %v6866 = vpop.f32.mrb[0].mxu0
        %6867 = vmatprep.mubr.bf16.mxu0 0
        %6868 = vmatmul.mubr.bf16.gmra.mrb[0].mxu0 %v6685
        %v6869 = vpop.f32.mrb[0].mxu0
        %v6870 = vadd.f32 %v6713, %v6869
        %v6871 = vpop.f32.mrb[0].mxu0
        %v6872 = vpop.f32.mrb[0].mxu0
        %v6873 = vadd.f32 %v6713, %v6872
        %v6874 = vpop.f32.mrb[0].mxu0
        %6875 = vmatprep.mubr.bf16.mxu0 0
        %6876 = vmatmul.mubr.bf16.gmra.mrb[0].mxu0 %v6686
        %v6877 = vpop.f32.mrb[0].mxu0
        %v6878 = vadd.f32 %v6713, %v6877
        %v6879 = vpop.f32.mrb[0].mxu0
        %v6880 = vpop.f32.mrb[0].mxu0
        %v6881 = vadd.f32 %v6713, %v6880
        %v6882 = vpop.f32.mrb[0].mxu0
        %6883 = vmatprep.mubr.bf16.mxu0 0
        %6884 = vmatmul.mubr.bf16.gmra.mrb[0].mxu0 %v6687
        %v6885 = vpop.f32.mrb[0].mxu0
        %v6886 = vadd.f32 %v6713, %v6885
        %v6887 = vpop.f32.mrb[0].mxu0
        %v6888 = vpop.f32.mrb[0].mxu0
        %v6889 = vadd.f32 %v6713, %v6888
        %v6890 = vpop.f32.mrb[0].mxu0
        %6891 = vmatprep.mubr.bf16.mxu0 0
        %6892 = vmatmul.mubr.bf16.gmra.mrb[0].mxu0 %v6688
        %v6893 = vpop.f32.mrb[0].mxu0
        %v6894 = vadd.f32 %v6713, %v6893
        %v6895 = vpop.f32.mrb[0].mxu0
        %v6896 = vpop.f32.mrb[0].mxu0
        %v6897 = vadd.f32 %v6713, %v6896
        %v6898 = vpop.f32.mrb[0].mxu0
        %6899 = vmatprep.mubr.bf16.mxu0 0
        %6900 = vmatmul.mubr.bf16.gmra.mrb[0].mxu0 %v6689
        %v6901 = vpop.f32.mrb[0].mxu0
        %v6902 = vadd.f32 %v6713, %v6901
        %v6903 = vpop.f32.mrb[0].mxu0
        %v6904 = vpop.f32.mrb[0].mxu0
        %v6905 = vadd.f32 %v6713, %v6904
        %v6906 = vpop.f32.mrb[0].mxu0
        %6907 = vmatprep.mubr.bf16.mxu0 0
        %6908 = vmatmul.mubr.bf16.gmra.mrb[0].mxu0 %v6690
        %v6909 = vpop.f32.mrb[0].mxu0
        %v6910 = vadd.f32 %v6713, %v6909
        %v6911 = vpop.f32.mrb[0].mxu0
        %v6912 = vpop.f32.mrb[0].mxu0
        %v6913 = vadd.f32 %v6713, %v6912
        %v6914 = vpop.f32.mrb[0].mxu0
        %6915 = vmatprep.mubr.bf16.mxu0 0
        %6916 = vmatmul.mubr.bf16.gmra.mrb[0].mxu0 %v6691
        %v6917 = vpop.f32.mrb[0].mxu0
        %v6918 = vadd.f32 %v6713, %v6917
        %v6919 = vpop.f32.mrb[0].mxu0
        %v6920 = vpop.f32.mrb[0].mxu0
        %v6921 = vadd.f32 %v6713, %v6920
        %v6922 = vpop.f32.mrb[0].mxu0
        %6923 = vdwg.mxu0
        %v6924 = vadd.f32 %v5833, %v6798
        %v6925 = vadd.f32 %v5834, %v6801
        %v6926 = vadd.f32 %v5835, %v6806
        %v6927 = vadd.f32 %v5836, %v6809
        %v6928 = vadd.f32 %v5837, %v6814
        %v6929 = vadd.f32 %v5838, %v6817
        %v6930 = vadd.f32 %v5839, %v6822
        %v6931 = vadd.f32 %v5840, %v6825
        %v6932 = vadd.f32 %v5841, %v6830
        %v6933 = vadd.f32 %v5842, %v6833
        %v6934 = vadd.f32 %v5843, %v6838
        %v6935 = vadd.f32 %v5844, %v6841
        %v6936 = vadd.f32 %v5845, %v6846
        %v6937 = vadd.f32 %v5846, %v6849
        %v6938 = vadd.f32 %v5847, %v6854
        %v6939 = vadd.f32 %v5848, %v6857
        %v6940 = vadd.f32 %v5849, %v6862
        %v6941 = vadd.f32 %v5850, %v6865
        %v6942 = vadd.f32 %v5851, %v6870
        %v6943 = vadd.f32 %v5852, %v6873
        %v6944 = vadd.f32 %v5853, %v6878
        %v6945 = vadd.f32 %v5854, %v6881
        %v6946 = vadd.f32 %v5855, %v6886
        %v6947 = vadd.f32 %v5856, %v6889
        %v6948 = vadd.f32 %v5857, %v6894
        %v6949 = vadd.f32 %v5858, %v6897
        %v6950 = vadd.f32 %v5859, %v6902
        %v6951 = vadd.f32 %v5860, %v6905
        %v6952 = vadd.f32 %v5861, %v6910
        %v6953 = vadd.f32 %v5862, %v6913
        %v6954 = vadd.f32 %v5863, %v6918
        %v6955 = vadd.f32 %v5864, %v6921
        %6956 = vst [vmem:[%s405] sm:$0xff] %v6924
        %6957 = vst [vmem:[%s405 + $0x8] sm:$0xff] %v6925
        %6958 = vst [vmem:[%s405 + $0x10] sm:$0xff] %v6926
        %6959 = vst [vmem:[%s405 + $0x18] sm:$0xff] %v6927
        %6960 = vst [vmem:[%s405 + $0x20] sm:$0xff] %v6928
        %6961 = vst [vmem:[%s405 + $0x28] sm:$0xff] %v6929
        %6962 = vst [vmem:[%s405 + $0x30] sm:$0xff] %v6930
        %6963 = vst [vmem:[%s405 + $0x38] sm:$0xff] %v6931
        %6964 = vst [vmem:[%s405 + $0x40] sm:$0xff] %v6932
        %6965 = vst [vmem:[%s405 + $0x48] sm:$0xff] %v6933
        %6966 = vst [vmem:[%s405 + $0x50] sm:$0xff] %v6934
        %6967 = vst [vmem:[%s405 + $0x58] sm:$0xff] %v6935
        %6968 = vst [vmem:[%s405 + $0x60] sm:$0xff] %v6936
        %6969 = vst [vmem:[%s405 + $0x68] sm:$0xff] %v6937
        %6970 = vst [vmem:[%s405 + $0x70] sm:$0xff] %v6938
        %6971 = vst [vmem:[%s405 + $0x78] sm:$0xff] %v6939
        %6972 = vst [vmem:[%s405 + $0x80] sm:$0xff] %v6940
        %6973 = vst [vmem:[%s405 + $0x88] sm:$0xff] %v6941
        %6974 = vst [vmem:[%s405 + $0x90] sm:$0xff] %v6942
        %6975 = vst [vmem:[%s405 + $0x98] sm:$0xff] %v6943
        %6976 = vst [vmem:[%s405 + $0xa0] sm:$0xff] %v6944
        %6977 = vst [vmem:[%s405 + $0xa8] sm:$0xff] %v6945
        %6978 = vst [vmem:[%s405 + $0xb0] sm:$0xff] %v6946
        %6979 = vst [vmem:[%s405 + $0xb8] sm:$0xff] %v6947
        %6980 = vst [vmem:[%s405 + $0xc0] sm:$0xff] %v6948
        %6981 = vst [vmem:[%s405 + $0xc8] sm:$0xff] %v6949
        %6982 = vst [vmem:[%s405 + $0xd0] sm:$0xff] %v6950
        %6983 = vst [vmem:[%s405 + $0xd8] sm:$0xff] %v6951
        %6984 = vst [vmem:[%s405 + $0xe0] sm:$0xff] %v6952
        %6985 = vst [vmem:[%s405 + $0xe8] sm:$0xff] %v6953
        %6986 = vst [vmem:[%s405 + $0xf0] sm:$0xff] %v6954
        %6987 = vst [vmem:[%s405 + $0xf8] sm:$0xff] %v6955
        %s6988 = sand.u32 %s218, 1
        %s6989 = scalar_lea.sflag [#allocation7], %s6988
        %s6990 = sand.u32 %s218, 1
        %s6991 = smul.addr %s6990, 256
        %s6992 = scalar_lea.vmem [#allocation19], %s6991
        // Predicated region
        $region85: #{tpu_custom_call.1} parent=51 // pred_check
          %p6993 = pneg %p228
        $region86: #{tpu_custom_call.1} parent=51 // pred_check_branch
          %6995 = sbr.rel (%p6993) target = $region88
        $region87: #{tpu_custom_call.1} parent=51 // pred_region
          %s6996 = smul.u32 16, %s33
          %s6998 = ssub.s32 4096, 4096
          %6999 = vsyncadd %s6989, %s6998
          %s7000 = smul.addr %s6996, 2
          %s7001 = smul.addr %s32, 32
          %s7002 = sadd.s32 %s7000, %s7001
          %s7003 = smul.addr %s7002, 128
          %s7004 = scalar_lea.hbm %s9, %s7003
          %s7005 = sshll.u32 %s6992, 4
          %s7006 = int_to_ptr.vmem [resolvable:$true] %s7005
          %7011 = dma.vmem_to_hbm [thread:$0]  %s7006, 4096, %s7004, %s6989, 128, 128, 8
        $region88: #{tpu_custom_call.1} parent=51 // pred_fallthru
          _
      $region52: #{tpu_custom_call.1} parent=5 // pred_fallthru
        _
      %p7012 = scmp.le.s32.totalorder 2, %s23
      // Predicated region
      $region89: #{tpu_custom_call.1} parent=5 // pred_check
        %p7013 = pneg %p7012
      $region90: #{tpu_custom_call.1} parent=5 // pred_check_branch
        %7015 = sbr.rel (%p7013) target = $region92
      $region91: #{tpu_custom_call.1} parent=5 // pred_region
        %s7016 = ssub.s32 %s23, 2
        // Predicated region
        $region93: #{tpu_custom_call.1} parent=91 // pred_check
          %p7017 = pneg %p234
        $region94: #{tpu_custom_call.1} parent=91 // pred_check_branch
          %7019 = sbr.rel (%p7017) target = $region96
        $region95: #{tpu_custom_call.1} parent=91 // pred_region
          %s7020 = sand.u32 %s219, 1
          %s7021 = scalar_lea.sflag [#allocation7], %s7020
          %s7022 = sand.u32 %s219, 1
          %s7023 = smul.addr %s7022, 256
          %s7024 = scalar_lea.vmem [#allocation19], %s7023
          %7025 = dma.done %s7021, 4096
        $region96: #{tpu_custom_call.1} parent=91 // pred_fallthru
          _
      $region92: #{tpu_custom_call.1} parent=5 // pred_fallthru
        _
    $region6: #{tpu_custom_call.1} parent=1 // loop_footer
      %s27 = sadd.s32 1, %s23
    $region7: #{tpu_custom_call.1} parent=1 // loop_footer_branch
      %22 = sbr.rel target = $region3
    $region8: #{tpu_custom_call.1} parent=1 // loop_exit
      _
    %7026 = vsyncpa [#allocation6], 1
    %s7027 = scalar_lea.sflag [#allocation6], 1
    %7028 = vsyncpa %s7027, 1
    %7029 = vsyncpa [#allocation9], 1
    %7030 = vsyncpa [#allocation12], 1
    %7031 = vsyncpa [#allocation15], 1
    %7032 = vsyncpa [#allocation18], 1
    %7033 = vsyncpa [#allocation7], 1
    %s7034 = scalar_lea.sflag [#allocation7], 1
    %7035 = vsyncpa %s7034, 1
  %7036 = vsyncmov [#allocation4]
  %s7037 = vpop.sfrf %7036
  %p7038 = scmp.eq.s32.totalorder %s7037, 0
  %p7039 = pneg %p7038
  %7041 = shalt.err (%p7039)

</llo_original>
